<compile_context>
chip_gen: v7x
topology: tpu7x:2x2x1
jax: 0.10.0
libtpu: 0.0.40
codegen_flags: <defaults>
</compile_context>

<pallas_src>
import functools

import jax
import jax.numpy as jnp
from jax.experimental import pallas as pl
from jax.experimental.pallas import tpu as pltpu


# ---------------------------------------------------------------------------
# Pallas kernel: one tile of BT beads per grid step
# ---------------------------------------------------------------------------
def _psf_kernel(xyz_ref,     # (BT, 8)          f32: cols 0..2 = x,y,z; 3 = N; 4 = bg
                wv_ref,      # (8, 2*Np^2)      f32: rows 0..2 = [Re(wv) | Im(wv)]
                pm_ref,      # (32, Np^2)       f32: rows 0:12 = A1, 16:28 = A2
                whi_ref,     # (Np^2, 2*Qpad)   bf16: hi part of [wk_r | wk_i]
                wlo_ref,     # (Np^2, 2*Qpad)   bf16: lo part of [wk_r | wk_i]
                psf_ref,     # (BT, Qpad)       f32: scaled PSF
                mu_ref,      # (BT, Qpad)       f32: N*PSF + bg
                *, bt, np2, qpad):
    # --- position phase mask for all BT beads at once (lane-dense) ----------
    wvp = wv_ref[...]                                    # (8, 2*np2)
    w = (xyz_ref[:, 0:1] * wvp[0:1, :]
         + xyz_ref[:, 1:2] * wvp[1:2, :]
         + xyz_ref[:, 2:3] * wvp[2:3, :])                # (bt, 2*np2) = [Re W | Im W]
    w_re = w[:, :np2]
    w_im = w[:, np2:]
    # PositionPhaseMask = exp(-1j*W) = exp(Im W) * (cos(Re W) - 1j*sin(Re W))
    amp = jnp.exp(w_im)
    ppm_r = amp * jnp.cos(w_re)                          # (bt, np2)
    ppm_i = -amp * jnp.sin(w_re)

    # --- PupilFunction, row-stacked [Re(PF) comps 0..5 ; Im(PF) comps 0..5] --
    # A1 = [PM_r ; PM_i], A2 = [-PM_i ; PM_r]  =>  x = A1*ppm_r + A2*ppm_i
    a1 = pm_ref[0:12, :]                                 # (12, np2)
    a2 = pm_ref[16:28, :]                                # (12, np2)
    x = (a1[:, None, :] * ppm_r[None, :, :]
         + a2[:, None, :] * ppm_i[None, :, :]).reshape(12 * bt, np2)

    # --- pinned-precision matmul: manual bf16x3 (drop lo*lo term) -----------
    x_hi = x.astype(jnp.bfloat16)
    x_lo = (x - x_hi.astype(jnp.float32)).astype(jnp.bfloat16)
    g = jnp.dot(x_hi, whi_ref[...], preferred_element_type=jnp.float32)
    g = g + jnp.dot(x_lo, whi_ref[...], preferred_element_type=jnp.float32)
    g = g + jnp.dot(x_hi, wlo_ref[...], preferred_element_type=jnp.float32)
    # g rows 0:6bt   = [PF_r@wk_r | PF_r@wk_i]
    # g rows 6bt:12bt= [PF_i@wk_r | PF_i@wk_i]

    # --- PSF = sum over 6 components of Re(F)^2 + Im(F)^2, square fused -----
    acc = None
    for k in range(6):                                   # static, aligned slices
        r0 = k * bt
        top = g[r0:r0 + bt, :]                           # (bt, 2*qpad)
        bot = g[6 * bt + r0:6 * bt + r0 + bt, :]
        f_r = top[:, :qpad] - bot[:, qpad:]              # Re(Tx @ PF @ Ty^T)
        f_i = top[:, qpad:] + bot[:, :qpad]              # Im(Tx @ PF @ Ty^T)
        c = f_r * f_r + f_i * f_i
        acc = c if acc is None else acc + c

    psf_ref[...] = acc                                   # already normalization-scaled
    mu_ref[...] = xyz_ref[:, 3:4] * acc + xyz_ref[:, 4:5]


# ---------------------------------------------------------------------------
# glue: fold the Bluestein CZT into a dense transform matrix
# czt(x)[m] = B[m] * ifft_L( D * fft_L( pad_L(A*x) ) )[m]
#           = sum_n  B[m] * A[n] * ifft_L(D)[(m - n) mod L] * x[n]
# ---------------------------------------------------------------------------
def _czt_matrix(N, M, L, Amt, Bmt, Dmt):
    d = jnp.fft.ifft(Dmt.astype(jnp.complex64))
    m = jnp.arange(M)[:, None]
    n = jnp.arange(N)[None, :]
    return (Bmt[:, None] * Amt[None, :] * d[(m - n) % L]).astype(jnp.complex64)


def _pick_bead_tile(num_beads):
    # Largest tile (<=64, multiple of 8) that still leaves >=2 grid steps so
    # the "parallel" grid axis can feed both v7x TensorCores.
    bt = (max(num_beads // 2, 8) // 8) * 8
    return max(8, min(64, bt))


# ---------------------------------------------------------------------------
# wrapper mirroring Model_vectorial_psf_IBg.forward
# ---------------------------------------------------------------------------
def model_vectorial_psf_ibg_forward(
        NA, zvals, refmed, refcov, refimm, refimmnom, Lambda, Npupil,
        abberations, zmin, zmax, K, N, M, L, Ax, Bx, Dx, Ay, pixelsize,
        By, Dy, Mx, My, numparams_fit, thetatry, dev, zstack,
        wavevector, wavevectorzimm, all_zernikes, PupilMatrix,
        bead_tile=None):
    # forward() always calls poissonrate(..., ibg_ony=True); with zstack=False
    # the outputs only depend on wavevector, PupilMatrix, the CZT vectors,
    # NA/Lambda/Npupil/pixelsize and thetatry.
    assert not zstack, "ibg_only output path of the reference is the non-zstack path"
    assert Mx == M and My == M
    num_beads = thetatry.shape[0]
    Np = Npupil
    np2 = Np * Np
    mm = M * M
    qpad = -(-mm // 128) * 128            # lane-dense (multiple of 128) image slab

    BT = _pick_bead_tile(num_beads) if bead_tile is None else bead_tile
    assert BT % 8 == 0
    b_pad = -(-num_beads // BT) * BT

    # --- glue: get_normalization (3x3 reduction over the PupilMatrix, once) -
    imat = jnp.real(jnp.einsum('xypi,xypj->ij', PupilMatrix, jnp.conj(PupilMatrix)))
    dxyp = 2.0 * NA / Lambda / Npupil
    normint_free = jnp.trace((dxyp ** 2 / pixelsize ** 2) * imat) / 3.0
    scale = 1.0 / (3.0 * normint_free)
    s = jnp.sqrt(scale).astype(jnp.float32)          # folded into the CZT weights

    # --- dense CZT transforms and their Kronecker product (built once) ------
    Tx = _czt_matrix(N, M, L, Ax, Bx, Dx)            # (M, Np)   [m2, r]
    Ty = _czt_matrix(N, M, L, Ay, By, Dy)            # (M, Np)   [m1, c]
    # wk[r*Np+c, m2*M+m1] = Tx[m2, r] * Ty[m1, c]  so  PF_flat @ wk == Tx@PF@Ty^T
    wk = jnp.einsum('ar,bc->rcab', Tx, Ty).reshape(np2, mm)
    wk_r = s * jnp.pad(jnp.real(wk).astype(jnp.float32), ((0, 0), (0, qpad - mm)))
    wk_i = s * jnp.pad(jnp.imag(wk).astype(jnp.float32), ((0, 0), (0, qpad - mm)))
    w_cat = jnp.concatenate([wk_r, wk_i], axis=1)    # (np2, 2*qpad) f32
    w_hi = w_cat.astype(jnp.bfloat16)                # bf16 hi/lo split (pinned prec.)
    w_lo = (w_cat - w_hi.astype(jnp.float32)).astype(jnp.bfloat16)

    # --- repack constants into lane-dense kernel layouts --------------------
    wv3 = jnp.transpose(wavevector.reshape(np2, 3))                   # (3, np2)
    wvpack = jnp.zeros((8, 2 * np2), jnp.float32)
    wvpack = wvpack.at[0:3, 0:np2].set(jnp.real(wv3).astype(jnp.float32))
    wvpack = wvpack.at[0:3, np2:].set(jnp.imag(wv3).astype(jnp.float32))

    pm6 = jnp.transpose(PupilMatrix.reshape(np2, 6))                  # (6, np2)
    pm6_r = jnp.real(pm6).astype(jnp.float32)
    pm6_i = jnp.imag(pm6).astype(jnp.float32)
    pmpack = jnp.zeros((32, np2), jnp.float32)
    pmpack = pmpack.at[0:6].set(pm6_r)      # A1 = [PM_r ; PM_i]  (rows 0:12)
    pmpack = pmpack.at[6:12].set(pm6_i)
    pmpack = pmpack.at[16:22].set(-pm6_i)   # A2 = [-PM_i ; PM_r] (rows 16:28)
    pmpack = pmpack.at[22:28].set(pm6_r)

    xyz8 = jnp.zeros((b_pad, 8), jnp.float32)
    xyz8 = xyz8.at[:num_beads, 0:5].set(thetatry[:, 0:5].astype(jnp.float32))

    grid_spec = pltpu.PrefetchScalarGridSpec(
        num_scalar_prefetch=0,
        grid=(b_pad // BT,),
        in_specs=[
            pl.BlockSpec((BT, 8), lambda i: (i, 0)),                  # theta
            pl.BlockSpec((8, 2 * np2), lambda i: (0, 0)),             # wavevector
            pl.BlockSpec((32, np2), lambda i: (0, 0)),                # PupilMatrix A1/A2
            pl.BlockSpec((np2, 2 * qpad), lambda i: (0, 0)),          # [wk_r|wk_i] hi
            pl.BlockSpec((np2, 2 * qpad), lambda i: (0, 0)),          # [wk_r|wk_i] lo
        ],
        out_specs=[
            pl.BlockSpec((BT, qpad), lambda i: (i, 0)),               # PSF
            pl.BlockSpec((BT, qpad), lambda i: (i, 0)),               # mu
        ],
    )

    kernel = functools.partial(_psf_kernel, bt=BT, np2=np2, qpad=qpad)
    psf_raw, mu_raw = pl.pallas_call(
        kernel,
        out_shape=(jax.ShapeDtypeStruct((b_pad, qpad), jnp.float32),
                   jax.ShapeDtypeStruct((b_pad, qpad), jnp.float32)),
        grid_spec=grid_spec,
        compiler_params=pltpu.CompilerParams(
            dimension_semantics=("parallel",),
            vmem_limit_bytes=32 * 1024 * 1024),
    )(xyz8, wvpack, pmpack, w_hi, w_lo)

    # --- tiny wrapper epilogue: reshape + dmudtheta = [PSF, 1] ---------------
    psf = psf_raw[:num_beads, :mm].reshape(num_beads, M, M)
    mu = mu_raw[:num_beads, :mm].reshape(num_beads, M, M)
    dmudtheta = jnp.stack([psf, jnp.ones_like(psf)], axis=-1)
    # TODO(synk): FieldMatrixDerivatives in the reference are computed and then
    # discarded by `dmudtheta[:, :, :, 3:5]` on the ibg_only path; they never
    # reach the outputs, so they are intentionally not recomputed here.
    return mu, dmudtheta


# ---------------------------------------------------------------------------
# pure-JAX transliteration of the torch reference (FFT-based CZT) for checking
# ---------------------------------------------------------------------------
def _czt2d_ref(Nn, Mm, Ll, datain, Amt, Bmt, Dmt):
    cztin = jnp.zeros(datain.shape[:2] + (Ll,) + datain.shape[3:], jnp.complex64)
    cztin = cztin.at[:, :, :Nn].set(Amt[None, None, :, None, None] * datain)
    temp = Dmt[None, None, :, None, None] * jnp.fft.fft(cztin, axis=2)
    cztout = jnp.fft.ifft(temp, axis=2)
    dataout = Bmt[None, None, :, None, None] * cztout[:, :, :Mm]
    return jnp.swapaxes(dataout, 1, 2)


def _reference_ibg(NA, Lambda, Npupil, pixelsize, N, M, L,
                   Ax, Bx, Dx, Ay, By, Dy, theta, wavevector, PupilMatrix):
    B = theta.shape[0]
    wv = jnp.tile(wavevector[None], (B, 1, 1, 1))
    xe, ye, ze = theta[:, 0], theta[:, 1], theta[:, 2]
    Wpos = (xe[:, None, None] * wv[..., 0] + ye[:, None, None] * wv[..., 1]
            + ze[:, None, None] * wv[..., 2])
    PPM = jnp.exp(-1j * Wpos)
    PF = PPM[..., None, None] * PupilMatrix[None]
    II = _czt2d_ref(N, M, L, PF, Ay, By, Dy)
    FM = _czt2d_ref(N, M, L, II, Ax, Bx, Dx)
    imat = jnp.real(jnp.einsum('xypi,xypj->ij', PupilMatrix, jnp.conj(PupilMatrix)))
    dxyp = 2.0 * NA / Lambda / Npupil
    normint = jnp.trace((dxyp ** 2 / pixelsize ** 2) * imat) / 3.0
    PSF = (1.0 / 3.0) * jnp.sum(jnp.abs(FM) ** 2, axis=(-1, -2)) / normint
    mu = theta[:, 3, None, None] * PSF + theta[:, 4, None, None]
    dmu = jnp.stack([PSF, jnp.ones_like(PSF)], axis=-1)
    return mu, dmu


# ---------------------------------------------------------------------------
if __name__ == "__main__":
    key = jax.random.PRNGKey(0)
    B, Np, M, L = 64, 16, 24, 48          # 64 beads -> BT=32, 2 parallel grid steps
    N = Np
    NA, Lambda, pixelsize = 1.35, 500.0, 65.0
    refmed, refcov, refimm, refimmnom = 1.33, 1.52, 1.52, 1.52
    zmin, zmax, K = -400.0, 400.0, 5
    numparams_fit = 5

    ks = jax.random.split(key, 12)

    def cplx(k, shape, s=1.0):
        kr, ki = jax.random.split(k)
        return (s * (jax.random.normal(kr, shape)
                     + 1j * jax.random.normal(ki, shape))).astype(jnp.complex64)

    # synthetic deterministic "optical" inputs (the module receives these
    # already precomputed from its caller on the zstack=False / ibg path)
    PupilMatrix = cplx(ks[0], (Np, Np, 2, 3), 0.5)
    wavevector = (jax.random.normal(ks[1], (Np, Np, 3))
                  + 1j * 0.05 * jax.random.normal(ks[2], (Np, Np, 3))
                  ).astype(jnp.complex64)
    wavevectorzimm = cplx(ks[3], (Np, Np))                 # unused on this path
    all_zernikes = jax.random.normal(ks[4], (Np, Np, 4))   # unused on this path
    abberations = jnp.concatenate(
        [jnp.array([[2., 2.], [2., -2.], [3., 1.], [4., 0.]], jnp.float32),
         0.1 * jax.random.normal(ks[5], (4, 1))], axis=1)  # unused on this path
    zvals = jnp.zeros((3,), jnp.float32)                   # unused on this path

    # CZT chirp vectors (unit-magnitude complex, as produced by prechirpz)
    def chirp(k, n):
        ph = jax.random.uniform(k, (n,), minval=-jnp.pi, maxval=jnp.pi)
        return jnp.exp(1j * ph).astype(jnp.complex64)

    Ax, Bx, Dx = chirp(ks[6], N), chirp(ks[7], M), chirp(ks[8], L)
    Ay, By, Dy = chirp(ks[9], N), chirp(ks[10], M), chirp(ks[11], L)

    # per-bead parameters theta = [x, y, z, Nphotons, background]
    kx = jax.random.split(jax.random.PRNGKey(1), 3)
    xyz = 0.3 * jax.random.normal(kx[0], (B, 3))
    nph = 1000.0 + 200.0 * jax.random.uniform(kx[1], (B, 1))
    bgv = 5.0 + jax.random.uniform(kx[2], (B, 1))
    thetatry = jnp.concatenate([xyz, nph, bgv], axis=1).astype(jnp.float32)

    mu, dmudtheta = model_vectorial_psf_ibg_forward(
        NA, zvals, refmed, refcov, refimm, refimmnom, Lambda, Np,
        abberations, zmin, zmax, K, N, M, L, Ax, Bx, Dx, Ay, pixelsize,
        By, Dy, M, M, numparams_fit, thetatry, "tpu", False,
        wavevector, wavevectorzimm, all_zernikes, PupilMatrix)
    jax.block_until_ready((mu, dmudtheta))

    # numerical cross-check against a pure-JAX transliteration of the torch ref
    mu_r, dmu_r = _reference_ibg(NA, Lambda, Np, pixelsize, N, M, L,
                                 Ax, Bx, Dx, Ay, By, Dy,
                                 thetatry, wavevector, PupilMatrix)
    rel_mu = float(jnp.max(jnp.abs(mu - mu_r)) / (jnp.max(jnp.abs(mu_r)) + 1e-30))
    rel_d = float(jnp.max(jnp.abs(dmudtheta - dmu_r))
                  / (jnp.max(jnp.abs(dmu_r)) + 1e-30))
    assert mu.shape == (B, M, M) and dmudtheta.shape == (B, M, M, 2)
    assert rel_mu < 2e-3 and rel_d < 2e-3, (rel_mu, rel_d)

    print("KERNEL_OK")
</pallas_src>

<mosaic_0001>
module attributes {stable_mosaic.version = 11 : i64} {
  func.func @_psf_kernel(%arg0: i32, %arg1: memref<32x8xf32, #tpu.memory_space<vmem>>, %arg2: memref<8x512xf32, #tpu.memory_space<vmem>>, %arg3: memref<32x256xf32, #tpu.memory_space<vmem>>, %arg4: memref<256x1280xbf16, #tpu.memory_space<vmem>>, %arg5: memref<256x1280xbf16, #tpu.memory_space<vmem>>, %arg6: memref<32x640xf32, #tpu.memory_space<vmem>>, %arg7: memref<32x640xf32, #tpu.memory_space<vmem>>) attributes {dimension_semantics = [#tpu.dimension_semantics<parallel>], iteration_bounds = array<i64: 2>, scalar_prefetch = 0 : i64, scratch_operands = 0 : i64, tpu.core_type = #tpu.core_type<tc>, window_params = [{transform_indices = @transform_0, window_bounds = array<i64: 32, 8>}, {pipeline_mode = #tpu.pipeline_mode<synchronous>, transform_indices = @transform_1, window_bounds = array<i64: 8, 512>}, {pipeline_mode = #tpu.pipeline_mode<synchronous>, transform_indices = @transform_2, window_bounds = array<i64: 32, 256>}, {pipeline_mode = #tpu.pipeline_mode<synchronous>, transform_indices = @transform_3, window_bounds = array<i64: 256, 1280>}, {pipeline_mode = #tpu.pipeline_mode<synchronous>, transform_indices = @transform_4, window_bounds = array<i64: 256, 1280>}, {transform_indices = @transform_5, window_bounds = array<i64: 32, 640>}, {transform_indices = @transform_6, window_bounds = array<i64: 32, 640>}]} {
    %c0 = arith.constant 0 : index
    %c0_0 = arith.constant 0 : index
    %0 = vector.load %arg2[%c0, %c0_0] : memref<8x512xf32, #tpu.memory_space<vmem>>, vector<8x512xf32>
    %c0_1 = arith.constant 0 : index
    %c0_2 = arith.constant 0 : index
    %1 = vector.load %arg1[%c0_1, %c0_2] : memref<32x8xf32, #tpu.memory_space<vmem>>, vector<32x1xf32>
    %2 = vector.extract_strided_slice %0 {offsets = [0, 0], sizes = [1, 512], strides = [1, 1]} : vector<8x512xf32> to vector<1x512xf32>
    %3 = vector.broadcast %1 : vector<32x1xf32> to vector<32x512xf32>
    %4 = vector.broadcast %2 : vector<1x512xf32> to vector<32x512xf32>
    %5 = arith.mulf %3, %4 : vector<32x512xf32>
    %c0_3 = arith.constant 0 : index
    %c1 = arith.constant 1 : index
    %6 = vector.load %arg1[%c0_3, %c1] : memref<32x8xf32, #tpu.memory_space<vmem>>, vector<32x1xf32>
    %7 = vector.extract_strided_slice %0 {offsets = [1, 0], sizes = [1, 512], strides = [1, 1]} : vector<8x512xf32> to vector<1x512xf32>
    %8 = vector.broadcast %6 : vector<32x1xf32> to vector<32x512xf32>
    %9 = vector.broadcast %7 : vector<1x512xf32> to vector<32x512xf32>
    %10 = arith.mulf %8, %9 : vector<32x512xf32>
    %11 = arith.addf %5, %10 : vector<32x512xf32>
    %c0_4 = arith.constant 0 : index
    %c2 = arith.constant 2 : index
    %12 = vector.load %arg1[%c0_4, %c2] : memref<32x8xf32, #tpu.memory_space<vmem>>, vector<32x1xf32>
    %13 = vector.extract_strided_slice %0 {offsets = [2, 0], sizes = [1, 512], strides = [1, 1]} : vector<8x512xf32> to vector<1x512xf32>
    %14 = vector.broadcast %12 : vector<32x1xf32> to vector<32x512xf32>
    %15 = vector.broadcast %13 : vector<1x512xf32> to vector<32x512xf32>
    %16 = arith.mulf %14, %15 : vector<32x512xf32>
    %17 = arith.addf %11, %16 : vector<32x512xf32>
    %18 = vector.extract_strided_slice %17 {offsets = [0, 0], sizes = [32, 256], strides = [1, 1]} : vector<32x512xf32> to vector<32x256xf32>
    %19 = vector.extract_strided_slice %17 {offsets = [0, 256], sizes = [32, 256], strides = [1, 1]} : vector<32x512xf32> to vector<32x256xf32>
    %20 = math.exp %19 : vector<32x256xf32>
    %21 = math.cos %18 : vector<32x256xf32>
    %22 = arith.mulf %20, %21 : vector<32x256xf32>
    %cst = arith.constant 0.000000e+00 : f32
    %23 = vector.broadcast %cst : f32 to vector<32x256xf32>
    %24 = arith.subf %23, %20 : vector<32x256xf32>
    %25 = math.sin %18 : vector<32x256xf32>
    %26 = arith.mulf %24, %25 : vector<32x256xf32>
    %c0_5 = arith.constant 0 : index
    %c0_6 = arith.constant 0 : index
    %27 = vector.load %arg3[%c0_5, %c0_6] : memref<32x256xf32, #tpu.memory_space<vmem>>, vector<12x256xf32>
    %c16 = arith.constant 16 : index
    %c0_7 = arith.constant 0 : index
    %28 = vector.load %arg3[%c16, %c0_7] : memref<32x256xf32, #tpu.memory_space<vmem>>, vector<12x256xf32>
    %29 = vector.shape_cast %27 : vector<12x256xf32> to vector<12x1x256xf32>
    %30 = vector.shape_cast %22 : vector<32x256xf32> to vector<1x32x256xf32>
    %31 = vector.broadcast %29 : vector<12x1x256xf32> to vector<12x32x256xf32>
    %32 = vector.broadcast %30 : vector<1x32x256xf32> to vector<12x32x256xf32>
    %33 = arith.mulf %31, %32 : vector<12x32x256xf32>
    %34 = vector.shape_cast %28 : vector<12x256xf32> to vector<12x1x256xf32>
    %35 = vector.shape_cast %26 : vector<32x256xf32> to vector<1x32x256xf32>
    %36 = vector.broadcast %34 : vector<12x1x256xf32> to vector<12x32x256xf32>
    %37 = vector.broadcast %35 : vector<1x32x256xf32> to vector<12x32x256xf32>
    %38 = arith.mulf %36, %37 : vector<12x32x256xf32>
    %39 = arith.addf %33, %38 : vector<12x32x256xf32>
    %40 = vector.shape_cast %39 : vector<12x32x256xf32> to vector<384x256xf32>
    %41 = arith.truncf %40 : vector<384x256xf32> to vector<384x256xbf16>
    %42 = arith.extf %41 : vector<384x256xbf16> to vector<384x256xf32>
    %43 = arith.subf %40, %42 : vector<384x256xf32>
    %44 = arith.truncf %43 : vector<384x256xf32> to vector<384x256xbf16>
    %c0_8 = arith.constant 0 : index
    %c0_9 = arith.constant 0 : index
    %45 = vector.load %arg4[%c0_8, %c0_9] : memref<256x1280xbf16, #tpu.memory_space<vmem>>, vector<256x1280xbf16>
    %cst_10 = arith.constant dense<0.000000e+00> : vector<384x1280xf32>
    %46 = tpu.matmul %41, %45, %cst_10 {dimension_numbers = #tpu.dot_dimension_numbers<[1], [0], [0], [1], [0, 0, 1, 1], [], []>} : vector<384x256xbf16>, vector<256x1280xbf16>, vector<384x1280xf32> -> vector<384x1280xf32>
    %c0_11 = arith.constant 0 : index
    %c0_12 = arith.constant 0 : index
    %47 = vector.load %arg4[%c0_11, %c0_12] : memref<256x1280xbf16, #tpu.memory_space<vmem>>, vector<256x1280xbf16>
    %cst_13 = arith.constant dense<0.000000e+00> : vector<384x1280xf32>
    %48 = tpu.matmul %44, %47, %cst_13 {dimension_numbers = #tpu.dot_dimension_numbers<[1], [0], [0], [1], [0, 0, 1, 1], [], []>} : vector<384x256xbf16>, vector<256x1280xbf16>, vector<384x1280xf32> -> vector<384x1280xf32>
    %49 = arith.addf %46, %48 : vector<384x1280xf32>
    %c0_14 = arith.constant 0 : index
    %c0_15 = arith.constant 0 : index
    %50 = vector.load %arg5[%c0_14, %c0_15] : memref<256x1280xbf16, #tpu.memory_space<vmem>>, vector<256x1280xbf16>
    %cst_16 = arith.constant dense<0.000000e+00> : vector<384x1280xf32>
    %51 = tpu.matmul %41, %50, %cst_16 {dimension_numbers = #tpu.dot_dimension_numbers<[1], [0], [0], [1], [0, 0, 1, 1], [], []>} : vector<384x256xbf16>, vector<256x1280xbf16>, vector<384x1280xf32> -> vector<384x1280xf32>
    %52 = arith.addf %49, %51 : vector<384x1280xf32>
    %53 = vector.extract_strided_slice %52 {offsets = [0, 0], sizes = [32, 1280], strides = [1, 1]} : vector<384x1280xf32> to vector<32x1280xf32>
    %54 = vector.extract_strided_slice %52 {offsets = [192, 0], sizes = [32, 1280], strides = [1, 1]} : vector<384x1280xf32> to vector<32x1280xf32>
    %55 = vector.extract_strided_slice %53 {offsets = [0, 0], sizes = [32, 640], strides = [1, 1]} : vector<32x1280xf32> to vector<32x640xf32>
    %56 = vector.extract_strided_slice %54 {offsets = [0, 640], sizes = [32, 640], strides = [1, 1]} : vector<32x1280xf32> to vector<32x640xf32>
    %57 = arith.subf %55, %56 : vector<32x640xf32>
    %58 = vector.extract_strided_slice %53 {offsets = [0, 640], sizes = [32, 640], strides = [1, 1]} : vector<32x1280xf32> to vector<32x640xf32>
    %59 = vector.extract_strided_slice %54 {offsets = [0, 0], sizes = [32, 640], strides = [1, 1]} : vector<32x1280xf32> to vector<32x640xf32>
    %60 = arith.addf %58, %59 : vector<32x640xf32>
    %61 = arith.mulf %57, %57 : vector<32x640xf32>
    %62 = arith.mulf %60, %60 : vector<32x640xf32>
    %63 = arith.addf %61, %62 : vector<32x640xf32>
    %64 = vector.extract_strided_slice %52 {offsets = [32, 0], sizes = [32, 1280], strides = [1, 1]} : vector<384x1280xf32> to vector<32x1280xf32>
    %65 = vector.extract_strided_slice %52 {offsets = [224, 0], sizes = [32, 1280], strides = [1, 1]} : vector<384x1280xf32> to vector<32x1280xf32>
    %66 = vector.extract_strided_slice %64 {offsets = [0, 0], sizes = [32, 640], strides = [1, 1]} : vector<32x1280xf32> to vector<32x640xf32>
    %67 = vector.extract_strided_slice %65 {offsets = [0, 640], sizes = [32, 640], strides = [1, 1]} : vector<32x1280xf32> to vector<32x640xf32>
    %68 = arith.subf %66, %67 : vector<32x640xf32>
    %69 = vector.extract_strided_slice %64 {offsets = [0, 640], sizes = [32, 640], strides = [1, 1]} : vector<32x1280xf32> to vector<32x640xf32>
    %70 = vector.extract_strided_slice %65 {offsets = [0, 0], sizes = [32, 640], strides = [1, 1]} : vector<32x1280xf32> to vector<32x640xf32>
    %71 = arith.addf %69, %70 : vector<32x640xf32>
    %72 = arith.mulf %68, %68 : vector<32x640xf32>
    %73 = arith.mulf %71, %71 : vector<32x640xf32>
    %74 = arith.addf %72, %73 : vector<32x640xf32>
    %75 = arith.addf %63, %74 : vector<32x640xf32>
    %76 = vector.extract_strided_slice %52 {offsets = [64, 0], sizes = [32, 1280], strides = [1, 1]} : vector<384x1280xf32> to vector<32x1280xf32>
    %77 = vector.extract_strided_slice %52 {offsets = [256, 0], sizes = [32, 1280], strides = [1, 1]} : vector<384x1280xf32> to vector<32x1280xf32>
    %78 = vector.extract_strided_slice %76 {offsets = [0, 0], sizes = [32, 640], strides = [1, 1]} : vector<32x1280xf32> to vector<32x640xf32>
    %79 = vector.extract_strided_slice %77 {offsets = [0, 640], sizes = [32, 640], strides = [1, 1]} : vector<32x1280xf32> to vector<32x640xf32>
    %80 = arith.subf %78, %79 : vector<32x640xf32>
    %81 = vector.extract_strided_slice %76 {offsets = [0, 640], sizes = [32, 640], strides = [1, 1]} : vector<32x1280xf32> to vector<32x640xf32>
    %82 = vector.extract_strided_slice %77 {offsets = [0, 0], sizes = [32, 640], strides = [1, 1]} : vector<32x1280xf32> to vector<32x640xf32>
    %83 = arith.addf %81, %82 : vector<32x640xf32>
    %84 = arith.mulf %80, %80 : vector<32x640xf32>
    %85 = arith.mulf %83, %83 : vector<32x640xf32>
    %86 = arith.addf %84, %85 : vector<32x640xf32>
    %87 = arith.addf %75, %86 : vector<32x640xf32>
    %88 = vector.extract_strided_slice %52 {offsets = [96, 0], sizes = [32, 1280], strides = [1, 1]} : vector<384x1280xf32> to vector<32x1280xf32>
    %89 = vector.extract_strided_slice %52 {offsets = [288, 0], sizes = [32, 1280], strides = [1, 1]} : vector<384x1280xf32> to vector<32x1280xf32>
    %90 = vector.extract_strided_slice %88 {offsets = [0, 0], sizes = [32, 640], strides = [1, 1]} : vector<32x1280xf32> to vector<32x640xf32>
    %91 = vector.extract_strided_slice %89 {offsets = [0, 640], sizes = [32, 640], strides = [1, 1]} : vector<32x1280xf32> to vector<32x640xf32>
    %92 = arith.subf %90, %91 : vector<32x640xf32>
    %93 = vector.extract_strided_slice %88 {offsets = [0, 640], sizes = [32, 640], strides = [1, 1]} : vector<32x1280xf32> to vector<32x640xf32>
    %94 = vector.extract_strided_slice %89 {offsets = [0, 0], sizes = [32, 640], strides = [1, 1]} : vector<32x1280xf32> to vector<32x640xf32>
    %95 = arith.addf %93, %94 : vector<32x640xf32>
    %96 = arith.mulf %92, %92 : vector<32x640xf32>
    %97 = arith.mulf %95, %95 : vector<32x640xf32>
    %98 = arith.addf %96, %97 : vector<32x640xf32>
    %99 = arith.addf %87, %98 : vector<32x640xf32>
    %100 = vector.extract_strided_slice %52 {offsets = [128, 0], sizes = [32, 1280], strides = [1, 1]} : vector<384x1280xf32> to vector<32x1280xf32>
    %101 = vector.extract_strided_slice %52 {offsets = [320, 0], sizes = [32, 1280], strides = [1, 1]} : vector<384x1280xf32> to vector<32x1280xf32>
    %102 = vector.extract_strided_slice %100 {offsets = [0, 0], sizes = [32, 640], strides = [1, 1]} : vector<32x1280xf32> to vector<32x640xf32>
    %103 = vector.extract_strided_slice %101 {offsets = [0, 640], sizes = [32, 640], strides = [1, 1]} : vector<32x1280xf32> to vector<32x640xf32>
    %104 = arith.subf %102, %103 : vector<32x640xf32>
    %105 = vector.extract_strided_slice %100 {offsets = [0, 640], sizes = [32, 640], strides = [1, 1]} : vector<32x1280xf32> to vector<32x640xf32>
    %106 = vector.extract_strided_slice %101 {offsets = [0, 0], sizes = [32, 640], strides = [1, 1]} : vector<32x1280xf32> to vector<32x640xf32>
    %107 = arith.addf %105, %106 : vector<32x640xf32>
    %108 = arith.mulf %104, %104 : vector<32x640xf32>
    %109 = arith.mulf %107, %107 : vector<32x640xf32>
    %110 = arith.addf %108, %109 : vector<32x640xf32>
    %111 = arith.addf %99, %110 : vector<32x640xf32>
    %112 = vector.extract_strided_slice %52 {offsets = [160, 0], sizes = [32, 1280], strides = [1, 1]} : vector<384x1280xf32> to vector<32x1280xf32>
    %113 = vector.extract_strided_slice %52 {offsets = [352, 0], sizes = [32, 1280], strides = [1, 1]} : vector<384x1280xf32> to vector<32x1280xf32>
    %114 = vector.extract_strided_slice %112 {offsets = [0, 0], sizes = [32, 640], strides = [1, 1]} : vector<32x1280xf32> to vector<32x640xf32>
    %115 = vector.extract_strided_slice %113 {offsets = [0, 640], sizes = [32, 640], strides = [1, 1]} : vector<32x1280xf32> to vector<32x640xf32>
    %116 = arith.subf %114, %115 : vector<32x640xf32>
    %117 = vector.extract_strided_slice %112 {offsets = [0, 640], sizes = [32, 640], strides = [1, 1]} : vector<32x1280xf32> to vector<32x640xf32>
    %118 = vector.extract_strided_slice %113 {offsets = [0, 0], sizes = [32, 640], strides = [1, 1]} : vector<32x1280xf32> to vector<32x640xf32>
    %119 = arith.addf %117, %118 : vector<32x640xf32>
    %120 = arith.mulf %116, %116 : vector<32x640xf32>
    %121 = arith.mulf %119, %119 : vector<32x640xf32>
    %122 = arith.addf %120, %121 : vector<32x640xf32>
    %123 = arith.addf %111, %122 : vector<32x640xf32>
    %c0_17 = arith.constant 0 : index
    %c0_18 = arith.constant 0 : index
    %124 = vector.load %arg6[%c0_17, %c0_18] : memref<32x640xf32, #tpu.memory_space<vmem>>, vector<32x640xf32>
    tpu.vector_store %arg6[%c0_17, %c0_18], %123 {strides = array<i32>} : memref<32x640xf32, #tpu.memory_space<vmem>>, vector<32x640xf32>,
    %c0_19 = arith.constant 0 : index
    %c3 = arith.constant 3 : index
    %125 = vector.load %arg1[%c0_19, %c3] : memref<32x8xf32, #tpu.memory_space<vmem>>, vector<32x1xf32>
    %126 = vector.broadcast %125 : vector<32x1xf32> to vector<32x640xf32>
    %127 = arith.mulf %126, %123 : vector<32x640xf32>
    %c0_20 = arith.constant 0 : index
    %c4 = arith.constant 4 : index
    %128 = vector.load %arg1[%c0_20, %c4] : memref<32x8xf32, #tpu.memory_space<vmem>>, vector<32x1xf32>
    %129 = vector.broadcast %128 : vector<32x1xf32> to vector<32x640xf32>
    %130 = arith.addf %127, %129 : vector<32x640xf32>
    %c0_21 = arith.constant 0 : index
    %c0_22 = arith.constant 0 : index
    %131 = vector.load %arg7[%c0_21, %c0_22] : memref<32x640xf32, #tpu.memory_space<vmem>>, vector<32x640xf32>
    tpu.vector_store %arg7[%c0_21, %c0_22], %130 {strides = array<i32>} : memref<32x640xf32, #tpu.memory_space<vmem>>, vector<32x640xf32>,
    return
  }
  func.func @transform_0(%arg0: i32) -> (i32, i32) {
    %c0_i32 = arith.constant 0 : i32
    %c0_i32_0 = arith.constant 0 : i32
    return %arg0, %c0_i32 : i32, i32
  }
  func.func @transform_1(%arg0: i32) -> (i32, i32) {
    %c0_i32 = arith.constant 0 : i32
    %c0_i32_0 = arith.constant 0 : i32
    %c0_i32_1 = arith.constant 0 : i32
    return %c0_i32, %c0_i32_0 : i32, i32
  }
  func.func @transform_2(%arg0: i32) -> (i32, i32) {
    %c0_i32 = arith.constant 0 : i32
    %c0_i32_0 = arith.constant 0 : i32
    %c0_i32_1 = arith.constant 0 : i32
    return %c0_i32, %c0_i32_0 : i32, i32
  }
  func.func @transform_3(%arg0: i32) -> (i32, i32) {
    %c0_i32 = arith.constant 0 : i32
    %c0_i32_0 = arith.constant 0 : i32
    %c0_i32_1 = arith.constant 0 : i32
    return %c0_i32, %c0_i32_0 : i32, i32
  }
  func.func @transform_4(%arg0: i32) -> (i32, i32) {
    %c0_i32 = arith.constant 0 : i32
    %c0_i32_0 = arith.constant 0 : i32
    %c0_i32_1 = arith.constant 0 : i32
    return %c0_i32, %c0_i32_0 : i32, i32
  }
  func.func @transform_5(%arg0: i32) -> (i32, i32) {
    %c0_i32 = arith.constant 0 : i32
    %c0_i32_0 = arith.constant 0 : i32
    return %arg0, %c0_i32 : i32, i32
  }
  func.func @transform_6(%arg0: i32) -> (i32, i32) {
    %c0_i32 = arith.constant 0 : i32
    %c0_i32_0 = arith.constant 0 : i32
    return %arg0, %c0_i32 : i32, i32
  }
}

</mosaic_0001>

<llo_original>
// kernel: tpu_custom_call.1
$region0: #{tpu_custom_call.1}
  #allocation0 [shape = 'u32[]', space=smem, size = 0x4, offset = 0x4, fixed_abs, tag = 'smem constant byte address 0x4 - core index']
  #allocation1 [shape = 'u32[144,128]{1,0:T(1,128)}', space=vmem, size = 0x12000, scoped, tag = 'internal scratch']
  %s0 = inlined_call_operand.vmem [shape: f32[64,8], index: 0, kind: input, shape index: {}]
  %s1 = inlined_call_operand.hbm [shape: f32[8,512], index: 1, kind: input, shape index: {}]
  %s2 = inlined_call_operand.vmem [shape: f32[32,256], index: 2, kind: input, shape index: {}]
  %s3 = inlined_call_operand.hbm [shape: bf16[256,1280], index: 3, kind: input, shape index: {}]
  %s4 = inlined_call_operand.hbm [shape: bf16[256,1280], index: 4, kind: input, shape index: {}]
  %s5 = inlined_call_operand.hbm [shape: f32[64,640], index: 5, kind: output, shape index: {0}]
  %s6 = inlined_call_operand.hbm [shape: f32[64,640], index: 6, kind: output, shape index: {1}]
  %7 = xla_tuple %s5, %s6
  %s8 = sld [smem:[#allocation0]]
  $region73: #{tpu_custom_call.1} parent=0
    _
  %s10 = ssub.s32 1, %s8
  %s11 = scalar_select 0, %s10, %s8
  $region1: #{tpu_custom_call.1} parent=0
    #allocation2 [shape = 'u8[16384]{0}', space=vmem, size = 0x4000, scoped, tag = 'input window, operand 1, single buffered']
    #allocation3 [shape = 's32[2]{0}', space=sflag, size = 0x8, scoped, tag = 'scoped memory for tpu_custom_call.1']
    #allocation4 [shape = 's32[2]{0}', space=sflag, size = 0x8, scoped, tag = 'scoped memory for tpu_custom_call.1']
    #allocation5 [shape = 'u8[655360]{0}', space=vmem, size = 0xa0000, scoped, tag = 'input window, operand 3, single buffered']
    #allocation6 [shape = 's32[1]{0}', space=sflag, size = 0x4, scoped, tag = 'scoped memory for tpu_custom_call.1']
    #allocation7 [shape = 'u8[655360]{0}', space=vmem, size = 0xa0000, scoped, tag = 'input window, operand 4, single buffered']
    #allocation8 [shape = 'u8[163840]{0}', space=vmem, size = 0x28000, scoped, tag = 'output window, operand 0']
    #allocation9 [shape = 'u8[163840]{0}', space=vmem, size = 0x28000, scoped, tag = 'output window, operand 1']
    #allocation10 [shape = 's32[2]{0}', space=sflag, size = 0x8, scoped, tag = 'scoped memory for tpu_custom_call.1']
    %12 = vsyncpa [#allocation3], 0
    %13 = vsyncpa [#allocation6], 0
    %14 = vsyncpa [#allocation4], 0
    %s15 = scalar_lea.sflag [#allocation4], 1
    %16 = vsyncpa %s15, 0
    %17 = vsyncpa [#allocation10], 0
    %s18 = scalar_lea.sflag [#allocation10], 1
    %19 = vsyncpa %s18, 0
    loop: start=0, step=1, limit=4
    $region2: #{tpu_custom_call.1} parent=1 // loop_pre_header
      _
    $region3: #{tpu_custom_call.1} parent=1 // loop_header
      %s21 = sphi 0, %s25
      %p22 = scmp.ge.s32.totalorder %s21, 4
      %s31 = sphi 0, %s33
      %s34 = sphi 0, %s31
      %s35 = sphi 0, %s34
      %s51 = sphi 0, %s35
      %s55 = sphi 0, %s55
      %s57 = sphi 0, %s55
      %s58 = sphi 0, %s57
      %s72 = sphi 0, %s58
      %s76 = sphi 0, %s76
      %s78 = sphi 0, %s76
      %s79 = sphi 0, %s78
      %s93 = sphi 0, %s79
      %s97 = sphi 0, %s97
      %s99 = sphi 0, %s97
      %s100 = sphi 0, %s99
      %s114 = sphi 0, %s100
      %s118 = sphi 0, %s118
      %s120 = sphi 0, %s118
      %s121 = sphi 0, %s120
      %s135 = sphi 0, %s121
      %s141 = sphi 0, %s143
      %s144 = sphi 0, %s141
      %s145 = sphi 0, %s144
      %s161 = sphi 0, %s145
      %s167 = sphi 0, %s169
      %s170 = sphi 0, %s167
      %s171 = sphi 0, %s170
      %s187 = sphi 0, %s171
    $region4: #{tpu_custom_call.1} parent=1 // loop_header_branch
      %24 = sbr.rel (%p22) target = $region8
    $region5: #{tpu_custom_call.1} parent=1 // loop_body
      %s26 = ssub.s32 %s21, 1
      %s27 = ssub.s32 %s21, 2
      %s28 = sadd.s32 %s21, 1
      %s29 = ssub.s32 %s21, %s28
      %p30 = scmp.eq.s32.totalorder %s29, 0
      %s32 = sadd.s32 %s31, 1
      %s33 = scalar_select %p30, %s31, %s32
      %p36 = pneg %p30
      %p37 = scmp.eq.s32.totalorder %s21, 1
      %p38 = por %p36, %p37
      %p39 = scmp.ne.s32.totalorder %s31, %s34
      %p40 = scmp.eq.s32.totalorder %s21, 0
      %p41 = por %p39, %p40
      %p42 = scmp.ne.s32.totalorder %s31, %s34
      %p43 = scmp.eq.s32.totalorder %s26, 1
      %p44 = por %p42, %p43
      %p45 = scmp.ne.s32.totalorder %s34, %s35
      %p46 = scmp.eq.s32.totalorder %s26, 0
      %p47 = por %p45, %p46
      %p48 = scmp.ne.s32.totalorder %s34, %s35
      %p49 = scmp.eq.s32.totalorder %s27, 1
      %p50 = por %p48, %p49
      %p52 = scmp.ne.s32.totalorder %s35, %s51
      %p53 = scmp.eq.s32.totalorder %s27, 0
      %p54 = por %p52, %p53
      %s56 = sadd.s32 %s55, 1
      %p59 = scmp.eq.s32.totalorder %s21, 1
      %p60 = scmp.ne.s32.totalorder %s55, %s57
      %p61 = scmp.eq.s32.totalorder %s21, 0
      %p62 = por %p60, %p61
      %p63 = scmp.ne.s32.totalorder %s55, %s57
      %p64 = scmp.eq.s32.totalorder %s26, 1
      %p65 = por %p63, %p64
      %p66 = scmp.ne.s32.totalorder %s57, %s58
      %p67 = scmp.eq.s32.totalorder %s26, 0
      %p68 = por %p66, %p67
      %p69 = scmp.ne.s32.totalorder %s57, %s58
      %p70 = scmp.eq.s32.totalorder %s27, 1
      %p71 = por %p69, %p70
      %p73 = scmp.ne.s32.totalorder %s58, %s72
      %p74 = scmp.eq.s32.totalorder %s27, 0
      %p75 = por %p73, %p74
      %s77 = sadd.s32 %s76, 1
      %p80 = scmp.eq.s32.totalorder %s21, 1
      %p81 = scmp.ne.s32.totalorder %s76, %s78
      %p82 = scmp.eq.s32.totalorder %s21, 0
      %p83 = por %p81, %p82
      %p84 = scmp.ne.s32.totalorder %s76, %s78
      %p85 = scmp.eq.s32.totalorder %s26, 1
      %p86 = por %p84, %p85
      %p87 = scmp.ne.s32.totalorder %s78, %s79
      %p88 = scmp.eq.s32.totalorder %s26, 0
      %p89 = por %p87, %p88
      %p90 = scmp.ne.s32.totalorder %s78, %s79
      %p91 = scmp.eq.s32.totalorder %s27, 1
      %p92 = por %p90, %p91
      %p94 = scmp.ne.s32.totalorder %s79, %s93
      %p95 = scmp.eq.s32.totalorder %s27, 0
      %p96 = por %p94, %p95
      %s98 = sadd.s32 %s97, 1
      %p101 = scmp.eq.s32.totalorder %s21, 1
      %p102 = scmp.ne.s32.totalorder %s97, %s99
      %p103 = scmp.eq.s32.totalorder %s21, 0
      %p104 = por %p102, %p103
      %p105 = scmp.ne.s32.totalorder %s97, %s99
      %p106 = scmp.eq.s32.totalorder %s26, 1
      %p107 = por %p105, %p106
      %p108 = scmp.ne.s32.totalorder %s99, %s100
      %p109 = scmp.eq.s32.totalorder %s26, 0
      %p110 = por %p108, %p109
      %p111 = scmp.ne.s32.totalorder %s99, %s100
      %p112 = scmp.eq.s32.totalorder %s27, 1
      %p113 = por %p111, %p112
      %p115 = scmp.ne.s32.totalorder %s100, %s114
      %p116 = scmp.eq.s32.totalorder %s27, 0
      %p117 = por %p115, %p116
      %s119 = sadd.s32 %s118, 1
      %p122 = scmp.eq.s32.totalorder %s21, 1
      %p123 = scmp.ne.s32.totalorder %s118, %s120
      %p124 = scmp.eq.s32.totalorder %s21, 0
      %p125 = por %p123, %p124
      %p126 = scmp.ne.s32.totalorder %s118, %s120
      %p127 = scmp.eq.s32.totalorder %s26, 1
      %p128 = por %p126, %p127
      %p129 = scmp.ne.s32.totalorder %s120, %s121
      %p130 = scmp.eq.s32.totalorder %s26, 0
      %p131 = por %p129, %p130
      %p132 = scmp.ne.s32.totalorder %s120, %s121
      %p133 = scmp.eq.s32.totalorder %s27, 1
      %p134 = por %p132, %p133
      %p136 = scmp.ne.s32.totalorder %s121, %s135
      %p137 = scmp.eq.s32.totalorder %s27, 0
      %p138 = por %p136, %p137
      %s139 = ssub.s32 %s21, %s28
      %p140 = scmp.eq.s32.totalorder %s139, 0
      %s142 = sadd.s32 %s141, 1
      %s143 = scalar_select %p140, %s141, %s142
      %p146 = pneg %p140
      %p147 = scmp.eq.s32.totalorder %s21, 1
      %p148 = por %p146, %p147
      %p149 = scmp.ne.s32.totalorder %s141, %s144
      %p150 = scmp.eq.s32.totalorder %s21, 0
      %p151 = por %p149, %p150
      %p152 = scmp.ne.s32.totalorder %s141, %s144
      %p153 = scmp.eq.s32.totalorder %s26, 1
      %p154 = por %p152, %p153
      %p155 = scmp.ne.s32.totalorder %s144, %s145
      %p156 = scmp.eq.s32.totalorder %s26, 0
      %p157 = por %p155, %p156
      %p158 = scmp.ne.s32.totalorder %s144, %s145
      %p159 = scmp.eq.s32.totalorder %s27, 1
      %p160 = por %p158, %p159
      %p162 = scmp.ne.s32.totalorder %s145, %s161
      %p163 = scmp.eq.s32.totalorder %s27, 0
      %p164 = por %p162, %p163
      %s165 = ssub.s32 %s21, %s28
      %p166 = scmp.eq.s32.totalorder %s165, 0
      %s168 = sadd.s32 %s167, 1
      %s169 = scalar_select %p166, %s167, %s168
      %p172 = pneg %p166
      %p173 = scmp.eq.s32.totalorder %s21, 1
      %p174 = por %p172, %p173
      %p175 = scmp.ne.s32.totalorder %s167, %s170
      %p176 = scmp.eq.s32.totalorder %s21, 0
      %p177 = por %p175, %p176
      %p178 = scmp.ne.s32.totalorder %s167, %s170
      %p179 = scmp.eq.s32.totalorder %s26, 1
      %p180 = por %p178, %p179
      %p181 = scmp.ne.s32.totalorder %s170, %s171
      %p182 = scmp.eq.s32.totalorder %s26, 0
      %p183 = por %p181, %p182
      %p184 = scmp.ne.s32.totalorder %s170, %s171
      %p185 = scmp.eq.s32.totalorder %s27, 1
      %p186 = por %p184, %p185
      %p188 = scmp.ne.s32.totalorder %s171, %s187
      %p189 = scmp.eq.s32.totalorder %s27, 0
      %p190 = por %p188, %p189
      %p191 = scmp.le.s32.totalorder 1, %s21
      %p192 = scmp.lt.s32.totalorder %s21, 3
      %p193 = pnand %p191, %p192
      %p194 = pneg %p193
      // Predicated region
      $region9: #{tpu_custom_call.1} parent=5 // pred_check
        _
      $region10: #{tpu_custom_call.1} parent=5 // pred_check_branch
        %196 = sbr.rel (%p193) target = $region12
      $region11: #{tpu_custom_call.1} parent=5 // pred_region
        %s197 = ssub.s32 %s21, 1
        // Predicated region
        $region13: #{tpu_custom_call.1} parent=11 // pred_check
          %p198 = pneg %p68
        $region14: #{tpu_custom_call.1} parent=11 // pred_check_branch
          %200 = sbr.rel (%p198) target = $region16
        $region15: #{tpu_custom_call.1} parent=11 // pred_region
          %s202 = ssub.s32 512, 512
          %203 = vsyncadd [#allocation3], %s202
          %s205 = sshll.u32 [#allocation2], 4
          %s206 = int_to_ptr.vmem [resolvable:$true] %s205
          %208 = dma.hbm_to_vmem [thread:$0]  %s1, 512, %s206, [#allocation3]
        $region16: #{tpu_custom_call.1} parent=11 // pred_fallthru
          _
        // Predicated region
        $region17: #{tpu_custom_call.1} parent=11 // pred_check
          %p209 = pneg %p89
        $region18: #{tpu_custom_call.1} parent=11 // pred_check_branch
          %211 = sbr.rel (%p209) target = $region20
        $region19: #{tpu_custom_call.1} parent=11 // pred_region
          _
        $region20: #{tpu_custom_call.1} parent=11 // pred_fallthru
          _
        // Predicated region
        $region21: #{tpu_custom_call.1} parent=11 // pred_check
          %p212 = pneg %p110
        $region22: #{tpu_custom_call.1} parent=11 // pred_check_branch
          %214 = sbr.rel (%p212) target = $region24
        $region23: #{tpu_custom_call.1} parent=11 // pred_region
          %s216 = ssub.s32 20480, 20480
          %217 = vsyncadd [#allocation6], %s216
          %s218 = sshll.u32 [#allocation5], 4
          %s219 = int_to_ptr.vmem [resolvable:$true] %s218
          %224 = dma.hbm_to_vmem [thread:$0]  %s3, 20480, %s219, [#allocation6], 640, 640, 40
        $region24: #{tpu_custom_call.1} parent=11 // pred_fallthru
          _
        // Predicated region
        $region25: #{tpu_custom_call.1} parent=11 // pred_check
          %p225 = pneg %p131
        $region26: #{tpu_custom_call.1} parent=11 // pred_check_branch
          %227 = sbr.rel (%p225) target = $region28
        $region27: #{tpu_custom_call.1} parent=11 // pred_region
          %s229 = ssub.s32 20480, 20480
          %230 = vsyncadd [#allocation6], %s229
          %s231 = sshll.u32 [#allocation7], 4
          %s232 = int_to_ptr.vmem [resolvable:$true] %s231
          %237 = dma.hbm_to_vmem [thread:$0]  %s4, 20480, %s232, [#allocation6], 640, 640, 40
        $region28: #{tpu_custom_call.1} parent=11 // pred_fallthru
          _
      $region12: #{tpu_custom_call.1} parent=5 // pred_fallthru
        _
      %p238 = scmp.lt.s32.totalorder %s21, 2
      // Predicated region
      $region29: #{tpu_custom_call.1} parent=5 // pred_check
        %p239 = pneg %p238
      $region30: #{tpu_custom_call.1} parent=5 // pred_check_branch
        %241 = sbr.rel (%p239) target = $region32
      $region31: #{tpu_custom_call.1} parent=5 // pred_region
        // Predicated region
        $region33: #{tpu_custom_call.1} parent=31 // pred_check
          %p242 = pneg %p41
        $region34: #{tpu_custom_call.1} parent=31 // pred_check_branch
          %244 = sbr.rel (%p242) target = $region36
        $region35: #{tpu_custom_call.1} parent=31 // pred_region
          %s245 = smul.u32 4, %s21
          %p246 = scmp.lt.s32.totalorder %s245, 7
          %s247 = scalar_select %p246, %s245, 7
          %s248 = smul.addr %s247, 8
          %s249 = scalar_lea.vmem %s0, %s248
          %s250 = smul.u32 4, %s21
        $region36: #{tpu_custom_call.1} parent=31 // pred_fallthru
          _
      $region32: #{tpu_custom_call.1} parent=5 // pred_fallthru
        _
      %p251 = scmp.le.s32.totalorder 1, %s21
      %p252 = scmp.lt.s32.totalorder %s21, 3
      %p253 = pnand %p251, %p252
      %p254 = pneg %p253
      // Predicated region
      $region37: #{tpu_custom_call.1} parent=5 // pred_check
        _
      $region38: #{tpu_custom_call.1} parent=5 // pred_check_branch
        %256 = sbr.rel (%p253) target = $region40
      $region39: #{tpu_custom_call.1} parent=5 // pred_region
        %s257 = ssub.s32 %s21, 1
        // Predicated region
        $region41: #{tpu_custom_call.1} parent=39 // pred_check
          %p258 = pneg %p68
        $region42: #{tpu_custom_call.1} parent=39 // pred_check_branch
          %260 = sbr.rel (%p258) target = $region44
        $region43: #{tpu_custom_call.1} parent=39 // pred_region
          %261 = dma.done [#allocation3], 512
        $region44: #{tpu_custom_call.1} parent=39 // pred_fallthru
          _
        // Predicated region
        $region45: #{tpu_custom_call.1} parent=39 // pred_check
          %p262 = pneg %p110
        $region46: #{tpu_custom_call.1} parent=39 // pred_check_branch
          %264 = sbr.rel (%p262) target = $region48
        $region47: #{tpu_custom_call.1} parent=39 // pred_region
          %265 = dma.done [#allocation6], 20480
        $region48: #{tpu_custom_call.1} parent=39 // pred_fallthru
          _
        // Predicated region
        $region49: #{tpu_custom_call.1} parent=39 // pred_check
          %p266 = pneg %p131
        $region50: #{tpu_custom_call.1} parent=39 // pred_check_branch
          %268 = sbr.rel (%p266) target = $region52
        $region51: #{tpu_custom_call.1} parent=39 // pred_region
          %269 = dma.done [#allocation6], 20480
        $region52: #{tpu_custom_call.1} parent=39 // pred_fallthru
          _
        %s270 = smul.u32 4, %s26
        %p271 = scmp.lt.s32.totalorder %s270, 7
        %s272 = scalar_select %p271, %s270, 7
        %s273 = smul.addr %s272, 8
        %s274 = scalar_lea.vmem %s0, %s273
        %p275 = pneg %p47
        %p276 = pneg %p44
        %p277 = pneg %p68
        %p278 = pneg %p65
        %p279 = pneg %p89
        %p280 = pneg %p86
        %p281 = pneg %p110
        %p282 = pneg %p107
        %p283 = pneg %p131
        %p284 = pneg %p128
        %p285 = pneg %p157
        %p286 = pneg %p154
        %s287 = sand.u32 %s144, 1
        %s288 = scalar_lea.sflag [#allocation4], %s287
        %s289 = sand.u32 %s144, 1
        %s290 = smul.addr %s289, 160
        %s291 = scalar_lea.vmem [#allocation8], %s290
        %p292 = pneg %p183
        %p293 = pneg %p180
        %s294 = sand.u32 %s170, 1
        %s295 = scalar_lea.sflag [#allocation10], %s294
        %s296 = sand.u32 %s170, 1
        %s297 = smul.addr %s296, 160
        %s298 = scalar_lea.vmem [#allocation9], %s297
        %s299 = smul.u32 4, %s26
        %p300 = scmp.lt.s32.totalorder %s299, 7
        %s301 = scalar_select %p300, %s299, 7
        %s302 = smul.addr %s301, 8
        %s303 = scalar_lea.vmem %s0, %s302
        %s304 = smul.u32 4, %s26
        %s305 = smul.u32 4, %s26
        %s306 = smul.u32 4, %s26
        %v307 = vld [vmem:[#allocation2] sm:$0xff]
        %v308 = vld [vmem:[#allocation2 + $0x8] sm:$0xff]
        %v309 = vld [vmem:[#allocation2 + $0x10] sm:$0xff]
        %v310 = vld [vmem:[#allocation2 + $0x18] sm:$0xff]
        %v311 = vld [vmem:[%s303] sm:$0xff]
        %v312 = vld [vmem:[%s303 + $0x8] sm:$0xff]
        %v313 = vld [vmem:[%s303 + $0x10] sm:$0xff]
        %v314 = vld [vmem:[%s303 + $0x18] sm:$0xff]
        %316 = vset.pattern.permute.xlu0 0
        %317 = vperm.xlu0 %316, %v311
        %v318 = vpop.permute.xlu0 %317
        %321 = vset.pattern.permute.xlu0 0
        %322 = vperm.xlu0 %321, %v312
        %v323 = vpop.permute.xlu0 %322
        %326 = vset.pattern.permute.xlu0 0
        %327 = vperm.xlu0 %326, %v313
        %v328 = vpop.permute.xlu0 %327
        %331 = vset.pattern.permute.xlu0 0
        %332 = vperm.xlu0 %331, %v314
        %v333 = vpop.permute.xlu0 %332
        %v335 = vlaneseq
        %v336 = vshrl.u32 %v335, 7
        %v337 = vsub.s32 0, %v336
        %v338 = vrot.slane %v307, %v337
        %v339 = vlaneseq
        %v340 = vshrl.u32 %v339, 7
        %v341 = vsub.s32 0, %v340
        %v342 = vrot.slane %v308, %v341
        %v343 = vlaneseq
        %v344 = vshrl.u32 %v343, 7
        %v345 = vsub.s32 0, %v344
        %v346 = vrot.slane %v309, %v345
        %v347 = vlaneseq
        %v348 = vshrl.u32 %v347, 7
        %v349 = vsub.s32 0, %v348
        %v350 = vrot.slane %v310, %v349
        %v351 = vmul.f32 %v318, %v338
        %v352 = vmul.f32 %v318, %v342
        %v353 = vmul.f32 %v318, %v346
        %v354 = vmul.f32 %v318, %v350
        %v355 = vmul.f32 %v323, %v338
        %v356 = vmul.f32 %v323, %v342
        %v357 = vmul.f32 %v323, %v346
        %v358 = vmul.f32 %v323, %v350
        %v359 = vmul.f32 %v328, %v338
        %v360 = vmul.f32 %v328, %v342
        %v361 = vmul.f32 %v328, %v346
        %v362 = vmul.f32 %v328, %v350
        %v363 = vmul.f32 %v333, %v338
        %v364 = vmul.f32 %v333, %v342
        %v365 = vmul.f32 %v333, %v346
        %v366 = vmul.f32 %v333, %v350
        %367 = vset.pattern.permute.xlu0 1
        %368 = vperm.xlu0 %367, %v311
        %v369 = vpop.permute.xlu0 %368
        %371 = vset.pattern.permute.xlu0 1
        %372 = vperm.xlu0 %371, %v312
        %v373 = vpop.permute.xlu0 %372
        %375 = vset.pattern.permute.xlu0 1
        %376 = vperm.xlu0 %375, %v313
        %v377 = vpop.permute.xlu0 %376
        %379 = vset.pattern.permute.xlu0 1
        %380 = vperm.xlu0 %379, %v314
        %v381 = vpop.permute.xlu0 %380
        %v383 = vlaneseq
        %v384 = vshrl.u32 %v383, 7
        %v385 = vsub.s32 1, %v384
        %v386 = vrot.slane %v307, %v385
        %v387 = vlaneseq
        %v388 = vshrl.u32 %v387, 7
        %v389 = vsub.s32 1, %v388
        %v390 = vrot.slane %v308, %v389
        %v391 = vlaneseq
        %v392 = vshrl.u32 %v391, 7
        %v393 = vsub.s32 1, %v392
        %v394 = vrot.slane %v309, %v393
        %v395 = vlaneseq
        %v396 = vshrl.u32 %v395, 7
        %v397 = vsub.s32 1, %v396
        %v398 = vrot.slane %v310, %v397
        %v399 = vmul.f32 %v369, %v386
        %v400 = vmul.f32 %v369, %v390
        %v401 = vmul.f32 %v369, %v394
        %v402 = vmul.f32 %v369, %v398
        %v403 = vmul.f32 %v373, %v386
        %v404 = vmul.f32 %v373, %v390
        %v405 = vmul.f32 %v373, %v394
        %v406 = vmul.f32 %v373, %v398
        %v407 = vmul.f32 %v377, %v386
        %v408 = vmul.f32 %v377, %v390
        %v409 = vmul.f32 %v377, %v394
        %v410 = vmul.f32 %v377, %v398
        %v411 = vmul.f32 %v381, %v386
        %v412 = vmul.f32 %v381, %v390
        %v413 = vmul.f32 %v381, %v394
        %v414 = vmul.f32 %v381, %v398
        %v415 = vadd.f32 %v351, %v399
        %v416 = vadd.f32 %v352, %v400
        %v417 = vadd.f32 %v353, %v401
        %v418 = vadd.f32 %v354, %v402
        %v419 = vadd.f32 %v355, %v403
        %v420 = vadd.f32 %v356, %v404
        %v421 = vadd.f32 %v357, %v405
        %v422 = vadd.f32 %v358, %v406
        %v423 = vadd.f32 %v359, %v407
        %v424 = vadd.f32 %v360, %v408
        %v425 = vadd.f32 %v361, %v409
        %v426 = vadd.f32 %v362, %v410
        %v427 = vadd.f32 %v363, %v411
        %v428 = vadd.f32 %v364, %v412
        %v429 = vadd.f32 %v365, %v413
        %v430 = vadd.f32 %v366, %v414
        %431 = vset.pattern.permute.xlu0 2
        %432 = vperm.xlu0 %431, %v311
        %v433 = vpop.permute.xlu0 %432
        %435 = vset.pattern.permute.xlu0 2
        %436 = vperm.xlu0 %435, %v312
        %v437 = vpop.permute.xlu0 %436
        %439 = vset.pattern.permute.xlu0 2
        %440 = vperm.xlu0 %439, %v313
        %v441 = vpop.permute.xlu0 %440
        %443 = vset.pattern.permute.xlu0 2
        %444 = vperm.xlu0 %443, %v314
        %v445 = vpop.permute.xlu0 %444
        %v447 = vlaneseq
        %v448 = vshrl.u32 %v447, 7
        %v449 = vsub.s32 2, %v448
        %v450 = vrot.slane %v307, %v449
        %v451 = vlaneseq
        %v452 = vshrl.u32 %v451, 7
        %v453 = vsub.s32 2, %v452
        %v454 = vrot.slane %v308, %v453
        %v455 = vlaneseq
        %v456 = vshrl.u32 %v455, 7
        %v457 = vsub.s32 2, %v456
        %v458 = vrot.slane %v309, %v457
        %v459 = vlaneseq
        %v460 = vshrl.u32 %v459, 7
        %v461 = vsub.s32 2, %v460
        %v462 = vrot.slane %v310, %v461
        %v463 = vmul.f32 %v433, %v450
        %v464 = vmul.f32 %v433, %v454
        %v465 = vmul.f32 %v433, %v458
        %v466 = vmul.f32 %v433, %v462
        %v467 = vmul.f32 %v437, %v450
        %v468 = vmul.f32 %v437, %v454
        %v469 = vmul.f32 %v437, %v458
        %v470 = vmul.f32 %v437, %v462
        %v471 = vmul.f32 %v441, %v450
        %v472 = vmul.f32 %v441, %v454
        %v473 = vmul.f32 %v441, %v458
        %v474 = vmul.f32 %v441, %v462
        %v475 = vmul.f32 %v445, %v450
        %v476 = vmul.f32 %v445, %v454
        %v477 = vmul.f32 %v445, %v458
        %v478 = vmul.f32 %v445, %v462
        %v479 = vadd.f32 %v415, %v463
        %v480 = vadd.f32 %v416, %v464
        %v481 = vadd.f32 %v417, %v465
        %v482 = vadd.f32 %v418, %v466
        %v483 = vadd.f32 %v419, %v467
        %v484 = vadd.f32 %v420, %v468
        %v485 = vadd.f32 %v421, %v469
        %v486 = vadd.f32 %v422, %v470
        %v487 = vadd.f32 %v423, %v471
        %v488 = vadd.f32 %v424, %v472
        %v489 = vadd.f32 %v425, %v473
        %v490 = vadd.f32 %v426, %v474
        %v491 = vadd.f32 %v427, %v475
        %v492 = vadd.f32 %v428, %v476
        %v493 = vadd.f32 %v429, %v477
        %v494 = vadd.f32 %v430, %v478
        %v495 = vmul.f32 %v481, 1.442695
        %v496 = vpow.pop %v495
        %v497 = vmul.f32 %v482, 1.442695
        %v498 = vpow.pop %v497
        %v499 = vmul.f32 %v485, 1.442695
        %v500 = vpow.pop %v499
        %v501 = vmul.f32 %v486, 1.442695
        %v502 = vpow.pop %v501
        %v503 = vmul.f32 %v489, 1.442695
        %v504 = vpow.pop %v503
        %v505 = vmul.f32 %v490, 1.442695
        %v506 = vpow.pop %v505
        %v507 = vmul.f32 %v493, 1.442695
        %v508 = vpow.pop %v507
        %v509 = vmul.f32 %v494, 1.442695
        %v510 = vpow.pop %v509
        %v511 = vand.u32 2147483647, %v479
        %vm512 = vcmp.le.f32.partialorder %v511, 0.7853982
        %vm513 = vcmp.lt.s32.totalorder %v479, 0
        %v514 = vand.u32 %v479, 2139095040
        %v515 = vshrl.u32 %v514, 23
        %v516 = vsub.s32 %v515, 127
        %v517 = vand.u32 2147483647, %v479
        %v518 = vand.u32 %v517, 8388607
        %v519 = vor.u32 %v518, 8388608
        %v520 = vsub.s32 0, %v519
        %v521 = vadd.s32 %v516, 1
        %vm522 = vcmp.gt.s32.totalorder %v521, 0
        %v523 = vsel %vm522, %v521, 0
        %v524 = vshrl.u32 %v523, 5
        %v525 = vand.u32 %v523, 31
        %v526 = vsub.s32 32, %v525
        %v527 = vshrl.u32 683565275, %v526
        %v528 = vshll.u32 683565275, %v525
        %v529 = vshrl.u32 2475754826, %v526
        %v530 = vor.u32 %v528, %v529
        %v531 = vshll.u32 2475754826, %v525
        %v532 = vshrl.u32 2131351028, %v526
        %v533 = vor.u32 %v531, %v532
        %v534 = vshll.u32 2131351028, %v525
        %v535 = vshrl.u32 2102212464, %v526
        %v536 = vor.u32 %v534, %v535
        %v537 = vshll.u32 2102212464, %v525
        %v538 = vshrl.u32 920167782, %v526
        %v539 = vor.u32 %v537, %v538
        %v540 = vshll.u32 920167782, %v525
        %v541 = vshrl.u32 1326507024, %v526
        %v542 = vor.u32 %v540, %v541
        %vm543 = vcmp.lt.s32.totalorder %v524, 1
        %vm544 = vcmp.lt.s32.totalorder %v524, 2
        %vm545 = vcmp.lt.s32.totalorder %v524, 3
        %vm546 = vcmp.lt.s32.totalorder %v524, 4
        %v547 = vsel %vm543, %v527, %v530
        %v548 = vsel %vm546, %v536, 2102212464
        %v549 = vsel %vm545, %v533, %v548
        %v550 = vsel %vm544, %v547, %v549
        %v551 = vsel %vm543, %v530, %v533
        %v552 = vsel %vm546, %v539, 920167782
        %v553 = vsel %vm545, %v536, %v552
        %v554 = vsel %vm544, %v551, %v553
        %v555 = vsel %vm543, %v533, %v536
        %v556 = vsel %vm546, %v542, 1326507024
        %v557 = vsel %vm545, %v539, %v556
        %v558 = vsel %vm544, %v555, %v557
        %v559 = vshll.u32 %v519, 8
        %v560 = vmul.u32.u64.compose %v559, %v558
        %v561 = vextract.low.u32 %v560
        %v562 = vextract.high.u32 %v560
        %v563 = vmul.u32.u64.compose %v559, %v554
        %v564 = vextract.low.u32 %v563
        %v565 = vextract.high.u32 %v563
        %v566 = vmul.u32 %v559, %v550
        %v567 = vadd.s32 %v562, %v564
        %vm568 = vc.u32 %v562, %v564
        %v569 = vadd.s32 %v565, 1
        %v570 = vsel %vm568, %v569, %v565
        %v571 = vadd.s32 %v566, %v570
        %v572 = vadd.s32 %v571, 536870912
        %v573 = vshrl.u32 %v572, 30
        %v574 = vshll.u32 %v573, 30
        %v575 = vsub.s32 %v571, %v574
        %vm576 = vcmp.lt.s32.totalorder %v575, 0
        %v577 = vsub.s32 0, %v575
        %v578 = vsel %vm576, %v577, %v575
        %v579 = vclz %v578
        %v580 = vsub.s32 %v579, 2
        %vm581 = vcmp.gt.s32.totalorder 0, %v580
        %v582 = vsel %vm581, 0, %v580
        %v583 = vsub.s32 32, %v582
        %v584 = vshll.u32 %v575, %v582
        %v585 = vshrl.u32 %v567, %v583
        %v586 = vor.u32 %v584, %v585
        %v587 = vsub.s32 4294967266, %v582
        %v588 = vadd.s32 %v587, 127
        %v589 = vshll.u32 %v588, 23
        %v590 = vor.u32 4788187, %v589
        %v591 = vand.u32 2147483647, %v590
        %v593 = vcvt.s32.f32 %v586
        %v594 = vmul.f32 %v593, %v591
        %v595 = vxor.u32 %v594, 2147483648
        %v596 = vsel %vm513, %v595, %v594
        %v597 = vsub.s32 4, %v573
        %v598 = vsel %vm513, %v597, %v573
        %v599 = vsel %vm512, %v479, %v596
        %v600 = vsel %vm512, 0, %v598
        %v601 = vcosq.f32.pop %v599
        %v602 = vsinq.f32.pop %v599
        %vm603 = vweird.f32 %v479
        %v604 = vand.u32 %v600, 3
        %vm605 = vcmp.lt.s32.totalorder %v604, 2
        %vm606 = vcmp.eq.s32.totalorder %v604, 0
        %v607 = vxor.u32 %v602, 2147483648
        %v608 = vsel %vm606, %v601, %v607
        %vm609 = vcmp.eq.s32.totalorder %v604, 2
        %v610 = vxor.u32 %v601, 2147483648
        %v611 = vsel %vm609, %v610, %v602
        %v612 = vsel %vm605, %v608, %v611
        %v613 = vsel %vm603, nan, %v612
        %v614 = vand.u32 2147483647, %v480
        %vm615 = vcmp.le.f32.partialorder %v614, 0.7853982
        %vm616 = vcmp.lt.s32.totalorder %v480, 0
        %v617 = vand.u32 %v480, 2139095040
        %v618 = vshrl.u32 %v617, 23
        %v619 = vsub.s32 %v618, 127
        %v620 = vand.u32 2147483647, %v480
        %v621 = vand.u32 %v620, 8388607
        %v622 = vor.u32 %v621, 8388608
        %v623 = vsub.s32 0, %v622
        %v624 = vadd.s32 %v619, 1
        %vm625 = vcmp.gt.s32.totalorder %v624, 0
        %v626 = vsel %vm625, %v624, 0
        %v627 = vshrl.u32 %v626, 5
        %v628 = vand.u32 %v626, 31
        %v629 = vsub.s32 32, %v628
        %v630 = vshrl.u32 683565275, %v629
        %v631 = vshll.u32 683565275, %v628
        %v632 = vshrl.u32 2475754826, %v629
        %v633 = vor.u32 %v631, %v632
        %v634 = vshll.u32 2475754826, %v628
        %v635 = vshrl.u32 2131351028, %v629
        %v636 = vor.u32 %v634, %v635
        %v637 = vshll.u32 2131351028, %v628
        %v638 = vshrl.u32 2102212464, %v629
        %v639 = vor.u32 %v637, %v638
        %v640 = vshll.u32 2102212464, %v628
        %v641 = vshrl.u32 920167782, %v629
        %v642 = vor.u32 %v640, %v641
        %v643 = vshll.u32 920167782, %v628
        %v644 = vshrl.u32 1326507024, %v629
        %v645 = vor.u32 %v643, %v644
        %vm646 = vcmp.lt.s32.totalorder %v627, 1
        %vm647 = vcmp.lt.s32.totalorder %v627, 2
        %vm648 = vcmp.lt.s32.totalorder %v627, 3
        %vm649 = vcmp.lt.s32.totalorder %v627, 4
        %v650 = vsel %vm646, %v630, %v633
        %v651 = vsel %vm649, %v639, 2102212464
        %v652 = vsel %vm648, %v636, %v651
        %v653 = vsel %vm647, %v650, %v652
        %v654 = vsel %vm646, %v633, %v636
        %v655 = vsel %vm649, %v642, 920167782
        %v656 = vsel %vm648, %v639, %v655
        %v657 = vsel %vm647, %v654, %v656
        %v658 = vsel %vm646, %v636, %v639
        %v659 = vsel %vm649, %v645, 1326507024
        %v660 = vsel %vm648, %v642, %v659
        %v661 = vsel %vm647, %v658, %v660
        %v662 = vshll.u32 %v622, 8
        %v663 = vmul.u32.u64.compose %v662, %v661
        %v664 = vextract.low.u32 %v663
        %v665 = vextract.high.u32 %v663
        %v666 = vmul.u32.u64.compose %v662, %v657
        %v667 = vextract.low.u32 %v666
        %v668 = vextract.high.u32 %v666
        %v669 = vmul.u32 %v662, %v653
        %v670 = vadd.s32 %v665, %v667
        %vm671 = vc.u32 %v665, %v667
        %v672 = vadd.s32 %v668, 1
        %v673 = vsel %vm671, %v672, %v668
        %v674 = vadd.s32 %v669, %v673
        %v675 = vadd.s32 %v674, 536870912
        %v676 = vshrl.u32 %v675, 30
        %v677 = vshll.u32 %v676, 30
        %v678 = vsub.s32 %v674, %v677
        %vm679 = vcmp.lt.s32.totalorder %v678, 0
        %v680 = vsub.s32 0, %v678
        %v681 = vsel %vm679, %v680, %v678
        %v682 = vclz %v681
        %v683 = vsub.s32 %v682, 2
        %vm684 = vcmp.gt.s32.totalorder 0, %v683
        %v685 = vsel %vm684, 0, %v683
        %v686 = vsub.s32 32, %v685
        %v687 = vshll.u32 %v678, %v685
        %v688 = vshrl.u32 %v670, %v686
        %v689 = vor.u32 %v687, %v688
        %v690 = vsub.s32 4294967266, %v685
        %v691 = vadd.s32 %v690, 127
        %v692 = vshll.u32 %v691, 23
        %v693 = vor.u32 4788187, %v692
        %v694 = vand.u32 2147483647, %v693
        %v696 = vcvt.s32.f32 %v689
        %v697 = vmul.f32 %v696, %v694
        %v698 = vxor.u32 %v697, 2147483648
        %v699 = vsel %vm616, %v698, %v697
        %v700 = vsub.s32 4, %v676
        %v701 = vsel %vm616, %v700, %v676
        %v702 = vsel %vm615, %v480, %v699
        %v703 = vsel %vm615, 0, %v701
        %v704 = vcosq.f32.pop %v702
        %v705 = vsinq.f32.pop %v702
        %vm706 = vweird.f32 %v480
        %v707 = vand.u32 %v703, 3
        %vm708 = vcmp.lt.s32.totalorder %v707, 2
        %vm709 = vcmp.eq.s32.totalorder %v707, 0
        %v710 = vxor.u32 %v705, 2147483648
        %v711 = vsel %vm709, %v704, %v710
        %vm712 = vcmp.eq.s32.totalorder %v707, 2
        %v713 = vxor.u32 %v704, 2147483648
        %v714 = vsel %vm712, %v713, %v705
        %v715 = vsel %vm708, %v711, %v714
        %v716 = vsel %vm706, nan, %v715
        %v717 = vand.u32 2147483647, %v483
        %vm718 = vcmp.le.f32.partialorder %v717, 0.7853982
        %vm719 = vcmp.lt.s32.totalorder %v483, 0
        %v720 = vand.u32 %v483, 2139095040
        %v721 = vshrl.u32 %v720, 23
        %v722 = vsub.s32 %v721, 127
        %v723 = vand.u32 2147483647, %v483
        %v724 = vand.u32 %v723, 8388607
        %v725 = vor.u32 %v724, 8388608
        %v726 = vsub.s32 0, %v725
        %v727 = vadd.s32 %v722, 1
        %vm728 = vcmp.gt.s32.totalorder %v727, 0
        %v729 = vsel %vm728, %v727, 0
        %v730 = vshrl.u32 %v729, 5
        %v731 = vand.u32 %v729, 31
        %v732 = vsub.s32 32, %v731
        %v733 = vshrl.u32 683565275, %v732
        %v734 = vshll.u32 683565275, %v731
        %v735 = vshrl.u32 2475754826, %v732
        %v736 = vor.u32 %v734, %v735
        %v737 = vshll.u32 2475754826, %v731
        %v738 = vshrl.u32 2131351028, %v732
        %v739 = vor.u32 %v737, %v738
        %v740 = vshll.u32 2131351028, %v731
        %v741 = vshrl.u32 2102212464, %v732
        %v742 = vor.u32 %v740, %v741
        %v743 = vshll.u32 2102212464, %v731
        %v744 = vshrl.u32 920167782, %v732
        %v745 = vor.u32 %v743, %v744
        %v746 = vshll.u32 920167782, %v731
        %v747 = vshrl.u32 1326507024, %v732
        %v748 = vor.u32 %v746, %v747
        %vm749 = vcmp.lt.s32.totalorder %v730, 1
        %vm750 = vcmp.lt.s32.totalorder %v730, 2
        %vm751 = vcmp.lt.s32.totalorder %v730, 3
        %vm752 = vcmp.lt.s32.totalorder %v730, 4
        %v753 = vsel %vm749, %v733, %v736
        %v754 = vsel %vm752, %v742, 2102212464
        %v755 = vsel %vm751, %v739, %v754
        %v756 = vsel %vm750, %v753, %v755
        %v757 = vsel %vm749, %v736, %v739
        %v758 = vsel %vm752, %v745, 920167782
        %v759 = vsel %vm751, %v742, %v758
        %v760 = vsel %vm750, %v757, %v759
        %v761 = vsel %vm749, %v739, %v742
        %v762 = vsel %vm752, %v748, 1326507024
        %v763 = vsel %vm751, %v745, %v762
        %v764 = vsel %vm750, %v761, %v763
        %v765 = vshll.u32 %v725, 8
        %v766 = vmul.u32.u64.compose %v765, %v764
        %v767 = vextract.low.u32 %v766
        %v768 = vextract.high.u32 %v766
        %v769 = vmul.u32.u64.compose %v765, %v760
        %v770 = vextract.low.u32 %v769
        %v771 = vextract.high.u32 %v769
        %v772 = vmul.u32 %v765, %v756
        %v773 = vadd.s32 %v768, %v770
        %vm774 = vc.u32 %v768, %v770
        %v775 = vadd.s32 %v771, 1
        %v776 = vsel %vm774, %v775, %v771
        %v777 = vadd.s32 %v772, %v776
        %v778 = vadd.s32 %v777, 536870912
        %v779 = vshrl.u32 %v778, 30
        %v780 = vshll.u32 %v779, 30
        %v781 = vsub.s32 %v777, %v780
        %vm782 = vcmp.lt.s32.totalorder %v781, 0
        %v783 = vsub.s32 0, %v781
        %v784 = vsel %vm782, %v783, %v781
        %v785 = vclz %v784
        %v786 = vsub.s32 %v785, 2
        %vm787 = vcmp.gt.s32.totalorder 0, %v786
        %v788 = vsel %vm787, 0, %v786
        %v789 = vsub.s32 32, %v788
        %v790 = vshll.u32 %v781, %v788
        %v791 = vshrl.u32 %v773, %v789
        %v792 = vor.u32 %v790, %v791
        %v793 = vsub.s32 4294967266, %v788
        %v794 = vadd.s32 %v793, 127
        %v795 = vshll.u32 %v794, 23
        %v796 = vor.u32 4788187, %v795
        %v797 = vand.u32 2147483647, %v796
        %v799 = vcvt.s32.f32 %v792
        %v800 = vmul.f32 %v799, %v797
        %v801 = vxor.u32 %v800, 2147483648
        %v802 = vsel %vm719, %v801, %v800
        %v803 = vsub.s32 4, %v779
        %v804 = vsel %vm719, %v803, %v779
        %v805 = vsel %vm718, %v483, %v802
        %v806 = vsel %vm718, 0, %v804
        %v807 = vcosq.f32.pop %v805
        %v808 = vsinq.f32.pop %v805
        %vm809 = vweird.f32 %v483
        %v810 = vand.u32 %v806, 3
        %vm811 = vcmp.lt.s32.totalorder %v810, 2
        %vm812 = vcmp.eq.s32.totalorder %v810, 0
        %v813 = vxor.u32 %v808, 2147483648
        %v814 = vsel %vm812, %v807, %v813
        %vm815 = vcmp.eq.s32.totalorder %v810, 2
        %v816 = vxor.u32 %v807, 2147483648
        %v817 = vsel %vm815, %v816, %v808
        %v818 = vsel %vm811, %v814, %v817
        %v819 = vsel %vm809, nan, %v818
        %v820 = vand.u32 2147483647, %v484
        %vm821 = vcmp.le.f32.partialorder %v820, 0.7853982
        %vm822 = vcmp.lt.s32.totalorder %v484, 0
        %v823 = vand.u32 %v484, 2139095040
        %v824 = vshrl.u32 %v823, 23
        %v825 = vsub.s32 %v824, 127
        %v826 = vand.u32 2147483647, %v484
        %v827 = vand.u32 %v826, 8388607
        %v828 = vor.u32 %v827, 8388608
        %v829 = vsub.s32 0, %v828
        %v830 = vadd.s32 %v825, 1
        %vm831 = vcmp.gt.s32.totalorder %v830, 0
        %v832 = vsel %vm831, %v830, 0
        %v833 = vshrl.u32 %v832, 5
        %v834 = vand.u32 %v832, 31
        %v835 = vsub.s32 32, %v834
        %v836 = vshrl.u32 683565275, %v835
        %v837 = vshll.u32 683565275, %v834
        %v838 = vshrl.u32 2475754826, %v835
        %v839 = vor.u32 %v837, %v838
        %v840 = vshll.u32 2475754826, %v834
        %v841 = vshrl.u32 2131351028, %v835
        %v842 = vor.u32 %v840, %v841
        %v843 = vshll.u32 2131351028, %v834
        %v844 = vshrl.u32 2102212464, %v835
        %v845 = vor.u32 %v843, %v844
        %v846 = vshll.u32 2102212464, %v834
        %v847 = vshrl.u32 920167782, %v835
        %v848 = vor.u32 %v846, %v847
        %v849 = vshll.u32 920167782, %v834
        %v850 = vshrl.u32 1326507024, %v835
        %v851 = vor.u32 %v849, %v850
        %vm852 = vcmp.lt.s32.totalorder %v833, 1
        %vm853 = vcmp.lt.s32.totalorder %v833, 2
        %vm854 = vcmp.lt.s32.totalorder %v833, 3
        %vm855 = vcmp.lt.s32.totalorder %v833, 4
        %v856 = vsel %vm852, %v836, %v839
        %v857 = vsel %vm855, %v845, 2102212464
        %v858 = vsel %vm854, %v842, %v857
        %v859 = vsel %vm853, %v856, %v858
        %v860 = vsel %vm852, %v839, %v842
        %v861 = vsel %vm855, %v848, 920167782
        %v862 = vsel %vm854, %v845, %v861
        %v863 = vsel %vm853, %v860, %v862
        %v864 = vsel %vm852, %v842, %v845
        %v865 = vsel %vm855, %v851, 1326507024
        %v866 = vsel %vm854, %v848, %v865
        %v867 = vsel %vm853, %v864, %v866
        %v868 = vshll.u32 %v828, 8
        %v869 = vmul.u32.u64.compose %v868, %v867
        %v870 = vextract.low.u32 %v869
        %v871 = vextract.high.u32 %v869
        %v872 = vmul.u32.u64.compose %v868, %v863
        %v873 = vextract.low.u32 %v872
        %v874 = vextract.high.u32 %v872
        %v875 = vmul.u32 %v868, %v859
        %v876 = vadd.s32 %v871, %v873
        %vm877 = vc.u32 %v871, %v873
        %v878 = vadd.s32 %v874, 1
        %v879 = vsel %vm877, %v878, %v874
        %v880 = vadd.s32 %v875, %v879
        %v881 = vadd.s32 %v880, 536870912
        %v882 = vshrl.u32 %v881, 30
        %v883 = vshll.u32 %v882, 30
        %v884 = vsub.s32 %v880, %v883
        %vm885 = vcmp.lt.s32.totalorder %v884, 0
        %v886 = vsub.s32 0, %v884
        %v887 = vsel %vm885, %v886, %v884
        %v888 = vclz %v887
        %v889 = vsub.s32 %v888, 2
        %vm890 = vcmp.gt.s32.totalorder 0, %v889
        %v891 = vsel %vm890, 0, %v889
        %v892 = vsub.s32 32, %v891
        %v893 = vshll.u32 %v884, %v891
        %v894 = vshrl.u32 %v876, %v892
        %v895 = vor.u32 %v893, %v894
        %v896 = vsub.s32 4294967266, %v891
        %v897 = vadd.s32 %v896, 127
        %v898 = vshll.u32 %v897, 23
        %v899 = vor.u32 4788187, %v898
        %v900 = vand.u32 2147483647, %v899
        %v902 = vcvt.s32.f32 %v895
        %v903 = vmul.f32 %v902, %v900
        %v904 = vxor.u32 %v903, 2147483648
        %v905 = vsel %vm822, %v904, %v903
        %v906 = vsub.s32 4, %v882
        %v907 = vsel %vm822, %v906, %v882
        %v908 = vsel %vm821, %v484, %v905
        %v909 = vsel %vm821, 0, %v907
        %v910 = vcosq.f32.pop %v908
        %v911 = vsinq.f32.pop %v908
        %vm912 = vweird.f32 %v484
        %v913 = vand.u32 %v909, 3
        %vm914 = vcmp.lt.s32.totalorder %v913, 2
        %vm915 = vcmp.eq.s32.totalorder %v913, 0
        %v916 = vxor.u32 %v911, 2147483648
        %v917 = vsel %vm915, %v910, %v916
        %vm918 = vcmp.eq.s32.totalorder %v913, 2
        %v919 = vxor.u32 %v910, 2147483648
        %v920 = vsel %vm918, %v919, %v911
        %v921 = vsel %vm914, %v917, %v920
        %v922 = vsel %vm912, nan, %v921
        %v923 = vand.u32 2147483647, %v487
        %vm924 = vcmp.le.f32.partialorder %v923, 0.7853982
        %vm925 = vcmp.lt.s32.totalorder %v487, 0
        %v926 = vand.u32 %v487, 2139095040
        %v927 = vshrl.u32 %v926, 23
        %v928 = vsub.s32 %v927, 127
        %v929 = vand.u32 2147483647, %v487
        %v930 = vand.u32 %v929, 8388607
        %v931 = vor.u32 %v930, 8388608
        %v932 = vsub.s32 0, %v931
        %v933 = vadd.s32 %v928, 1
        %vm934 = vcmp.gt.s32.totalorder %v933, 0
        %v935 = vsel %vm934, %v933, 0
        %v936 = vshrl.u32 %v935, 5
        %v937 = vand.u32 %v935, 31
        %v938 = vsub.s32 32, %v937
        %v939 = vshrl.u32 683565275, %v938
        %v940 = vshll.u32 683565275, %v937
        %v941 = vshrl.u32 2475754826, %v938
        %v942 = vor.u32 %v940, %v941
        %v943 = vshll.u32 2475754826, %v937
        %v944 = vshrl.u32 2131351028, %v938
        %v945 = vor.u32 %v943, %v944
        %v946 = vshll.u32 2131351028, %v937
        %v947 = vshrl.u32 2102212464, %v938
        %v948 = vor.u32 %v946, %v947
        %v949 = vshll.u32 2102212464, %v937
        %v950 = vshrl.u32 920167782, %v938
        %v951 = vor.u32 %v949, %v950
        %v952 = vshll.u32 920167782, %v937
        %v953 = vshrl.u32 1326507024, %v938
        %v954 = vor.u32 %v952, %v953
        %vm955 = vcmp.lt.s32.totalorder %v936, 1
        %vm956 = vcmp.lt.s32.totalorder %v936, 2
        %vm957 = vcmp.lt.s32.totalorder %v936, 3
        %vm958 = vcmp.lt.s32.totalorder %v936, 4
        %v959 = vsel %vm955, %v939, %v942
        %v960 = vsel %vm958, %v948, 2102212464
        %v961 = vsel %vm957, %v945, %v960
        %v962 = vsel %vm956, %v959, %v961
        %v963 = vsel %vm955, %v942, %v945
        %v964 = vsel %vm958, %v951, 920167782
        %v965 = vsel %vm957, %v948, %v964
        %v966 = vsel %vm956, %v963, %v965
        %v967 = vsel %vm955, %v945, %v948
        %v968 = vsel %vm958, %v954, 1326507024
        %v969 = vsel %vm957, %v951, %v968
        %v970 = vsel %vm956, %v967, %v969
        %v971 = vshll.u32 %v931, 8
        %v972 = vmul.u32.u64.compose %v971, %v970
        %v973 = vextract.low.u32 %v972
        %v974 = vextract.high.u32 %v972
        %v975 = vmul.u32.u64.compose %v971, %v966
        %v976 = vextract.low.u32 %v975
        %v977 = vextract.high.u32 %v975
        %v978 = vmul.u32 %v971, %v962
        %v979 = vadd.s32 %v974, %v976
        %vm980 = vc.u32 %v974, %v976
        %v981 = vadd.s32 %v977, 1
        %v982 = vsel %vm980, %v981, %v977
        %v983 = vadd.s32 %v978, %v982
        %v984 = vadd.s32 %v983, 536870912
        %v985 = vshrl.u32 %v984, 30
        %v986 = vshll.u32 %v985, 30
        %v987 = vsub.s32 %v983, %v986
        %vm988 = vcmp.lt.s32.totalorder %v987, 0
        %v989 = vsub.s32 0, %v987
        %v990 = vsel %vm988, %v989, %v987
        %v991 = vclz %v990
        %v992 = vsub.s32 %v991, 2
        %vm993 = vcmp.gt.s32.totalorder 0, %v992
        %v994 = vsel %vm993, 0, %v992
        %v995 = vsub.s32 32, %v994
        %v996 = vshll.u32 %v987, %v994
        %v997 = vshrl.u32 %v979, %v995
        %v998 = vor.u32 %v996, %v997
        %v999 = vsub.s32 4294967266, %v994
        %v1000 = vadd.s32 %v999, 127
        %v1001 = vshll.u32 %v1000, 23
        %v1002 = vor.u32 4788187, %v1001
        %v1003 = vand.u32 2147483647, %v1002
        %v1005 = vcvt.s32.f32 %v998
        %v1006 = vmul.f32 %v1005, %v1003
        %v1007 = vxor.u32 %v1006, 2147483648
        %v1008 = vsel %vm925, %v1007, %v1006
        %v1009 = vsub.s32 4, %v985
        %v1010 = vsel %vm925, %v1009, %v985
        %v1011 = vsel %vm924, %v487, %v1008
        %v1012 = vsel %vm924, 0, %v1010
        %v1013 = vcosq.f32.pop %v1011
        %v1014 = vsinq.f32.pop %v1011
        %vm1015 = vweird.f32 %v487
        %v1016 = vand.u32 %v1012, 3
        %vm1017 = vcmp.lt.s32.totalorder %v1016, 2
        %vm1018 = vcmp.eq.s32.totalorder %v1016, 0
        %v1019 = vxor.u32 %v1014, 2147483648
        %v1020 = vsel %vm1018, %v1013, %v1019
        %vm1021 = vcmp.eq.s32.totalorder %v1016, 2
        %v1022 = vxor.u32 %v1013, 2147483648
        %v1023 = vsel %vm1021, %v1022, %v1014
        %v1024 = vsel %vm1017, %v1020, %v1023
        %v1025 = vsel %vm1015, nan, %v1024
        %v1026 = vand.u32 2147483647, %v488
        %vm1027 = vcmp.le.f32.partialorder %v1026, 0.7853982
        %vm1028 = vcmp.lt.s32.totalorder %v488, 0
        %v1029 = vand.u32 %v488, 2139095040
        %v1030 = vshrl.u32 %v1029, 23
        %v1031 = vsub.s32 %v1030, 127
        %v1032 = vand.u32 2147483647, %v488
        %v1033 = vand.u32 %v1032, 8388607
        %v1034 = vor.u32 %v1033, 8388608
        %v1035 = vsub.s32 0, %v1034
        %v1036 = vadd.s32 %v1031, 1
        %vm1037 = vcmp.gt.s32.totalorder %v1036, 0
        %v1038 = vsel %vm1037, %v1036, 0
        %v1039 = vshrl.u32 %v1038, 5
        %v1040 = vand.u32 %v1038, 31
        %v1041 = vsub.s32 32, %v1040
        %v1042 = vshrl.u32 683565275, %v1041
        %v1043 = vshll.u32 683565275, %v1040
        %v1044 = vshrl.u32 2475754826, %v1041
        %v1045 = vor.u32 %v1043, %v1044
        %v1046 = vshll.u32 2475754826, %v1040
        %v1047 = vshrl.u32 2131351028, %v1041
        %v1048 = vor.u32 %v1046, %v1047
        %v1049 = vshll.u32 2131351028, %v1040
        %v1050 = vshrl.u32 2102212464, %v1041
        %v1051 = vor.u32 %v1049, %v1050
        %v1052 = vshll.u32 2102212464, %v1040
        %v1053 = vshrl.u32 920167782, %v1041
        %v1054 = vor.u32 %v1052, %v1053
        %v1055 = vshll.u32 920167782, %v1040
        %v1056 = vshrl.u32 1326507024, %v1041
        %v1057 = vor.u32 %v1055, %v1056
        %vm1058 = vcmp.lt.s32.totalorder %v1039, 1
        %vm1059 = vcmp.lt.s32.totalorder %v1039, 2
        %vm1060 = vcmp.lt.s32.totalorder %v1039, 3
        %vm1061 = vcmp.lt.s32.totalorder %v1039, 4
        %v1062 = vsel %vm1058, %v1042, %v1045
        %v1063 = vsel %vm1061, %v1051, 2102212464
        %v1064 = vsel %vm1060, %v1048, %v1063
        %v1065 = vsel %vm1059, %v1062, %v1064
        %v1066 = vsel %vm1058, %v1045, %v1048
        %v1067 = vsel %vm1061, %v1054, 920167782
        %v1068 = vsel %vm1060, %v1051, %v1067
        %v1069 = vsel %vm1059, %v1066, %v1068
        %v1070 = vsel %vm1058, %v1048, %v1051
        %v1071 = vsel %vm1061, %v1057, 1326507024
        %v1072 = vsel %vm1060, %v1054, %v1071
        %v1073 = vsel %vm1059, %v1070, %v1072
        %v1074 = vshll.u32 %v1034, 8
        %v1075 = vmul.u32.u64.compose %v1074, %v1073
        %v1076 = vextract.low.u32 %v1075
        %v1077 = vextract.high.u32 %v1075
        %v1078 = vmul.u32.u64.compose %v1074, %v1069
        %v1079 = vextract.low.u32 %v1078
        %v1080 = vextract.high.u32 %v1078
        %v1081 = vmul.u32 %v1074, %v1065
        %v1082 = vadd.s32 %v1077, %v1079
        %vm1083 = vc.u32 %v1077, %v1079
        %v1084 = vadd.s32 %v1080, 1
        %v1085 = vsel %vm1083, %v1084, %v1080
        %v1086 = vadd.s32 %v1081, %v1085
        %v1087 = vadd.s32 %v1086, 536870912
        %v1088 = vshrl.u32 %v1087, 30
        %v1089 = vshll.u32 %v1088, 30
        %v1090 = vsub.s32 %v1086, %v1089
        %vm1091 = vcmp.lt.s32.totalorder %v1090, 0
        %v1092 = vsub.s32 0, %v1090
        %v1093 = vsel %vm1091, %v1092, %v1090
        %v1094 = vclz %v1093
        %v1095 = vsub.s32 %v1094, 2
        %vm1096 = vcmp.gt.s32.totalorder 0, %v1095
        %v1097 = vsel %vm1096, 0, %v1095
        %v1098 = vsub.s32 32, %v1097
        %v1099 = vshll.u32 %v1090, %v1097
        %v1100 = vshrl.u32 %v1082, %v1098
        %v1101 = vor.u32 %v1099, %v1100
        %v1102 = vsub.s32 4294967266, %v1097
        %v1103 = vadd.s32 %v1102, 127
        %v1104 = vshll.u32 %v1103, 23
        %v1105 = vor.u32 4788187, %v1104
        %v1106 = vand.u32 2147483647, %v1105
        %v1108 = vcvt.s32.f32 %v1101
        %v1109 = vmul.f32 %v1108, %v1106
        %v1110 = vxor.u32 %v1109, 2147483648
        %v1111 = vsel %vm1028, %v1110, %v1109
        %v1112 = vsub.s32 4, %v1088
        %v1113 = vsel %vm1028, %v1112, %v1088
        %v1114 = vsel %vm1027, %v488, %v1111
        %v1115 = vsel %vm1027, 0, %v1113
        %v1116 = vcosq.f32.pop %v1114
        %v1117 = vsinq.f32.pop %v1114
        %vm1118 = vweird.f32 %v488
        %v1119 = vand.u32 %v1115, 3
        %vm1120 = vcmp.lt.s32.totalorder %v1119, 2
        %vm1121 = vcmp.eq.s32.totalorder %v1119, 0
        %v1122 = vxor.u32 %v1117, 2147483648
        %v1123 = vsel %vm1121, %v1116, %v1122
        %vm1124 = vcmp.eq.s32.totalorder %v1119, 2
        %v1125 = vxor.u32 %v1116, 2147483648
        %v1126 = vsel %vm1124, %v1125, %v1117
        %v1127 = vsel %vm1120, %v1123, %v1126
        %v1128 = vsel %vm1118, nan, %v1127
        %v1129 = vand.u32 2147483647, %v491
        %vm1130 = vcmp.le.f32.partialorder %v1129, 0.7853982
        %vm1131 = vcmp.lt.s32.totalorder %v491, 0
        %v1132 = vand.u32 %v491, 2139095040
        %v1133 = vshrl.u32 %v1132, 23
        %v1134 = vsub.s32 %v1133, 127
        %v1135 = vand.u32 2147483647, %v491
        %v1136 = vand.u32 %v1135, 8388607
        %v1137 = vor.u32 %v1136, 8388608
        %v1138 = vsub.s32 0, %v1137
        %v1139 = vadd.s32 %v1134, 1
        %vm1140 = vcmp.gt.s32.totalorder %v1139, 0
        %v1141 = vsel %vm1140, %v1139, 0
        %v1142 = vshrl.u32 %v1141, 5
        %v1143 = vand.u32 %v1141, 31
        %v1144 = vsub.s32 32, %v1143
        %v1145 = vshrl.u32 683565275, %v1144
        %v1146 = vshll.u32 683565275, %v1143
        %v1147 = vshrl.u32 2475754826, %v1144
        %v1148 = vor.u32 %v1146, %v1147
        %v1149 = vshll.u32 2475754826, %v1143
        %v1150 = vshrl.u32 2131351028, %v1144
        %v1151 = vor.u32 %v1149, %v1150
        %v1152 = vshll.u32 2131351028, %v1143
        %v1153 = vshrl.u32 2102212464, %v1144
        %v1154 = vor.u32 %v1152, %v1153
        %v1155 = vshll.u32 2102212464, %v1143
        %v1156 = vshrl.u32 920167782, %v1144
        %v1157 = vor.u32 %v1155, %v1156
        %v1158 = vshll.u32 920167782, %v1143
        %v1159 = vshrl.u32 1326507024, %v1144
        %v1160 = vor.u32 %v1158, %v1159
        %vm1161 = vcmp.lt.s32.totalorder %v1142, 1
        %vm1162 = vcmp.lt.s32.totalorder %v1142, 2
        %vm1163 = vcmp.lt.s32.totalorder %v1142, 3
        %vm1164 = vcmp.lt.s32.totalorder %v1142, 4
        %v1165 = vsel %vm1161, %v1145, %v1148
        %v1166 = vsel %vm1164, %v1154, 2102212464
        %v1167 = vsel %vm1163, %v1151, %v1166
        %v1168 = vsel %vm1162, %v1165, %v1167
        %v1169 = vsel %vm1161, %v1148, %v1151
        %v1170 = vsel %vm1164, %v1157, 920167782
        %v1171 = vsel %vm1163, %v1154, %v1170
        %v1172 = vsel %vm1162, %v1169, %v1171
        %v1173 = vsel %vm1161, %v1151, %v1154
        %v1174 = vsel %vm1164, %v1160, 1326507024
        %v1175 = vsel %vm1163, %v1157, %v1174
        %v1176 = vsel %vm1162, %v1173, %v1175
        %v1177 = vshll.u32 %v1137, 8
        %v1178 = vmul.u32.u64.compose %v1177, %v1176
        %v1179 = vextract.low.u32 %v1178
        %v1180 = vextract.high.u32 %v1178
        %v1181 = vmul.u32.u64.compose %v1177, %v1172
        %v1182 = vextract.low.u32 %v1181
        %v1183 = vextract.high.u32 %v1181
        %v1184 = vmul.u32 %v1177, %v1168
        %v1185 = vadd.s32 %v1180, %v1182
        %vm1186 = vc.u32 %v1180, %v1182
        %v1187 = vadd.s32 %v1183, 1
        %v1188 = vsel %vm1186, %v1187, %v1183
        %v1189 = vadd.s32 %v1184, %v1188
        %v1190 = vadd.s32 %v1189, 536870912
        %v1191 = vshrl.u32 %v1190, 30
        %v1192 = vshll.u32 %v1191, 30
        %v1193 = vsub.s32 %v1189, %v1192
        %vm1194 = vcmp.lt.s32.totalorder %v1193, 0
        %v1195 = vsub.s32 0, %v1193
        %v1196 = vsel %vm1194, %v1195, %v1193
        %v1197 = vclz %v1196
        %v1198 = vsub.s32 %v1197, 2
        %vm1199 = vcmp.gt.s32.totalorder 0, %v1198
        %v1200 = vsel %vm1199, 0, %v1198
        %v1201 = vsub.s32 32, %v1200
        %v1202 = vshll.u32 %v1193, %v1200
        %v1203 = vshrl.u32 %v1185, %v1201
        %v1204 = vor.u32 %v1202, %v1203
        %v1205 = vsub.s32 4294967266, %v1200
        %v1206 = vadd.s32 %v1205, 127
        %v1207 = vshll.u32 %v1206, 23
        %v1208 = vor.u32 4788187, %v1207
        %v1209 = vand.u32 2147483647, %v1208
        %v1211 = vcvt.s32.f32 %v1204
        %v1212 = vmul.f32 %v1211, %v1209
        %v1213 = vxor.u32 %v1212, 2147483648
        %v1214 = vsel %vm1131, %v1213, %v1212
        %v1215 = vsub.s32 4, %v1191
        %v1216 = vsel %vm1131, %v1215, %v1191
        %v1217 = vsel %vm1130, %v491, %v1214
        %v1218 = vsel %vm1130, 0, %v1216
        %v1219 = vcosq.f32.pop %v1217
        %v1220 = vsinq.f32.pop %v1217
        %vm1221 = vweird.f32 %v491
        %v1222 = vand.u32 %v1218, 3
        %vm1223 = vcmp.lt.s32.totalorder %v1222, 2
        %vm1224 = vcmp.eq.s32.totalorder %v1222, 0
        %v1225 = vxor.u32 %v1220, 2147483648
        %v1226 = vsel %vm1224, %v1219, %v1225
        %vm1227 = vcmp.eq.s32.totalorder %v1222, 2
        %v1228 = vxor.u32 %v1219, 2147483648
        %v1229 = vsel %vm1227, %v1228, %v1220
        %v1230 = vsel %vm1223, %v1226, %v1229
        %v1231 = vsel %vm1221, nan, %v1230
        %v1232 = vand.u32 2147483647, %v492
        %vm1233 = vcmp.le.f32.partialorder %v1232, 0.7853982
        %vm1234 = vcmp.lt.s32.totalorder %v492, 0
        %v1235 = vand.u32 %v492, 2139095040
        %v1236 = vshrl.u32 %v1235, 23
        %v1237 = vsub.s32 %v1236, 127
        %v1238 = vand.u32 2147483647, %v492
        %v1239 = vand.u32 %v1238, 8388607
        %v1240 = vor.u32 %v1239, 8388608
        %v1241 = vsub.s32 0, %v1240
        %v1242 = vadd.s32 %v1237, 1
        %vm1243 = vcmp.gt.s32.totalorder %v1242, 0
        %v1244 = vsel %vm1243, %v1242, 0
        %v1245 = vshrl.u32 %v1244, 5
        %v1246 = vand.u32 %v1244, 31
        %v1247 = vsub.s32 32, %v1246
        %v1248 = vshrl.u32 683565275, %v1247
        %v1249 = vshll.u32 683565275, %v1246
        %v1250 = vshrl.u32 2475754826, %v1247
        %v1251 = vor.u32 %v1249, %v1250
        %v1252 = vshll.u32 2475754826, %v1246
        %v1253 = vshrl.u32 2131351028, %v1247
        %v1254 = vor.u32 %v1252, %v1253
        %v1255 = vshll.u32 2131351028, %v1246
        %v1256 = vshrl.u32 2102212464, %v1247
        %v1257 = vor.u32 %v1255, %v1256
        %v1258 = vshll.u32 2102212464, %v1246
        %v1259 = vshrl.u32 920167782, %v1247
        %v1260 = vor.u32 %v1258, %v1259
        %v1261 = vshll.u32 920167782, %v1246
        %v1262 = vshrl.u32 1326507024, %v1247
        %v1263 = vor.u32 %v1261, %v1262
        %vm1264 = vcmp.lt.s32.totalorder %v1245, 1
        %vm1265 = vcmp.lt.s32.totalorder %v1245, 2
        %vm1266 = vcmp.lt.s32.totalorder %v1245, 3
        %vm1267 = vcmp.lt.s32.totalorder %v1245, 4
        %v1268 = vsel %vm1264, %v1248, %v1251
        %v1269 = vsel %vm1267, %v1257, 2102212464
        %v1270 = vsel %vm1266, %v1254, %v1269
        %v1271 = vsel %vm1265, %v1268, %v1270
        %v1272 = vsel %vm1264, %v1251, %v1254
        %v1273 = vsel %vm1267, %v1260, 920167782
        %v1274 = vsel %vm1266, %v1257, %v1273
        %v1275 = vsel %vm1265, %v1272, %v1274
        %v1276 = vsel %vm1264, %v1254, %v1257
        %v1277 = vsel %vm1267, %v1263, 1326507024
        %v1278 = vsel %vm1266, %v1260, %v1277
        %v1279 = vsel %vm1265, %v1276, %v1278
        %v1280 = vshll.u32 %v1240, 8
        %v1281 = vmul.u32.u64.compose %v1280, %v1279
        %v1282 = vextract.low.u32 %v1281
        %v1283 = vextract.high.u32 %v1281
        %v1284 = vmul.u32.u64.compose %v1280, %v1275
        %v1285 = vextract.low.u32 %v1284
        %v1286 = vextract.high.u32 %v1284
        %v1287 = vmul.u32 %v1280, %v1271
        %v1288 = vadd.s32 %v1283, %v1285
        %vm1289 = vc.u32 %v1283, %v1285
        %v1290 = vadd.s32 %v1286, 1
        %v1291 = vsel %vm1289, %v1290, %v1286
        %v1292 = vadd.s32 %v1287, %v1291
        %v1293 = vadd.s32 %v1292, 536870912
        %v1294 = vshrl.u32 %v1293, 30
        %v1295 = vshll.u32 %v1294, 30
        %v1296 = vsub.s32 %v1292, %v1295
        %vm1297 = vcmp.lt.s32.totalorder %v1296, 0
        %v1298 = vsub.s32 0, %v1296
        %v1299 = vsel %vm1297, %v1298, %v1296
        %v1300 = vclz %v1299
        %v1301 = vsub.s32 %v1300, 2
        %vm1302 = vcmp.gt.s32.totalorder 0, %v1301
        %v1303 = vsel %vm1302, 0, %v1301
        %v1304 = vsub.s32 32, %v1303
        %v1305 = vshll.u32 %v1296, %v1303
        %v1306 = vshrl.u32 %v1288, %v1304
        %v1307 = vor.u32 %v1305, %v1306
        %v1308 = vsub.s32 4294967266, %v1303
        %v1309 = vadd.s32 %v1308, 127
        %v1310 = vshll.u32 %v1309, 23
        %v1311 = vor.u32 4788187, %v1310
        %v1312 = vand.u32 2147483647, %v1311
        %v1314 = vcvt.s32.f32 %v1307
        %v1315 = vmul.f32 %v1314, %v1312
        %v1316 = vxor.u32 %v1315, 2147483648
        %v1317 = vsel %vm1234, %v1316, %v1315
        %v1318 = vsub.s32 4, %v1294
        %v1319 = vsel %vm1234, %v1318, %v1294
        %v1320 = vsel %vm1233, %v492, %v1317
        %v1321 = vsel %vm1233, 0, %v1319
        %v1322 = vcosq.f32.pop %v1320
        %v1323 = vsinq.f32.pop %v1320
        %vm1324 = vweird.f32 %v492
        %v1325 = vand.u32 %v1321, 3
        %vm1326 = vcmp.lt.s32.totalorder %v1325, 2
        %vm1327 = vcmp.eq.s32.totalorder %v1325, 0
        %v1328 = vxor.u32 %v1323, 2147483648
        %v1329 = vsel %vm1327, %v1322, %v1328
        %vm1330 = vcmp.eq.s32.totalorder %v1325, 2
        %v1331 = vxor.u32 %v1322, 2147483648
        %v1332 = vsel %vm1330, %v1331, %v1323
        %v1333 = vsel %vm1326, %v1329, %v1332
        %v1334 = vsel %vm1324, nan, %v1333
        %v1335 = vmul.f32 %v496, %v613
        %v1336 = vmul.f32 %v498, %v716
        %v1337 = vmul.f32 %v500, %v819
        %v1338 = vmul.f32 %v502, %v922
        %v1339 = vmul.f32 %v504, %v1025
        %v1340 = vmul.f32 %v506, %v1128
        %v1341 = vmul.f32 %v508, %v1231
        %v1342 = vmul.f32 %v510, %v1334
        %v1343 = vsub.f32 0.0, %v496
        %v1344 = vsub.f32 0.0, %v498
        %v1345 = vsub.f32 0.0, %v500
        %v1346 = vsub.f32 0.0, %v502
        %v1347 = vsub.f32 0.0, %v504
        %v1348 = vsub.f32 0.0, %v506
        %v1349 = vsub.f32 0.0, %v508
        %v1350 = vsub.f32 0.0, %v510
        %v1351 = vand.u32 2147483647, %v479
        %vm1352 = vcmp.le.f32.partialorder %v1351, 0.7853982
        %vm1353 = vcmp.lt.s32.totalorder %v479, 0
        %v1354 = vand.u32 %v479, 2139095040
        %v1355 = vshrl.u32 %v1354, 23
        %v1356 = vsub.s32 %v1355, 127
        %v1357 = vand.u32 2147483647, %v479
        %v1358 = vand.u32 %v1357, 8388607
        %v1359 = vor.u32 %v1358, 8388608
        %v1360 = vsub.s32 0, %v1359
        %v1361 = vadd.s32 %v1356, 1
        %vm1362 = vcmp.gt.s32.totalorder %v1361, 0
        %v1363 = vsel %vm1362, %v1361, 0
        %v1364 = vshrl.u32 %v1363, 5
        %v1365 = vand.u32 %v1363, 31
        %v1366 = vsub.s32 32, %v1365
        %v1367 = vshrl.u32 683565275, %v1366
        %v1368 = vshll.u32 683565275, %v1365
        %v1369 = vshrl.u32 2475754826, %v1366
        %v1370 = vor.u32 %v1368, %v1369
        %v1371 = vshll.u32 2475754826, %v1365
        %v1372 = vshrl.u32 2131351028, %v1366
        %v1373 = vor.u32 %v1371, %v1372
        %v1374 = vshll.u32 2131351028, %v1365
        %v1375 = vshrl.u32 2102212464, %v1366
        %v1376 = vor.u32 %v1374, %v1375
        %v1377 = vshll.u32 2102212464, %v1365
        %v1378 = vshrl.u32 920167782, %v1366
        %v1379 = vor.u32 %v1377, %v1378
        %v1380 = vshll.u32 920167782, %v1365
        %v1381 = vshrl.u32 1326507024, %v1366
        %v1382 = vor.u32 %v1380, %v1381
        %vm1383 = vcmp.lt.s32.totalorder %v1364, 1
        %vm1384 = vcmp.lt.s32.totalorder %v1364, 2
        %vm1385 = vcmp.lt.s32.totalorder %v1364, 3
        %vm1386 = vcmp.lt.s32.totalorder %v1364, 4
        %v1387 = vsel %vm1383, %v1367, %v1370
        %v1388 = vsel %vm1386, %v1376, 2102212464
        %v1389 = vsel %vm1385, %v1373, %v1388
        %v1390 = vsel %vm1384, %v1387, %v1389
        %v1391 = vsel %vm1383, %v1370, %v1373
        %v1392 = vsel %vm1386, %v1379, 920167782
        %v1393 = vsel %vm1385, %v1376, %v1392
        %v1394 = vsel %vm1384, %v1391, %v1393
        %v1395 = vsel %vm1383, %v1373, %v1376
        %v1396 = vsel %vm1386, %v1382, 1326507024
        %v1397 = vsel %vm1385, %v1379, %v1396
        %v1398 = vsel %vm1384, %v1395, %v1397
        %v1399 = vshll.u32 %v1359, 8
        %v1400 = vmul.u32.u64.compose %v1399, %v1398
        %v1401 = vextract.low.u32 %v1400
        %v1402 = vextract.high.u32 %v1400
        %v1403 = vmul.u32.u64.compose %v1399, %v1394
        %v1404 = vextract.low.u32 %v1403
        %v1405 = vextract.high.u32 %v1403
        %v1406 = vmul.u32 %v1399, %v1390
        %v1407 = vadd.s32 %v1402, %v1404
        %vm1408 = vc.u32 %v1402, %v1404
        %v1409 = vadd.s32 %v1405, 1
        %v1410 = vsel %vm1408, %v1409, %v1405
        %v1411 = vadd.s32 %v1406, %v1410
        %v1412 = vadd.s32 %v1411, 536870912
        %v1413 = vshrl.u32 %v1412, 30
        %v1414 = vshll.u32 %v1413, 30
        %v1415 = vsub.s32 %v1411, %v1414
        %vm1416 = vcmp.lt.s32.totalorder %v1415, 0
        %v1417 = vsub.s32 0, %v1415
        %v1418 = vsel %vm1416, %v1417, %v1415
        %v1419 = vclz %v1418
        %v1420 = vsub.s32 %v1419, 2
        %vm1421 = vcmp.gt.s32.totalorder 0, %v1420
        %v1422 = vsel %vm1421, 0, %v1420
        %v1423 = vsub.s32 32, %v1422
        %v1424 = vshll.u32 %v1415, %v1422
        %v1425 = vshrl.u32 %v1407, %v1423
        %v1426 = vor.u32 %v1424, %v1425
        %v1427 = vsub.s32 4294967266, %v1422
        %v1428 = vadd.s32 %v1427, 127
        %v1429 = vshll.u32 %v1428, 23
        %v1430 = vor.u32 4788187, %v1429
        %v1431 = vand.u32 2147483647, %v1430
        %v1433 = vcvt.s32.f32 %v1426
        %v1434 = vmul.f32 %v1433, %v1431
        %v1435 = vxor.u32 %v1434, 2147483648
        %v1436 = vsel %vm1353, %v1435, %v1434
        %v1437 = vsub.s32 4, %v1413
        %v1438 = vsel %vm1353, %v1437, %v1413
        %v1439 = vsel %vm1352, %v479, %v1436
        %v1440 = vsel %vm1352, 0, %v1438
        %v1441 = vcosq.f32.pop %v1439
        %v1442 = vsinq.f32.pop %v1439
        %vm1443 = vweird.f32 %v479
        %v1444 = vadd.s32 %v1440, 3
        %v1445 = vand.u32 %v1444, 3
        %vm1446 = vcmp.lt.s32.totalorder %v1445, 2
        %vm1447 = vcmp.eq.s32.totalorder %v1445, 0
        %v1448 = vxor.u32 %v1442, 2147483648
        %v1449 = vsel %vm1447, %v1441, %v1448
        %vm1450 = vcmp.eq.s32.totalorder %v1445, 2
        %v1451 = vxor.u32 %v1441, 2147483648
        %v1452 = vsel %vm1450, %v1451, %v1442
        %v1453 = vsel %vm1446, %v1449, %v1452
        %v1454 = vsel %vm1443, nan, %v1453
        %v1455 = vand.u32 2147483647, %v480
        %vm1456 = vcmp.le.f32.partialorder %v1455, 0.7853982
        %vm1457 = vcmp.lt.s32.totalorder %v480, 0
        %v1458 = vand.u32 %v480, 2139095040
        %v1459 = vshrl.u32 %v1458, 23
        %v1460 = vsub.s32 %v1459, 127
        %v1461 = vand.u32 2147483647, %v480
        %v1462 = vand.u32 %v1461, 8388607
        %v1463 = vor.u32 %v1462, 8388608
        %v1464 = vsub.s32 0, %v1463
        %v1465 = vadd.s32 %v1460, 1
        %vm1466 = vcmp.gt.s32.totalorder %v1465, 0
        %v1467 = vsel %vm1466, %v1465, 0
        %v1468 = vshrl.u32 %v1467, 5
        %v1469 = vand.u32 %v1467, 31
        %v1470 = vsub.s32 32, %v1469
        %v1471 = vshrl.u32 683565275, %v1470
        %v1472 = vshll.u32 683565275, %v1469
        %v1473 = vshrl.u32 2475754826, %v1470
        %v1474 = vor.u32 %v1472, %v1473
        %v1475 = vshll.u32 2475754826, %v1469
        %v1476 = vshrl.u32 2131351028, %v1470
        %v1477 = vor.u32 %v1475, %v1476
        %v1478 = vshll.u32 2131351028, %v1469
        %v1479 = vshrl.u32 2102212464, %v1470
        %v1480 = vor.u32 %v1478, %v1479
        %v1481 = vshll.u32 2102212464, %v1469
        %v1482 = vshrl.u32 920167782, %v1470
        %v1483 = vor.u32 %v1481, %v1482
        %v1484 = vshll.u32 920167782, %v1469
        %v1485 = vshrl.u32 1326507024, %v1470
        %v1486 = vor.u32 %v1484, %v1485
        %vm1487 = vcmp.lt.s32.totalorder %v1468, 1
        %vm1488 = vcmp.lt.s32.totalorder %v1468, 2
        %vm1489 = vcmp.lt.s32.totalorder %v1468, 3
        %vm1490 = vcmp.lt.s32.totalorder %v1468, 4
        %v1491 = vsel %vm1487, %v1471, %v1474
        %v1492 = vsel %vm1490, %v1480, 2102212464
        %v1493 = vsel %vm1489, %v1477, %v1492
        %v1494 = vsel %vm1488, %v1491, %v1493
        %v1495 = vsel %vm1487, %v1474, %v1477
        %v1496 = vsel %vm1490, %v1483, 920167782
        %v1497 = vsel %vm1489, %v1480, %v1496
        %v1498 = vsel %vm1488, %v1495, %v1497
        %v1499 = vsel %vm1487, %v1477, %v1480
        %v1500 = vsel %vm1490, %v1486, 1326507024
        %v1501 = vsel %vm1489, %v1483, %v1500
        %v1502 = vsel %vm1488, %v1499, %v1501
        %v1503 = vshll.u32 %v1463, 8
        %v1504 = vmul.u32.u64.compose %v1503, %v1502
        %v1505 = vextract.low.u32 %v1504
        %v1506 = vextract.high.u32 %v1504
        %v1507 = vmul.u32.u64.compose %v1503, %v1498
        %v1508 = vextract.low.u32 %v1507
        %v1509 = vextract.high.u32 %v1507
        %v1510 = vmul.u32 %v1503, %v1494
        %v1511 = vadd.s32 %v1506, %v1508
        %vm1512 = vc.u32 %v1506, %v1508
        %v1513 = vadd.s32 %v1509, 1
        %v1514 = vsel %vm1512, %v1513, %v1509
        %v1515 = vadd.s32 %v1510, %v1514
        %v1516 = vadd.s32 %v1515, 536870912
        %v1517 = vshrl.u32 %v1516, 30
        %v1518 = vshll.u32 %v1517, 30
        %v1519 = vsub.s32 %v1515, %v1518
        %vm1520 = vcmp.lt.s32.totalorder %v1519, 0
        %v1521 = vsub.s32 0, %v1519
        %v1522 = vsel %vm1520, %v1521, %v1519
        %v1523 = vclz %v1522
        %v1524 = vsub.s32 %v1523, 2
        %vm1525 = vcmp.gt.s32.totalorder 0, %v1524
        %v1526 = vsel %vm1525, 0, %v1524
        %v1527 = vsub.s32 32, %v1526
        %v1528 = vshll.u32 %v1519, %v1526
        %v1529 = vshrl.u32 %v1511, %v1527
        %v1530 = vor.u32 %v1528, %v1529
        %v1531 = vsub.s32 4294967266, %v1526
        %v1532 = vadd.s32 %v1531, 127
        %v1533 = vshll.u32 %v1532, 23
        %v1534 = vor.u32 4788187, %v1533
        %v1535 = vand.u32 2147483647, %v1534
        %v1537 = vcvt.s32.f32 %v1530
        %v1538 = vmul.f32 %v1537, %v1535
        %v1539 = vxor.u32 %v1538, 2147483648
        %v1540 = vsel %vm1457, %v1539, %v1538
        %v1541 = vsub.s32 4, %v1517
        %v1542 = vsel %vm1457, %v1541, %v1517
        %v1543 = vsel %vm1456, %v480, %v1540
        %v1544 = vsel %vm1456, 0, %v1542
        %v1545 = vcosq.f32.pop %v1543
        %v1546 = vsinq.f32.pop %v1543
        %vm1547 = vweird.f32 %v480
        %v1548 = vadd.s32 %v1544, 3
        %v1549 = vand.u32 %v1548, 3
        %vm1550 = vcmp.lt.s32.totalorder %v1549, 2
        %vm1551 = vcmp.eq.s32.totalorder %v1549, 0
        %v1552 = vxor.u32 %v1546, 2147483648
        %v1553 = vsel %vm1551, %v1545, %v1552
        %vm1554 = vcmp.eq.s32.totalorder %v1549, 2
        %v1555 = vxor.u32 %v1545, 2147483648
        %v1556 = vsel %vm1554, %v1555, %v1546
        %v1557 = vsel %vm1550, %v1553, %v1556
        %v1558 = vsel %vm1547, nan, %v1557
        %v1559 = vand.u32 2147483647, %v483
        %vm1560 = vcmp.le.f32.partialorder %v1559, 0.7853982
        %vm1561 = vcmp.lt.s32.totalorder %v483, 0
        %v1562 = vand.u32 %v483, 2139095040
        %v1563 = vshrl.u32 %v1562, 23
        %v1564 = vsub.s32 %v1563, 127
        %v1565 = vand.u32 2147483647, %v483
        %v1566 = vand.u32 %v1565, 8388607
        %v1567 = vor.u32 %v1566, 8388608
        %v1568 = vsub.s32 0, %v1567
        %v1569 = vadd.s32 %v1564, 1
        %vm1570 = vcmp.gt.s32.totalorder %v1569, 0
        %v1571 = vsel %vm1570, %v1569, 0
        %v1572 = vshrl.u32 %v1571, 5
        %v1573 = vand.u32 %v1571, 31
        %v1574 = vsub.s32 32, %v1573
        %v1575 = vshrl.u32 683565275, %v1574
        %v1576 = vshll.u32 683565275, %v1573
        %v1577 = vshrl.u32 2475754826, %v1574
        %v1578 = vor.u32 %v1576, %v1577
        %v1579 = vshll.u32 2475754826, %v1573
        %v1580 = vshrl.u32 2131351028, %v1574
        %v1581 = vor.u32 %v1579, %v1580
        %v1582 = vshll.u32 2131351028, %v1573
        %v1583 = vshrl.u32 2102212464, %v1574
        %v1584 = vor.u32 %v1582, %v1583
        %v1585 = vshll.u32 2102212464, %v1573
        %v1586 = vshrl.u32 920167782, %v1574
        %v1587 = vor.u32 %v1585, %v1586
        %v1588 = vshll.u32 920167782, %v1573
        %v1589 = vshrl.u32 1326507024, %v1574
        %v1590 = vor.u32 %v1588, %v1589
        %vm1591 = vcmp.lt.s32.totalorder %v1572, 1
        %vm1592 = vcmp.lt.s32.totalorder %v1572, 2
        %vm1593 = vcmp.lt.s32.totalorder %v1572, 3
        %vm1594 = vcmp.lt.s32.totalorder %v1572, 4
        %v1595 = vsel %vm1591, %v1575, %v1578
        %v1596 = vsel %vm1594, %v1584, 2102212464
        %v1597 = vsel %vm1593, %v1581, %v1596
        %v1598 = vsel %vm1592, %v1595, %v1597
        %v1599 = vsel %vm1591, %v1578, %v1581
        %v1600 = vsel %vm1594, %v1587, 920167782
        %v1601 = vsel %vm1593, %v1584, %v1600
        %v1602 = vsel %vm1592, %v1599, %v1601
        %v1603 = vsel %vm1591, %v1581, %v1584
        %v1604 = vsel %vm1594, %v1590, 1326507024
        %v1605 = vsel %vm1593, %v1587, %v1604
        %v1606 = vsel %vm1592, %v1603, %v1605
        %v1607 = vshll.u32 %v1567, 8
        %v1608 = vmul.u32.u64.compose %v1607, %v1606
        %v1609 = vextract.low.u32 %v1608
        %v1610 = vextract.high.u32 %v1608
        %v1611 = vmul.u32.u64.compose %v1607, %v1602
        %v1612 = vextract.low.u32 %v1611
        %v1613 = vextract.high.u32 %v1611
        %v1614 = vmul.u32 %v1607, %v1598
        %v1615 = vadd.s32 %v1610, %v1612
        %vm1616 = vc.u32 %v1610, %v1612
        %v1617 = vadd.s32 %v1613, 1
        %v1618 = vsel %vm1616, %v1617, %v1613
        %v1619 = vadd.s32 %v1614, %v1618
        %v1620 = vadd.s32 %v1619, 536870912
        %v1621 = vshrl.u32 %v1620, 30
        %v1622 = vshll.u32 %v1621, 30
        %v1623 = vsub.s32 %v1619, %v1622
        %vm1624 = vcmp.lt.s32.totalorder %v1623, 0
        %v1625 = vsub.s32 0, %v1623
        %v1626 = vsel %vm1624, %v1625, %v1623
        %v1627 = vclz %v1626
        %v1628 = vsub.s32 %v1627, 2
        %vm1629 = vcmp.gt.s32.totalorder 0, %v1628
        %v1630 = vsel %vm1629, 0, %v1628
        %v1631 = vsub.s32 32, %v1630
        %v1632 = vshll.u32 %v1623, %v1630
        %v1633 = vshrl.u32 %v1615, %v1631
        %v1634 = vor.u32 %v1632, %v1633
        %v1635 = vsub.s32 4294967266, %v1630
        %v1636 = vadd.s32 %v1635, 127
        %v1637 = vshll.u32 %v1636, 23
        %v1638 = vor.u32 4788187, %v1637
        %v1639 = vand.u32 2147483647, %v1638
        %v1641 = vcvt.s32.f32 %v1634
        %v1642 = vmul.f32 %v1641, %v1639
        %v1643 = vxor.u32 %v1642, 2147483648
        %v1644 = vsel %vm1561, %v1643, %v1642
        %v1645 = vsub.s32 4, %v1621
        %v1646 = vsel %vm1561, %v1645, %v1621
        %v1647 = vsel %vm1560, %v483, %v1644
        %v1648 = vsel %vm1560, 0, %v1646
        %v1649 = vcosq.f32.pop %v1647
        %v1650 = vsinq.f32.pop %v1647
        %vm1651 = vweird.f32 %v483
        %v1652 = vadd.s32 %v1648, 3
        %v1653 = vand.u32 %v1652, 3
        %vm1654 = vcmp.lt.s32.totalorder %v1653, 2
        %vm1655 = vcmp.eq.s32.totalorder %v1653, 0
        %v1656 = vxor.u32 %v1650, 2147483648
        %v1657 = vsel %vm1655, %v1649, %v1656
        %vm1658 = vcmp.eq.s32.totalorder %v1653, 2
        %v1659 = vxor.u32 %v1649, 2147483648
        %v1660 = vsel %vm1658, %v1659, %v1650
        %v1661 = vsel %vm1654, %v1657, %v1660
        %v1662 = vsel %vm1651, nan, %v1661
        %v1663 = vand.u32 2147483647, %v484
        %vm1664 = vcmp.le.f32.partialorder %v1663, 0.7853982
        %vm1665 = vcmp.lt.s32.totalorder %v484, 0
        %v1666 = vand.u32 %v484, 2139095040
        %v1667 = vshrl.u32 %v1666, 23
        %v1668 = vsub.s32 %v1667, 127
        %v1669 = vand.u32 2147483647, %v484
        %v1670 = vand.u32 %v1669, 8388607
        %v1671 = vor.u32 %v1670, 8388608
        %v1672 = vsub.s32 0, %v1671
        %v1673 = vadd.s32 %v1668, 1
        %vm1674 = vcmp.gt.s32.totalorder %v1673, 0
        %v1675 = vsel %vm1674, %v1673, 0
        %v1676 = vshrl.u32 %v1675, 5
        %v1677 = vand.u32 %v1675, 31
        %v1678 = vsub.s32 32, %v1677
        %v1679 = vshrl.u32 683565275, %v1678
        %v1680 = vshll.u32 683565275, %v1677
        %v1681 = vshrl.u32 2475754826, %v1678
        %v1682 = vor.u32 %v1680, %v1681
        %v1683 = vshll.u32 2475754826, %v1677
        %v1684 = vshrl.u32 2131351028, %v1678
        %v1685 = vor.u32 %v1683, %v1684
        %v1686 = vshll.u32 2131351028, %v1677
        %v1687 = vshrl.u32 2102212464, %v1678
        %v1688 = vor.u32 %v1686, %v1687
        %v1689 = vshll.u32 2102212464, %v1677
        %v1690 = vshrl.u32 920167782, %v1678
        %v1691 = vor.u32 %v1689, %v1690
        %v1692 = vshll.u32 920167782, %v1677
        %v1693 = vshrl.u32 1326507024, %v1678
        %v1694 = vor.u32 %v1692, %v1693
        %vm1695 = vcmp.lt.s32.totalorder %v1676, 1
        %vm1696 = vcmp.lt.s32.totalorder %v1676, 2
        %vm1697 = vcmp.lt.s32.totalorder %v1676, 3
        %vm1698 = vcmp.lt.s32.totalorder %v1676, 4
        %v1699 = vsel %vm1695, %v1679, %v1682
        %v1700 = vsel %vm1698, %v1688, 2102212464
        %v1701 = vsel %vm1697, %v1685, %v1700
        %v1702 = vsel %vm1696, %v1699, %v1701
        %v1703 = vsel %vm1695, %v1682, %v1685
        %v1704 = vsel %vm1698, %v1691, 920167782
        %v1705 = vsel %vm1697, %v1688, %v1704
        %v1706 = vsel %vm1696, %v1703, %v1705
        %v1707 = vsel %vm1695, %v1685, %v1688
        %v1708 = vsel %vm1698, %v1694, 1326507024
        %v1709 = vsel %vm1697, %v1691, %v1708
        %v1710 = vsel %vm1696, %v1707, %v1709
        %v1711 = vshll.u32 %v1671, 8
        %v1712 = vmul.u32.u64.compose %v1711, %v1710
        %v1713 = vextract.low.u32 %v1712
        %v1714 = vextract.high.u32 %v1712
        %v1715 = vmul.u32.u64.compose %v1711, %v1706
        %v1716 = vextract.low.u32 %v1715
        %v1717 = vextract.high.u32 %v1715
        %v1718 = vmul.u32 %v1711, %v1702
        %v1719 = vadd.s32 %v1714, %v1716
        %vm1720 = vc.u32 %v1714, %v1716
        %v1721 = vadd.s32 %v1717, 1
        %v1722 = vsel %vm1720, %v1721, %v1717
        %v1723 = vadd.s32 %v1718, %v1722
        %v1724 = vadd.s32 %v1723, 536870912
        %v1725 = vshrl.u32 %v1724, 30
        %v1726 = vshll.u32 %v1725, 30
        %v1727 = vsub.s32 %v1723, %v1726
        %vm1728 = vcmp.lt.s32.totalorder %v1727, 0
        %v1729 = vsub.s32 0, %v1727
        %v1730 = vsel %vm1728, %v1729, %v1727
        %v1731 = vclz %v1730
        %v1732 = vsub.s32 %v1731, 2
        %vm1733 = vcmp.gt.s32.totalorder 0, %v1732
        %v1734 = vsel %vm1733, 0, %v1732
        %v1735 = vsub.s32 32, %v1734
        %v1736 = vshll.u32 %v1727, %v1734
        %v1737 = vshrl.u32 %v1719, %v1735
        %v1738 = vor.u32 %v1736, %v1737
        %v1739 = vsub.s32 4294967266, %v1734
        %v1740 = vadd.s32 %v1739, 127
        %v1741 = vshll.u32 %v1740, 23
        %v1742 = vor.u32 4788187, %v1741
        %v1743 = vand.u32 2147483647, %v1742
        %v1745 = vcvt.s32.f32 %v1738
        %v1746 = vmul.f32 %v1745, %v1743
        %v1747 = vxor.u32 %v1746, 2147483648
        %v1748 = vsel %vm1665, %v1747, %v1746
        %v1749 = vsub.s32 4, %v1725
        %v1750 = vsel %vm1665, %v1749, %v1725
        %v1751 = vsel %vm1664, %v484, %v1748
        %v1752 = vsel %vm1664, 0, %v1750
        %v1753 = vcosq.f32.pop %v1751
        %v1754 = vsinq.f32.pop %v1751
        %vm1755 = vweird.f32 %v484
        %v1756 = vadd.s32 %v1752, 3
        %v1757 = vand.u32 %v1756, 3
        %vm1758 = vcmp.lt.s32.totalorder %v1757, 2
        %vm1759 = vcmp.eq.s32.totalorder %v1757, 0
        %v1760 = vxor.u32 %v1754, 2147483648
        %v1761 = vsel %vm1759, %v1753, %v1760
        %vm1762 = vcmp.eq.s32.totalorder %v1757, 2
        %v1763 = vxor.u32 %v1753, 2147483648
        %v1764 = vsel %vm1762, %v1763, %v1754
        %v1765 = vsel %vm1758, %v1761, %v1764
        %v1766 = vsel %vm1755, nan, %v1765
        %v1767 = vand.u32 2147483647, %v487
        %vm1768 = vcmp.le.f32.partialorder %v1767, 0.7853982
        %vm1769 = vcmp.lt.s32.totalorder %v487, 0
        %v1770 = vand.u32 %v487, 2139095040
        %v1771 = vshrl.u32 %v1770, 23
        %v1772 = vsub.s32 %v1771, 127
        %v1773 = vand.u32 2147483647, %v487
        %v1774 = vand.u32 %v1773, 8388607
        %v1775 = vor.u32 %v1774, 8388608
        %v1776 = vsub.s32 0, %v1775
        %v1777 = vadd.s32 %v1772, 1
        %vm1778 = vcmp.gt.s32.totalorder %v1777, 0
        %v1779 = vsel %vm1778, %v1777, 0
        %v1780 = vshrl.u32 %v1779, 5
        %v1781 = vand.u32 %v1779, 31
        %v1782 = vsub.s32 32, %v1781
        %v1783 = vshrl.u32 683565275, %v1782
        %v1784 = vshll.u32 683565275, %v1781
        %v1785 = vshrl.u32 2475754826, %v1782
        %v1786 = vor.u32 %v1784, %v1785
        %v1787 = vshll.u32 2475754826, %v1781
        %v1788 = vshrl.u32 2131351028, %v1782
        %v1789 = vor.u32 %v1787, %v1788
        %v1790 = vshll.u32 2131351028, %v1781
        %v1791 = vshrl.u32 2102212464, %v1782
        %v1792 = vor.u32 %v1790, %v1791
        %v1793 = vshll.u32 2102212464, %v1781
        %v1794 = vshrl.u32 920167782, %v1782
        %v1795 = vor.u32 %v1793, %v1794
        %v1796 = vshll.u32 920167782, %v1781
        %v1797 = vshrl.u32 1326507024, %v1782
        %v1798 = vor.u32 %v1796, %v1797
        %vm1799 = vcmp.lt.s32.totalorder %v1780, 1
        %vm1800 = vcmp.lt.s32.totalorder %v1780, 2
        %vm1801 = vcmp.lt.s32.totalorder %v1780, 3
        %vm1802 = vcmp.lt.s32.totalorder %v1780, 4
        %v1803 = vsel %vm1799, %v1783, %v1786
        %v1804 = vsel %vm1802, %v1792, 2102212464
        %v1805 = vsel %vm1801, %v1789, %v1804
        %v1806 = vsel %vm1800, %v1803, %v1805
        %v1807 = vsel %vm1799, %v1786, %v1789
        %v1808 = vsel %vm1802, %v1795, 920167782
        %v1809 = vsel %vm1801, %v1792, %v1808
        %v1810 = vsel %vm1800, %v1807, %v1809
        %v1811 = vsel %vm1799, %v1789, %v1792
        %v1812 = vsel %vm1802, %v1798, 1326507024
        %v1813 = vsel %vm1801, %v1795, %v1812
        %v1814 = vsel %vm1800, %v1811, %v1813
        %v1815 = vshll.u32 %v1775, 8
        %v1816 = vmul.u32.u64.compose %v1815, %v1814
        %v1817 = vextract.low.u32 %v1816
        %v1818 = vextract.high.u32 %v1816
        %v1819 = vmul.u32.u64.compose %v1815, %v1810
        %v1820 = vextract.low.u32 %v1819
        %v1821 = vextract.high.u32 %v1819
        %v1822 = vmul.u32 %v1815, %v1806
        %v1823 = vadd.s32 %v1818, %v1820
        %vm1824 = vc.u32 %v1818, %v1820
        %v1825 = vadd.s32 %v1821, 1
        %v1826 = vsel %vm1824, %v1825, %v1821
        %v1827 = vadd.s32 %v1822, %v1826
        %v1828 = vadd.s32 %v1827, 536870912
        %v1829 = vshrl.u32 %v1828, 30
        %v1830 = vshll.u32 %v1829, 30
        %v1831 = vsub.s32 %v1827, %v1830
        %vm1832 = vcmp.lt.s32.totalorder %v1831, 0
        %v1833 = vsub.s32 0, %v1831
        %v1834 = vsel %vm1832, %v1833, %v1831
        %v1835 = vclz %v1834
        %v1836 = vsub.s32 %v1835, 2
        %vm1837 = vcmp.gt.s32.totalorder 0, %v1836
        %v1838 = vsel %vm1837, 0, %v1836
        %v1839 = vsub.s32 32, %v1838
        %v1840 = vshll.u32 %v1831, %v1838
        %v1841 = vshrl.u32 %v1823, %v1839
        %v1842 = vor.u32 %v1840, %v1841
        %v1843 = vsub.s32 4294967266, %v1838
        %v1844 = vadd.s32 %v1843, 127
        %v1845 = vshll.u32 %v1844, 23
        %v1846 = vor.u32 4788187, %v1845
        %v1847 = vand.u32 2147483647, %v1846
        %v1849 = vcvt.s32.f32 %v1842
        %v1850 = vmul.f32 %v1849, %v1847
        %v1851 = vxor.u32 %v1850, 2147483648
        %v1852 = vsel %vm1769, %v1851, %v1850
        %v1853 = vsub.s32 4, %v1829
        %v1854 = vsel %vm1769, %v1853, %v1829
        %v1855 = vsel %vm1768, %v487, %v1852
        %v1856 = vsel %vm1768, 0, %v1854
        %v1857 = vcosq.f32.pop %v1855
        %v1858 = vsinq.f32.pop %v1855
        %vm1859 = vweird.f32 %v487
        %v1860 = vadd.s32 %v1856, 3
        %v1861 = vand.u32 %v1860, 3
        %vm1862 = vcmp.lt.s32.totalorder %v1861, 2
        %vm1863 = vcmp.eq.s32.totalorder %v1861, 0
        %v1864 = vxor.u32 %v1858, 2147483648
        %v1865 = vsel %vm1863, %v1857, %v1864
        %vm1866 = vcmp.eq.s32.totalorder %v1861, 2
        %v1867 = vxor.u32 %v1857, 2147483648
        %v1868 = vsel %vm1866, %v1867, %v1858
        %v1869 = vsel %vm1862, %v1865, %v1868
        %v1870 = vsel %vm1859, nan, %v1869
        %v1871 = vand.u32 2147483647, %v488
        %vm1872 = vcmp.le.f32.partialorder %v1871, 0.7853982
        %vm1873 = vcmp.lt.s32.totalorder %v488, 0
        %v1874 = vand.u32 %v488, 2139095040
        %v1875 = vshrl.u32 %v1874, 23
        %v1876 = vsub.s32 %v1875, 127
        %v1877 = vand.u32 2147483647, %v488
        %v1878 = vand.u32 %v1877, 8388607
        %v1879 = vor.u32 %v1878, 8388608
        %v1880 = vsub.s32 0, %v1879
        %v1881 = vadd.s32 %v1876, 1
        %vm1882 = vcmp.gt.s32.totalorder %v1881, 0
        %v1883 = vsel %vm1882, %v1881, 0
        %v1884 = vshrl.u32 %v1883, 5
        %v1885 = vand.u32 %v1883, 31
        %v1886 = vsub.s32 32, %v1885
        %v1887 = vshrl.u32 683565275, %v1886
        %v1888 = vshll.u32 683565275, %v1885
        %v1889 = vshrl.u32 2475754826, %v1886
        %v1890 = vor.u32 %v1888, %v1889
        %v1891 = vshll.u32 2475754826, %v1885
        %v1892 = vshrl.u32 2131351028, %v1886
        %v1893 = vor.u32 %v1891, %v1892
        %v1894 = vshll.u32 2131351028, %v1885
        %v1895 = vshrl.u32 2102212464, %v1886
        %v1896 = vor.u32 %v1894, %v1895
        %v1897 = vshll.u32 2102212464, %v1885
        %v1898 = vshrl.u32 920167782, %v1886
        %v1899 = vor.u32 %v1897, %v1898
        %v1900 = vshll.u32 920167782, %v1885
        %v1901 = vshrl.u32 1326507024, %v1886
        %v1902 = vor.u32 %v1900, %v1901
        %vm1903 = vcmp.lt.s32.totalorder %v1884, 1
        %vm1904 = vcmp.lt.s32.totalorder %v1884, 2
        %vm1905 = vcmp.lt.s32.totalorder %v1884, 3
        %vm1906 = vcmp.lt.s32.totalorder %v1884, 4
        %v1907 = vsel %vm1903, %v1887, %v1890
        %v1908 = vsel %vm1906, %v1896, 2102212464
        %v1909 = vsel %vm1905, %v1893, %v1908
        %v1910 = vsel %vm1904, %v1907, %v1909
        %v1911 = vsel %vm1903, %v1890, %v1893
        %v1912 = vsel %vm1906, %v1899, 920167782
        %v1913 = vsel %vm1905, %v1896, %v1912
        %v1914 = vsel %vm1904, %v1911, %v1913
        %v1915 = vsel %vm1903, %v1893, %v1896
        %v1916 = vsel %vm1906, %v1902, 1326507024
        %v1917 = vsel %vm1905, %v1899, %v1916
        %v1918 = vsel %vm1904, %v1915, %v1917
        %v1919 = vshll.u32 %v1879, 8
        %v1920 = vmul.u32.u64.compose %v1919, %v1918
        %v1921 = vextract.low.u32 %v1920
        %v1922 = vextract.high.u32 %v1920
        %v1923 = vmul.u32.u64.compose %v1919, %v1914
        %v1924 = vextract.low.u32 %v1923
        %v1925 = vextract.high.u32 %v1923
        %v1926 = vmul.u32 %v1919, %v1910
        %v1927 = vadd.s32 %v1922, %v1924
        %vm1928 = vc.u32 %v1922, %v1924
        %v1929 = vadd.s32 %v1925, 1
        %v1930 = vsel %vm1928, %v1929, %v1925
        %v1931 = vadd.s32 %v1926, %v1930
        %v1932 = vadd.s32 %v1931, 536870912
        %v1933 = vshrl.u32 %v1932, 30
        %v1934 = vshll.u32 %v1933, 30
        %v1935 = vsub.s32 %v1931, %v1934
        %vm1936 = vcmp.lt.s32.totalorder %v1935, 0
        %v1937 = vsub.s32 0, %v1935
        %v1938 = vsel %vm1936, %v1937, %v1935
        %v1939 = vclz %v1938
        %v1940 = vsub.s32 %v1939, 2
        %vm1941 = vcmp.gt.s32.totalorder 0, %v1940
        %v1942 = vsel %vm1941, 0, %v1940
        %v1943 = vsub.s32 32, %v1942
        %v1944 = vshll.u32 %v1935, %v1942
        %v1945 = vshrl.u32 %v1927, %v1943
        %v1946 = vor.u32 %v1944, %v1945
        %v1947 = vsub.s32 4294967266, %v1942
        %v1948 = vadd.s32 %v1947, 127
        %v1949 = vshll.u32 %v1948, 23
        %v1950 = vor.u32 4788187, %v1949
        %v1951 = vand.u32 2147483647, %v1950
        %v1953 = vcvt.s32.f32 %v1946
        %v1954 = vmul.f32 %v1953, %v1951
        %v1955 = vxor.u32 %v1954, 2147483648
        %v1956 = vsel %vm1873, %v1955, %v1954
        %v1957 = vsub.s32 4, %v1933
        %v1958 = vsel %vm1873, %v1957, %v1933
        %v1959 = vsel %vm1872, %v488, %v1956
        %v1960 = vsel %vm1872, 0, %v1958
        %v1961 = vcosq.f32.pop %v1959
        %v1962 = vsinq.f32.pop %v1959
        %vm1963 = vweird.f32 %v488
        %v1964 = vadd.s32 %v1960, 3
        %v1965 = vand.u32 %v1964, 3
        %vm1966 = vcmp.lt.s32.totalorder %v1965, 2
        %vm1967 = vcmp.eq.s32.totalorder %v1965, 0
        %v1968 = vxor.u32 %v1962, 2147483648
        %v1969 = vsel %vm1967, %v1961, %v1968
        %vm1970 = vcmp.eq.s32.totalorder %v1965, 2
        %v1971 = vxor.u32 %v1961, 2147483648
        %v1972 = vsel %vm1970, %v1971, %v1962
        %v1973 = vsel %vm1966, %v1969, %v1972
        %v1974 = vsel %vm1963, nan, %v1973
        %v1975 = vand.u32 2147483647, %v491
        %vm1976 = vcmp.le.f32.partialorder %v1975, 0.7853982
        %vm1977 = vcmp.lt.s32.totalorder %v491, 0
        %v1978 = vand.u32 %v491, 2139095040
        %v1979 = vshrl.u32 %v1978, 23
        %v1980 = vsub.s32 %v1979, 127
        %v1981 = vand.u32 2147483647, %v491
        %v1982 = vand.u32 %v1981, 8388607
        %v1983 = vor.u32 %v1982, 8388608
        %v1984 = vsub.s32 0, %v1983
        %v1985 = vadd.s32 %v1980, 1
        %vm1986 = vcmp.gt.s32.totalorder %v1985, 0
        %v1987 = vsel %vm1986, %v1985, 0
        %v1988 = vshrl.u32 %v1987, 5
        %v1989 = vand.u32 %v1987, 31
        %v1990 = vsub.s32 32, %v1989
        %v1991 = vshrl.u32 683565275, %v1990
        %v1992 = vshll.u32 683565275, %v1989
        %v1993 = vshrl.u32 2475754826, %v1990
        %v1994 = vor.u32 %v1992, %v1993
        %v1995 = vshll.u32 2475754826, %v1989
        %v1996 = vshrl.u32 2131351028, %v1990
        %v1997 = vor.u32 %v1995, %v1996
        %v1998 = vshll.u32 2131351028, %v1989
        %v1999 = vshrl.u32 2102212464, %v1990
        %v2000 = vor.u32 %v1998, %v1999
        %v2001 = vshll.u32 2102212464, %v1989
        %v2002 = vshrl.u32 920167782, %v1990
        %v2003 = vor.u32 %v2001, %v2002
        %v2004 = vshll.u32 920167782, %v1989
        %v2005 = vshrl.u32 1326507024, %v1990
        %v2006 = vor.u32 %v2004, %v2005
        %vm2007 = vcmp.lt.s32.totalorder %v1988, 1
        %vm2008 = vcmp.lt.s32.totalorder %v1988, 2
        %vm2009 = vcmp.lt.s32.totalorder %v1988, 3
        %vm2010 = vcmp.lt.s32.totalorder %v1988, 4
        %v2011 = vsel %vm2007, %v1991, %v1994
        %v2012 = vsel %vm2010, %v2000, 2102212464
        %v2013 = vsel %vm2009, %v1997, %v2012
        %v2014 = vsel %vm2008, %v2011, %v2013
        %v2015 = vsel %vm2007, %v1994, %v1997
        %v2016 = vsel %vm2010, %v2003, 920167782
        %v2017 = vsel %vm2009, %v2000, %v2016
        %v2018 = vsel %vm2008, %v2015, %v2017
        %v2019 = vsel %vm2007, %v1997, %v2000
        %v2020 = vsel %vm2010, %v2006, 1326507024
        %v2021 = vsel %vm2009, %v2003, %v2020
        %v2022 = vsel %vm2008, %v2019, %v2021
        %v2023 = vshll.u32 %v1983, 8
        %v2024 = vmul.u32.u64.compose %v2023, %v2022
        %v2025 = vextract.low.u32 %v2024
        %v2026 = vextract.high.u32 %v2024
        %v2027 = vmul.u32.u64.compose %v2023, %v2018
        %v2028 = vextract.low.u32 %v2027
        %v2029 = vextract.high.u32 %v2027
        %v2030 = vmul.u32 %v2023, %v2014
        %v2031 = vadd.s32 %v2026, %v2028
        %vm2032 = vc.u32 %v2026, %v2028
        %v2033 = vadd.s32 %v2029, 1
        %v2034 = vsel %vm2032, %v2033, %v2029
        %v2035 = vadd.s32 %v2030, %v2034
        %v2036 = vadd.s32 %v2035, 536870912
        %v2037 = vshrl.u32 %v2036, 30
        %v2038 = vshll.u32 %v2037, 30
        %v2039 = vsub.s32 %v2035, %v2038
        %vm2040 = vcmp.lt.s32.totalorder %v2039, 0
        %v2041 = vsub.s32 0, %v2039
        %v2042 = vsel %vm2040, %v2041, %v2039
        %v2043 = vclz %v2042
        %v2044 = vsub.s32 %v2043, 2
        %vm2045 = vcmp.gt.s32.totalorder 0, %v2044
        %v2046 = vsel %vm2045, 0, %v2044
        %v2047 = vsub.s32 32, %v2046
        %v2048 = vshll.u32 %v2039, %v2046
        %v2049 = vshrl.u32 %v2031, %v2047
        %v2050 = vor.u32 %v2048, %v2049
        %v2051 = vsub.s32 4294967266, %v2046
        %v2052 = vadd.s32 %v2051, 127
        %v2053 = vshll.u32 %v2052, 23
        %v2054 = vor.u32 4788187, %v2053
        %v2055 = vand.u32 2147483647, %v2054
        %v2057 = vcvt.s32.f32 %v2050
        %v2058 = vmul.f32 %v2057, %v2055
        %v2059 = vxor.u32 %v2058, 2147483648
        %v2060 = vsel %vm1977, %v2059, %v2058
        %v2061 = vsub.s32 4, %v2037
        %v2062 = vsel %vm1977, %v2061, %v2037
        %v2063 = vsel %vm1976, %v491, %v2060
        %v2064 = vsel %vm1976, 0, %v2062
        %v2065 = vcosq.f32.pop %v2063
        %v2066 = vsinq.f32.pop %v2063
        %vm2067 = vweird.f32 %v491
        %v2068 = vadd.s32 %v2064, 3
        %v2069 = vand.u32 %v2068, 3
        %vm2070 = vcmp.lt.s32.totalorder %v2069, 2
        %vm2071 = vcmp.eq.s32.totalorder %v2069, 0
        %v2072 = vxor.u32 %v2066, 2147483648
        %v2073 = vsel %vm2071, %v2065, %v2072
        %vm2074 = vcmp.eq.s32.totalorder %v2069, 2
        %v2075 = vxor.u32 %v2065, 2147483648
        %v2076 = vsel %vm2074, %v2075, %v2066
        %v2077 = vsel %vm2070, %v2073, %v2076
        %v2078 = vsel %vm2067, nan, %v2077
        %v2079 = vand.u32 2147483647, %v492
        %vm2080 = vcmp.le.f32.partialorder %v2079, 0.7853982
        %vm2081 = vcmp.lt.s32.totalorder %v492, 0
        %v2082 = vand.u32 %v492, 2139095040
        %v2083 = vshrl.u32 %v2082, 23
        %v2084 = vsub.s32 %v2083, 127
        %v2085 = vand.u32 2147483647, %v492
        %v2086 = vand.u32 %v2085, 8388607
        %v2087 = vor.u32 %v2086, 8388608
        %v2088 = vsub.s32 0, %v2087
        %v2089 = vadd.s32 %v2084, 1
        %vm2090 = vcmp.gt.s32.totalorder %v2089, 0
        %v2091 = vsel %vm2090, %v2089, 0
        %v2092 = vshrl.u32 %v2091, 5
        %v2093 = vand.u32 %v2091, 31
        %v2094 = vsub.s32 32, %v2093
        %v2095 = vshrl.u32 683565275, %v2094
        %v2096 = vshll.u32 683565275, %v2093
        %v2097 = vshrl.u32 2475754826, %v2094
        %v2098 = vor.u32 %v2096, %v2097
        %v2099 = vshll.u32 2475754826, %v2093
        %v2100 = vshrl.u32 2131351028, %v2094
        %v2101 = vor.u32 %v2099, %v2100
        %v2102 = vshll.u32 2131351028, %v2093
        %v2103 = vshrl.u32 2102212464, %v2094
        %v2104 = vor.u32 %v2102, %v2103
        %v2105 = vshll.u32 2102212464, %v2093
        %v2106 = vshrl.u32 920167782, %v2094
        %v2107 = vor.u32 %v2105, %v2106
        %v2108 = vshll.u32 920167782, %v2093
        %v2109 = vshrl.u32 1326507024, %v2094
        %v2110 = vor.u32 %v2108, %v2109
        %vm2111 = vcmp.lt.s32.totalorder %v2092, 1
        %vm2112 = vcmp.lt.s32.totalorder %v2092, 2
        %vm2113 = vcmp.lt.s32.totalorder %v2092, 3
        %vm2114 = vcmp.lt.s32.totalorder %v2092, 4
        %v2115 = vsel %vm2111, %v2095, %v2098
        %v2116 = vsel %vm2114, %v2104, 2102212464
        %v2117 = vsel %vm2113, %v2101, %v2116
        %v2118 = vsel %vm2112, %v2115, %v2117
        %v2119 = vsel %vm2111, %v2098, %v2101
        %v2120 = vsel %vm2114, %v2107, 920167782
        %v2121 = vsel %vm2113, %v2104, %v2120
        %v2122 = vsel %vm2112, %v2119, %v2121
        %v2123 = vsel %vm2111, %v2101, %v2104
        %v2124 = vsel %vm2114, %v2110, 1326507024
        %v2125 = vsel %vm2113, %v2107, %v2124
        %v2126 = vsel %vm2112, %v2123, %v2125
        %v2127 = vshll.u32 %v2087, 8
        %v2128 = vmul.u32.u64.compose %v2127, %v2126
        %v2129 = vextract.low.u32 %v2128
        %v2130 = vextract.high.u32 %v2128
        %v2131 = vmul.u32.u64.compose %v2127, %v2122
        %v2132 = vextract.low.u32 %v2131
        %v2133 = vextract.high.u32 %v2131
        %v2134 = vmul.u32 %v2127, %v2118
        %v2135 = vadd.s32 %v2130, %v2132
        %vm2136 = vc.u32 %v2130, %v2132
        %v2137 = vadd.s32 %v2133, 1
        %v2138 = vsel %vm2136, %v2137, %v2133
        %v2139 = vadd.s32 %v2134, %v2138
        %v2140 = vadd.s32 %v2139, 536870912
        %v2141 = vshrl.u32 %v2140, 30
        %v2142 = vshll.u32 %v2141, 30
        %v2143 = vsub.s32 %v2139, %v2142
        %vm2144 = vcmp.lt.s32.totalorder %v2143, 0
        %v2145 = vsub.s32 0, %v2143
        %v2146 = vsel %vm2144, %v2145, %v2143
        %v2147 = vclz %v2146
        %v2148 = vsub.s32 %v2147, 2
        %vm2149 = vcmp.gt.s32.totalorder 0, %v2148
        %v2150 = vsel %vm2149, 0, %v2148
        %v2151 = vsub.s32 32, %v2150
        %v2152 = vshll.u32 %v2143, %v2150
        %v2153 = vshrl.u32 %v2135, %v2151
        %v2154 = vor.u32 %v2152, %v2153
        %v2155 = vsub.s32 4294967266, %v2150
        %v2156 = vadd.s32 %v2155, 127
        %v2157 = vshll.u32 %v2156, 23
        %v2158 = vor.u32 4788187, %v2157
        %v2159 = vand.u32 2147483647, %v2158
        %v2161 = vcvt.s32.f32 %v2154
        %v2162 = vmul.f32 %v2161, %v2159
        %v2163 = vxor.u32 %v2162, 2147483648
        %v2164 = vsel %vm2081, %v2163, %v2162
        %v2165 = vsub.s32 4, %v2141
        %v2166 = vsel %vm2081, %v2165, %v2141
        %v2167 = vsel %vm2080, %v492, %v2164
        %v2168 = vsel %vm2080, 0, %v2166
        %v2169 = vcosq.f32.pop %v2167
        %v2170 = vsinq.f32.pop %v2167
        %vm2171 = vweird.f32 %v492
        %v2172 = vadd.s32 %v2168, 3
        %v2173 = vand.u32 %v2172, 3
        %vm2174 = vcmp.lt.s32.totalorder %v2173, 2
        %vm2175 = vcmp.eq.s32.totalorder %v2173, 0
        %v2176 = vxor.u32 %v2170, 2147483648
        %v2177 = vsel %vm2175, %v2169, %v2176
        %vm2178 = vcmp.eq.s32.totalorder %v2173, 2
        %v2179 = vxor.u32 %v2169, 2147483648
        %v2180 = vsel %vm2178, %v2179, %v2170
        %v2181 = vsel %vm2174, %v2177, %v2180
        %v2182 = vsel %vm2171, nan, %v2181
        %v2183 = vmul.f32 %v1343, %v1454
        %v2184 = vmul.f32 %v1344, %v1558
        %v2185 = vmul.f32 %v1345, %v1662
        %v2186 = vmul.f32 %v1346, %v1766
        %v2187 = vmul.f32 %v1347, %v1870
        %v2188 = vmul.f32 %v1348, %v1974
        %v2189 = vmul.f32 %v1349, %v2078
        %v2190 = vmul.f32 %v1350, %v2182
        %v2191 = vld [vmem:[%s2] sm:$0xff]
        %v2192 = vld [vmem:[%s2 + $0x8] sm:$0xff]
        %v2193 = vld [vmem:[%s2 + $0x10] sm:$0xf]
        %v2194 = vld [vmem:[%s2 + $0x18] sm:$0xf]
        %v2195 = vld [vmem:[%s2 + $0x20] sm:$0xff]
        %v2196 = vld [vmem:[%s2 + $0x28] sm:$0xff]
        %v2197 = vld [vmem:[%s2 + $0x30] sm:$0xf]
        %v2198 = vld [vmem:[%s2 + $0x38] sm:$0xf]
        %v2203 = vcombine.low %v2191, %v2192
        %v2204 = vcombine.high %v2191, %v2192
        %v2206 = vunpack.c.l.s4 1966171168
        %v2207 = vunpack.c.0.s8 %v2206
        %v2208 = vlaneseq
        %v2209 = vshrl.u32 %v2208, 7
        %v2210 = vsub.s32 %v2207, %v2209
        %v2211 = vrot.slane %v2203, %v2210
        %v2213 = vunpack.c.l.s4 1966171168
        %v2214 = vunpack.c.0.s8 %v2213
        %v2215 = vlaneseq
        %v2216 = vshrl.u32 %v2215, 7
        %v2217 = vsub.s32 %v2214, %v2216
        %v2218 = vrot.slane %v2204, %v2217
        %v2219 = vcombine.high %v2211, %v2211
        %v2220 = vcombine.high %v2218, %v2218
        %v2222 = vunpack.c.l.s4 1966171168
        %v2223 = vunpack.c.0.s8 %v2222
        %v2224 = vlaneseq
        %v2225 = vshrl.u32 %v2224, 7
        %v2226 = vsub.s32 %v2223, %v2225
        %v2227 = vrot.slane %v2211, %v2226
        %v2229 = vunpack.c.l.s4 1966171168
        %v2230 = vunpack.c.0.s8 %v2229
        %v2231 = vlaneseq
        %v2232 = vshrl.u32 %v2231, 7
        %v2233 = vsub.s32 %v2230, %v2232
        %v2234 = vrot.slane %v2218, %v2233
        %v2236 = vunpack.c.l.s4 1966171168
        %v2237 = vunpack.c.0.s8 %v2236
        %v2238 = vlaneseq
        %v2239 = vshrl.u32 %v2238, 7
        %v2240 = vsub.s32 %v2237, %v2239
        %v2241 = vrot.slane %v2219, %v2240
        %v2243 = vunpack.c.l.s4 1966171168
        %v2244 = vunpack.c.0.s8 %v2243
        %v2245 = vlaneseq
        %v2246 = vshrl.u32 %v2245, 7
        %v2247 = vsub.s32 %v2244, %v2246
        %v2248 = vrot.slane %v2220, %v2247
        %v2249 = vcombine.high %v2227, %v2227
        %v2250 = vcombine.high %v2234, %v2234
        %v2251 = vcombine.high %v2241, %v2241
        %v2252 = vcombine.high %v2248, %v2248
        %v2253 = vcombine.low %v2193, %v2194
        %v2255 = vunpack.c.l.s4 1966171168
        %v2256 = vunpack.c.0.s8 %v2255
        %v2257 = vlaneseq
        %v2258 = vshrl.u32 %v2257, 7
        %v2259 = vsub.s32 %v2256, %v2258
        %v2260 = vrot.slane %v2253, %v2259
        %v2261 = vcombine.high %v2260, %v2260
        %v2263 = vunpack.c.l.s4 1966171168
        %v2264 = vunpack.c.0.s8 %v2263
        %v2265 = vlaneseq
        %v2266 = vshrl.u32 %v2265, 7
        %v2267 = vsub.s32 %v2264, %v2266
        %v2268 = vrot.slane %v2260, %v2267
        %v2270 = vunpack.c.l.s4 1966171168
        %v2271 = vunpack.c.0.s8 %v2270
        %v2272 = vlaneseq
        %v2273 = vshrl.u32 %v2272, 7
        %v2274 = vsub.s32 %v2271, %v2273
        %v2275 = vrot.slane %v2261, %v2274
        %v2276 = vcombine.high %v2268, %v2268
        %v2277 = vcombine.high %v2275, %v2275
        %v2278 = vlaneseq
        %v2279 = vshrl.u32 %v2278, 7
        %v2280 = vsub.s32 0, %v2279
        %v2281 = vrot.slane %v2227, %v2280
        %v2282 = vlaneseq
        %v2283 = vshrl.u32 %v2282, 7
        %v2284 = vsub.s32 1, %v2283
        %v2285 = vrot.slane %v2227, %v2284
        %v2286 = vlaneseq
        %v2287 = vshrl.u32 %v2286, 7
        %v2288 = vsub.s32 0, %v2287
        %v2289 = vrot.slane %v2241, %v2288
        %v2290 = vlaneseq
        %v2291 = vshrl.u32 %v2290, 7
        %v2292 = vsub.s32 1, %v2291
        %v2293 = vrot.slane %v2241, %v2292
        %v2294 = vlaneseq
        %v2295 = vshrl.u32 %v2294, 7
        %v2296 = vsub.s32 0, %v2295
        %v2297 = vrot.slane %v2249, %v2296
        %v2298 = vlaneseq
        %v2299 = vshrl.u32 %v2298, 7
        %v2300 = vsub.s32 1, %v2299
        %v2301 = vrot.slane %v2249, %v2300
        %v2302 = vlaneseq
        %v2303 = vshrl.u32 %v2302, 7
        %v2304 = vsub.s32 0, %v2303
        %v2305 = vrot.slane %v2251, %v2304
        %v2306 = vlaneseq
        %v2307 = vshrl.u32 %v2306, 7
        %v2308 = vsub.s32 1, %v2307
        %v2309 = vrot.slane %v2251, %v2308
        %v2310 = vlaneseq
        %v2311 = vshrl.u32 %v2310, 7
        %v2312 = vsub.s32 0, %v2311
        %v2313 = vrot.slane %v2234, %v2312
        %v2314 = vlaneseq
        %v2315 = vshrl.u32 %v2314, 7
        %v2316 = vsub.s32 1, %v2315
        %v2317 = vrot.slane %v2234, %v2316
        %v2318 = vlaneseq
        %v2319 = vshrl.u32 %v2318, 7
        %v2320 = vsub.s32 0, %v2319
        %v2321 = vrot.slane %v2248, %v2320
        %v2322 = vlaneseq
        %v2323 = vshrl.u32 %v2322, 7
        %v2324 = vsub.s32 1, %v2323
        %v2325 = vrot.slane %v2248, %v2324
        %v2326 = vlaneseq
        %v2327 = vshrl.u32 %v2326, 7
        %v2328 = vsub.s32 0, %v2327
        %v2329 = vrot.slane %v2250, %v2328
        %v2330 = vlaneseq
        %v2331 = vshrl.u32 %v2330, 7
        %v2332 = vsub.s32 1, %v2331
        %v2333 = vrot.slane %v2250, %v2332
        %v2334 = vlaneseq
        %v2335 = vshrl.u32 %v2334, 7
        %v2336 = vsub.s32 0, %v2335
        %v2337 = vrot.slane %v2252, %v2336
        %v2338 = vlaneseq
        %v2339 = vshrl.u32 %v2338, 7
        %v2340 = vsub.s32 1, %v2339
        %v2341 = vrot.slane %v2252, %v2340
        %v2342 = vlaneseq
        %v2343 = vshrl.u32 %v2342, 7
        %v2344 = vsub.s32 0, %v2343
        %v2345 = vrot.slane %v2268, %v2344
        %v2346 = vlaneseq
        %v2347 = vshrl.u32 %v2346, 7
        %v2348 = vsub.s32 1, %v2347
        %v2349 = vrot.slane %v2268, %v2348
        %v2350 = vlaneseq
        %v2351 = vshrl.u32 %v2350, 7
        %v2352 = vsub.s32 0, %v2351
        %v2353 = vrot.slane %v2275, %v2352
        %v2354 = vlaneseq
        %v2355 = vshrl.u32 %v2354, 7
        %v2356 = vsub.s32 1, %v2355
        %v2357 = vrot.slane %v2275, %v2356
        %v2358 = vlaneseq
        %v2359 = vshrl.u32 %v2358, 7
        %v2360 = vsub.s32 0, %v2359
        %v2361 = vrot.slane %v2276, %v2360
        %v2362 = vlaneseq
        %v2363 = vshrl.u32 %v2362, 7
        %v2364 = vsub.s32 1, %v2363
        %v2365 = vrot.slane %v2276, %v2364
        %v2366 = vlaneseq
        %v2367 = vshrl.u32 %v2366, 7
        %v2368 = vsub.s32 0, %v2367
        %v2369 = vrot.slane %v2277, %v2368
        %v2370 = vlaneseq
        %v2371 = vshrl.u32 %v2370, 7
        %v2372 = vsub.s32 1, %v2371
        %v2373 = vrot.slane %v2277, %v2372
        %v2398 = vmul.f32 %v2281, %v1335
        %v2399 = vmul.f32 %v2285, %v1336
        %v2400 = vmul.f32 %v2281, %v1337
        %v2401 = vmul.f32 %v2285, %v1338
        %v2402 = vmul.f32 %v2281, %v1339
        %v2403 = vmul.f32 %v2285, %v1340
        %v2404 = vmul.f32 %v2281, %v1341
        %v2405 = vmul.f32 %v2285, %v1342
        %v2406 = vmul.f32 %v2289, %v1335
        %v2407 = vmul.f32 %v2293, %v1336
        %v2408 = vmul.f32 %v2289, %v1337
        %v2409 = vmul.f32 %v2293, %v1338
        %v2410 = vmul.f32 %v2289, %v1339
        %v2411 = vmul.f32 %v2293, %v1340
        %v2412 = vmul.f32 %v2289, %v1341
        %v2413 = vmul.f32 %v2293, %v1342
        %v2414 = vmul.f32 %v2297, %v1335
        %v2415 = vmul.f32 %v2301, %v1336
        %v2416 = vmul.f32 %v2297, %v1337
        %v2417 = vmul.f32 %v2301, %v1338
        %v2418 = vmul.f32 %v2297, %v1339
        %v2419 = vmul.f32 %v2301, %v1340
        %v2420 = vmul.f32 %v2297, %v1341
        %v2421 = vmul.f32 %v2301, %v1342
        %v2422 = vmul.f32 %v2305, %v1335
        %v2423 = vmul.f32 %v2309, %v1336
        %v2424 = vmul.f32 %v2305, %v1337
        %v2425 = vmul.f32 %v2309, %v1338
        %v2426 = vmul.f32 %v2305, %v1339
        %v2427 = vmul.f32 %v2309, %v1340
        %v2428 = vmul.f32 %v2305, %v1341
        %v2429 = vmul.f32 %v2309, %v1342
        %v2430 = vmul.f32 %v2313, %v1335
        %v2431 = vmul.f32 %v2317, %v1336
        %v2432 = vmul.f32 %v2313, %v1337
        %v2433 = vmul.f32 %v2317, %v1338
        %v2434 = vmul.f32 %v2313, %v1339
        %v2435 = vmul.f32 %v2317, %v1340
        %v2436 = vmul.f32 %v2313, %v1341
        %v2437 = vmul.f32 %v2317, %v1342
        %v2438 = vmul.f32 %v2321, %v1335
        %v2439 = vmul.f32 %v2325, %v1336
        %v2440 = vmul.f32 %v2321, %v1337
        %v2441 = vmul.f32 %v2325, %v1338
        %v2442 = vmul.f32 %v2321, %v1339
        %v2443 = vmul.f32 %v2325, %v1340
        %v2444 = vmul.f32 %v2321, %v1341
        %v2445 = vmul.f32 %v2325, %v1342
        %v2446 = vmul.f32 %v2329, %v1335
        %v2447 = vmul.f32 %v2333, %v1336
        %v2448 = vmul.f32 %v2329, %v1337
        %v2449 = vmul.f32 %v2333, %v1338
        %v2450 = vmul.f32 %v2329, %v1339
        %v2451 = vmul.f32 %v2333, %v1340
        %v2452 = vmul.f32 %v2329, %v1341
        %v2453 = vmul.f32 %v2333, %v1342
        %v2454 = vmul.f32 %v2337, %v1335
        %v2455 = vmul.f32 %v2341, %v1336
        %v2456 = vmul.f32 %v2337, %v1337
        %v2457 = vmul.f32 %v2341, %v1338
        %v2458 = vmul.f32 %v2337, %v1339
        %v2459 = vmul.f32 %v2341, %v1340
        %v2460 = vmul.f32 %v2337, %v1341
        %v2461 = vmul.f32 %v2341, %v1342
        %v2462 = vmul.f32 %v2345, %v1335
        %v2463 = vmul.f32 %v2349, %v1336
        %v2464 = vmul.f32 %v2345, %v1337
        %v2465 = vmul.f32 %v2349, %v1338
        %v2466 = vmul.f32 %v2345, %v1339
        %v2467 = vmul.f32 %v2349, %v1340
        %v2468 = vmul.f32 %v2345, %v1341
        %v2469 = vmul.f32 %v2349, %v1342
        %v2470 = vmul.f32 %v2353, %v1335
        %v2471 = vmul.f32 %v2357, %v1336
        %v2472 = vmul.f32 %v2353, %v1337
        %v2473 = vmul.f32 %v2357, %v1338
        %v2474 = vmul.f32 %v2353, %v1339
        %v2475 = vmul.f32 %v2357, %v1340
        %v2476 = vmul.f32 %v2353, %v1341
        %v2477 = vmul.f32 %v2357, %v1342
        %v2478 = vmul.f32 %v2361, %v1335
        %v2479 = vmul.f32 %v2365, %v1336
        %v2480 = vmul.f32 %v2361, %v1337
        %v2481 = vmul.f32 %v2365, %v1338
        %v2482 = vmul.f32 %v2361, %v1339
        %v2483 = vmul.f32 %v2365, %v1340
        %v2484 = vmul.f32 %v2361, %v1341
        %v2485 = vmul.f32 %v2365, %v1342
        %v2486 = vmul.f32 %v2369, %v1335
        %v2487 = vmul.f32 %v2373, %v1336
        %v2488 = vmul.f32 %v2369, %v1337
        %v2489 = vmul.f32 %v2373, %v1338
        %v2490 = vmul.f32 %v2369, %v1339
        %v2491 = vmul.f32 %v2373, %v1340
        %v2492 = vmul.f32 %v2369, %v1341
        %v2493 = vmul.f32 %v2373, %v1342
        %v2498 = vcombine.low %v2195, %v2196
        %v2499 = vcombine.high %v2195, %v2196
        %v2501 = vunpack.c.l.s4 1966171168
        %v2502 = vunpack.c.0.s8 %v2501
        %v2503 = vlaneseq
        %v2504 = vshrl.u32 %v2503, 7
        %v2505 = vsub.s32 %v2502, %v2504
        %v2506 = vrot.slane %v2498, %v2505
        %v2508 = vunpack.c.l.s4 1966171168
        %v2509 = vunpack.c.0.s8 %v2508
        %v2510 = vlaneseq
        %v2511 = vshrl.u32 %v2510, 7
        %v2512 = vsub.s32 %v2509, %v2511
        %v2513 = vrot.slane %v2499, %v2512
        %v2514 = vcombine.high %v2506, %v2506
        %v2515 = vcombine.high %v2513, %v2513
        %v2517 = vunpack.c.l.s4 1966171168
        %v2518 = vunpack.c.0.s8 %v2517
        %v2519 = vlaneseq
        %v2520 = vshrl.u32 %v2519, 7
        %v2521 = vsub.s32 %v2518, %v2520
        %v2522 = vrot.slane %v2506, %v2521
        %v2524 = vunpack.c.l.s4 1966171168
        %v2525 = vunpack.c.0.s8 %v2524
        %v2526 = vlaneseq
        %v2527 = vshrl.u32 %v2526, 7
        %v2528 = vsub.s32 %v2525, %v2527
        %v2529 = vrot.slane %v2513, %v2528
        %v2531 = vunpack.c.l.s4 1966171168
        %v2532 = vunpack.c.0.s8 %v2531
        %v2533 = vlaneseq
        %v2534 = vshrl.u32 %v2533, 7
        %v2535 = vsub.s32 %v2532, %v2534
        %v2536 = vrot.slane %v2514, %v2535
        %v2538 = vunpack.c.l.s4 1966171168
        %v2539 = vunpack.c.0.s8 %v2538
        %v2540 = vlaneseq
        %v2541 = vshrl.u32 %v2540, 7
        %v2542 = vsub.s32 %v2539, %v2541
        %v2543 = vrot.slane %v2515, %v2542
        %v2544 = vcombine.high %v2522, %v2522
        %v2545 = vcombine.high %v2529, %v2529
        %v2546 = vcombine.high %v2536, %v2536
        %v2547 = vcombine.high %v2543, %v2543
        %v2548 = vcombine.low %v2197, %v2198
        %v2550 = vunpack.c.l.s4 1966171168
        %v2551 = vunpack.c.0.s8 %v2550
        %v2552 = vlaneseq
        %v2553 = vshrl.u32 %v2552, 7
        %v2554 = vsub.s32 %v2551, %v2553
        %v2555 = vrot.slane %v2548, %v2554
        %v2556 = vcombine.high %v2555, %v2555
        %v2558 = vunpack.c.l.s4 1966171168
        %v2559 = vunpack.c.0.s8 %v2558
        %v2560 = vlaneseq
        %v2561 = vshrl.u32 %v2560, 7
        %v2562 = vsub.s32 %v2559, %v2561
        %v2563 = vrot.slane %v2555, %v2562
        %v2565 = vunpack.c.l.s4 1966171168
        %v2566 = vunpack.c.0.s8 %v2565
        %v2567 = vlaneseq
        %v2568 = vshrl.u32 %v2567, 7
        %v2569 = vsub.s32 %v2566, %v2568
        %v2570 = vrot.slane %v2556, %v2569
        %v2571 = vcombine.high %v2563, %v2563
        %v2572 = vcombine.high %v2570, %v2570
        %v2573 = vlaneseq
        %v2574 = vshrl.u32 %v2573, 7
        %v2575 = vsub.s32 0, %v2574
        %v2576 = vrot.slane %v2522, %v2575
        %v2577 = vlaneseq
        %v2578 = vshrl.u32 %v2577, 7
        %v2579 = vsub.s32 1, %v2578
        %v2580 = vrot.slane %v2522, %v2579
        %v2581 = vlaneseq
        %v2582 = vshrl.u32 %v2581, 7
        %v2583 = vsub.s32 0, %v2582
        %v2584 = vrot.slane %v2536, %v2583
        %v2585 = vlaneseq
        %v2586 = vshrl.u32 %v2585, 7
        %v2587 = vsub.s32 1, %v2586
        %v2588 = vrot.slane %v2536, %v2587
        %v2589 = vlaneseq
        %v2590 = vshrl.u32 %v2589, 7
        %v2591 = vsub.s32 0, %v2590
        %v2592 = vrot.slane %v2544, %v2591
        %v2593 = vlaneseq
        %v2594 = vshrl.u32 %v2593, 7
        %v2595 = vsub.s32 1, %v2594
        %v2596 = vrot.slane %v2544, %v2595
        %v2597 = vlaneseq
        %v2598 = vshrl.u32 %v2597, 7
        %v2599 = vsub.s32 0, %v2598
        %v2600 = vrot.slane %v2546, %v2599
        %v2601 = vlaneseq
        %v2602 = vshrl.u32 %v2601, 7
        %v2603 = vsub.s32 1, %v2602
        %v2604 = vrot.slane %v2546, %v2603
        %v2605 = vlaneseq
        %v2606 = vshrl.u32 %v2605, 7
        %v2607 = vsub.s32 0, %v2606
        %v2608 = vrot.slane %v2529, %v2607
        %v2609 = vlaneseq
        %v2610 = vshrl.u32 %v2609, 7
        %v2611 = vsub.s32 1, %v2610
        %v2612 = vrot.slane %v2529, %v2611
        %v2613 = vlaneseq
        %v2614 = vshrl.u32 %v2613, 7
        %v2615 = vsub.s32 0, %v2614
        %v2616 = vrot.slane %v2543, %v2615
        %v2617 = vlaneseq
        %v2618 = vshrl.u32 %v2617, 7
        %v2619 = vsub.s32 1, %v2618
        %v2620 = vrot.slane %v2543, %v2619
        %v2621 = vlaneseq
        %v2622 = vshrl.u32 %v2621, 7
        %v2623 = vsub.s32 0, %v2622
        %v2624 = vrot.slane %v2545, %v2623
        %v2625 = vlaneseq
        %v2626 = vshrl.u32 %v2625, 7
        %v2627 = vsub.s32 1, %v2626
        %v2628 = vrot.slane %v2545, %v2627
        %v2629 = vlaneseq
        %v2630 = vshrl.u32 %v2629, 7
        %v2631 = vsub.s32 0, %v2630
        %v2632 = vrot.slane %v2547, %v2631
        %v2633 = vlaneseq
        %v2634 = vshrl.u32 %v2633, 7
        %v2635 = vsub.s32 1, %v2634
        %v2636 = vrot.slane %v2547, %v2635
        %v2637 = vlaneseq
        %v2638 = vshrl.u32 %v2637, 7
        %v2639 = vsub.s32 0, %v2638
        %v2640 = vrot.slane %v2563, %v2639
        %v2641 = vlaneseq
        %v2642 = vshrl.u32 %v2641, 7
        %v2643 = vsub.s32 1, %v2642
        %v2644 = vrot.slane %v2563, %v2643
        %v2645 = vlaneseq
        %v2646 = vshrl.u32 %v2645, 7
        %v2647 = vsub.s32 0, %v2646
        %v2648 = vrot.slane %v2570, %v2647
        %v2649 = vlaneseq
        %v2650 = vshrl.u32 %v2649, 7
        %v2651 = vsub.s32 1, %v2650
        %v2652 = vrot.slane %v2570, %v2651
        %v2653 = vlaneseq
        %v2654 = vshrl.u32 %v2653, 7
        %v2655 = vsub.s32 0, %v2654
        %v2656 = vrot.slane %v2571, %v2655
        %v2657 = vlaneseq
        %v2658 = vshrl.u32 %v2657, 7
        %v2659 = vsub.s32 1, %v2658
        %v2660 = vrot.slane %v2571, %v2659
        %v2661 = vlaneseq
        %v2662 = vshrl.u32 %v2661, 7
        %v2663 = vsub.s32 0, %v2662
        %v2664 = vrot.slane %v2572, %v2663
        %v2665 = vlaneseq
        %v2666 = vshrl.u32 %v2665, 7
        %v2667 = vsub.s32 1, %v2666
        %v2668 = vrot.slane %v2572, %v2667
        %v2693 = vmul.f32 %v2576, %v2183
        %v2694 = vmul.f32 %v2580, %v2184
        %v2695 = vmul.f32 %v2576, %v2185
        %v2696 = vmul.f32 %v2580, %v2186
        %v2697 = vmul.f32 %v2576, %v2187
        %v2698 = vmul.f32 %v2580, %v2188
        %v2699 = vmul.f32 %v2576, %v2189
        %v2700 = vmul.f32 %v2580, %v2190
        %v2701 = vmul.f32 %v2584, %v2183
        %v2702 = vmul.f32 %v2588, %v2184
        %v2703 = vmul.f32 %v2584, %v2185
        %v2704 = vmul.f32 %v2588, %v2186
        %v2705 = vmul.f32 %v2584, %v2187
        %v2706 = vmul.f32 %v2588, %v2188
        %v2707 = vmul.f32 %v2584, %v2189
        %v2708 = vmul.f32 %v2588, %v2190
        %v2709 = vmul.f32 %v2592, %v2183
        %v2710 = vmul.f32 %v2596, %v2184
        %v2711 = vmul.f32 %v2592, %v2185
        %v2712 = vmul.f32 %v2596, %v2186
        %v2713 = vmul.f32 %v2592, %v2187
        %v2714 = vmul.f32 %v2596, %v2188
        %v2715 = vmul.f32 %v2592, %v2189
        %v2716 = vmul.f32 %v2596, %v2190
        %v2717 = vmul.f32 %v2600, %v2183
        %v2718 = vmul.f32 %v2604, %v2184
        %v2719 = vmul.f32 %v2600, %v2185
        %v2720 = vmul.f32 %v2604, %v2186
        %v2721 = vmul.f32 %v2600, %v2187
        %v2722 = vmul.f32 %v2604, %v2188
        %v2723 = vmul.f32 %v2600, %v2189
        %v2724 = vmul.f32 %v2604, %v2190
        %v2725 = vmul.f32 %v2608, %v2183
        %v2726 = vmul.f32 %v2612, %v2184
        %v2727 = vmul.f32 %v2608, %v2185
        %v2728 = vmul.f32 %v2612, %v2186
        %v2729 = vmul.f32 %v2608, %v2187
        %v2730 = vmul.f32 %v2612, %v2188
        %v2731 = vmul.f32 %v2608, %v2189
        %v2732 = vmul.f32 %v2612, %v2190
        %v2733 = vmul.f32 %v2616, %v2183
        %v2734 = vmul.f32 %v2620, %v2184
        %v2735 = vmul.f32 %v2616, %v2185
        %v2736 = vmul.f32 %v2620, %v2186
        %v2737 = vmul.f32 %v2616, %v2187
        %v2738 = vmul.f32 %v2620, %v2188
        %v2739 = vmul.f32 %v2616, %v2189
        %v2740 = vmul.f32 %v2620, %v2190
        %v2741 = vmul.f32 %v2624, %v2183
        %v2742 = vmul.f32 %v2628, %v2184
        %v2743 = vmul.f32 %v2624, %v2185
        %v2744 = vmul.f32 %v2628, %v2186
        %v2745 = vmul.f32 %v2624, %v2187
        %v2746 = vmul.f32 %v2628, %v2188
        %v2747 = vmul.f32 %v2624, %v2189
        %v2748 = vmul.f32 %v2628, %v2190
        %v2749 = vmul.f32 %v2632, %v2183
        %v2750 = vmul.f32 %v2636, %v2184
        %v2751 = vmul.f32 %v2632, %v2185
        %v2752 = vmul.f32 %v2636, %v2186
        %v2753 = vmul.f32 %v2632, %v2187
        %v2754 = vmul.f32 %v2636, %v2188
        %v2755 = vmul.f32 %v2632, %v2189
        %v2756 = vmul.f32 %v2636, %v2190
        %v2757 = vmul.f32 %v2640, %v2183
        %v2758 = vmul.f32 %v2644, %v2184
        %v2759 = vmul.f32 %v2640, %v2185
        %v2760 = vmul.f32 %v2644, %v2186
        %v2761 = vmul.f32 %v2640, %v2187
        %v2762 = vmul.f32 %v2644, %v2188
        %v2763 = vmul.f32 %v2640, %v2189
        %v2764 = vmul.f32 %v2644, %v2190
        %v2765 = vmul.f32 %v2648, %v2183
        %v2766 = vmul.f32 %v2652, %v2184
        %v2767 = vmul.f32 %v2648, %v2185
        %v2768 = vmul.f32 %v2652, %v2186
        %v2769 = vmul.f32 %v2648, %v2187
        %v2770 = vmul.f32 %v2652, %v2188
        %v2771 = vmul.f32 %v2648, %v2189
        %v2772 = vmul.f32 %v2652, %v2190
        %v2773 = vmul.f32 %v2656, %v2183
        %v2774 = vmul.f32 %v2660, %v2184
        %v2775 = vmul.f32 %v2656, %v2185
        %v2776 = vmul.f32 %v2660, %v2186
        %v2777 = vmul.f32 %v2656, %v2187
        %v2778 = vmul.f32 %v2660, %v2188
        %v2779 = vmul.f32 %v2656, %v2189
        %v2780 = vmul.f32 %v2660, %v2190
        %v2781 = vmul.f32 %v2664, %v2183
        %v2782 = vmul.f32 %v2668, %v2184
        %v2783 = vmul.f32 %v2664, %v2185
        %v2784 = vmul.f32 %v2668, %v2186
        %v2785 = vmul.f32 %v2664, %v2187
        %v2786 = vmul.f32 %v2668, %v2188
        %v2787 = vmul.f32 %v2664, %v2189
        %v2788 = vmul.f32 %v2668, %v2190
        %v2789 = vadd.f32 %v2398, %v2693
        %v2790 = vadd.f32 %v2399, %v2694
        %v2791 = vadd.f32 %v2400, %v2695
        %v2792 = vadd.f32 %v2401, %v2696
        %v2793 = vadd.f32 %v2402, %v2697
        %v2794 = vadd.f32 %v2403, %v2698
        %v2795 = vadd.f32 %v2404, %v2699
        %v2796 = vadd.f32 %v2405, %v2700
        %v2797 = vadd.f32 %v2406, %v2701
        %v2798 = vadd.f32 %v2407, %v2702
        %v2799 = vadd.f32 %v2408, %v2703
        %v2800 = vadd.f32 %v2409, %v2704
        %v2801 = vadd.f32 %v2410, %v2705
        %v2802 = vadd.f32 %v2411, %v2706
        %v2803 = vadd.f32 %v2412, %v2707
        %v2804 = vadd.f32 %v2413, %v2708
        %v2805 = vadd.f32 %v2414, %v2709
        %v2806 = vadd.f32 %v2415, %v2710
        %v2807 = vadd.f32 %v2416, %v2711
        %v2808 = vadd.f32 %v2417, %v2712
        %v2809 = vadd.f32 %v2418, %v2713
        %v2810 = vadd.f32 %v2419, %v2714
        %v2811 = vadd.f32 %v2420, %v2715
        %v2812 = vadd.f32 %v2421, %v2716
        %v2813 = vadd.f32 %v2422, %v2717
        %v2814 = vadd.f32 %v2423, %v2718
        %v2815 = vadd.f32 %v2424, %v2719
        %v2816 = vadd.f32 %v2425, %v2720
        %v2817 = vadd.f32 %v2426, %v2721
        %v2818 = vadd.f32 %v2427, %v2722
        %v2819 = vadd.f32 %v2428, %v2723
        %v2820 = vadd.f32 %v2429, %v2724
        %v2821 = vadd.f32 %v2430, %v2725
        %v2822 = vadd.f32 %v2431, %v2726
        %v2823 = vadd.f32 %v2432, %v2727
        %v2824 = vadd.f32 %v2433, %v2728
        %v2825 = vadd.f32 %v2434, %v2729
        %v2826 = vadd.f32 %v2435, %v2730
        %v2827 = vadd.f32 %v2436, %v2731
        %v2828 = vadd.f32 %v2437, %v2732
        %v2829 = vadd.f32 %v2438, %v2733
        %v2830 = vadd.f32 %v2439, %v2734
        %v2831 = vadd.f32 %v2440, %v2735
        %v2832 = vadd.f32 %v2441, %v2736
        %v2833 = vadd.f32 %v2442, %v2737
        %v2834 = vadd.f32 %v2443, %v2738
        %v2835 = vadd.f32 %v2444, %v2739
        %v2836 = vadd.f32 %v2445, %v2740
        %v2837 = vadd.f32 %v2446, %v2741
        %v2838 = vadd.f32 %v2447, %v2742
        %v2839 = vadd.f32 %v2448, %v2743
        %v2840 = vadd.f32 %v2449, %v2744
        %v2841 = vadd.f32 %v2450, %v2745
        %v2842 = vadd.f32 %v2451, %v2746
        %v2843 = vadd.f32 %v2452, %v2747
        %v2844 = vadd.f32 %v2453, %v2748
        %v2845 = vadd.f32 %v2454, %v2749
        %v2846 = vadd.f32 %v2455, %v2750
        %v2847 = vadd.f32 %v2456, %v2751
        %v2848 = vadd.f32 %v2457, %v2752
        %v2849 = vadd.f32 %v2458, %v2753
        %v2850 = vadd.f32 %v2459, %v2754
        %v2851 = vadd.f32 %v2460, %v2755
        %v2852 = vadd.f32 %v2461, %v2756
        %v2853 = vadd.f32 %v2462, %v2757
        %v2854 = vadd.f32 %v2463, %v2758
        %v2855 = vadd.f32 %v2464, %v2759
        %v2856 = vadd.f32 %v2465, %v2760
        %v2857 = vadd.f32 %v2466, %v2761
        %v2858 = vadd.f32 %v2467, %v2762
        %v2859 = vadd.f32 %v2468, %v2763
        %v2860 = vadd.f32 %v2469, %v2764
        %v2861 = vadd.f32 %v2470, %v2765
        %v2862 = vadd.f32 %v2471, %v2766
        %v2863 = vadd.f32 %v2472, %v2767
        %v2864 = vadd.f32 %v2473, %v2768
        %v2865 = vadd.f32 %v2474, %v2769
        %v2866 = vadd.f32 %v2475, %v2770
        %v2867 = vadd.f32 %v2476, %v2771
        %v2868 = vadd.f32 %v2477, %v2772
        %v2869 = vadd.f32 %v2478, %v2773
        %v2870 = vadd.f32 %v2479, %v2774
        %v2871 = vadd.f32 %v2480, %v2775
        %v2872 = vadd.f32 %v2481, %v2776
        %v2873 = vadd.f32 %v2482, %v2777
        %v2874 = vadd.f32 %v2483, %v2778
        %v2875 = vadd.f32 %v2484, %v2779
        %v2876 = vadd.f32 %v2485, %v2780
        %v2877 = vadd.f32 %v2486, %v2781
        %v2878 = vadd.f32 %v2487, %v2782
        %v2879 = vadd.f32 %v2488, %v2783
        %v2880 = vadd.f32 %v2489, %v2784
        %v2881 = vadd.f32 %v2490, %v2785
        %v2882 = vadd.f32 %v2491, %v2786
        %v2883 = vadd.f32 %v2492, %v2787
        %v2884 = vadd.f32 %v2493, %v2788
        %v2885 = vpack.c.bf16 %v2791, %v2789
        %v2886 = vpack.c.bf16 %v2792, %v2790
        %v2887 = vpack.c.bf16 %v2795, %v2793
        %v2888 = vpack.c.bf16 %v2796, %v2794
        %v2889 = vpack.c.bf16 %v2799, %v2797
        %v2890 = vpack.c.bf16 %v2800, %v2798
        %v2891 = vpack.c.bf16 %v2803, %v2801
        %v2892 = vpack.c.bf16 %v2804, %v2802
        %v2893 = vpack.c.bf16 %v2807, %v2805
        %v2894 = vpack.c.bf16 %v2808, %v2806
        %v2895 = vpack.c.bf16 %v2811, %v2809
        %v2896 = vpack.c.bf16 %v2812, %v2810
        %v2897 = vpack.c.bf16 %v2815, %v2813
        %v2898 = vpack.c.bf16 %v2816, %v2814
        %v2899 = vpack.c.bf16 %v2819, %v2817
        %v2900 = vpack.c.bf16 %v2820, %v2818
        %v2901 = vpack.c.bf16 %v2823, %v2821
        %v2902 = vpack.c.bf16 %v2824, %v2822
        %v2903 = vpack.c.bf16 %v2827, %v2825
        %v2904 = vpack.c.bf16 %v2828, %v2826
        %v2905 = vpack.c.bf16 %v2831, %v2829
        %v2906 = vpack.c.bf16 %v2832, %v2830
        %v2907 = vpack.c.bf16 %v2835, %v2833
        %v2908 = vpack.c.bf16 %v2836, %v2834
        %v2909 = vpack.c.bf16 %v2839, %v2837
        %v2910 = vpack.c.bf16 %v2840, %v2838
        %v2911 = vpack.c.bf16 %v2843, %v2841
        %v2912 = vpack.c.bf16 %v2844, %v2842
        %v2913 = vpack.c.bf16 %v2847, %v2845
        %v2914 = vpack.c.bf16 %v2848, %v2846
        %v2915 = vpack.c.bf16 %v2851, %v2849
        %v2916 = vpack.c.bf16 %v2852, %v2850
        %v2917 = vpack.c.bf16 %v2855, %v2853
        %v2918 = vpack.c.bf16 %v2856, %v2854
        %v2919 = vpack.c.bf16 %v2859, %v2857
        %v2920 = vpack.c.bf16 %v2860, %v2858
        %v2921 = vpack.c.bf16 %v2863, %v2861
        %v2922 = vpack.c.bf16 %v2864, %v2862
        %v2923 = vpack.c.bf16 %v2867, %v2865
        %v2924 = vpack.c.bf16 %v2868, %v2866
        %v2925 = vpack.c.bf16 %v2871, %v2869
        %v2926 = vpack.c.bf16 %v2872, %v2870
        %v2927 = vpack.c.bf16 %v2875, %v2873
        %v2928 = vpack.c.bf16 %v2876, %v2874
        %v2929 = vpack.c.bf16 %v2879, %v2877
        %v2930 = vpack.c.bf16 %v2880, %v2878
        %v2931 = vpack.c.bf16 %v2883, %v2881
        %v2932 = vpack.c.bf16 %v2884, %v2882
        %v2933 = vunpack.c.l.bf16 %v2885
        %v2934 = vunpack.c.l.bf16 %v2886
        %v2935 = vunpack.c.h.bf16 %v2885
        %v2936 = vunpack.c.h.bf16 %v2886
        %v2937 = vunpack.c.l.bf16 %v2887
        %v2938 = vunpack.c.l.bf16 %v2888
        %v2939 = vunpack.c.h.bf16 %v2887
        %v2940 = vunpack.c.h.bf16 %v2888
        %v2941 = vunpack.c.l.bf16 %v2889
        %v2942 = vunpack.c.l.bf16 %v2890
        %v2943 = vunpack.c.h.bf16 %v2889
        %v2944 = vunpack.c.h.bf16 %v2890
        %v2945 = vunpack.c.l.bf16 %v2891
        %v2946 = vunpack.c.l.bf16 %v2892
        %v2947 = vunpack.c.h.bf16 %v2891
        %v2948 = vunpack.c.h.bf16 %v2892
        %v2949 = vunpack.c.l.bf16 %v2893
        %v2950 = vunpack.c.l.bf16 %v2894
        %v2951 = vunpack.c.h.bf16 %v2893
        %v2952 = vunpack.c.h.bf16 %v2894
        %v2953 = vunpack.c.l.bf16 %v2895
        %v2954 = vunpack.c.l.bf16 %v2896
        %v2955 = vunpack.c.h.bf16 %v2895
        %v2956 = vunpack.c.h.bf16 %v2896
        %v2957 = vunpack.c.l.bf16 %v2897
        %v2958 = vunpack.c.l.bf16 %v2898
        %v2959 = vunpack.c.h.bf16 %v2897
        %v2960 = vunpack.c.h.bf16 %v2898
        %v2961 = vunpack.c.l.bf16 %v2899
        %v2962 = vunpack.c.l.bf16 %v2900
        %v2963 = vunpack.c.h.bf16 %v2899
        %v2964 = vunpack.c.h.bf16 %v2900
        %v2965 = vunpack.c.l.bf16 %v2901
        %v2966 = vunpack.c.l.bf16 %v2902
        %v2967 = vunpack.c.h.bf16 %v2901
        %v2968 = vunpack.c.h.bf16 %v2902
        %v2969 = vunpack.c.l.bf16 %v2903
        %v2970 = vunpack.c.l.bf16 %v2904
        %v2971 = vunpack.c.h.bf16 %v2903
        %v2972 = vunpack.c.h.bf16 %v2904
        %v2973 = vunpack.c.l.bf16 %v2905
        %v2974 = vunpack.c.l.bf16 %v2906
        %v2975 = vunpack.c.h.bf16 %v2905
        %v2976 = vunpack.c.h.bf16 %v2906
        %v2977 = vunpack.c.l.bf16 %v2907
        %v2978 = vunpack.c.l.bf16 %v2908
        %v2979 = vunpack.c.h.bf16 %v2907
        %v2980 = vunpack.c.h.bf16 %v2908
        %v2981 = vunpack.c.l.bf16 %v2909
        %v2982 = vunpack.c.l.bf16 %v2910
        %v2983 = vunpack.c.h.bf16 %v2909
        %v2984 = vunpack.c.h.bf16 %v2910
        %v2985 = vunpack.c.l.bf16 %v2911
        %v2986 = vunpack.c.l.bf16 %v2912
        %v2987 = vunpack.c.h.bf16 %v2911
        %v2988 = vunpack.c.h.bf16 %v2912
        %v2989 = vunpack.c.l.bf16 %v2913
        %v2990 = vunpack.c.l.bf16 %v2914
        %v2991 = vunpack.c.h.bf16 %v2913
        %v2992 = vunpack.c.h.bf16 %v2914
        %v2993 = vunpack.c.l.bf16 %v2915
        %v2994 = vunpack.c.l.bf16 %v2916
        %v2995 = vunpack.c.h.bf16 %v2915
        %v2996 = vunpack.c.h.bf16 %v2916
        %v2997 = vunpack.c.l.bf16 %v2917
        %v2998 = vunpack.c.l.bf16 %v2918
        %v2999 = vunpack.c.h.bf16 %v2917
        %v3000 = vunpack.c.h.bf16 %v2918
        %v3001 = vunpack.c.l.bf16 %v2919
        %v3002 = vunpack.c.l.bf16 %v2920
        %v3003 = vunpack.c.h.bf16 %v2919
        %v3004 = vunpack.c.h.bf16 %v2920
        %v3005 = vunpack.c.l.bf16 %v2921
        %v3006 = vunpack.c.l.bf16 %v2922
        %v3007 = vunpack.c.h.bf16 %v2921
        %v3008 = vunpack.c.h.bf16 %v2922
        %v3009 = vunpack.c.l.bf16 %v2923
        %v3010 = vunpack.c.l.bf16 %v2924
        %v3011 = vunpack.c.h.bf16 %v2923
        %v3012 = vunpack.c.h.bf16 %v2924
        %v3013 = vunpack.c.l.bf16 %v2925
        %v3014 = vunpack.c.l.bf16 %v2926
        %v3015 = vunpack.c.h.bf16 %v2925
        %v3016 = vunpack.c.h.bf16 %v2926
        %v3017 = vunpack.c.l.bf16 %v2927
        %v3018 = vunpack.c.l.bf16 %v2928
        %v3019 = vunpack.c.h.bf16 %v2927
        %v3020 = vunpack.c.h.bf16 %v2928
        %v3021 = vunpack.c.l.bf16 %v2929
        %v3022 = vunpack.c.l.bf16 %v2930
        %v3023 = vunpack.c.h.bf16 %v2929
        %v3024 = vunpack.c.h.bf16 %v2930
        %v3025 = vunpack.c.l.bf16 %v2931
        %v3026 = vunpack.c.l.bf16 %v2932
        %v3027 = vunpack.c.h.bf16 %v2931
        %v3028 = vunpack.c.h.bf16 %v2932
        %v3029 = vsub.f32 %v2789, %v2933
        %v3030 = vsub.f32 %v2790, %v2934
        %v3031 = vsub.f32 %v2791, %v2935
        %v3032 = vsub.f32 %v2792, %v2936
        %v3033 = vsub.f32 %v2793, %v2937
        %v3034 = vsub.f32 %v2794, %v2938
        %v3035 = vsub.f32 %v2795, %v2939
        %v3036 = vsub.f32 %v2796, %v2940
        %v3037 = vsub.f32 %v2797, %v2941
        %v3038 = vsub.f32 %v2798, %v2942
        %v3039 = vsub.f32 %v2799, %v2943
        %v3040 = vsub.f32 %v2800, %v2944
        %v3041 = vsub.f32 %v2801, %v2945
        %v3042 = vsub.f32 %v2802, %v2946
        %v3043 = vsub.f32 %v2803, %v2947
        %v3044 = vsub.f32 %v2804, %v2948
        %v3045 = vsub.f32 %v2805, %v2949
        %v3046 = vsub.f32 %v2806, %v2950
        %v3047 = vsub.f32 %v2807, %v2951
        %v3048 = vsub.f32 %v2808, %v2952
        %v3049 = vsub.f32 %v2809, %v2953
        %v3050 = vsub.f32 %v2810, %v2954
        %v3051 = vsub.f32 %v2811, %v2955
        %v3052 = vsub.f32 %v2812, %v2956
        %v3053 = vsub.f32 %v2813, %v2957
        %v3054 = vsub.f32 %v2814, %v2958
        %v3055 = vsub.f32 %v2815, %v2959
        %v3056 = vsub.f32 %v2816, %v2960
        %v3057 = vsub.f32 %v2817, %v2961
        %v3058 = vsub.f32 %v2818, %v2962
        %v3059 = vsub.f32 %v2819, %v2963
        %v3060 = vsub.f32 %v2820, %v2964
        %v3061 = vsub.f32 %v2821, %v2965
        %v3062 = vsub.f32 %v2822, %v2966
        %v3063 = vsub.f32 %v2823, %v2967
        %v3064 = vsub.f32 %v2824, %v2968
        %v3065 = vsub.f32 %v2825, %v2969
        %v3066 = vsub.f32 %v2826, %v2970
        %v3067 = vsub.f32 %v2827, %v2971
        %v3068 = vsub.f32 %v2828, %v2972
        %v3069 = vsub.f32 %v2829, %v2973
        %v3070 = vsub.f32 %v2830, %v2974
        %v3071 = vsub.f32 %v2831, %v2975
        %v3072 = vsub.f32 %v2832, %v2976
        %v3073 = vsub.f32 %v2833, %v2977
        %v3074 = vsub.f32 %v2834, %v2978
        %v3075 = vsub.f32 %v2835, %v2979
        %v3076 = vsub.f32 %v2836, %v2980
        %v3077 = vsub.f32 %v2837, %v2981
        %v3078 = vsub.f32 %v2838, %v2982
        %v3079 = vsub.f32 %v2839, %v2983
        %v3080 = vsub.f32 %v2840, %v2984
        %v3081 = vsub.f32 %v2841, %v2985
        %v3082 = vsub.f32 %v2842, %v2986
        %v3083 = vsub.f32 %v2843, %v2987
        %v3084 = vsub.f32 %v2844, %v2988
        %v3085 = vsub.f32 %v2845, %v2989
        %v3086 = vsub.f32 %v2846, %v2990
        %v3087 = vsub.f32 %v2847, %v2991
        %v3088 = vsub.f32 %v2848, %v2992
        %v3089 = vsub.f32 %v2849, %v2993
        %v3090 = vsub.f32 %v2850, %v2994
        %v3091 = vsub.f32 %v2851, %v2995
        %v3092 = vsub.f32 %v2852, %v2996
        %v3093 = vsub.f32 %v2853, %v2997
        %v3094 = vsub.f32 %v2854, %v2998
        %v3095 = vsub.f32 %v2855, %v2999
        %v3096 = vsub.f32 %v2856, %v3000
        %v3097 = vsub.f32 %v2857, %v3001
        %v3098 = vsub.f32 %v2858, %v3002
        %v3099 = vsub.f32 %v2859, %v3003
        %v3100 = vsub.f32 %v2860, %v3004
        %v3101 = vsub.f32 %v2861, %v3005
        %v3102 = vsub.f32 %v2862, %v3006
        %v3103 = vsub.f32 %v2863, %v3007
        %v3104 = vsub.f32 %v2864, %v3008
        %v3105 = vsub.f32 %v2865, %v3009
        %v3106 = vsub.f32 %v2866, %v3010
        %v3107 = vsub.f32 %v2867, %v3011
        %v3108 = vsub.f32 %v2868, %v3012
        %v3109 = vsub.f32 %v2869, %v3013
        %v3110 = vsub.f32 %v2870, %v3014
        %v3111 = vsub.f32 %v2871, %v3015
        %v3112 = vsub.f32 %v2872, %v3016
        %v3113 = vsub.f32 %v2873, %v3017
        %v3114 = vsub.f32 %v2874, %v3018
        %v3115 = vsub.f32 %v2875, %v3019
        %v3116 = vsub.f32 %v2876, %v3020
        %v3117 = vsub.f32 %v2877, %v3021
        %v3118 = vsub.f32 %v2878, %v3022
        %v3119 = vsub.f32 %v2879, %v3023
        %v3120 = vsub.f32 %v2880, %v3024
        %v3121 = vsub.f32 %v2881, %v3025
        %v3122 = vsub.f32 %v2882, %v3026
        %v3123 = vsub.f32 %v2883, %v3027
        %v3124 = vsub.f32 %v2884, %v3028
        %v3125 = vpack.c.bf16 %v3031, %v3029
        %v3126 = vpack.c.bf16 %v3032, %v3030
        %v3127 = vpack.c.bf16 %v3035, %v3033
        %v3128 = vpack.c.bf16 %v3036, %v3034
        %v3129 = vpack.c.bf16 %v3039, %v3037
        %v3130 = vpack.c.bf16 %v3040, %v3038
        %v3131 = vpack.c.bf16 %v3043, %v3041
        %v3132 = vpack.c.bf16 %v3044, %v3042
        %v3133 = vpack.c.bf16 %v3047, %v3045
        %v3134 = vpack.c.bf16 %v3048, %v3046
        %v3135 = vpack.c.bf16 %v3051, %v3049
        %v3136 = vpack.c.bf16 %v3052, %v3050
        %v3137 = vpack.c.bf16 %v3055, %v3053
        %v3138 = vpack.c.bf16 %v3056, %v3054
        %v3139 = vpack.c.bf16 %v3059, %v3057
        %v3140 = vpack.c.bf16 %v3060, %v3058
        %v3141 = vpack.c.bf16 %v3063, %v3061
        %v3142 = vpack.c.bf16 %v3064, %v3062
        %v3143 = vpack.c.bf16 %v3067, %v3065
        %v3144 = vpack.c.bf16 %v3068, %v3066
        %v3145 = vpack.c.bf16 %v3071, %v3069
        %v3146 = vpack.c.bf16 %v3072, %v3070
        %v3147 = vpack.c.bf16 %v3075, %v3073
        %v3148 = vpack.c.bf16 %v3076, %v3074
        %v3149 = vpack.c.bf16 %v3079, %v3077
        %v3150 = vpack.c.bf16 %v3080, %v3078
        %v3151 = vpack.c.bf16 %v3083, %v3081
        %v3152 = vpack.c.bf16 %v3084, %v3082
        %v3153 = vpack.c.bf16 %v3087, %v3085
        %v3154 = vpack.c.bf16 %v3088, %v3086
        %v3155 = vpack.c.bf16 %v3091, %v3089
        %v3156 = vpack.c.bf16 %v3092, %v3090
        %v3157 = vpack.c.bf16 %v3095, %v3093
        %v3158 = vpack.c.bf16 %v3096, %v3094
        %v3159 = vpack.c.bf16 %v3099, %v3097
        %v3160 = vpack.c.bf16 %v3100, %v3098
        %v3161 = vpack.c.bf16 %v3103, %v3101
        %v3162 = vpack.c.bf16 %v3104, %v3102
        %v3163 = vpack.c.bf16 %v3107, %v3105
        %v3164 = vpack.c.bf16 %v3108, %v3106
        %v3165 = vpack.c.bf16 %v3111, %v3109
        %v3166 = vpack.c.bf16 %v3112, %v3110
        %v3167 = vpack.c.bf16 %v3115, %v3113
        %v3168 = vpack.c.bf16 %v3116, %v3114
        %v3169 = vpack.c.bf16 %v3119, %v3117
        %v3170 = vpack.c.bf16 %v3120, %v3118
        %v3171 = vpack.c.bf16 %v3123, %v3121
        %v3172 = vpack.c.bf16 %v3124, %v3122
        %v3173 = vld [vmem:[#allocation5] sm:$0xff]
        %v3174 = vld [vmem:[#allocation5 + $0x8] sm:$0xff]
        %v3175 = vld [vmem:[#allocation5 + $0x10] sm:$0xff]
        %v3176 = vld [vmem:[#allocation5 + $0x18] sm:$0xff]
        %v3177 = vld [vmem:[#allocation5 + $0x20] sm:$0xff]
        %v3178 = vld [vmem:[#allocation5 + $0x28] sm:$0xff]
        %v3179 = vld [vmem:[#allocation5 + $0x30] sm:$0xff]
        %v3180 = vld [vmem:[#allocation5 + $0x38] sm:$0xff]
        %v3181 = vld [vmem:[#allocation5 + $0x40] sm:$0xff]
        %v3182 = vld [vmem:[#allocation5 + $0x48] sm:$0xff]
        %v3183 = vld [vmem:[#allocation5 + $0x50] sm:$0xff]
        %v3184 = vld [vmem:[#allocation5 + $0x58] sm:$0xff]
        %v3185 = vld [vmem:[#allocation5 + $0x60] sm:$0xff]
        %v3186 = vld [vmem:[#allocation5 + $0x68] sm:$0xff]
        %v3187 = vld [vmem:[#allocation5 + $0x70] sm:$0xff]
        %v3188 = vld [vmem:[#allocation5 + $0x78] sm:$0xff]
        %v3189 = vld [vmem:[#allocation5 + $0x80] sm:$0xff]
        %v3190 = vld [vmem:[#allocation5 + $0x88] sm:$0xff]
        %v3191 = vld [vmem:[#allocation5 + $0x90] sm:$0xff]
        %v3192 = vld [vmem:[#allocation5 + $0x98] sm:$0xff]
        %v3193 = vld [vmem:[#allocation5 + $0xa0] sm:$0xff]
        %v3194 = vld [vmem:[#allocation5 + $0xa8] sm:$0xff]
        %v3195 = vld [vmem:[#allocation5 + $0xb0] sm:$0xff]
        %v3196 = vld [vmem:[#allocation5 + $0xb8] sm:$0xff]
        %v3197 = vld [vmem:[#allocation5 + $0xc0] sm:$0xff]
        %v3198 = vld [vmem:[#allocation5 + $0xc8] sm:$0xff]
        %v3199 = vld [vmem:[#allocation5 + $0xd0] sm:$0xff]
        %v3200 = vld [vmem:[#allocation5 + $0xd8] sm:$0xff]
        %v3201 = vld [vmem:[#allocation5 + $0xe0] sm:$0xff]
        %v3202 = vld [vmem:[#allocation5 + $0xe8] sm:$0xff]
        %v3203 = vld [vmem:[#allocation5 + $0xf0] sm:$0xff]
        %v3204 = vld [vmem:[#allocation5 + $0xf8] sm:$0xff]
        %v3205 = vld [vmem:[#allocation5 + $0x100] sm:$0xff]
        %v3206 = vld [vmem:[#allocation5 + $0x108] sm:$0xff]
        %v3207 = vld [vmem:[#allocation5 + $0x110] sm:$0xff]
        %v3208 = vld [vmem:[#allocation5 + $0x118] sm:$0xff]
        %v3209 = vld [vmem:[#allocation5 + $0x120] sm:$0xff]
        %v3210 = vld [vmem:[#allocation5 + $0x128] sm:$0xff]
        %v3211 = vld [vmem:[#allocation5 + $0x130] sm:$0xff]
        %v3212 = vld [vmem:[#allocation5 + $0x138] sm:$0xff]
        %v3213 = vld [vmem:[#allocation5 + $0x140] sm:$0xff]
        %v3214 = vld [vmem:[#allocation5 + $0x148] sm:$0xff]
        %v3215 = vld [vmem:[#allocation5 + $0x150] sm:$0xff]
        %v3216 = vld [vmem:[#allocation5 + $0x158] sm:$0xff]
        %v3217 = vld [vmem:[#allocation5 + $0x160] sm:$0xff]
        %v3218 = vld [vmem:[#allocation5 + $0x168] sm:$0xff]
        %v3219 = vld [vmem:[#allocation5 + $0x170] sm:$0xff]
        %v3220 = vld [vmem:[#allocation5 + $0x178] sm:$0xff]
        %v3221 = vld [vmem:[#allocation5 + $0x180] sm:$0xff]
        %v3222 = vld [vmem:[#allocation5 + $0x188] sm:$0xff]
        %v3223 = vld [vmem:[#allocation5 + $0x190] sm:$0xff]
        %v3224 = vld [vmem:[#allocation5 + $0x198] sm:$0xff]
        %v3225 = vld [vmem:[#allocation5 + $0x1a0] sm:$0xff]
        %v3226 = vld [vmem:[#allocation5 + $0x1a8] sm:$0xff]
        %v3227 = vld [vmem:[#allocation5 + $0x1b0] sm:$0xff]
        %v3228 = vld [vmem:[#allocation5 + $0x1b8] sm:$0xff]
        %v3229 = vld [vmem:[#allocation5 + $0x1c0] sm:$0xff]
        %v3230 = vld [vmem:[#allocation5 + $0x1c8] sm:$0xff]
        %v3231 = vld [vmem:[#allocation5 + $0x1d0] sm:$0xff]
        %v3232 = vld [vmem:[#allocation5 + $0x1d8] sm:$0xff]
        %v3233 = vld [vmem:[#allocation5 + $0x1e0] sm:$0xff]
        %v3234 = vld [vmem:[#allocation5 + $0x1e8] sm:$0xff]
        %v3235 = vld [vmem:[#allocation5 + $0x1f0] sm:$0xff]
        %v3236 = vld [vmem:[#allocation5 + $0x1f8] sm:$0xff]
        %v3237 = vld [vmem:[#allocation5 + $0x200] sm:$0xff]
        %v3238 = vld [vmem:[#allocation5 + $0x208] sm:$0xff]
        %v3239 = vld [vmem:[#allocation5 + $0x210] sm:$0xff]
        %v3240 = vld [vmem:[#allocation5 + $0x218] sm:$0xff]
        %v3241 = vld [vmem:[#allocation5 + $0x220] sm:$0xff]
        %v3242 = vld [vmem:[#allocation5 + $0x228] sm:$0xff]
        %v3243 = vld [vmem:[#allocation5 + $0x230] sm:$0xff]
        %v3244 = vld [vmem:[#allocation5 + $0x238] sm:$0xff]
        %v3245 = vld [vmem:[#allocation5 + $0x240] sm:$0xff]
        %v3246 = vld [vmem:[#allocation5 + $0x248] sm:$0xff]
        %v3247 = vld [vmem:[#allocation5 + $0x250] sm:$0xff]
        %v3248 = vld [vmem:[#allocation5 + $0x258] sm:$0xff]
        %v3249 = vld [vmem:[#allocation5 + $0x260] sm:$0xff]
        %v3250 = vld [vmem:[#allocation5 + $0x268] sm:$0xff]
        %v3251 = vld [vmem:[#allocation5 + $0x270] sm:$0xff]
        %v3252 = vld [vmem:[#allocation5 + $0x278] sm:$0xff]
        %v3253 = vld [vmem:[#allocation5 + $0x280] sm:$0xff]
        %v3254 = vld [vmem:[#allocation5 + $0x288] sm:$0xff]
        %v3255 = vld [vmem:[#allocation5 + $0x290] sm:$0xff]
        %v3256 = vld [vmem:[#allocation5 + $0x298] sm:$0xff]
        %v3257 = vld [vmem:[#allocation5 + $0x2a0] sm:$0xff]
        %v3258 = vld [vmem:[#allocation5 + $0x2a8] sm:$0xff]
        %v3259 = vld [vmem:[#allocation5 + $0x2b0] sm:$0xff]
        %v3260 = vld [vmem:[#allocation5 + $0x2b8] sm:$0xff]
        %v3261 = vld [vmem:[#allocation5 + $0x2c0] sm:$0xff]
        %v3262 = vld [vmem:[#allocation5 + $0x2c8] sm:$0xff]
        %v3263 = vld [vmem:[#allocation5 + $0x2d0] sm:$0xff]
        %v3264 = vld [vmem:[#allocation5 + $0x2d8] sm:$0xff]
        %v3265 = vld [vmem:[#allocation5 + $0x2e0] sm:$0xff]
        %v3266 = vld [vmem:[#allocation5 + $0x2e8] sm:$0xff]
        %v3267 = vld [vmem:[#allocation5 + $0x2f0] sm:$0xff]
        %v3268 = vld [vmem:[#allocation5 + $0x2f8] sm:$0xff]
        %v3269 = vld [vmem:[#allocation5 + $0x300] sm:$0xff]
        %v3270 = vld [vmem:[#allocation5 + $0x308] sm:$0xff]
        %v3271 = vld [vmem:[#allocation5 + $0x310] sm:$0xff]
        %v3272 = vld [vmem:[#allocation5 + $0x318] sm:$0xff]
        %v3273 = vld [vmem:[#allocation5 + $0x320] sm:$0xff]
        %v3274 = vld [vmem:[#allocation5 + $0x328] sm:$0xff]
        %v3275 = vld [vmem:[#allocation5 + $0x330] sm:$0xff]
        %v3276 = vld [vmem:[#allocation5 + $0x338] sm:$0xff]
        %v3277 = vld [vmem:[#allocation5 + $0x340] sm:$0xff]
        %v3278 = vld [vmem:[#allocation5 + $0x348] sm:$0xff]
        %v3279 = vld [vmem:[#allocation5 + $0x350] sm:$0xff]
        %v3280 = vld [vmem:[#allocation5 + $0x358] sm:$0xff]
        %v3281 = vld [vmem:[#allocation5 + $0x360] sm:$0xff]
        %v3282 = vld [vmem:[#allocation5 + $0x368] sm:$0xff]
        %v3283 = vld [vmem:[#allocation5 + $0x370] sm:$0xff]
        %v3284 = vld [vmem:[#allocation5 + $0x378] sm:$0xff]
        %v3285 = vld [vmem:[#allocation5 + $0x380] sm:$0xff]
        %v3286 = vld [vmem:[#allocation5 + $0x388] sm:$0xff]
        %v3287 = vld [vmem:[#allocation5 + $0x390] sm:$0xff]
        %v3288 = vld [vmem:[#allocation5 + $0x398] sm:$0xff]
        %v3289 = vld [vmem:[#allocation5 + $0x3a0] sm:$0xff]
        %v3290 = vld [vmem:[#allocation5 + $0x3a8] sm:$0xff]
        %v3291 = vld [vmem:[#allocation5 + $0x3b0] sm:$0xff]
        %v3292 = vld [vmem:[#allocation5 + $0x3b8] sm:$0xff]
        %v3293 = vld [vmem:[#allocation5 + $0x3c0] sm:$0xff]
        %v3294 = vld [vmem:[#allocation5 + $0x3c8] sm:$0xff]
        %v3295 = vld [vmem:[#allocation5 + $0x3d0] sm:$0xff]
        %v3296 = vld [vmem:[#allocation5 + $0x3d8] sm:$0xff]
        %v3297 = vld [vmem:[#allocation5 + $0x3e0] sm:$0xff]
        %v3298 = vld [vmem:[#allocation5 + $0x3e8] sm:$0xff]
        %v3299 = vld [vmem:[#allocation5 + $0x3f0] sm:$0xff]
        %v3300 = vld [vmem:[#allocation5 + $0x3f8] sm:$0xff]
        %v3301 = vld [vmem:[#allocation5 + $0x400] sm:$0xff]
        %v3302 = vld [vmem:[#allocation5 + $0x408] sm:$0xff]
        %v3303 = vld [vmem:[#allocation5 + $0x410] sm:$0xff]
        %v3304 = vld [vmem:[#allocation5 + $0x418] sm:$0xff]
        %v3305 = vld [vmem:[#allocation5 + $0x420] sm:$0xff]
        %v3306 = vld [vmem:[#allocation5 + $0x428] sm:$0xff]
        %v3307 = vld [vmem:[#allocation5 + $0x430] sm:$0xff]
        %v3308 = vld [vmem:[#allocation5 + $0x438] sm:$0xff]
        %v3309 = vld [vmem:[#allocation5 + $0x440] sm:$0xff]
        %v3310 = vld [vmem:[#allocation5 + $0x448] sm:$0xff]
        %v3311 = vld [vmem:[#allocation5 + $0x450] sm:$0xff]
        %v3312 = vld [vmem:[#allocation5 + $0x458] sm:$0xff]
        %v3313 = vld [vmem:[#allocation5 + $0x460] sm:$0xff]
        %v3314 = vld [vmem:[#allocation5 + $0x468] sm:$0xff]
        %v3315 = vld [vmem:[#allocation5 + $0x470] sm:$0xff]
        %v3316 = vld [vmem:[#allocation5 + $0x478] sm:$0xff]
        %v3317 = vld [vmem:[#allocation5 + $0x480] sm:$0xff]
        %v3318 = vld [vmem:[#allocation5 + $0x488] sm:$0xff]
        %v3319 = vld [vmem:[#allocation5 + $0x490] sm:$0xff]
        %v3320 = vld [vmem:[#allocation5 + $0x498] sm:$0xff]
        %v3321 = vld [vmem:[#allocation5 + $0x4a0] sm:$0xff]
        %v3322 = vld [vmem:[#allocation5 + $0x4a8] sm:$0xff]
        %v3323 = vld [vmem:[#allocation5 + $0x4b0] sm:$0xff]
        %v3324 = vld [vmem:[#allocation5 + $0x4b8] sm:$0xff]
        %v3325 = vld [vmem:[#allocation5 + $0x4c0] sm:$0xff]
        %v3326 = vld [vmem:[#allocation5 + $0x4c8] sm:$0xff]
        %v3327 = vld [vmem:[#allocation5 + $0x4d0] sm:$0xff]
        %v3328 = vld [vmem:[#allocation5 + $0x4d8] sm:$0xff]
        %v3329 = vld [vmem:[#allocation5 + $0x4e0] sm:$0xff]
        %v3330 = vld [vmem:[#allocation5 + $0x4e8] sm:$0xff]
        %v3331 = vld [vmem:[#allocation5 + $0x4f0] sm:$0xff]
        %v3332 = vld [vmem:[#allocation5 + $0x4f8] sm:$0xff]
        %v3493 = vunpack.c.l.b16 %v3173
        %v3494 = vunpack.c.h.b16 %v3173
        %v3495 = vunpack.c.l.b16 %v3174
        %v3496 = vunpack.c.h.b16 %v3174
        %v3497 = vunpack.c.l.b16 %v3175
        %v3498 = vunpack.c.h.b16 %v3175
        %v3499 = vunpack.c.l.b16 %v3176
        %v3500 = vunpack.c.h.b16 %v3176
        %v3501 = vunpack.c.l.b16 %v3177
        %v3502 = vunpack.c.h.b16 %v3177
        %v3503 = vunpack.c.l.b16 %v3178
        %v3504 = vunpack.c.h.b16 %v3178
        %v3505 = vunpack.c.l.b16 %v3179
        %v3506 = vunpack.c.h.b16 %v3179
        %v3507 = vunpack.c.l.b16 %v3180
        %v3508 = vunpack.c.h.b16 %v3180
        %v3509 = vunpack.c.l.b16 %v3181
        %v3510 = vunpack.c.h.b16 %v3181
        %v3511 = vunpack.c.l.b16 %v3182
        %v3512 = vunpack.c.h.b16 %v3182
        %v3513 = vunpack.c.l.b16 %v3183
        %v3514 = vunpack.c.h.b16 %v3183
        %v3515 = vunpack.c.l.b16 %v3184
        %v3516 = vunpack.c.h.b16 %v3184
        %v3517 = vunpack.c.l.b16 %v3185
        %v3518 = vunpack.c.h.b16 %v3185
        %v3519 = vunpack.c.l.b16 %v3186
        %v3520 = vunpack.c.h.b16 %v3186
        %v3521 = vunpack.c.l.b16 %v3187
        %v3522 = vunpack.c.h.b16 %v3187
        %v3523 = vunpack.c.l.b16 %v3188
        %v3524 = vunpack.c.h.b16 %v3188
        %v3525 = vunpack.c.l.b16 %v3189
        %v3526 = vunpack.c.h.b16 %v3189
        %v3527 = vunpack.c.l.b16 %v3190
        %v3528 = vunpack.c.h.b16 %v3190
        %v3529 = vunpack.c.l.b16 %v3191
        %v3530 = vunpack.c.h.b16 %v3191
        %v3531 = vunpack.c.l.b16 %v3192
        %v3532 = vunpack.c.h.b16 %v3192
        %v3533 = vunpack.c.l.b16 %v3193
        %v3534 = vunpack.c.h.b16 %v3193
        %v3535 = vunpack.c.l.b16 %v3194
        %v3536 = vunpack.c.h.b16 %v3194
        %v3537 = vunpack.c.l.b16 %v3195
        %v3538 = vunpack.c.h.b16 %v3195
        %v3539 = vunpack.c.l.b16 %v3196
        %v3540 = vunpack.c.h.b16 %v3196
        %v3541 = vunpack.c.l.b16 %v3197
        %v3542 = vunpack.c.h.b16 %v3197
        %v3543 = vunpack.c.l.b16 %v3198
        %v3544 = vunpack.c.h.b16 %v3198
        %v3545 = vunpack.c.l.b16 %v3199
        %v3546 = vunpack.c.h.b16 %v3199
        %v3547 = vunpack.c.l.b16 %v3200
        %v3548 = vunpack.c.h.b16 %v3200
        %v3549 = vunpack.c.l.b16 %v3201
        %v3550 = vunpack.c.h.b16 %v3201
        %v3551 = vunpack.c.l.b16 %v3202
        %v3552 = vunpack.c.h.b16 %v3202
        %v3553 = vunpack.c.l.b16 %v3203
        %v3554 = vunpack.c.h.b16 %v3203
        %v3555 = vunpack.c.l.b16 %v3204
        %v3556 = vunpack.c.h.b16 %v3204
        %v3557 = vunpack.c.l.b16 %v3205
        %v3558 = vunpack.c.h.b16 %v3205
        %v3559 = vunpack.c.l.b16 %v3206
        %v3560 = vunpack.c.h.b16 %v3206
        %v3561 = vunpack.c.l.b16 %v3207
        %v3562 = vunpack.c.h.b16 %v3207
        %v3563 = vunpack.c.l.b16 %v3208
        %v3564 = vunpack.c.h.b16 %v3208
        %v3565 = vunpack.c.l.b16 %v3209
        %v3566 = vunpack.c.h.b16 %v3209
        %v3567 = vunpack.c.l.b16 %v3210
        %v3568 = vunpack.c.h.b16 %v3210
        %v3569 = vunpack.c.l.b16 %v3211
        %v3570 = vunpack.c.h.b16 %v3211
        %v3571 = vunpack.c.l.b16 %v3212
        %v3572 = vunpack.c.h.b16 %v3212
        %v3573 = vunpack.c.l.b16 %v3213
        %v3574 = vunpack.c.h.b16 %v3213
        %v3575 = vunpack.c.l.b16 %v3214
        %v3576 = vunpack.c.h.b16 %v3214
        %v3577 = vunpack.c.l.b16 %v3215
        %v3578 = vunpack.c.h.b16 %v3215
        %v3579 = vunpack.c.l.b16 %v3216
        %v3580 = vunpack.c.h.b16 %v3216
        %v3581 = vunpack.c.l.b16 %v3217
        %v3582 = vunpack.c.h.b16 %v3217
        %v3583 = vunpack.c.l.b16 %v3218
        %v3584 = vunpack.c.h.b16 %v3218
        %v3585 = vunpack.c.l.b16 %v3219
        %v3586 = vunpack.c.h.b16 %v3219
        %v3587 = vunpack.c.l.b16 %v3220
        %v3588 = vunpack.c.h.b16 %v3220
        %v3589 = vunpack.c.l.b16 %v3221
        %v3590 = vunpack.c.h.b16 %v3221
        %v3591 = vunpack.c.l.b16 %v3222
        %v3592 = vunpack.c.h.b16 %v3222
        %v3593 = vunpack.c.l.b16 %v3223
        %v3594 = vunpack.c.h.b16 %v3223
        %v3595 = vunpack.c.l.b16 %v3224
        %v3596 = vunpack.c.h.b16 %v3224
        %v3597 = vunpack.c.l.b16 %v3225
        %v3598 = vunpack.c.h.b16 %v3225
        %v3599 = vunpack.c.l.b16 %v3226
        %v3600 = vunpack.c.h.b16 %v3226
        %v3601 = vunpack.c.l.b16 %v3227
        %v3602 = vunpack.c.h.b16 %v3227
        %v3603 = vunpack.c.l.b16 %v3228
        %v3604 = vunpack.c.h.b16 %v3228
        %v3605 = vunpack.c.l.b16 %v3229
        %v3606 = vunpack.c.h.b16 %v3229
        %v3607 = vunpack.c.l.b16 %v3230
        %v3608 = vunpack.c.h.b16 %v3230
        %v3609 = vunpack.c.l.b16 %v3231
        %v3610 = vunpack.c.h.b16 %v3231
        %v3611 = vunpack.c.l.b16 %v3232
        %v3612 = vunpack.c.h.b16 %v3232
        %v3613 = vunpack.c.l.b16 %v3233
        %v3614 = vunpack.c.h.b16 %v3233
        %v3615 = vunpack.c.l.b16 %v3234
        %v3616 = vunpack.c.h.b16 %v3234
        %v3617 = vunpack.c.l.b16 %v3235
        %v3618 = vunpack.c.h.b16 %v3235
        %v3619 = vunpack.c.l.b16 %v3236
        %v3620 = vunpack.c.h.b16 %v3236
        %v3621 = vunpack.c.l.b16 %v3237
        %v3622 = vunpack.c.h.b16 %v3237
        %v3623 = vunpack.c.l.b16 %v3238
        %v3624 = vunpack.c.h.b16 %v3238
        %v3625 = vunpack.c.l.b16 %v3239
        %v3626 = vunpack.c.h.b16 %v3239
        %v3627 = vunpack.c.l.b16 %v3240
        %v3628 = vunpack.c.h.b16 %v3240
        %v3629 = vunpack.c.l.b16 %v3241
        %v3630 = vunpack.c.h.b16 %v3241
        %v3631 = vunpack.c.l.b16 %v3242
        %v3632 = vunpack.c.h.b16 %v3242
        %v3633 = vunpack.c.l.b16 %v3243
        %v3634 = vunpack.c.h.b16 %v3243
        %v3635 = vunpack.c.l.b16 %v3244
        %v3636 = vunpack.c.h.b16 %v3244
        %v3637 = vunpack.c.l.b16 %v3245
        %v3638 = vunpack.c.h.b16 %v3245
        %v3639 = vunpack.c.l.b16 %v3246
        %v3640 = vunpack.c.h.b16 %v3246
        %v3641 = vunpack.c.l.b16 %v3247
        %v3642 = vunpack.c.h.b16 %v3247
        %v3643 = vunpack.c.l.b16 %v3248
        %v3644 = vunpack.c.h.b16 %v3248
        %v3645 = vunpack.c.l.b16 %v3249
        %v3646 = vunpack.c.h.b16 %v3249
        %v3647 = vunpack.c.l.b16 %v3250
        %v3648 = vunpack.c.h.b16 %v3250
        %v3649 = vunpack.c.l.b16 %v3251
        %v3650 = vunpack.c.h.b16 %v3251
        %v3651 = vunpack.c.l.b16 %v3252
        %v3652 = vunpack.c.h.b16 %v3252
        %v3653 = vunpack.c.l.b16 %v3253
        %v3654 = vunpack.c.h.b16 %v3253
        %v3655 = vunpack.c.l.b16 %v3254
        %v3656 = vunpack.c.h.b16 %v3254
        %v3657 = vunpack.c.l.b16 %v3255
        %v3658 = vunpack.c.h.b16 %v3255
        %v3659 = vunpack.c.l.b16 %v3256
        %v3660 = vunpack.c.h.b16 %v3256
        %v3661 = vunpack.c.l.b16 %v3257
        %v3662 = vunpack.c.h.b16 %v3257
        %v3663 = vunpack.c.l.b16 %v3258
        %v3664 = vunpack.c.h.b16 %v3258
        %v3665 = vunpack.c.l.b16 %v3259
        %v3666 = vunpack.c.h.b16 %v3259
        %v3667 = vunpack.c.l.b16 %v3260
        %v3668 = vunpack.c.h.b16 %v3260
        %v3669 = vunpack.c.l.b16 %v3261
        %v3670 = vunpack.c.h.b16 %v3261
        %v3671 = vunpack.c.l.b16 %v3262
        %v3672 = vunpack.c.h.b16 %v3262
        %v3673 = vunpack.c.l.b16 %v3263
        %v3674 = vunpack.c.h.b16 %v3263
        %v3675 = vunpack.c.l.b16 %v3264
        %v3676 = vunpack.c.h.b16 %v3264
        %v3677 = vunpack.c.l.b16 %v3265
        %v3678 = vunpack.c.h.b16 %v3265
        %v3679 = vunpack.c.l.b16 %v3266
        %v3680 = vunpack.c.h.b16 %v3266
        %v3681 = vunpack.c.l.b16 %v3267
        %v3682 = vunpack.c.h.b16 %v3267
        %v3683 = vunpack.c.l.b16 %v3268
        %v3684 = vunpack.c.h.b16 %v3268
        %v3685 = vunpack.c.l.b16 %v3269
        %v3686 = vunpack.c.h.b16 %v3269
        %v3687 = vunpack.c.l.b16 %v3270
        %v3688 = vunpack.c.h.b16 %v3270
        %v3689 = vunpack.c.l.b16 %v3271
        %v3690 = vunpack.c.h.b16 %v3271
        %v3691 = vunpack.c.l.b16 %v3272
        %v3692 = vunpack.c.h.b16 %v3272
        %v3693 = vunpack.c.l.b16 %v3273
        %v3694 = vunpack.c.h.b16 %v3273
        %v3695 = vunpack.c.l.b16 %v3274
        %v3696 = vunpack.c.h.b16 %v3274
        %v3697 = vunpack.c.l.b16 %v3275
        %v3698 = vunpack.c.h.b16 %v3275
        %v3699 = vunpack.c.l.b16 %v3276
        %v3700 = vunpack.c.h.b16 %v3276
        %v3701 = vunpack.c.l.b16 %v3277
        %v3702 = vunpack.c.h.b16 %v3277
        %v3703 = vunpack.c.l.b16 %v3278
        %v3704 = vunpack.c.h.b16 %v3278
        %v3705 = vunpack.c.l.b16 %v3279
        %v3706 = vunpack.c.h.b16 %v3279
        %v3707 = vunpack.c.l.b16 %v3280
        %v3708 = vunpack.c.h.b16 %v3280
        %v3709 = vunpack.c.l.b16 %v3281
        %v3710 = vunpack.c.h.b16 %v3281
        %v3711 = vunpack.c.l.b16 %v3282
        %v3712 = vunpack.c.h.b16 %v3282
        %v3713 = vunpack.c.l.b16 %v3283
        %v3714 = vunpack.c.h.b16 %v3283
        %v3715 = vunpack.c.l.b16 %v3284
        %v3716 = vunpack.c.h.b16 %v3284
        %v3717 = vunpack.c.l.b16 %v3285
        %v3718 = vunpack.c.h.b16 %v3285
        %v3719 = vunpack.c.l.b16 %v3286
        %v3720 = vunpack.c.h.b16 %v3286
        %v3721 = vunpack.c.l.b16 %v3287
        %v3722 = vunpack.c.h.b16 %v3287
        %v3723 = vunpack.c.l.b16 %v3288
        %v3724 = vunpack.c.h.b16 %v3288
        %v3725 = vunpack.c.l.b16 %v3289
        %v3726 = vunpack.c.h.b16 %v3289
        %v3727 = vunpack.c.l.b16 %v3290
        %v3728 = vunpack.c.h.b16 %v3290
        %v3729 = vunpack.c.l.b16 %v3291
        %v3730 = vunpack.c.h.b16 %v3291
        %v3731 = vunpack.c.l.b16 %v3292
        %v3732 = vunpack.c.h.b16 %v3292
        %v3733 = vunpack.c.l.b16 %v3293
        %v3734 = vunpack.c.h.b16 %v3293
        %v3735 = vunpack.c.l.b16 %v3294
        %v3736 = vunpack.c.h.b16 %v3294
        %v3737 = vunpack.c.l.b16 %v3295
        %v3738 = vunpack.c.h.b16 %v3295
        %v3739 = vunpack.c.l.b16 %v3296
        %v3740 = vunpack.c.h.b16 %v3296
        %v3741 = vunpack.c.l.b16 %v3297
        %v3742 = vunpack.c.h.b16 %v3297
        %v3743 = vunpack.c.l.b16 %v3298
        %v3744 = vunpack.c.h.b16 %v3298
        %v3745 = vunpack.c.l.b16 %v3299
        %v3746 = vunpack.c.h.b16 %v3299
        %v3747 = vunpack.c.l.b16 %v3300
        %v3748 = vunpack.c.h.b16 %v3300
        %v3749 = vunpack.c.l.b16 %v3301
        %v3750 = vunpack.c.h.b16 %v3301
        %v3751 = vunpack.c.l.b16 %v3302
        %v3752 = vunpack.c.h.b16 %v3302
        %v3753 = vunpack.c.l.b16 %v3303
        %v3754 = vunpack.c.h.b16 %v3303
        %v3755 = vunpack.c.l.b16 %v3304
        %v3756 = vunpack.c.h.b16 %v3304
        %v3757 = vunpack.c.l.b16 %v3305
        %v3758 = vunpack.c.h.b16 %v3305
        %v3759 = vunpack.c.l.b16 %v3306
        %v3760 = vunpack.c.h.b16 %v3306
        %v3761 = vunpack.c.l.b16 %v3307
        %v3762 = vunpack.c.h.b16 %v3307
        %v3763 = vunpack.c.l.b16 %v3308
        %v3764 = vunpack.c.h.b16 %v3308
        %v3765 = vunpack.c.l.b16 %v3309
        %v3766 = vunpack.c.h.b16 %v3309
        %v3767 = vunpack.c.l.b16 %v3310
        %v3768 = vunpack.c.h.b16 %v3310
        %v3769 = vunpack.c.l.b16 %v3311
        %v3770 = vunpack.c.h.b16 %v3311
        %v3771 = vunpack.c.l.b16 %v3312
        %v3772 = vunpack.c.h.b16 %v3312
        %v3773 = vunpack.c.l.b16 %v3313
        %v3774 = vunpack.c.h.b16 %v3313
        %v3775 = vunpack.c.l.b16 %v3314
        %v3776 = vunpack.c.h.b16 %v3314
        %v3777 = vunpack.c.l.b16 %v3315
        %v3778 = vunpack.c.h.b16 %v3315
        %v3779 = vunpack.c.l.b16 %v3316
        %v3780 = vunpack.c.h.b16 %v3316
        %v3781 = vunpack.c.l.b16 %v3317
        %v3782 = vunpack.c.h.b16 %v3317
        %v3783 = vunpack.c.l.b16 %v3318
        %v3784 = vunpack.c.h.b16 %v3318
        %v3785 = vunpack.c.l.b16 %v3319
        %v3786 = vunpack.c.h.b16 %v3319
        %v3787 = vunpack.c.l.b16 %v3320
        %v3788 = vunpack.c.h.b16 %v3320
        %v3789 = vunpack.c.l.b16 %v3321
        %v3790 = vunpack.c.h.b16 %v3321
        %v3791 = vunpack.c.l.b16 %v3322
        %v3792 = vunpack.c.h.b16 %v3322
        %v3793 = vunpack.c.l.b16 %v3323
        %v3794 = vunpack.c.h.b16 %v3323
        %v3795 = vunpack.c.l.b16 %v3324
        %v3796 = vunpack.c.h.b16 %v3324
        %v3797 = vunpack.c.l.b16 %v3325
        %v3798 = vunpack.c.h.b16 %v3325
        %v3799 = vunpack.c.l.b16 %v3326
        %v3800 = vunpack.c.h.b16 %v3326
        %v3801 = vunpack.c.l.b16 %v3327
        %v3802 = vunpack.c.h.b16 %v3327
        %v3803 = vunpack.c.l.b16 %v3328
        %v3804 = vunpack.c.h.b16 %v3328
        %v3805 = vunpack.c.l.b16 %v3329
        %v3806 = vunpack.c.h.b16 %v3329
        %v3807 = vunpack.c.l.b16 %v3330
        %v3808 = vunpack.c.h.b16 %v3330
        %v3809 = vunpack.c.l.b16 %v3331
        %v3810 = vunpack.c.h.b16 %v3331
        %v3811 = vunpack.c.l.b16 %v3332
        %v3812 = vunpack.c.h.b16 %v3332
        %v3813 = vpack.c.b16 %v3503, %v3493
        %v3814 = vpack.c.b16 %v3504, %v3494
        %v3815 = vpack.c.b16 %v3505, %v3495
        %v3816 = vpack.c.b16 %v3506, %v3496
        %v3817 = vpack.c.b16 %v3507, %v3497
        %v3818 = vpack.c.b16 %v3508, %v3498
        %v3819 = vpack.c.b16 %v3509, %v3499
        %v3820 = vpack.c.b16 %v3510, %v3500
        %v3821 = vpack.c.b16 %v3511, %v3501
        %v3822 = vpack.c.b16 %v3512, %v3502
        %v3823 = vpack.c.b16 %v3523, %v3513
        %v3824 = vpack.c.b16 %v3524, %v3514
        %v3825 = vpack.c.b16 %v3525, %v3515
        %v3826 = vpack.c.b16 %v3526, %v3516
        %v3827 = vpack.c.b16 %v3527, %v3517
        %v3828 = vpack.c.b16 %v3528, %v3518
        %v3829 = vpack.c.b16 %v3529, %v3519
        %v3830 = vpack.c.b16 %v3530, %v3520
        %v3831 = vpack.c.b16 %v3531, %v3521
        %v3832 = vpack.c.b16 %v3532, %v3522
        %v3833 = vpack.c.b16 %v3543, %v3533
        %v3834 = vpack.c.b16 %v3544, %v3534
        %v3835 = vpack.c.b16 %v3545, %v3535
        %v3836 = vpack.c.b16 %v3546, %v3536
        %v3837 = vpack.c.b16 %v3547, %v3537
        %v3838 = vpack.c.b16 %v3548, %v3538
        %v3839 = vpack.c.b16 %v3549, %v3539
        %v3840 = vpack.c.b16 %v3550, %v3540
        %v3841 = vpack.c.b16 %v3551, %v3541
        %v3842 = vpack.c.b16 %v3552, %v3542
        %v3843 = vpack.c.b16 %v3563, %v3553
        %v3844 = vpack.c.b16 %v3564, %v3554
        %v3845 = vpack.c.b16 %v3565, %v3555
        %v3846 = vpack.c.b16 %v3566, %v3556
        %v3847 = vpack.c.b16 %v3567, %v3557
        %v3848 = vpack.c.b16 %v3568, %v3558
        %v3849 = vpack.c.b16 %v3569, %v3559
        %v3850 = vpack.c.b16 %v3570, %v3560
        %v3851 = vpack.c.b16 %v3571, %v3561
        %v3852 = vpack.c.b16 %v3572, %v3562
        %v3853 = vpack.c.b16 %v3583, %v3573
        %v3854 = vpack.c.b16 %v3584, %v3574
        %v3855 = vpack.c.b16 %v3585, %v3575
        %v3856 = vpack.c.b16 %v3586, %v3576
        %v3857 = vpack.c.b16 %v3587, %v3577
        %v3858 = vpack.c.b16 %v3588, %v3578
        %v3859 = vpack.c.b16 %v3589, %v3579
        %v3860 = vpack.c.b16 %v3590, %v3580
        %v3861 = vpack.c.b16 %v3591, %v3581
        %v3862 = vpack.c.b16 %v3592, %v3582
        %v3863 = vpack.c.b16 %v3603, %v3593
        %v3864 = vpack.c.b16 %v3604, %v3594
        %v3865 = vpack.c.b16 %v3605, %v3595
        %v3866 = vpack.c.b16 %v3606, %v3596
        %v3867 = vpack.c.b16 %v3607, %v3597
        %v3868 = vpack.c.b16 %v3608, %v3598
        %v3869 = vpack.c.b16 %v3609, %v3599
        %v3870 = vpack.c.b16 %v3610, %v3600
        %v3871 = vpack.c.b16 %v3611, %v3601
        %v3872 = vpack.c.b16 %v3612, %v3602
        %v3873 = vpack.c.b16 %v3623, %v3613
        %v3874 = vpack.c.b16 %v3624, %v3614
        %v3875 = vpack.c.b16 %v3625, %v3615
        %v3876 = vpack.c.b16 %v3626, %v3616
        %v3877 = vpack.c.b16 %v3627, %v3617
        %v3878 = vpack.c.b16 %v3628, %v3618
        %v3879 = vpack.c.b16 %v3629, %v3619
        %v3880 = vpack.c.b16 %v3630, %v3620
        %v3881 = vpack.c.b16 %v3631, %v3621
        %v3882 = vpack.c.b16 %v3632, %v3622
        %v3883 = vpack.c.b16 %v3643, %v3633
        %v3884 = vpack.c.b16 %v3644, %v3634
        %v3885 = vpack.c.b16 %v3645, %v3635
        %v3886 = vpack.c.b16 %v3646, %v3636
        %v3887 = vpack.c.b16 %v3647, %v3637
        %v3888 = vpack.c.b16 %v3648, %v3638
        %v3889 = vpack.c.b16 %v3649, %v3639
        %v3890 = vpack.c.b16 %v3650, %v3640
        %v3891 = vpack.c.b16 %v3651, %v3641
        %v3892 = vpack.c.b16 %v3652, %v3642
        %v3893 = vpack.c.b16 %v3663, %v3653
        %v3894 = vpack.c.b16 %v3664, %v3654
        %v3895 = vpack.c.b16 %v3665, %v3655
        %v3896 = vpack.c.b16 %v3666, %v3656
        %v3897 = vpack.c.b16 %v3667, %v3657
        %v3898 = vpack.c.b16 %v3668, %v3658
        %v3899 = vpack.c.b16 %v3669, %v3659
        %v3900 = vpack.c.b16 %v3670, %v3660
        %v3901 = vpack.c.b16 %v3671, %v3661
        %v3902 = vpack.c.b16 %v3672, %v3662
        %v3903 = vpack.c.b16 %v3683, %v3673
        %v3904 = vpack.c.b16 %v3684, %v3674
        %v3905 = vpack.c.b16 %v3685, %v3675
        %v3906 = vpack.c.b16 %v3686, %v3676
        %v3907 = vpack.c.b16 %v3687, %v3677
        %v3908 = vpack.c.b16 %v3688, %v3678
        %v3909 = vpack.c.b16 %v3689, %v3679
        %v3910 = vpack.c.b16 %v3690, %v3680
        %v3911 = vpack.c.b16 %v3691, %v3681
        %v3912 = vpack.c.b16 %v3692, %v3682
        %v3913 = vpack.c.b16 %v3703, %v3693
        %v3914 = vpack.c.b16 %v3704, %v3694
        %v3915 = vpack.c.b16 %v3705, %v3695
        %v3916 = vpack.c.b16 %v3706, %v3696
        %v3917 = vpack.c.b16 %v3707, %v3697
        %v3918 = vpack.c.b16 %v3708, %v3698
        %v3919 = vpack.c.b16 %v3709, %v3699
        %v3920 = vpack.c.b16 %v3710, %v3700
        %v3921 = vpack.c.b16 %v3711, %v3701
        %v3922 = vpack.c.b16 %v3712, %v3702
        %v3923 = vpack.c.b16 %v3723, %v3713
        %v3924 = vpack.c.b16 %v3724, %v3714
        %v3925 = vpack.c.b16 %v3725, %v3715
        %v3926 = vpack.c.b16 %v3726, %v3716
        %v3927 = vpack.c.b16 %v3727, %v3717
        %v3928 = vpack.c.b16 %v3728, %v3718
        %v3929 = vpack.c.b16 %v3729, %v3719
        %v3930 = vpack.c.b16 %v3730, %v3720
        %v3931 = vpack.c.b16 %v3731, %v3721
        %v3932 = vpack.c.b16 %v3732, %v3722
        %v3933 = vpack.c.b16 %v3743, %v3733
        %v3934 = vpack.c.b16 %v3744, %v3734
        %v3935 = vpack.c.b16 %v3745, %v3735
        %v3936 = vpack.c.b16 %v3746, %v3736
        %v3937 = vpack.c.b16 %v3747, %v3737
        %v3938 = vpack.c.b16 %v3748, %v3738
        %v3939 = vpack.c.b16 %v3749, %v3739
        %v3940 = vpack.c.b16 %v3750, %v3740
        %v3941 = vpack.c.b16 %v3751, %v3741
        %v3942 = vpack.c.b16 %v3752, %v3742
        %v3943 = vpack.c.b16 %v3763, %v3753
        %v3944 = vpack.c.b16 %v3764, %v3754
        %v3945 = vpack.c.b16 %v3765, %v3755
        %v3946 = vpack.c.b16 %v3766, %v3756
        %v3947 = vpack.c.b16 %v3767, %v3757
        %v3948 = vpack.c.b16 %v3768, %v3758
        %v3949 = vpack.c.b16 %v3769, %v3759
        %v3950 = vpack.c.b16 %v3770, %v3760
        %v3951 = vpack.c.b16 %v3771, %v3761
        %v3952 = vpack.c.b16 %v3772, %v3762
        %v3953 = vpack.c.b16 %v3783, %v3773
        %v3954 = vpack.c.b16 %v3784, %v3774
        %v3955 = vpack.c.b16 %v3785, %v3775
        %v3956 = vpack.c.b16 %v3786, %v3776
        %v3957 = vpack.c.b16 %v3787, %v3777
        %v3958 = vpack.c.b16 %v3788, %v3778
        %v3959 = vpack.c.b16 %v3789, %v3779
        %v3960 = vpack.c.b16 %v3790, %v3780
        %v3961 = vpack.c.b16 %v3791, %v3781
        %v3962 = vpack.c.b16 %v3792, %v3782
        %v3963 = vpack.c.b16 %v3803, %v3793
        %v3964 = vpack.c.b16 %v3804, %v3794
        %v3965 = vpack.c.b16 %v3805, %v3795
        %v3966 = vpack.c.b16 %v3806, %v3796
        %v3967 = vpack.c.b16 %v3807, %v3797
        %v3968 = vpack.c.b16 %v3808, %v3798
        %v3969 = vpack.c.b16 %v3809, %v3799
        %v3970 = vpack.c.b16 %v3810, %v3800
        %v3971 = vpack.c.b16 %v3811, %v3801
        %v3972 = vpack.c.b16 %v3812, %v3802
        %4133 = vmatprep.subr.bf16.mxu0 %v3814
        %4134 = vmatpush1.bf16.msra.mxu0 %v3813
        %4135 = vmatprep.subr.bf16.mxu0 %v3824
        %4136 = vmatpush1.bf16.msra.mxu0 %v3823
        %4137 = vmatprep.subr.bf16.mxu0 %v3834
        %4138 = vmatpush1.bf16.msra.mxu0 %v3833
        %4139 = vmatprep.subr.bf16.mxu0 %v3844
        %4140 = vmatpush1.bf16.msra.mxu0 %v3843
        %4141 = vmatprep.subr.bf16.mxu0 %v3854
        %4142 = vmatpush1.bf16.msra.mxu0 %v3853
        %4143 = vmatprep.subr.bf16.mxu0 %v3864
        %4144 = vmatpush1.bf16.msra.mxu0 %v3863
        %4145 = vmatprep.subr.bf16.mxu0 %v3874
        %4146 = vmatpush1.bf16.msra.mxu0 %v3873
        %4147 = vmatprep.subr.bf16.mxu0 %v3884
        %4148 = vmatpush1.bf16.msra.mxu0 %v3883
        %4149 = vmatprep.subr.bf16.mxu0 %v3894
        %4150 = vmatpush1.bf16.msra.mxu0 %v3893
        %4151 = vmatprep.subr.bf16.mxu0 %v3904
        %4152 = vmatpush1.bf16.msra.mxu0 %v3903
        %4153 = vmatprep.subr.bf16.mxu0 %v3914
        %4154 = vmatpush1.bf16.msra.mxu0 %v3913
        %4155 = vmatprep.subr.bf16.mxu0 %v3924
        %4156 = vmatpush1.bf16.msra.mxu0 %v3923
        %4157 = vmatprep.subr.bf16.mxu0 %v3934
        %4158 = vmatpush1.bf16.msra.mxu0 %v3933
        %4159 = vmatprep.subr.bf16.mxu0 %v3944
        %4160 = vmatpush1.bf16.msra.mxu0 %v3943
        %4161 = vmatprep.subr.bf16.mxu0 %v3954
        %4162 = vmatpush1.bf16.msra.mxu0 %v3953
        %4163 = vmatprep.subr.bf16.mxu0 %v3964
        %4164 = vmatpush1.bf16.msra.mxu0 %v3963
        %4165 = vmatprep.mubr.bf16.mxu0 %v3126
        %4166 = vmatmul.mubr.bf16.gmra.mrb[0].mxu0 %v3125
        %v4167 = vpop.f32.mrb[0].mxu0
        %v4168 = vadd.f32 0.0, %v4167
        %v4169 = vpop.f32.mrb[0].mxu0
        %v4170 = vadd.f32 0.0, %v4169
        %v4171 = vpop.f32.mrb[0].mxu0
        %v4172 = vadd.f32 0.0, %v4171
        %v4173 = vpop.f32.mrb[0].mxu0
        %v4174 = vadd.f32 0.0, %v4173
        %4175 = vmatprep.mubr.bf16.mxu0 %v3128
        %4176 = vmatmul.mubr.bf16.gmra.mrb[0].mxu0 %v3127
        %v4177 = vpop.f32.mrb[0].mxu0
        %v4178 = vadd.f32 0.0, %v4177
        %v4179 = vpop.f32.mrb[0].mxu0
        %v4180 = vadd.f32 0.0, %v4179
        %v4181 = vpop.f32.mrb[0].mxu0
        %v4182 = vadd.f32 0.0, %v4181
        %v4183 = vpop.f32.mrb[0].mxu0
        %v4184 = vadd.f32 0.0, %v4183
        %4185 = vmatprep.mubr.bf16.mxu0 %v3130
        %4186 = vmatmul.mubr.bf16.gmra.mrb[0].mxu0 %v3129
        %v4187 = vpop.f32.mrb[0].mxu0
        %v4188 = vadd.f32 0.0, %v4187
        %v4189 = vpop.f32.mrb[0].mxu0
        %v4190 = vadd.f32 0.0, %v4189
        %v4191 = vpop.f32.mrb[0].mxu0
        %v4192 = vadd.f32 0.0, %v4191
        %v4193 = vpop.f32.mrb[0].mxu0
        %v4194 = vadd.f32 0.0, %v4193
        %4195 = vmatprep.mubr.bf16.mxu0 %v3132
        %4196 = vmatmul.mubr.bf16.gmra.mrb[0].mxu0 %v3131
        %v4197 = vpop.f32.mrb[0].mxu0
        %v4198 = vadd.f32 0.0, %v4197
        %v4199 = vpop.f32.mrb[0].mxu0
        %v4200 = vadd.f32 0.0, %v4199
        %v4201 = vpop.f32.mrb[0].mxu0
        %v4202 = vadd.f32 0.0, %v4201
        %v4203 = vpop.f32.mrb[0].mxu0
        %v4204 = vadd.f32 0.0, %v4203
        %4205 = vmatprep.mubr.bf16.mxu0 %v3134
        %4206 = vmatmul.mubr.bf16.gmra.mrb[0].mxu0 %v3133
        %v4207 = vpop.f32.mrb[0].mxu0
        %v4208 = vadd.f32 0.0, %v4207
        %v4209 = vpop.f32.mrb[0].mxu0
        %v4210 = vadd.f32 0.0, %v4209
        %v4211 = vpop.f32.mrb[0].mxu0
        %v4212 = vadd.f32 0.0, %v4211
        %v4213 = vpop.f32.mrb[0].mxu0
        %v4214 = vadd.f32 0.0, %v4213
        %4215 = vmatprep.mubr.bf16.mxu0 %v3136
        %4216 = vmatmul.mubr.bf16.gmra.mrb[0].mxu0 %v3135
        %v4217 = vpop.f32.mrb[0].mxu0
        %v4218 = vadd.f32 0.0, %v4217
        %v4219 = vpop.f32.mrb[0].mxu0
        %v4220 = vadd.f32 0.0, %v4219
        %v4221 = vpop.f32.mrb[0].mxu0
        %v4222 = vadd.f32 0.0, %v4221
        %v4223 = vpop.f32.mrb[0].mxu0
        %v4224 = vadd.f32 0.0, %v4223
        %4225 = vmatprep.mubr.bf16.mxu0 %v3138
        %4226 = vmatmul.mubr.bf16.gmra.mrb[0].mxu0 %v3137
        %v4227 = vpop.f32.mrb[0].mxu0
        %v4228 = vadd.f32 0.0, %v4227
        %v4229 = vpop.f32.mrb[0].mxu0
        %v4230 = vadd.f32 0.0, %v4229
        %v4231 = vpop.f32.mrb[0].mxu0
        %v4232 = vadd.f32 0.0, %v4231
        %v4233 = vpop.f32.mrb[0].mxu0
        %v4234 = vadd.f32 0.0, %v4233
        %4235 = vmatprep.mubr.bf16.mxu0 %v3140
        %4236 = vmatmul.mubr.bf16.gmra.mrb[0].mxu0 %v3139
        %v4237 = vpop.f32.mrb[0].mxu0
        %v4238 = vadd.f32 0.0, %v4237
        %v4239 = vpop.f32.mrb[0].mxu0
        %v4240 = vadd.f32 0.0, %v4239
        %v4241 = vpop.f32.mrb[0].mxu0
        %v4242 = vadd.f32 0.0, %v4241
        %v4243 = vpop.f32.mrb[0].mxu0
        %v4244 = vadd.f32 0.0, %v4243
        %4245 = vmatprep.mubr.bf16.mxu0 %v3142
        %4246 = vmatmul.mubr.bf16.gmra.mrb[0].mxu0 %v3141
        %v4247 = vpop.f32.mrb[0].mxu0
        %v4248 = vadd.f32 0.0, %v4247
        %v4249 = vpop.f32.mrb[0].mxu0
        %v4250 = vadd.f32 0.0, %v4249
        %v4251 = vpop.f32.mrb[0].mxu0
        %v4252 = vadd.f32 0.0, %v4251
        %v4253 = vpop.f32.mrb[0].mxu0
        %v4254 = vadd.f32 0.0, %v4253
        %4255 = vmatprep.mubr.bf16.mxu0 %v3144
        %4256 = vmatmul.mubr.bf16.gmra.mrb[0].mxu0 %v3143
        %v4257 = vpop.f32.mrb[0].mxu0
        %v4258 = vadd.f32 0.0, %v4257
        %v4259 = vpop.f32.mrb[0].mxu0
        %v4260 = vadd.f32 0.0, %v4259
        %v4261 = vpop.f32.mrb[0].mxu0
        %v4262 = vadd.f32 0.0, %v4261
        %v4263 = vpop.f32.mrb[0].mxu0
        %v4264 = vadd.f32 0.0, %v4263
        %4265 = vmatprep.mubr.bf16.mxu0 %v3146
        %4266 = vmatmul.mubr.bf16.gmra.mrb[0].mxu0 %v3145
        %v4267 = vpop.f32.mrb[0].mxu0
        %v4268 = vadd.f32 0.0, %v4267
        %v4269 = vpop.f32.mrb[0].mxu0
        %v4270 = vadd.f32 0.0, %v4269
        %v4271 = vpop.f32.mrb[0].mxu0
        %v4272 = vadd.f32 0.0, %v4271
        %v4273 = vpop.f32.mrb[0].mxu0
        %v4274 = vadd.f32 0.0, %v4273
        %4275 = vmatprep.mubr.bf16.mxu0 %v3148
        %4276 = vmatmul.mubr.bf16.gmra.mrb[0].mxu0 %v3147
        %v4277 = vpop.f32.mrb[0].mxu0
        %v4278 = vadd.f32 0.0, %v4277
        %v4279 = vpop.f32.mrb[0].mxu0
        %v4280 = vadd.f32 0.0, %v4279
        %v4281 = vpop.f32.mrb[0].mxu0
        %v4282 = vadd.f32 0.0, %v4281
        %v4283 = vpop.f32.mrb[0].mxu0
        %v4284 = vadd.f32 0.0, %v4283
        %4285 = vmatprep.mubr.bf16.mxu0 %v3150
        %4286 = vmatmul.mubr.bf16.gmra.mrb[0].mxu0 %v3149
        %v4287 = vpop.f32.mrb[0].mxu0
        %v4288 = vadd.f32 0.0, %v4287
        %v4289 = vpop.f32.mrb[0].mxu0
        %v4290 = vadd.f32 0.0, %v4289
        %v4291 = vpop.f32.mrb[0].mxu0
        %v4292 = vadd.f32 0.0, %v4291
        %v4293 = vpop.f32.mrb[0].mxu0
        %v4294 = vadd.f32 0.0, %v4293
        %4295 = vmatprep.mubr.bf16.mxu0 %v3152
        %4296 = vmatmul.mubr.bf16.gmra.mrb[0].mxu0 %v3151
        %v4297 = vpop.f32.mrb[0].mxu0
        %v4298 = vadd.f32 0.0, %v4297
        %v4299 = vpop.f32.mrb[0].mxu0
        %v4300 = vadd.f32 0.0, %v4299
        %v4301 = vpop.f32.mrb[0].mxu0
        %v4302 = vadd.f32 0.0, %v4301
        %v4303 = vpop.f32.mrb[0].mxu0
        %v4304 = vadd.f32 0.0, %v4303
        %4305 = vmatprep.mubr.bf16.mxu0 %v3154
        %4306 = vmatmul.mubr.bf16.gmra.mrb[0].mxu0 %v3153
        %v4307 = vpop.f32.mrb[0].mxu0
        %v4308 = vadd.f32 0.0, %v4307
        %v4309 = vpop.f32.mrb[0].mxu0
        %v4310 = vadd.f32 0.0, %v4309
        %v4311 = vpop.f32.mrb[0].mxu0
        %v4312 = vadd.f32 0.0, %v4311
        %v4313 = vpop.f32.mrb[0].mxu0
        %v4314 = vadd.f32 0.0, %v4313
        %4315 = vmatprep.mubr.bf16.mxu0 %v3156
        %4316 = vmatmul.mubr.bf16.gmra.mrb[0].mxu0 %v3155
        %v4317 = vpop.f32.mrb[0].mxu0
        %v4318 = vadd.f32 0.0, %v4317
        %v4319 = vpop.f32.mrb[0].mxu0
        %v4320 = vadd.f32 0.0, %v4319
        %v4321 = vpop.f32.mrb[0].mxu0
        %v4322 = vadd.f32 0.0, %v4321
        %v4323 = vpop.f32.mrb[0].mxu0
        %v4324 = vadd.f32 0.0, %v4323
        %4325 = vmatprep.mubr.bf16.mxu0 %v3158
        %4326 = vmatmul.mubr.bf16.gmra.mrb[0].mxu0 %v3157
        %v4327 = vpop.f32.mrb[0].mxu0
        %v4328 = vadd.f32 0.0, %v4327
        %v4329 = vpop.f32.mrb[0].mxu0
        %v4330 = vadd.f32 0.0, %v4329
        %v4331 = vpop.f32.mrb[0].mxu0
        %v4332 = vadd.f32 0.0, %v4331
        %v4333 = vpop.f32.mrb[0].mxu0
        %v4334 = vadd.f32 0.0, %v4333
        %4335 = vmatprep.mubr.bf16.mxu0 %v3160
        %4336 = vmatmul.mubr.bf16.gmra.mrb[0].mxu0 %v3159
        %v4337 = vpop.f32.mrb[0].mxu0
        %v4338 = vadd.f32 0.0, %v4337
        %v4339 = vpop.f32.mrb[0].mxu0
        %v4340 = vadd.f32 0.0, %v4339
        %v4341 = vpop.f32.mrb[0].mxu0
        %v4342 = vadd.f32 0.0, %v4341
        %v4343 = vpop.f32.mrb[0].mxu0
        %v4344 = vadd.f32 0.0, %v4343
        %4345 = vmatprep.mubr.bf16.mxu0 %v3162
        %4346 = vmatmul.mubr.bf16.gmra.mrb[0].mxu0 %v3161
        %v4347 = vpop.f32.mrb[0].mxu0
        %v4348 = vadd.f32 0.0, %v4347
        %v4349 = vpop.f32.mrb[0].mxu0
        %v4350 = vadd.f32 0.0, %v4349
        %v4351 = vpop.f32.mrb[0].mxu0
        %v4352 = vadd.f32 0.0, %v4351
        %v4353 = vpop.f32.mrb[0].mxu0
        %v4354 = vadd.f32 0.0, %v4353
        %4355 = vmatprep.mubr.bf16.mxu0 %v3164
        %4356 = vmatmul.mubr.bf16.gmra.mrb[0].mxu0 %v3163
        %v4357 = vpop.f32.mrb[0].mxu0
        %v4358 = vadd.f32 0.0, %v4357
        %v4359 = vpop.f32.mrb[0].mxu0
        %v4360 = vadd.f32 0.0, %v4359
        %v4361 = vpop.f32.mrb[0].mxu0
        %v4362 = vadd.f32 0.0, %v4361
        %v4363 = vpop.f32.mrb[0].mxu0
        %v4364 = vadd.f32 0.0, %v4363
        %4365 = vmatprep.mubr.bf16.mxu0 %v3166
        %4366 = vmatmul.mubr.bf16.gmra.mrb[0].mxu0 %v3165
        %v4367 = vpop.f32.mrb[0].mxu0
        %v4368 = vadd.f32 0.0, %v4367
        %v4369 = vpop.f32.mrb[0].mxu0
        %v4370 = vadd.f32 0.0, %v4369
        %v4371 = vpop.f32.mrb[0].mxu0
        %v4372 = vadd.f32 0.0, %v4371
        %v4373 = vpop.f32.mrb[0].mxu0
        %v4374 = vadd.f32 0.0, %v4373
        %4375 = vmatprep.mubr.bf16.mxu0 %v3168
        %4376 = vmatmul.mubr.bf16.gmra.mrb[0].mxu0 %v3167
        %v4377 = vpop.f32.mrb[0].mxu0
        %v4378 = vadd.f32 0.0, %v4377
        %v4379 = vpop.f32.mrb[0].mxu0
        %v4380 = vadd.f32 0.0, %v4379
        %v4381 = vpop.f32.mrb[0].mxu0
        %v4382 = vadd.f32 0.0, %v4381
        %v4383 = vpop.f32.mrb[0].mxu0
        %v4384 = vadd.f32 0.0, %v4383
        %4385 = vmatprep.mubr.bf16.mxu0 %v3170
        %4386 = vmatmul.mubr.bf16.gmra.mrb[0].mxu0 %v3169
        %v4387 = vpop.f32.mrb[0].mxu0
        %v4388 = vadd.f32 0.0, %v4387
        %v4389 = vpop.f32.mrb[0].mxu0
        %v4390 = vadd.f32 0.0, %v4389
        %v4391 = vpop.f32.mrb[0].mxu0
        %v4392 = vadd.f32 0.0, %v4391
        %v4393 = vpop.f32.mrb[0].mxu0
        %v4394 = vadd.f32 0.0, %v4393
        %4395 = vmatprep.mubr.bf16.mxu0 %v3172
        %4396 = vmatmul.mubr.bf16.gmra.mrb[0].mxu0 %v3171
        %v4397 = vpop.f32.mrb[0].mxu0
        %v4398 = vadd.f32 0.0, %v4397
        %v4399 = vpop.f32.mrb[0].mxu0
        %v4400 = vadd.f32 0.0, %v4399
        %v4401 = vpop.f32.mrb[0].mxu0
        %v4402 = vadd.f32 0.0, %v4401
        %v4403 = vpop.f32.mrb[0].mxu0
        %v4404 = vadd.f32 0.0, %v4403
        %4405 = vdwg.mxu0
        %4406 = vmatprep.subr.bf16.mxu0 %v3816
        %4407 = vmatpush1.bf16.msra.mxu0 %v3815
        %4408 = vmatprep.subr.bf16.mxu0 %v3826
        %4409 = vmatpush1.bf16.msra.mxu0 %v3825
        %4410 = vmatprep.subr.bf16.mxu0 %v3836
        %4411 = vmatpush1.bf16.msra.mxu0 %v3835
        %4412 = vmatprep.subr.bf16.mxu0 %v3846
        %4413 = vmatpush1.bf16.msra.mxu0 %v3845
        %4414 = vmatprep.subr.bf16.mxu0 %v3856
        %4415 = vmatpush1.bf16.msra.mxu0 %v3855
        %4416 = vmatprep.subr.bf16.mxu0 %v3866
        %4417 = vmatpush1.bf16.msra.mxu0 %v3865
        %4418 = vmatprep.subr.bf16.mxu0 %v3876
        %4419 = vmatpush1.bf16.msra.mxu0 %v3875
        %4420 = vmatprep.subr.bf16.mxu0 %v3886
        %4421 = vmatpush1.bf16.msra.mxu0 %v3885
        %4422 = vmatprep.subr.bf16.mxu0 %v3896
        %4423 = vmatpush1.bf16.msra.mxu0 %v3895
        %4424 = vmatprep.subr.bf16.mxu0 %v3906
        %4425 = vmatpush1.bf16.msra.mxu0 %v3905
        %4426 = vmatprep.subr.bf16.mxu0 %v3916
        %4427 = vmatpush1.bf16.msra.mxu0 %v3915
        %4428 = vmatprep.subr.bf16.mxu0 %v3926
        %4429 = vmatpush1.bf16.msra.mxu0 %v3925
        %4430 = vmatprep.subr.bf16.mxu0 %v3936
        %4431 = vmatpush1.bf16.msra.mxu0 %v3935
        %4432 = vmatprep.subr.bf16.mxu0 %v3946
        %4433 = vmatpush1.bf16.msra.mxu0 %v3945
        %4434 = vmatprep.subr.bf16.mxu0 %v3956
        %4435 = vmatpush1.bf16.msra.mxu0 %v3955
        %4436 = vmatprep.subr.bf16.mxu0 %v3966
        %4437 = vmatpush1.bf16.msra.mxu0 %v3965
        %4438 = vmatprep.mubr.bf16.mxu0 %v3126
        %4439 = vmatmul.mubr.bf16.gmra.mrb[0].mxu0 %v3125
        %v4440 = vpop.f32.mrb[0].mxu0
        %v4441 = vadd.f32 0.0, %v4440
        %v4442 = vpop.f32.mrb[0].mxu0
        %v4443 = vadd.f32 0.0, %v4442
        %v4444 = vpop.f32.mrb[0].mxu0
        %v4445 = vadd.f32 0.0, %v4444
        %v4446 = vpop.f32.mrb[0].mxu0
        %v4447 = vadd.f32 0.0, %v4446
        %4448 = vmatprep.mubr.bf16.mxu0 %v3128
        %4449 = vmatmul.mubr.bf16.gmra.mrb[0].mxu0 %v3127
        %v4450 = vpop.f32.mrb[0].mxu0
        %v4451 = vadd.f32 0.0, %v4450
        %v4452 = vpop.f32.mrb[0].mxu0
        %v4453 = vadd.f32 0.0, %v4452
        %v4454 = vpop.f32.mrb[0].mxu0
        %v4455 = vadd.f32 0.0, %v4454
        %v4456 = vpop.f32.mrb[0].mxu0
        %v4457 = vadd.f32 0.0, %v4456
        %4458 = vmatprep.mubr.bf16.mxu0 %v3130
        %4459 = vmatmul.mubr.bf16.gmra.mrb[0].mxu0 %v3129
        %v4460 = vpop.f32.mrb[0].mxu0
        %v4461 = vadd.f32 0.0, %v4460
        %v4462 = vpop.f32.mrb[0].mxu0
        %v4463 = vadd.f32 0.0, %v4462
        %v4464 = vpop.f32.mrb[0].mxu0
        %v4465 = vadd.f32 0.0, %v4464
        %v4466 = vpop.f32.mrb[0].mxu0
        %v4467 = vadd.f32 0.0, %v4466
        %4468 = vmatprep.mubr.bf16.mxu0 %v3132
        %4469 = vmatmul.mubr.bf16.gmra.mrb[0].mxu0 %v3131
        %v4470 = vpop.f32.mrb[0].mxu0
        %v4471 = vadd.f32 0.0, %v4470
        %v4472 = vpop.f32.mrb[0].mxu0
        %v4473 = vadd.f32 0.0, %v4472
        %v4474 = vpop.f32.mrb[0].mxu0
        %v4475 = vadd.f32 0.0, %v4474
        %v4476 = vpop.f32.mrb[0].mxu0
        %v4477 = vadd.f32 0.0, %v4476
        %4478 = vmatprep.mubr.bf16.mxu0 %v3134
        %4479 = vmatmul.mubr.bf16.gmra.mrb[0].mxu0 %v3133
        %v4480 = vpop.f32.mrb[0].mxu0
        %v4481 = vadd.f32 0.0, %v4480
        %v4482 = vpop.f32.mrb[0].mxu0
        %v4483 = vadd.f32 0.0, %v4482
        %v4484 = vpop.f32.mrb[0].mxu0
        %v4485 = vadd.f32 0.0, %v4484
        %v4486 = vpop.f32.mrb[0].mxu0
        %v4487 = vadd.f32 0.0, %v4486
        %4488 = vmatprep.mubr.bf16.mxu0 %v3136
        %4489 = vmatmul.mubr.bf16.gmra.mrb[0].mxu0 %v3135
        %v4490 = vpop.f32.mrb[0].mxu0
        %v4491 = vadd.f32 0.0, %v4490
        %v4492 = vpop.f32.mrb[0].mxu0
        %v4493 = vadd.f32 0.0, %v4492
        %v4494 = vpop.f32.mrb[0].mxu0
        %v4495 = vadd.f32 0.0, %v4494
        %v4496 = vpop.f32.mrb[0].mxu0
        %v4497 = vadd.f32 0.0, %v4496
        %4498 = vmatprep.mubr.bf16.mxu0 %v3138
        %4499 = vmatmul.mubr.bf16.gmra.mrb[0].mxu0 %v3137
        %v4500 = vpop.f32.mrb[0].mxu0
        %v4501 = vadd.f32 0.0, %v4500
        %v4502 = vpop.f32.mrb[0].mxu0
        %v4503 = vadd.f32 0.0, %v4502
        %v4504 = vpop.f32.mrb[0].mxu0
        %v4505 = vadd.f32 0.0, %v4504
        %v4506 = vpop.f32.mrb[0].mxu0
        %v4507 = vadd.f32 0.0, %v4506
        %4508 = vmatprep.mubr.bf16.mxu0 %v3140
        %4509 = vmatmul.mubr.bf16.gmra.mrb[0].mxu0 %v3139
        %v4510 = vpop.f32.mrb[0].mxu0
        %v4511 = vadd.f32 0.0, %v4510
        %v4512 = vpop.f32.mrb[0].mxu0
        %v4513 = vadd.f32 0.0, %v4512
        %v4514 = vpop.f32.mrb[0].mxu0
        %v4515 = vadd.f32 0.0, %v4514
        %v4516 = vpop.f32.mrb[0].mxu0
        %v4517 = vadd.f32 0.0, %v4516
        %4518 = vmatprep.mubr.bf16.mxu0 %v3142
        %4519 = vmatmul.mubr.bf16.gmra.mrb[0].mxu0 %v3141
        %v4520 = vpop.f32.mrb[0].mxu0
        %v4521 = vadd.f32 0.0, %v4520
        %v4522 = vpop.f32.mrb[0].mxu0
        %v4523 = vadd.f32 0.0, %v4522
        %v4524 = vpop.f32.mrb[0].mxu0
        %v4525 = vadd.f32 0.0, %v4524
        %v4526 = vpop.f32.mrb[0].mxu0
        %v4527 = vadd.f32 0.0, %v4526
        %4528 = vmatprep.mubr.bf16.mxu0 %v3144
        %4529 = vmatmul.mubr.bf16.gmra.mrb[0].mxu0 %v3143
        %v4530 = vpop.f32.mrb[0].mxu0
        %v4531 = vadd.f32 0.0, %v4530
        %v4532 = vpop.f32.mrb[0].mxu0
        %v4533 = vadd.f32 0.0, %v4532
        %v4534 = vpop.f32.mrb[0].mxu0
        %v4535 = vadd.f32 0.0, %v4534
        %v4536 = vpop.f32.mrb[0].mxu0
        %v4537 = vadd.f32 0.0, %v4536
        %4538 = vmatprep.mubr.bf16.mxu0 %v3146
        %4539 = vmatmul.mubr.bf16.gmra.mrb[0].mxu0 %v3145
        %v4540 = vpop.f32.mrb[0].mxu0
        %v4541 = vadd.f32 0.0, %v4540
        %v4542 = vpop.f32.mrb[0].mxu0
        %v4543 = vadd.f32 0.0, %v4542
        %v4544 = vpop.f32.mrb[0].mxu0
        %v4545 = vadd.f32 0.0, %v4544
        %v4546 = vpop.f32.mrb[0].mxu0
        %v4547 = vadd.f32 0.0, %v4546
        %4548 = vmatprep.mubr.bf16.mxu0 %v3148
        %4549 = vmatmul.mubr.bf16.gmra.mrb[0].mxu0 %v3147
        %v4550 = vpop.f32.mrb[0].mxu0
        %v4551 = vadd.f32 0.0, %v4550
        %v4552 = vpop.f32.mrb[0].mxu0
        %v4553 = vadd.f32 0.0, %v4552
        %v4554 = vpop.f32.mrb[0].mxu0
        %v4555 = vadd.f32 0.0, %v4554
        %v4556 = vpop.f32.mrb[0].mxu0
        %v4557 = vadd.f32 0.0, %v4556
        %4558 = vmatprep.mubr.bf16.mxu0 %v3150
        %4559 = vmatmul.mubr.bf16.gmra.mrb[0].mxu0 %v3149
        %v4560 = vpop.f32.mrb[0].mxu0
        %v4561 = vadd.f32 0.0, %v4560
        %v4562 = vpop.f32.mrb[0].mxu0
        %v4563 = vadd.f32 0.0, %v4562
        %v4564 = vpop.f32.mrb[0].mxu0
        %v4565 = vadd.f32 0.0, %v4564
        %v4566 = vpop.f32.mrb[0].mxu0
        %v4567 = vadd.f32 0.0, %v4566
        %4568 = vmatprep.mubr.bf16.mxu0 %v3152
        %4569 = vmatmul.mubr.bf16.gmra.mrb[0].mxu0 %v3151
        %v4570 = vpop.f32.mrb[0].mxu0
        %v4571 = vadd.f32 0.0, %v4570
        %v4572 = vpop.f32.mrb[0].mxu0
        %v4573 = vadd.f32 0.0, %v4572
        %v4574 = vpop.f32.mrb[0].mxu0
        %v4575 = vadd.f32 0.0, %v4574
        %v4576 = vpop.f32.mrb[0].mxu0
        %v4577 = vadd.f32 0.0, %v4576
        %4578 = vmatprep.mubr.bf16.mxu0 %v3154
        %4579 = vmatmul.mubr.bf16.gmra.mrb[0].mxu0 %v3153
        %v4580 = vpop.f32.mrb[0].mxu0
        %v4581 = vadd.f32 0.0, %v4580
        %v4582 = vpop.f32.mrb[0].mxu0
        %v4583 = vadd.f32 0.0, %v4582
        %v4584 = vpop.f32.mrb[0].mxu0
        %v4585 = vadd.f32 0.0, %v4584
        %v4586 = vpop.f32.mrb[0].mxu0
        %v4587 = vadd.f32 0.0, %v4586
        %4588 = vmatprep.mubr.bf16.mxu0 %v3156
        %4589 = vmatmul.mubr.bf16.gmra.mrb[0].mxu0 %v3155
        %v4590 = vpop.f32.mrb[0].mxu0
        %v4591 = vadd.f32 0.0, %v4590
        %v4592 = vpop.f32.mrb[0].mxu0
        %v4593 = vadd.f32 0.0, %v4592
        %v4594 = vpop.f32.mrb[0].mxu0
        %v4595 = vadd.f32 0.0, %v4594
        %v4596 = vpop.f32.mrb[0].mxu0
        %v4597 = vadd.f32 0.0, %v4596
        %4598 = vmatprep.mubr.bf16.mxu0 %v3158
        %4599 = vmatmul.mubr.bf16.gmra.mrb[0].mxu0 %v3157
        %v4600 = vpop.f32.mrb[0].mxu0
        %v4601 = vadd.f32 0.0, %v4600
        %v4602 = vpop.f32.mrb[0].mxu0
        %v4603 = vadd.f32 0.0, %v4602
        %v4604 = vpop.f32.mrb[0].mxu0
        %v4605 = vadd.f32 0.0, %v4604
        %v4606 = vpop.f32.mrb[0].mxu0
        %v4607 = vadd.f32 0.0, %v4606
        %4608 = vmatprep.mubr.bf16.mxu0 %v3160
        %4609 = vmatmul.mubr.bf16.gmra.mrb[0].mxu0 %v3159
        %v4610 = vpop.f32.mrb[0].mxu0
        %v4611 = vadd.f32 0.0, %v4610
        %v4612 = vpop.f32.mrb[0].mxu0
        %v4613 = vadd.f32 0.0, %v4612
        %v4614 = vpop.f32.mrb[0].mxu0
        %v4615 = vadd.f32 0.0, %v4614
        %v4616 = vpop.f32.mrb[0].mxu0
        %v4617 = vadd.f32 0.0, %v4616
        %4618 = vmatprep.mubr.bf16.mxu0 %v3162
        %4619 = vmatmul.mubr.bf16.gmra.mrb[0].mxu0 %v3161
        %v4620 = vpop.f32.mrb[0].mxu0
        %v4621 = vadd.f32 0.0, %v4620
        %v4622 = vpop.f32.mrb[0].mxu0
        %v4623 = vadd.f32 0.0, %v4622
        %v4624 = vpop.f32.mrb[0].mxu0
        %v4625 = vadd.f32 0.0, %v4624
        %v4626 = vpop.f32.mrb[0].mxu0
        %v4627 = vadd.f32 0.0, %v4626
        %4628 = vmatprep.mubr.bf16.mxu0 %v3164
        %4629 = vmatmul.mubr.bf16.gmra.mrb[0].mxu0 %v3163
        %v4630 = vpop.f32.mrb[0].mxu0
        %v4631 = vadd.f32 0.0, %v4630
        %v4632 = vpop.f32.mrb[0].mxu0
        %v4633 = vadd.f32 0.0, %v4632
        %v4634 = vpop.f32.mrb[0].mxu0
        %v4635 = vadd.f32 0.0, %v4634
        %v4636 = vpop.f32.mrb[0].mxu0
        %v4637 = vadd.f32 0.0, %v4636
        %4638 = vmatprep.mubr.bf16.mxu0 %v3166
        %4639 = vmatmul.mubr.bf16.gmra.mrb[0].mxu0 %v3165
        %v4640 = vpop.f32.mrb[0].mxu0
        %v4641 = vadd.f32 0.0, %v4640
        %v4642 = vpop.f32.mrb[0].mxu0
        %v4643 = vadd.f32 0.0, %v4642
        %v4644 = vpop.f32.mrb[0].mxu0
        %v4645 = vadd.f32 0.0, %v4644
        %v4646 = vpop.f32.mrb[0].mxu0
        %v4647 = vadd.f32 0.0, %v4646
        %4648 = vmatprep.mubr.bf16.mxu0 %v3168
        %4649 = vmatmul.mubr.bf16.gmra.mrb[0].mxu0 %v3167
        %v4650 = vpop.f32.mrb[0].mxu0
        %v4651 = vadd.f32 0.0, %v4650
        %v4652 = vpop.f32.mrb[0].mxu0
        %v4653 = vadd.f32 0.0, %v4652
        %v4654 = vpop.f32.mrb[0].mxu0
        %v4655 = vadd.f32 0.0, %v4654
        %v4656 = vpop.f32.mrb[0].mxu0
        %v4657 = vadd.f32 0.0, %v4656
        %4658 = vmatprep.mubr.bf16.mxu0 %v3170
        %4659 = vmatmul.mubr.bf16.gmra.mrb[0].mxu0 %v3169
        %v4660 = vpop.f32.mrb[0].mxu0
        %v4661 = vadd.f32 0.0, %v4660
        %v4662 = vpop.f32.mrb[0].mxu0
        %v4663 = vadd.f32 0.0, %v4662
        %v4664 = vpop.f32.mrb[0].mxu0
        %v4665 = vadd.f32 0.0, %v4664
        %v4666 = vpop.f32.mrb[0].mxu0
        %v4667 = vadd.f32 0.0, %v4666
        %4668 = vmatprep.mubr.bf16.mxu0 %v3172
        %4669 = vmatmul.mubr.bf16.gmra.mrb[0].mxu0 %v3171
        %v4670 = vpop.f32.mrb[0].mxu0
        %v4671 = vadd.f32 0.0, %v4670
        %v4672 = vpop.f32.mrb[0].mxu0
        %v4673 = vadd.f32 0.0, %v4672
        %v4674 = vpop.f32.mrb[0].mxu0
        %v4675 = vadd.f32 0.0, %v4674
        %v4676 = vpop.f32.mrb[0].mxu0
        %v4677 = vadd.f32 0.0, %v4676
        %4678 = vdwg.mxu0
        %4679 = vmatprep.subr.bf16.mxu0 %v3818
        %4680 = vmatpush1.bf16.msra.mxu0 %v3817
        %4681 = vmatprep.subr.bf16.mxu0 %v3828
        %4682 = vmatpush1.bf16.msra.mxu0 %v3827
        %4683 = vmatprep.subr.bf16.mxu0 %v3838
        %4684 = vmatpush1.bf16.msra.mxu0 %v3837
        %4685 = vmatprep.subr.bf16.mxu0 %v3848
        %4686 = vmatpush1.bf16.msra.mxu0 %v3847
        %4687 = vmatprep.subr.bf16.mxu0 %v3858
        %4688 = vmatpush1.bf16.msra.mxu0 %v3857
        %4689 = vmatprep.subr.bf16.mxu0 %v3868
        %4690 = vmatpush1.bf16.msra.mxu0 %v3867
        %4691 = vmatprep.subr.bf16.mxu0 %v3878
        %4692 = vmatpush1.bf16.msra.mxu0 %v3877
        %4693 = vmatprep.subr.bf16.mxu0 %v3888
        %4694 = vmatpush1.bf16.msra.mxu0 %v3887
        %4695 = vmatprep.subr.bf16.mxu0 %v3898
        %4696 = vmatpush1.bf16.msra.mxu0 %v3897
        %4697 = vmatprep.subr.bf16.mxu0 %v3908
        %4698 = vmatpush1.bf16.msra.mxu0 %v3907
        %4699 = vmatprep.subr.bf16.mxu0 %v3918
        %4700 = vmatpush1.bf16.msra.mxu0 %v3917
        %4701 = vmatprep.subr.bf16.mxu0 %v3928
        %4702 = vmatpush1.bf16.msra.mxu0 %v3927
        %4703 = vmatprep.subr.bf16.mxu0 %v3938
        %4704 = vmatpush1.bf16.msra.mxu0 %v3937
        %4705 = vmatprep.subr.bf16.mxu0 %v3948
        %4706 = vmatpush1.bf16.msra.mxu0 %v3947
        %4707 = vmatprep.subr.bf16.mxu0 %v3958
        %4708 = vmatpush1.bf16.msra.mxu0 %v3957
        %4709 = vmatprep.subr.bf16.mxu0 %v3968
        %4710 = vmatpush1.bf16.msra.mxu0 %v3967
        %4711 = vmatprep.mubr.bf16.mxu0 %v3126
        %4712 = vmatmul.mubr.bf16.gmra.mrb[0].mxu0 %v3125
        %v4713 = vpop.f32.mrb[0].mxu0
        %v4714 = vadd.f32 0.0, %v4713
        %v4715 = vpop.f32.mrb[0].mxu0
        %v4716 = vadd.f32 0.0, %v4715
        %v4717 = vpop.f32.mrb[0].mxu0
        %v4718 = vadd.f32 0.0, %v4717
        %v4719 = vpop.f32.mrb[0].mxu0
        %v4720 = vadd.f32 0.0, %v4719
        %4721 = vmatprep.mubr.bf16.mxu0 %v3128
        %4722 = vmatmul.mubr.bf16.gmra.mrb[0].mxu0 %v3127
        %v4723 = vpop.f32.mrb[0].mxu0
        %v4724 = vadd.f32 0.0, %v4723
        %v4725 = vpop.f32.mrb[0].mxu0
        %v4726 = vadd.f32 0.0, %v4725
        %v4727 = vpop.f32.mrb[0].mxu0
        %v4728 = vadd.f32 0.0, %v4727
        %v4729 = vpop.f32.mrb[0].mxu0
        %v4730 = vadd.f32 0.0, %v4729
        %4731 = vmatprep.mubr.bf16.mxu0 %v3130
        %4732 = vmatmul.mubr.bf16.gmra.mrb[0].mxu0 %v3129
        %v4733 = vpop.f32.mrb[0].mxu0
        %v4734 = vadd.f32 0.0, %v4733
        %v4735 = vpop.f32.mrb[0].mxu0
        %v4736 = vadd.f32 0.0, %v4735
        %v4737 = vpop.f32.mrb[0].mxu0
        %v4738 = vadd.f32 0.0, %v4737
        %v4739 = vpop.f32.mrb[0].mxu0
        %v4740 = vadd.f32 0.0, %v4739
        %4741 = vmatprep.mubr.bf16.mxu0 %v3132
        %4742 = vmatmul.mubr.bf16.gmra.mrb[0].mxu0 %v3131
        %v4743 = vpop.f32.mrb[0].mxu0
        %v4744 = vadd.f32 0.0, %v4743
        %v4745 = vpop.f32.mrb[0].mxu0
        %v4746 = vadd.f32 0.0, %v4745
        %v4747 = vpop.f32.mrb[0].mxu0
        %v4748 = vadd.f32 0.0, %v4747
        %v4749 = vpop.f32.mrb[0].mxu0
        %v4750 = vadd.f32 0.0, %v4749
        %4751 = vmatprep.mubr.bf16.mxu0 %v3134
        %4752 = vmatmul.mubr.bf16.gmra.mrb[0].mxu0 %v3133
        %v4753 = vpop.f32.mrb[0].mxu0
        %v4754 = vadd.f32 0.0, %v4753
        %v4755 = vpop.f32.mrb[0].mxu0
        %v4756 = vadd.f32 0.0, %v4755
        %v4757 = vpop.f32.mrb[0].mxu0
        %v4758 = vadd.f32 0.0, %v4757
        %v4759 = vpop.f32.mrb[0].mxu0
        %v4760 = vadd.f32 0.0, %v4759
        %4761 = vmatprep.mubr.bf16.mxu0 %v3136
        %4762 = vmatmul.mubr.bf16.gmra.mrb[0].mxu0 %v3135
        %v4763 = vpop.f32.mrb[0].mxu0
        %v4764 = vadd.f32 0.0, %v4763
        %v4765 = vpop.f32.mrb[0].mxu0
        %v4766 = vadd.f32 0.0, %v4765
        %v4767 = vpop.f32.mrb[0].mxu0
        %v4768 = vadd.f32 0.0, %v4767
        %v4769 = vpop.f32.mrb[0].mxu0
        %v4770 = vadd.f32 0.0, %v4769
        %4771 = vmatprep.mubr.bf16.mxu0 %v3138
        %4772 = vmatmul.mubr.bf16.gmra.mrb[0].mxu0 %v3137
        %v4773 = vpop.f32.mrb[0].mxu0
        %v4774 = vadd.f32 0.0, %v4773
        %v4775 = vpop.f32.mrb[0].mxu0
        %v4776 = vadd.f32 0.0, %v4775
        %v4777 = vpop.f32.mrb[0].mxu0
        %v4778 = vadd.f32 0.0, %v4777
        %v4779 = vpop.f32.mrb[0].mxu0
        %v4780 = vadd.f32 0.0, %v4779
        %4781 = vmatprep.mubr.bf16.mxu0 %v3140
        %4782 = vmatmul.mubr.bf16.gmra.mrb[0].mxu0 %v3139
        %v4783 = vpop.f32.mrb[0].mxu0
        %v4784 = vadd.f32 0.0, %v4783
        %v4785 = vpop.f32.mrb[0].mxu0
        %v4786 = vadd.f32 0.0, %v4785
        %v4787 = vpop.f32.mrb[0].mxu0
        %v4788 = vadd.f32 0.0, %v4787
        %v4789 = vpop.f32.mrb[0].mxu0
        %v4790 = vadd.f32 0.0, %v4789
        %4791 = vmatprep.mubr.bf16.mxu0 %v3142
        %4792 = vmatmul.mubr.bf16.gmra.mrb[0].mxu0 %v3141
        %v4793 = vpop.f32.mrb[0].mxu0
        %v4794 = vadd.f32 0.0, %v4793
        %v4795 = vpop.f32.mrb[0].mxu0
        %v4796 = vadd.f32 0.0, %v4795
        %v4797 = vpop.f32.mrb[0].mxu0
        %v4798 = vadd.f32 0.0, %v4797
        %v4799 = vpop.f32.mrb[0].mxu0
        %v4800 = vadd.f32 0.0, %v4799
        %4801 = vmatprep.mubr.bf16.mxu0 %v3144
        %4802 = vmatmul.mubr.bf16.gmra.mrb[0].mxu0 %v3143
        %v4803 = vpop.f32.mrb[0].mxu0
        %v4804 = vadd.f32 0.0, %v4803
        %v4805 = vpop.f32.mrb[0].mxu0
        %v4806 = vadd.f32 0.0, %v4805
        %v4807 = vpop.f32.mrb[0].mxu0
        %v4808 = vadd.f32 0.0, %v4807
        %v4809 = vpop.f32.mrb[0].mxu0
        %v4810 = vadd.f32 0.0, %v4809
        %4811 = vmatprep.mubr.bf16.mxu0 %v3146
        %4812 = vmatmul.mubr.bf16.gmra.mrb[0].mxu0 %v3145
        %v4813 = vpop.f32.mrb[0].mxu0
        %v4814 = vadd.f32 0.0, %v4813
        %v4815 = vpop.f32.mrb[0].mxu0
        %v4816 = vadd.f32 0.0, %v4815
        %v4817 = vpop.f32.mrb[0].mxu0
        %v4818 = vadd.f32 0.0, %v4817
        %v4819 = vpop.f32.mrb[0].mxu0
        %v4820 = vadd.f32 0.0, %v4819
        %4821 = vmatprep.mubr.bf16.mxu0 %v3148
        %4822 = vmatmul.mubr.bf16.gmra.mrb[0].mxu0 %v3147
        %v4823 = vpop.f32.mrb[0].mxu0
        %v4824 = vadd.f32 0.0, %v4823
        %v4825 = vpop.f32.mrb[0].mxu0
        %v4826 = vadd.f32 0.0, %v4825
        %v4827 = vpop.f32.mrb[0].mxu0
        %v4828 = vadd.f32 0.0, %v4827
        %v4829 = vpop.f32.mrb[0].mxu0
        %v4830 = vadd.f32 0.0, %v4829
        %4831 = vmatprep.mubr.bf16.mxu0 %v3150
        %4832 = vmatmul.mubr.bf16.gmra.mrb[0].mxu0 %v3149
        %v4833 = vpop.f32.mrb[0].mxu0
        %v4834 = vadd.f32 0.0, %v4833
        %v4835 = vpop.f32.mrb[0].mxu0
        %v4836 = vadd.f32 0.0, %v4835
        %v4837 = vpop.f32.mrb[0].mxu0
        %v4838 = vadd.f32 0.0, %v4837
        %v4839 = vpop.f32.mrb[0].mxu0
        %v4840 = vadd.f32 0.0, %v4839
        %4841 = vmatprep.mubr.bf16.mxu0 %v3152
        %4842 = vmatmul.mubr.bf16.gmra.mrb[0].mxu0 %v3151
        %v4843 = vpop.f32.mrb[0].mxu0
        %v4844 = vadd.f32 0.0, %v4843
        %v4845 = vpop.f32.mrb[0].mxu0
        %v4846 = vadd.f32 0.0, %v4845
        %v4847 = vpop.f32.mrb[0].mxu0
        %v4848 = vadd.f32 0.0, %v4847
        %v4849 = vpop.f32.mrb[0].mxu0
        %v4850 = vadd.f32 0.0, %v4849
        %4851 = vmatprep.mubr.bf16.mxu0 %v3154
        %4852 = vmatmul.mubr.bf16.gmra.mrb[0].mxu0 %v3153
        %v4853 = vpop.f32.mrb[0].mxu0
        %v4854 = vadd.f32 0.0, %v4853
        %v4855 = vpop.f32.mrb[0].mxu0
        %v4856 = vadd.f32 0.0, %v4855
        %v4857 = vpop.f32.mrb[0].mxu0
        %v4858 = vadd.f32 0.0, %v4857
        %v4859 = vpop.f32.mrb[0].mxu0
        %v4860 = vadd.f32 0.0, %v4859
        %4861 = vmatprep.mubr.bf16.mxu0 %v3156
        %4862 = vmatmul.mubr.bf16.gmra.mrb[0].mxu0 %v3155
        %v4863 = vpop.f32.mrb[0].mxu0
        %v4864 = vadd.f32 0.0, %v4863
        %v4865 = vpop.f32.mrb[0].mxu0
        %v4866 = vadd.f32 0.0, %v4865
        %v4867 = vpop.f32.mrb[0].mxu0
        %v4868 = vadd.f32 0.0, %v4867
        %v4869 = vpop.f32.mrb[0].mxu0
        %v4870 = vadd.f32 0.0, %v4869
        %4871 = vmatprep.mubr.bf16.mxu0 %v3158
        %4872 = vmatmul.mubr.bf16.gmra.mrb[0].mxu0 %v3157
        %v4873 = vpop.f32.mrb[0].mxu0
        %v4874 = vadd.f32 0.0, %v4873
        %v4875 = vpop.f32.mrb[0].mxu0
        %v4876 = vadd.f32 0.0, %v4875
        %v4877 = vpop.f32.mrb[0].mxu0
        %v4878 = vadd.f32 0.0, %v4877
        %v4879 = vpop.f32.mrb[0].mxu0
        %v4880 = vadd.f32 0.0, %v4879
        %4881 = vmatprep.mubr.bf16.mxu0 %v3160
        %4882 = vmatmul.mubr.bf16.gmra.mrb[0].mxu0 %v3159
        %v4883 = vpop.f32.mrb[0].mxu0
        %v4884 = vadd.f32 0.0, %v4883
        %v4885 = vpop.f32.mrb[0].mxu0
        %v4886 = vadd.f32 0.0, %v4885
        %v4887 = vpop.f32.mrb[0].mxu0
        %v4888 = vadd.f32 0.0, %v4887
        %v4889 = vpop.f32.mrb[0].mxu0
        %v4890 = vadd.f32 0.0, %v4889
        %4891 = vmatprep.mubr.bf16.mxu0 %v3162
        %4892 = vmatmul.mubr.bf16.gmra.mrb[0].mxu0 %v3161
        %v4893 = vpop.f32.mrb[0].mxu0
        %v4894 = vadd.f32 0.0, %v4893
        %v4895 = vpop.f32.mrb[0].mxu0
        %v4896 = vadd.f32 0.0, %v4895
        %v4897 = vpop.f32.mrb[0].mxu0
        %v4898 = vadd.f32 0.0, %v4897
        %v4899 = vpop.f32.mrb[0].mxu0
        %v4900 = vadd.f32 0.0, %v4899
        %4901 = vmatprep.mubr.bf16.mxu0 %v3164
        %4902 = vmatmul.mubr.bf16.gmra.mrb[0].mxu0 %v3163
        %v4903 = vpop.f32.mrb[0].mxu0
        %v4904 = vadd.f32 0.0, %v4903
        %v4905 = vpop.f32.mrb[0].mxu0
        %v4906 = vadd.f32 0.0, %v4905
        %v4907 = vpop.f32.mrb[0].mxu0
        %v4908 = vadd.f32 0.0, %v4907
        %v4909 = vpop.f32.mrb[0].mxu0
        %v4910 = vadd.f32 0.0, %v4909
        %4911 = vmatprep.mubr.bf16.mxu0 %v3166
        %4912 = vmatmul.mubr.bf16.gmra.mrb[0].mxu0 %v3165
        %v4913 = vpop.f32.mrb[0].mxu0
        %v4914 = vadd.f32 0.0, %v4913
        %v4915 = vpop.f32.mrb[0].mxu0
        %v4916 = vadd.f32 0.0, %v4915
        %v4917 = vpop.f32.mrb[0].mxu0
        %v4918 = vadd.f32 0.0, %v4917
        %v4919 = vpop.f32.mrb[0].mxu0
        %v4920 = vadd.f32 0.0, %v4919
        %4921 = vmatprep.mubr.bf16.mxu0 %v3168
        %4922 = vmatmul.mubr.bf16.gmra.mrb[0].mxu0 %v3167
        %v4923 = vpop.f32.mrb[0].mxu0
        %v4924 = vadd.f32 0.0, %v4923
        %v4925 = vpop.f32.mrb[0].mxu0
        %v4926 = vadd.f32 0.0, %v4925
        %v4927 = vpop.f32.mrb[0].mxu0
        %v4928 = vadd.f32 0.0, %v4927
        %v4929 = vpop.f32.mrb[0].mxu0
        %v4930 = vadd.f32 0.0, %v4929
        %4931 = vmatprep.mubr.bf16.mxu0 %v3170
        %4932 = vmatmul.mubr.bf16.gmra.mrb[0].mxu0 %v3169
        %v4933 = vpop.f32.mrb[0].mxu0
        %v4934 = vadd.f32 0.0, %v4933
        %v4935 = vpop.f32.mrb[0].mxu0
        %v4936 = vadd.f32 0.0, %v4935
        %v4937 = vpop.f32.mrb[0].mxu0
        %v4938 = vadd.f32 0.0, %v4937
        %v4939 = vpop.f32.mrb[0].mxu0
        %v4940 = vadd.f32 0.0, %v4939
        %4941 = vmatprep.mubr.bf16.mxu0 %v3172
        %4942 = vmatmul.mubr.bf16.gmra.mrb[0].mxu0 %v3171
        %v4943 = vpop.f32.mrb[0].mxu0
        %v4944 = vadd.f32 0.0, %v4943
        %v4945 = vpop.f32.mrb[0].mxu0
        %v4946 = vadd.f32 0.0, %v4945
        %v4947 = vpop.f32.mrb[0].mxu0
        %v4948 = vadd.f32 0.0, %v4947
        %v4949 = vpop.f32.mrb[0].mxu0
        %v4950 = vadd.f32 0.0, %v4949
        %4951 = vdwg.mxu0
        %4952 = vmatprep.subr.bf16.mxu0 %v3820
        %4953 = vmatpush1.bf16.msra.mxu0 %v3819
        %4954 = vmatprep.subr.bf16.mxu0 %v3830
        %4955 = vmatpush1.bf16.msra.mxu0 %v3829
        %4956 = vmatprep.subr.bf16.mxu0 %v3840
        %4957 = vmatpush1.bf16.msra.mxu0 %v3839
        %4958 = vmatprep.subr.bf16.mxu0 %v3850
        %4959 = vmatpush1.bf16.msra.mxu0 %v3849
        %4960 = vmatprep.subr.bf16.mxu0 %v3860
        %4961 = vmatpush1.bf16.msra.mxu0 %v3859
        %4962 = vmatprep.subr.bf16.mxu0 %v3870
        %4963 = vmatpush1.bf16.msra.mxu0 %v3869
        %4964 = vmatprep.subr.bf16.mxu0 %v3880
        %4965 = vmatpush1.bf16.msra.mxu0 %v3879
        %4966 = vmatprep.subr.bf16.mxu0 %v3890
        %4967 = vmatpush1.bf16.msra.mxu0 %v3889
        %4968 = vmatprep.subr.bf16.mxu0 %v3900
        %4969 = vmatpush1.bf16.msra.mxu0 %v3899
        %4970 = vmatprep.subr.bf16.mxu0 %v3910
        %4971 = vmatpush1.bf16.msra.mxu0 %v3909
        %4972 = vmatprep.subr.bf16.mxu0 %v3920
        %4973 = vmatpush1.bf16.msra.mxu0 %v3919
        %4974 = vmatprep.subr.bf16.mxu0 %v3930
        %4975 = vmatpush1.bf16.msra.mxu0 %v3929
        %4976 = vmatprep.subr.bf16.mxu0 %v3940
        %4977 = vmatpush1.bf16.msra.mxu0 %v3939
        %4978 = vmatprep.subr.bf16.mxu0 %v3950
        %4979 = vmatpush1.bf16.msra.mxu0 %v3949
        %4980 = vmatprep.subr.bf16.mxu0 %v3960
        %4981 = vmatpush1.bf16.msra.mxu0 %v3959
        %4982 = vmatprep.subr.bf16.mxu0 %v3970
        %4983 = vmatpush1.bf16.msra.mxu0 %v3969
        %4984 = vmatprep.mubr.bf16.mxu0 %v3126
        %4985 = vmatmul.mubr.bf16.gmra.mrb[0].mxu0 %v3125
        %v4986 = vpop.f32.mrb[0].mxu0
        %v4987 = vadd.f32 0.0, %v4986
        %v4988 = vpop.f32.mrb[0].mxu0
        %v4989 = vadd.f32 0.0, %v4988
        %v4990 = vpop.f32.mrb[0].mxu0
        %v4991 = vadd.f32 0.0, %v4990
        %v4992 = vpop.f32.mrb[0].mxu0
        %v4993 = vadd.f32 0.0, %v4992
        %4994 = vmatprep.mubr.bf16.mxu0 %v3128
        %4995 = vmatmul.mubr.bf16.gmra.mrb[0].mxu0 %v3127
        %v4996 = vpop.f32.mrb[0].mxu0
        %v4997 = vadd.f32 0.0, %v4996
        %v4998 = vpop.f32.mrb[0].mxu0
        %v4999 = vadd.f32 0.0, %v4998
        %v5000 = vpop.f32.mrb[0].mxu0
        %v5001 = vadd.f32 0.0, %v5000
        %v5002 = vpop.f32.mrb[0].mxu0
        %v5003 = vadd.f32 0.0, %v5002
        %5004 = vmatprep.mubr.bf16.mxu0 %v3130
        %5005 = vmatmul.mubr.bf16.gmra.mrb[0].mxu0 %v3129
        %v5006 = vpop.f32.mrb[0].mxu0
        %v5007 = vadd.f32 0.0, %v5006
        %v5008 = vpop.f32.mrb[0].mxu0
        %v5009 = vadd.f32 0.0, %v5008
        %v5010 = vpop.f32.mrb[0].mxu0
        %v5011 = vadd.f32 0.0, %v5010
        %v5012 = vpop.f32.mrb[0].mxu0
        %v5013 = vadd.f32 0.0, %v5012
        %5014 = vmatprep.mubr.bf16.mxu0 %v3132
        %5015 = vmatmul.mubr.bf16.gmra.mrb[0].mxu0 %v3131
        %v5016 = vpop.f32.mrb[0].mxu0
        %v5017 = vadd.f32 0.0, %v5016
        %v5018 = vpop.f32.mrb[0].mxu0
        %v5019 = vadd.f32 0.0, %v5018
        %v5020 = vpop.f32.mrb[0].mxu0
        %v5021 = vadd.f32 0.0, %v5020
        %v5022 = vpop.f32.mrb[0].mxu0
        %v5023 = vadd.f32 0.0, %v5022
        %5024 = vmatprep.mubr.bf16.mxu0 %v3134
        %5025 = vmatmul.mubr.bf16.gmra.mrb[0].mxu0 %v3133
        %v5026 = vpop.f32.mrb[0].mxu0
        %v5027 = vadd.f32 0.0, %v5026
        %v5028 = vpop.f32.mrb[0].mxu0
        %v5029 = vadd.f32 0.0, %v5028
        %v5030 = vpop.f32.mrb[0].mxu0
        %v5031 = vadd.f32 0.0, %v5030
        %v5032 = vpop.f32.mrb[0].mxu0
        %v5033 = vadd.f32 0.0, %v5032
        %5034 = vmatprep.mubr.bf16.mxu0 %v3136
        %5035 = vmatmul.mubr.bf16.gmra.mrb[0].mxu0 %v3135
        %v5036 = vpop.f32.mrb[0].mxu0
        %v5037 = vadd.f32 0.0, %v5036
        %v5038 = vpop.f32.mrb[0].mxu0
        %v5039 = vadd.f32 0.0, %v5038
        %v5040 = vpop.f32.mrb[0].mxu0
        %v5041 = vadd.f32 0.0, %v5040
        %v5042 = vpop.f32.mrb[0].mxu0
        %v5043 = vadd.f32 0.0, %v5042
        %5044 = vmatprep.mubr.bf16.mxu0 %v3138
        %5045 = vmatmul.mubr.bf16.gmra.mrb[0].mxu0 %v3137
        %v5046 = vpop.f32.mrb[0].mxu0
        %v5047 = vadd.f32 0.0, %v5046
        %v5048 = vpop.f32.mrb[0].mxu0
        %v5049 = vadd.f32 0.0, %v5048
        %v5050 = vpop.f32.mrb[0].mxu0
        %v5051 = vadd.f32 0.0, %v5050
        %v5052 = vpop.f32.mrb[0].mxu0
        %v5053 = vadd.f32 0.0, %v5052
        %5054 = vmatprep.mubr.bf16.mxu0 %v3140
        %5055 = vmatmul.mubr.bf16.gmra.mrb[0].mxu0 %v3139
        %v5056 = vpop.f32.mrb[0].mxu0
        %v5057 = vadd.f32 0.0, %v5056
        %v5058 = vpop.f32.mrb[0].mxu0
        %v5059 = vadd.f32 0.0, %v5058
        %v5060 = vpop.f32.mrb[0].mxu0
        %v5061 = vadd.f32 0.0, %v5060
        %v5062 = vpop.f32.mrb[0].mxu0
        %v5063 = vadd.f32 0.0, %v5062
        %5064 = vmatprep.mubr.bf16.mxu0 %v3142
        %5065 = vmatmul.mubr.bf16.gmra.mrb[0].mxu0 %v3141
        %v5066 = vpop.f32.mrb[0].mxu0
        %v5067 = vadd.f32 0.0, %v5066
        %v5068 = vpop.f32.mrb[0].mxu0
        %v5069 = vadd.f32 0.0, %v5068
        %v5070 = vpop.f32.mrb[0].mxu0
        %v5071 = vadd.f32 0.0, %v5070
        %v5072 = vpop.f32.mrb[0].mxu0
        %v5073 = vadd.f32 0.0, %v5072
        %5074 = vmatprep.mubr.bf16.mxu0 %v3144
        %5075 = vmatmul.mubr.bf16.gmra.mrb[0].mxu0 %v3143
        %v5076 = vpop.f32.mrb[0].mxu0
        %v5077 = vadd.f32 0.0, %v5076
        %v5078 = vpop.f32.mrb[0].mxu0
        %v5079 = vadd.f32 0.0, %v5078
        %v5080 = vpop.f32.mrb[0].mxu0
        %v5081 = vadd.f32 0.0, %v5080
        %v5082 = vpop.f32.mrb[0].mxu0
        %v5083 = vadd.f32 0.0, %v5082
        %5084 = vmatprep.mubr.bf16.mxu0 %v3146
        %5085 = vmatmul.mubr.bf16.gmra.mrb[0].mxu0 %v3145
        %v5086 = vpop.f32.mrb[0].mxu0
        %v5087 = vadd.f32 0.0, %v5086
        %v5088 = vpop.f32.mrb[0].mxu0
        %v5089 = vadd.f32 0.0, %v5088
        %v5090 = vpop.f32.mrb[0].mxu0
        %v5091 = vadd.f32 0.0, %v5090
        %v5092 = vpop.f32.mrb[0].mxu0
        %v5093 = vadd.f32 0.0, %v5092
        %5094 = vmatprep.mubr.bf16.mxu0 %v3148
        %5095 = vmatmul.mubr.bf16.gmra.mrb[0].mxu0 %v3147
        %v5096 = vpop.f32.mrb[0].mxu0
        %v5097 = vadd.f32 0.0, %v5096
        %v5098 = vpop.f32.mrb[0].mxu0
        %v5099 = vadd.f32 0.0, %v5098
        %v5100 = vpop.f32.mrb[0].mxu0
        %v5101 = vadd.f32 0.0, %v5100
        %v5102 = vpop.f32.mrb[0].mxu0
        %v5103 = vadd.f32 0.0, %v5102
        %5104 = vmatprep.mubr.bf16.mxu0 %v3150
        %5105 = vmatmul.mubr.bf16.gmra.mrb[0].mxu0 %v3149
        %v5106 = vpop.f32.mrb[0].mxu0
        %v5107 = vadd.f32 0.0, %v5106
        %v5108 = vpop.f32.mrb[0].mxu0
        %v5109 = vadd.f32 0.0, %v5108
        %v5110 = vpop.f32.mrb[0].mxu0
        %v5111 = vadd.f32 0.0, %v5110
        %v5112 = vpop.f32.mrb[0].mxu0
        %v5113 = vadd.f32 0.0, %v5112
        %5114 = vmatprep.mubr.bf16.mxu0 %v3152
        %5115 = vmatmul.mubr.bf16.gmra.mrb[0].mxu0 %v3151
        %v5116 = vpop.f32.mrb[0].mxu0
        %v5117 = vadd.f32 0.0, %v5116
        %v5118 = vpop.f32.mrb[0].mxu0
        %v5119 = vadd.f32 0.0, %v5118
        %v5120 = vpop.f32.mrb[0].mxu0
        %v5121 = vadd.f32 0.0, %v5120
        %v5122 = vpop.f32.mrb[0].mxu0
        %v5123 = vadd.f32 0.0, %v5122
        %5124 = vmatprep.mubr.bf16.mxu0 %v3154
        %5125 = vmatmul.mubr.bf16.gmra.mrb[0].mxu0 %v3153
        %v5126 = vpop.f32.mrb[0].mxu0
        %v5127 = vadd.f32 0.0, %v5126
        %v5128 = vpop.f32.mrb[0].mxu0
        %v5129 = vadd.f32 0.0, %v5128
        %v5130 = vpop.f32.mrb[0].mxu0
        %v5131 = vadd.f32 0.0, %v5130
        %v5132 = vpop.f32.mrb[0].mxu0
        %v5133 = vadd.f32 0.0, %v5132
        %5134 = vmatprep.mubr.bf16.mxu0 %v3156
        %5135 = vmatmul.mubr.bf16.gmra.mrb[0].mxu0 %v3155
        %v5136 = vpop.f32.mrb[0].mxu0
        %v5137 = vadd.f32 0.0, %v5136
        %v5138 = vpop.f32.mrb[0].mxu0
        %v5139 = vadd.f32 0.0, %v5138
        %v5140 = vpop.f32.mrb[0].mxu0
        %v5141 = vadd.f32 0.0, %v5140
        %v5142 = vpop.f32.mrb[0].mxu0
        %v5143 = vadd.f32 0.0, %v5142
        %5144 = vmatprep.mubr.bf16.mxu0 %v3158
        %5145 = vmatmul.mubr.bf16.gmra.mrb[0].mxu0 %v3157
        %v5146 = vpop.f32.mrb[0].mxu0
        %v5147 = vadd.f32 0.0, %v5146
        %v5148 = vpop.f32.mrb[0].mxu0
        %v5149 = vadd.f32 0.0, %v5148
        %v5150 = vpop.f32.mrb[0].mxu0
        %v5151 = vadd.f32 0.0, %v5150
        %v5152 = vpop.f32.mrb[0].mxu0
        %v5153 = vadd.f32 0.0, %v5152
        %5154 = vmatprep.mubr.bf16.mxu0 %v3160
        %5155 = vmatmul.mubr.bf16.gmra.mrb[0].mxu0 %v3159
        %v5156 = vpop.f32.mrb[0].mxu0
        %v5157 = vadd.f32 0.0, %v5156
        %v5158 = vpop.f32.mrb[0].mxu0
        %v5159 = vadd.f32 0.0, %v5158
        %v5160 = vpop.f32.mrb[0].mxu0
        %v5161 = vadd.f32 0.0, %v5160
        %v5162 = vpop.f32.mrb[0].mxu0
        %v5163 = vadd.f32 0.0, %v5162
        %5164 = vmatprep.mubr.bf16.mxu0 %v3162
        %5165 = vmatmul.mubr.bf16.gmra.mrb[0].mxu0 %v3161
        %v5166 = vpop.f32.mrb[0].mxu0
        %v5167 = vadd.f32 0.0, %v5166
        %v5168 = vpop.f32.mrb[0].mxu0
        %v5169 = vadd.f32 0.0, %v5168
        %v5170 = vpop.f32.mrb[0].mxu0
        %v5171 = vadd.f32 0.0, %v5170
        %v5172 = vpop.f32.mrb[0].mxu0
        %v5173 = vadd.f32 0.0, %v5172
        %5174 = vmatprep.mubr.bf16.mxu0 %v3164
        %5175 = vmatmul.mubr.bf16.gmra.mrb[0].mxu0 %v3163
        %v5176 = vpop.f32.mrb[0].mxu0
        %v5177 = vadd.f32 0.0, %v5176
        %v5178 = vpop.f32.mrb[0].mxu0
        %v5179 = vadd.f32 0.0, %v5178
        %v5180 = vpop.f32.mrb[0].mxu0
        %v5181 = vadd.f32 0.0, %v5180
        %v5182 = vpop.f32.mrb[0].mxu0
        %v5183 = vadd.f32 0.0, %v5182
        %5184 = vmatprep.mubr.bf16.mxu0 %v3166
        %5185 = vmatmul.mubr.bf16.gmra.mrb[0].mxu0 %v3165
        %v5186 = vpop.f32.mrb[0].mxu0
        %v5187 = vadd.f32 0.0, %v5186
        %v5188 = vpop.f32.mrb[0].mxu0
        %v5189 = vadd.f32 0.0, %v5188
        %v5190 = vpop.f32.mrb[0].mxu0
        %v5191 = vadd.f32 0.0, %v5190
        %v5192 = vpop.f32.mrb[0].mxu0
        %v5193 = vadd.f32 0.0, %v5192
        %5194 = vmatprep.mubr.bf16.mxu0 %v3168
        %5195 = vmatmul.mubr.bf16.gmra.mrb[0].mxu0 %v3167
        %v5196 = vpop.f32.mrb[0].mxu0
        %v5197 = vadd.f32 0.0, %v5196
        %v5198 = vpop.f32.mrb[0].mxu0
        %v5199 = vadd.f32 0.0, %v5198
        %v5200 = vpop.f32.mrb[0].mxu0
        %v5201 = vadd.f32 0.0, %v5200
        %v5202 = vpop.f32.mrb[0].mxu0
        %v5203 = vadd.f32 0.0, %v5202
        %5204 = vmatprep.mubr.bf16.mxu0 %v3170
        %5205 = vmatmul.mubr.bf16.gmra.mrb[0].mxu0 %v3169
        %v5206 = vpop.f32.mrb[0].mxu0
        %v5207 = vadd.f32 0.0, %v5206
        %v5208 = vpop.f32.mrb[0].mxu0
        %v5209 = vadd.f32 0.0, %v5208
        %v5210 = vpop.f32.mrb[0].mxu0
        %v5211 = vadd.f32 0.0, %v5210
        %v5212 = vpop.f32.mrb[0].mxu0
        %v5213 = vadd.f32 0.0, %v5212
        %5214 = vmatprep.mubr.bf16.mxu0 %v3172
        %5215 = vmatmul.mubr.bf16.gmra.mrb[0].mxu0 %v3171
        %v5216 = vpop.f32.mrb[0].mxu0
        %v5217 = vadd.f32 0.0, %v5216
        %v5218 = vpop.f32.mrb[0].mxu0
        %v5219 = vadd.f32 0.0, %v5218
        %v5220 = vpop.f32.mrb[0].mxu0
        %v5221 = vadd.f32 0.0, %v5220
        %v5222 = vpop.f32.mrb[0].mxu0
        %v5223 = vadd.f32 0.0, %v5222
        %5224 = vdwg.mxu0
        %5225 = vmatprep.subr.bf16.mxu0 %v3822
        %5226 = vmatpush1.bf16.msra.mxu0 %v3821
        %5227 = vmatprep.subr.bf16.mxu0 %v3832
        %5228 = vmatpush1.bf16.msra.mxu0 %v3831
        %5229 = vmatprep.subr.bf16.mxu0 %v3842
        %5230 = vmatpush1.bf16.msra.mxu0 %v3841
        %5231 = vmatprep.subr.bf16.mxu0 %v3852
        %5232 = vmatpush1.bf16.msra.mxu0 %v3851
        %5233 = vmatprep.subr.bf16.mxu0 %v3862
        %5234 = vmatpush1.bf16.msra.mxu0 %v3861
        %5235 = vmatprep.subr.bf16.mxu0 %v3872
        %5236 = vmatpush1.bf16.msra.mxu0 %v3871
        %5237 = vmatprep.subr.bf16.mxu0 %v3882
        %5238 = vmatpush1.bf16.msra.mxu0 %v3881
        %5239 = vmatprep.subr.bf16.mxu0 %v3892
        %5240 = vmatpush1.bf16.msra.mxu0 %v3891
        %5241 = vmatprep.subr.bf16.mxu0 %v3902
        %5242 = vmatpush1.bf16.msra.mxu0 %v3901
        %5243 = vmatprep.subr.bf16.mxu0 %v3912
        %5244 = vmatpush1.bf16.msra.mxu0 %v3911
        %5245 = vmatprep.subr.bf16.mxu0 %v3922
        %5246 = vmatpush1.bf16.msra.mxu0 %v3921
        %5247 = vmatprep.subr.bf16.mxu0 %v3932
        %5248 = vmatpush1.bf16.msra.mxu0 %v3931
        %5249 = vmatprep.subr.bf16.mxu0 %v3942
        %5250 = vmatpush1.bf16.msra.mxu0 %v3941
        %5251 = vmatprep.subr.bf16.mxu0 %v3952
        %5252 = vmatpush1.bf16.msra.mxu0 %v3951
        %5253 = vmatprep.subr.bf16.mxu0 %v3962
        %5254 = vmatpush1.bf16.msra.mxu0 %v3961
        %5255 = vmatprep.subr.bf16.mxu0 %v3972
        %5256 = vmatpush1.bf16.msra.mxu0 %v3971
        %5257 = vmatprep.mubr.bf16.mxu0 %v3126
        %5258 = vmatmul.mubr.bf16.gmra.mrb[0].mxu0 %v3125
        %v5259 = vpop.f32.mrb[0].mxu0
        %v5260 = vadd.f32 0.0, %v5259
        %v5261 = vpop.f32.mrb[0].mxu0
        %v5262 = vadd.f32 0.0, %v5261
        %v5263 = vpop.f32.mrb[0].mxu0
        %v5264 = vadd.f32 0.0, %v5263
        %v5265 = vpop.f32.mrb[0].mxu0
        %v5266 = vadd.f32 0.0, %v5265
        %5267 = vmatprep.mubr.bf16.mxu0 %v3128
        %5268 = vmatmul.mubr.bf16.gmra.mrb[0].mxu0 %v3127
        %v5269 = vpop.f32.mrb[0].mxu0
        %v5270 = vadd.f32 0.0, %v5269
        %v5271 = vpop.f32.mrb[0].mxu0
        %v5272 = vadd.f32 0.0, %v5271
        %v5273 = vpop.f32.mrb[0].mxu0
        %v5274 = vadd.f32 0.0, %v5273
        %v5275 = vpop.f32.mrb[0].mxu0
        %v5276 = vadd.f32 0.0, %v5275
        %5277 = vmatprep.mubr.bf16.mxu0 %v3130
        %5278 = vmatmul.mubr.bf16.gmra.mrb[0].mxu0 %v3129
        %v5279 = vpop.f32.mrb[0].mxu0
        %v5280 = vadd.f32 0.0, %v5279
        %v5281 = vpop.f32.mrb[0].mxu0
        %v5282 = vadd.f32 0.0, %v5281
        %v5283 = vpop.f32.mrb[0].mxu0
        %v5284 = vadd.f32 0.0, %v5283
        %v5285 = vpop.f32.mrb[0].mxu0
        %v5286 = vadd.f32 0.0, %v5285
        %5287 = vmatprep.mubr.bf16.mxu0 %v3132
        %5288 = vmatmul.mubr.bf16.gmra.mrb[0].mxu0 %v3131
        %v5289 = vpop.f32.mrb[0].mxu0
        %v5290 = vadd.f32 0.0, %v5289
        %v5291 = vpop.f32.mrb[0].mxu0
        %v5292 = vadd.f32 0.0, %v5291
        %v5293 = vpop.f32.mrb[0].mxu0
        %v5294 = vadd.f32 0.0, %v5293
        %v5295 = vpop.f32.mrb[0].mxu0
        %v5296 = vadd.f32 0.0, %v5295
        %5297 = vmatprep.mubr.bf16.mxu0 %v3134
        %5298 = vmatmul.mubr.bf16.gmra.mrb[0].mxu0 %v3133
        %v5299 = vpop.f32.mrb[0].mxu0
        %v5300 = vadd.f32 0.0, %v5299
        %v5301 = vpop.f32.mrb[0].mxu0
        %v5302 = vadd.f32 0.0, %v5301
        %v5303 = vpop.f32.mrb[0].mxu0
        %v5304 = vadd.f32 0.0, %v5303
        %v5305 = vpop.f32.mrb[0].mxu0
        %v5306 = vadd.f32 0.0, %v5305
        %5307 = vmatprep.mubr.bf16.mxu0 %v3136
        %5308 = vmatmul.mubr.bf16.gmra.mrb[0].mxu0 %v3135
        %v5309 = vpop.f32.mrb[0].mxu0
        %v5310 = vadd.f32 0.0, %v5309
        %v5311 = vpop.f32.mrb[0].mxu0
        %v5312 = vadd.f32 0.0, %v5311
        %v5313 = vpop.f32.mrb[0].mxu0
        %v5314 = vadd.f32 0.0, %v5313
        %v5315 = vpop.f32.mrb[0].mxu0
        %v5316 = vadd.f32 0.0, %v5315
        %5317 = vmatprep.mubr.bf16.mxu0 %v3138
        %5318 = vmatmul.mubr.bf16.gmra.mrb[0].mxu0 %v3137
        %v5319 = vpop.f32.mrb[0].mxu0
        %v5320 = vadd.f32 0.0, %v5319
        %v5321 = vpop.f32.mrb[0].mxu0
        %v5322 = vadd.f32 0.0, %v5321
        %v5323 = vpop.f32.mrb[0].mxu0
        %v5324 = vadd.f32 0.0, %v5323
        %v5325 = vpop.f32.mrb[0].mxu0
        %v5326 = vadd.f32 0.0, %v5325
        %5327 = vmatprep.mubr.bf16.mxu0 %v3140
        %5328 = vmatmul.mubr.bf16.gmra.mrb[0].mxu0 %v3139
        %v5329 = vpop.f32.mrb[0].mxu0
        %v5330 = vadd.f32 0.0, %v5329
        %v5331 = vpop.f32.mrb[0].mxu0
        %v5332 = vadd.f32 0.0, %v5331
        %v5333 = vpop.f32.mrb[0].mxu0
        %v5334 = vadd.f32 0.0, %v5333
        %v5335 = vpop.f32.mrb[0].mxu0
        %v5336 = vadd.f32 0.0, %v5335
        %5337 = vmatprep.mubr.bf16.mxu0 %v3142
        %5338 = vmatmul.mubr.bf16.gmra.mrb[0].mxu0 %v3141
        %v5339 = vpop.f32.mrb[0].mxu0
        %v5340 = vadd.f32 0.0, %v5339
        %v5341 = vpop.f32.mrb[0].mxu0
        %v5342 = vadd.f32 0.0, %v5341
        %v5343 = vpop.f32.mrb[0].mxu0
        %v5344 = vadd.f32 0.0, %v5343
        %v5345 = vpop.f32.mrb[0].mxu0
        %v5346 = vadd.f32 0.0, %v5345
        %5347 = vmatprep.mubr.bf16.mxu0 %v3144
        %5348 = vmatmul.mubr.bf16.gmra.mrb[0].mxu0 %v3143
        %v5349 = vpop.f32.mrb[0].mxu0
        %v5350 = vadd.f32 0.0, %v5349
        %v5351 = vpop.f32.mrb[0].mxu0
        %v5352 = vadd.f32 0.0, %v5351
        %v5353 = vpop.f32.mrb[0].mxu0
        %v5354 = vadd.f32 0.0, %v5353
        %v5355 = vpop.f32.mrb[0].mxu0
        %v5356 = vadd.f32 0.0, %v5355
        %5357 = vmatprep.mubr.bf16.mxu0 %v3146
        %5358 = vmatmul.mubr.bf16.gmra.mrb[0].mxu0 %v3145
        %v5359 = vpop.f32.mrb[0].mxu0
        %v5360 = vadd.f32 0.0, %v5359
        %v5361 = vpop.f32.mrb[0].mxu0
        %v5362 = vadd.f32 0.0, %v5361
        %v5363 = vpop.f32.mrb[0].mxu0
        %v5364 = vadd.f32 0.0, %v5363
        %v5365 = vpop.f32.mrb[0].mxu0
        %v5366 = vadd.f32 0.0, %v5365
        %5367 = vmatprep.mubr.bf16.mxu0 %v3148
        %5368 = vmatmul.mubr.bf16.gmra.mrb[0].mxu0 %v3147
        %v5369 = vpop.f32.mrb[0].mxu0
        %v5370 = vadd.f32 0.0, %v5369
        %v5371 = vpop.f32.mrb[0].mxu0
        %v5372 = vadd.f32 0.0, %v5371
        %v5373 = vpop.f32.mrb[0].mxu0
        %v5374 = vadd.f32 0.0, %v5373
        %v5375 = vpop.f32.mrb[0].mxu0
        %v5376 = vadd.f32 0.0, %v5375
        %5377 = vmatprep.mubr.bf16.mxu0 %v3150
        %5378 = vmatmul.mubr.bf16.gmra.mrb[0].mxu0 %v3149
        %v5379 = vpop.f32.mrb[0].mxu0
        %v5380 = vadd.f32 0.0, %v5379
        %v5381 = vpop.f32.mrb[0].mxu0
        %v5382 = vadd.f32 0.0, %v5381
        %v5383 = vpop.f32.mrb[0].mxu0
        %v5384 = vadd.f32 0.0, %v5383
        %v5385 = vpop.f32.mrb[0].mxu0
        %v5386 = vadd.f32 0.0, %v5385
        %5387 = vmatprep.mubr.bf16.mxu0 %v3152
        %5388 = vmatmul.mubr.bf16.gmra.mrb[0].mxu0 %v3151
        %v5389 = vpop.f32.mrb[0].mxu0
        %v5390 = vadd.f32 0.0, %v5389
        %v5391 = vpop.f32.mrb[0].mxu0
        %v5392 = vadd.f32 0.0, %v5391
        %v5393 = vpop.f32.mrb[0].mxu0
        %v5394 = vadd.f32 0.0, %v5393
        %v5395 = vpop.f32.mrb[0].mxu0
        %v5396 = vadd.f32 0.0, %v5395
        %5397 = vmatprep.mubr.bf16.mxu0 %v3154
        %5398 = vmatmul.mubr.bf16.gmra.mrb[0].mxu0 %v3153
        %v5399 = vpop.f32.mrb[0].mxu0
        %v5400 = vadd.f32 0.0, %v5399
        %v5401 = vpop.f32.mrb[0].mxu0
        %v5402 = vadd.f32 0.0, %v5401
        %v5403 = vpop.f32.mrb[0].mxu0
        %v5404 = vadd.f32 0.0, %v5403
        %v5405 = vpop.f32.mrb[0].mxu0
        %v5406 = vadd.f32 0.0, %v5405
        %5407 = vmatprep.mubr.bf16.mxu0 %v3156
        %5408 = vmatmul.mubr.bf16.gmra.mrb[0].mxu0 %v3155
        %v5409 = vpop.f32.mrb[0].mxu0
        %v5410 = vadd.f32 0.0, %v5409
        %v5411 = vpop.f32.mrb[0].mxu0
        %v5412 = vadd.f32 0.0, %v5411
        %v5413 = vpop.f32.mrb[0].mxu0
        %v5414 = vadd.f32 0.0, %v5413
        %v5415 = vpop.f32.mrb[0].mxu0
        %v5416 = vadd.f32 0.0, %v5415
        %5417 = vmatprep.mubr.bf16.mxu0 %v3158
        %5418 = vmatmul.mubr.bf16.gmra.mrb[0].mxu0 %v3157
        %v5419 = vpop.f32.mrb[0].mxu0
        %v5420 = vadd.f32 0.0, %v5419
        %v5421 = vpop.f32.mrb[0].mxu0
        %v5422 = vadd.f32 0.0, %v5421
        %v5423 = vpop.f32.mrb[0].mxu0
        %v5424 = vadd.f32 0.0, %v5423
        %v5425 = vpop.f32.mrb[0].mxu0
        %v5426 = vadd.f32 0.0, %v5425
        %5427 = vmatprep.mubr.bf16.mxu0 %v3160
        %5428 = vmatmul.mubr.bf16.gmra.mrb[0].mxu0 %v3159
        %v5429 = vpop.f32.mrb[0].mxu0
        %v5430 = vadd.f32 0.0, %v5429
        %v5431 = vpop.f32.mrb[0].mxu0
        %v5432 = vadd.f32 0.0, %v5431
        %v5433 = vpop.f32.mrb[0].mxu0
        %v5434 = vadd.f32 0.0, %v5433
        %v5435 = vpop.f32.mrb[0].mxu0
        %v5436 = vadd.f32 0.0, %v5435
        %5437 = vmatprep.mubr.bf16.mxu0 %v3162
        %5438 = vmatmul.mubr.bf16.gmra.mrb[0].mxu0 %v3161
        %v5439 = vpop.f32.mrb[0].mxu0
        %v5440 = vadd.f32 0.0, %v5439
        %v5441 = vpop.f32.mrb[0].mxu0
        %v5442 = vadd.f32 0.0, %v5441
        %v5443 = vpop.f32.mrb[0].mxu0
        %v5444 = vadd.f32 0.0, %v5443
        %v5445 = vpop.f32.mrb[0].mxu0
        %v5446 = vadd.f32 0.0, %v5445
        %5447 = vmatprep.mubr.bf16.mxu0 %v3164
        %5448 = vmatmul.mubr.bf16.gmra.mrb[0].mxu0 %v3163
        %v5449 = vpop.f32.mrb[0].mxu0
        %v5450 = vadd.f32 0.0, %v5449
        %v5451 = vpop.f32.mrb[0].mxu0
        %v5452 = vadd.f32 0.0, %v5451
        %v5453 = vpop.f32.mrb[0].mxu0
        %v5454 = vadd.f32 0.0, %v5453
        %v5455 = vpop.f32.mrb[0].mxu0
        %v5456 = vadd.f32 0.0, %v5455
        %5457 = vmatprep.mubr.bf16.mxu0 %v3166
        %5458 = vmatmul.mubr.bf16.gmra.mrb[0].mxu0 %v3165
        %v5459 = vpop.f32.mrb[0].mxu0
        %v5460 = vadd.f32 0.0, %v5459
        %v5461 = vpop.f32.mrb[0].mxu0
        %v5462 = vadd.f32 0.0, %v5461
        %v5463 = vpop.f32.mrb[0].mxu0
        %v5464 = vadd.f32 0.0, %v5463
        %v5465 = vpop.f32.mrb[0].mxu0
        %v5466 = vadd.f32 0.0, %v5465
        %5467 = vmatprep.mubr.bf16.mxu0 %v3168
        %5468 = vmatmul.mubr.bf16.gmra.mrb[0].mxu0 %v3167
        %v5469 = vpop.f32.mrb[0].mxu0
        %v5470 = vadd.f32 0.0, %v5469
        %v5471 = vpop.f32.mrb[0].mxu0
        %v5472 = vadd.f32 0.0, %v5471
        %v5473 = vpop.f32.mrb[0].mxu0
        %v5474 = vadd.f32 0.0, %v5473
        %v5475 = vpop.f32.mrb[0].mxu0
        %v5476 = vadd.f32 0.0, %v5475
        %5477 = vmatprep.mubr.bf16.mxu0 %v3170
        %5478 = vmatmul.mubr.bf16.gmra.mrb[0].mxu0 %v3169
        %v5479 = vpop.f32.mrb[0].mxu0
        %v5480 = vadd.f32 0.0, %v5479
        %v5481 = vpop.f32.mrb[0].mxu0
        %v5482 = vadd.f32 0.0, %v5481
        %v5483 = vpop.f32.mrb[0].mxu0
        %v5484 = vadd.f32 0.0, %v5483
        %v5485 = vpop.f32.mrb[0].mxu0
        %v5486 = vadd.f32 0.0, %v5485
        %5487 = vmatprep.mubr.bf16.mxu0 %v3172
        %5488 = vmatmul.mubr.bf16.gmra.mrb[0].mxu0 %v3171
        %v5489 = vpop.f32.mrb[0].mxu0
        %v5490 = vadd.f32 0.0, %v5489
        %v5491 = vpop.f32.mrb[0].mxu0
        %v5492 = vadd.f32 0.0, %v5491
        %v5493 = vpop.f32.mrb[0].mxu0
        %v5494 = vadd.f32 0.0, %v5493
        %v5495 = vpop.f32.mrb[0].mxu0
        %v5496 = vadd.f32 0.0, %v5495
        %5497 = vdwg.mxu0
        %5498 = vmatprep.subr.bf16.mxu0 %v3814
        %5499 = vmatpush1.bf16.msra.mxu0 %v3813
        %5500 = vmatprep.subr.bf16.mxu0 %v3824
        %5501 = vmatpush1.bf16.msra.mxu0 %v3823
        %5502 = vmatprep.subr.bf16.mxu0 %v3834
        %5503 = vmatpush1.bf16.msra.mxu0 %v3833
        %5504 = vmatprep.subr.bf16.mxu0 %v3844
        %5505 = vmatpush1.bf16.msra.mxu0 %v3843
        %5506 = vmatprep.subr.bf16.mxu0 %v3854
        %5507 = vmatpush1.bf16.msra.mxu0 %v3853
        %5508 = vmatprep.subr.bf16.mxu0 %v3864
        %5509 = vmatpush1.bf16.msra.mxu0 %v3863
        %5510 = vmatprep.subr.bf16.mxu0 %v3874
        %5511 = vmatpush1.bf16.msra.mxu0 %v3873
        %5512 = vmatprep.subr.bf16.mxu0 %v3884
        %5513 = vmatpush1.bf16.msra.mxu0 %v3883
        %5514 = vmatprep.subr.bf16.mxu0 %v3894
        %5515 = vmatpush1.bf16.msra.mxu0 %v3893
        %5516 = vmatprep.subr.bf16.mxu0 %v3904
        %5517 = vmatpush1.bf16.msra.mxu0 %v3903
        %5518 = vmatprep.subr.bf16.mxu0 %v3914
        %5519 = vmatpush1.bf16.msra.mxu0 %v3913
        %5520 = vmatprep.subr.bf16.mxu0 %v3924
        %5521 = vmatpush1.bf16.msra.mxu0 %v3923
        %5522 = vmatprep.subr.bf16.mxu0 %v3934
        %5523 = vmatpush1.bf16.msra.mxu0 %v3933
        %5524 = vmatprep.subr.bf16.mxu0 %v3944
        %5525 = vmatpush1.bf16.msra.mxu0 %v3943
        %5526 = vmatprep.subr.bf16.mxu0 %v3954
        %5527 = vmatpush1.bf16.msra.mxu0 %v3953
        %5528 = vmatprep.subr.bf16.mxu0 %v3964
        %5529 = vmatpush1.bf16.msra.mxu0 %v3963
        %5530 = vmatprep.mubr.bf16.mxu0 %v2886
        %5531 = vmatmul.mubr.bf16.gmra.mrb[0].mxu0 %v2885
        %v5532 = vpop.f32.mrb[0].mxu0
        %v5533 = vadd.f32 %v4168, %v5532
        %v5534 = vpop.f32.mrb[0].mxu0
        %v5535 = vadd.f32 %v4170, %v5534
        %v5536 = vpop.f32.mrb[0].mxu0
        %v5537 = vadd.f32 %v4172, %v5536
        %v5538 = vpop.f32.mrb[0].mxu0
        %v5539 = vadd.f32 %v4174, %v5538
        %5540 = vmatprep.mubr.bf16.mxu0 %v2888
        %5541 = vmatmul.mubr.bf16.gmra.mrb[0].mxu0 %v2887
        %v5542 = vpop.f32.mrb[0].mxu0
        %v5543 = vadd.f32 %v4178, %v5542
        %v5544 = vpop.f32.mrb[0].mxu0
        %v5545 = vadd.f32 %v4180, %v5544
        %v5546 = vpop.f32.mrb[0].mxu0
        %v5547 = vadd.f32 %v4182, %v5546
        %v5548 = vpop.f32.mrb[0].mxu0
        %v5549 = vadd.f32 %v4184, %v5548
        %5550 = vmatprep.mubr.bf16.mxu0 %v2890
        %5551 = vmatmul.mubr.bf16.gmra.mrb[0].mxu0 %v2889
        %v5552 = vpop.f32.mrb[0].mxu0
        %v5553 = vadd.f32 %v4188, %v5552
        %v5554 = vpop.f32.mrb[0].mxu0
        %v5555 = vadd.f32 %v4190, %v5554
        %v5556 = vpop.f32.mrb[0].mxu0
        %v5557 = vadd.f32 %v4192, %v5556
        %v5558 = vpop.f32.mrb[0].mxu0
        %v5559 = vadd.f32 %v4194, %v5558
        %5560 = vmatprep.mubr.bf16.mxu0 %v2892
        %5561 = vmatmul.mubr.bf16.gmra.mrb[0].mxu0 %v2891
        %v5562 = vpop.f32.mrb[0].mxu0
        %v5563 = vadd.f32 %v4198, %v5562
        %v5564 = vpop.f32.mrb[0].mxu0
        %v5565 = vadd.f32 %v4200, %v5564
        %v5566 = vpop.f32.mrb[0].mxu0
        %v5567 = vadd.f32 %v4202, %v5566
        %v5568 = vpop.f32.mrb[0].mxu0
        %v5569 = vadd.f32 %v4204, %v5568
        %5570 = vmatprep.mubr.bf16.mxu0 %v2894
        %5571 = vmatmul.mubr.bf16.gmra.mrb[0].mxu0 %v2893
        %v5572 = vpop.f32.mrb[0].mxu0
        %v5573 = vadd.f32 %v4208, %v5572
        %v5574 = vpop.f32.mrb[0].mxu0
        %v5575 = vadd.f32 %v4210, %v5574
        %v5576 = vpop.f32.mrb[0].mxu0
        %v5577 = vadd.f32 %v4212, %v5576
        %v5578 = vpop.f32.mrb[0].mxu0
        %v5579 = vadd.f32 %v4214, %v5578
        %5580 = vmatprep.mubr.bf16.mxu0 %v2896
        %5581 = vmatmul.mubr.bf16.gmra.mrb[0].mxu0 %v2895
        %v5582 = vpop.f32.mrb[0].mxu0
        %v5583 = vadd.f32 %v4218, %v5582
        %v5584 = vpop.f32.mrb[0].mxu0
        %v5585 = vadd.f32 %v4220, %v5584
        %v5586 = vpop.f32.mrb[0].mxu0
        %v5587 = vadd.f32 %v4222, %v5586
        %v5588 = vpop.f32.mrb[0].mxu0
        %v5589 = vadd.f32 %v4224, %v5588
        %5590 = vmatprep.mubr.bf16.mxu0 %v2898
        %5591 = vmatmul.mubr.bf16.gmra.mrb[0].mxu0 %v2897
        %v5592 = vpop.f32.mrb[0].mxu0
        %v5593 = vadd.f32 %v4228, %v5592
        %v5594 = vpop.f32.mrb[0].mxu0
        %v5595 = vadd.f32 %v4230, %v5594
        %v5596 = vpop.f32.mrb[0].mxu0
        %v5597 = vadd.f32 %v4232, %v5596
        %v5598 = vpop.f32.mrb[0].mxu0
        %v5599 = vadd.f32 %v4234, %v5598
        %5600 = vmatprep.mubr.bf16.mxu0 %v2900
        %5601 = vmatmul.mubr.bf16.gmra.mrb[0].mxu0 %v2899
        %v5602 = vpop.f32.mrb[0].mxu0
        %v5603 = vadd.f32 %v4238, %v5602
        %v5604 = vpop.f32.mrb[0].mxu0
        %v5605 = vadd.f32 %v4240, %v5604
        %v5606 = vpop.f32.mrb[0].mxu0
        %v5607 = vadd.f32 %v4242, %v5606
        %v5608 = vpop.f32.mrb[0].mxu0
        %v5609 = vadd.f32 %v4244, %v5608
        %5610 = vmatprep.mubr.bf16.mxu0 %v2902
        %5611 = vmatmul.mubr.bf16.gmra.mrb[0].mxu0 %v2901
        %v5612 = vpop.f32.mrb[0].mxu0
        %v5613 = vadd.f32 %v4248, %v5612
        %v5614 = vpop.f32.mrb[0].mxu0
        %v5615 = vadd.f32 %v4250, %v5614
        %v5616 = vpop.f32.mrb[0].mxu0
        %v5617 = vadd.f32 %v4252, %v5616
        %v5618 = vpop.f32.mrb[0].mxu0
        %v5619 = vadd.f32 %v4254, %v5618
        %5620 = vmatprep.mubr.bf16.mxu0 %v2904
        %5621 = vmatmul.mubr.bf16.gmra.mrb[0].mxu0 %v2903
        %v5622 = vpop.f32.mrb[0].mxu0
        %v5623 = vadd.f32 %v4258, %v5622
        %v5624 = vpop.f32.mrb[0].mxu0
        %v5625 = vadd.f32 %v4260, %v5624
        %v5626 = vpop.f32.mrb[0].mxu0
        %v5627 = vadd.f32 %v4262, %v5626
        %v5628 = vpop.f32.mrb[0].mxu0
        %v5629 = vadd.f32 %v4264, %v5628
        %5630 = vmatprep.mubr.bf16.mxu0 %v2906
        %5631 = vmatmul.mubr.bf16.gmra.mrb[0].mxu0 %v2905
        %v5632 = vpop.f32.mrb[0].mxu0
        %v5633 = vadd.f32 %v4268, %v5632
        %v5634 = vpop.f32.mrb[0].mxu0
        %v5635 = vadd.f32 %v4270, %v5634
        %v5636 = vpop.f32.mrb[0].mxu0
        %v5637 = vadd.f32 %v4272, %v5636
        %v5638 = vpop.f32.mrb[0].mxu0
        %v5639 = vadd.f32 %v4274, %v5638
        %5640 = vmatprep.mubr.bf16.mxu0 %v2908
        %5641 = vmatmul.mubr.bf16.gmra.mrb[0].mxu0 %v2907
        %v5642 = vpop.f32.mrb[0].mxu0
        %v5643 = vadd.f32 %v4278, %v5642
        %v5644 = vpop.f32.mrb[0].mxu0
        %v5645 = vadd.f32 %v4280, %v5644
        %v5646 = vpop.f32.mrb[0].mxu0
        %v5647 = vadd.f32 %v4282, %v5646
        %v5648 = vpop.f32.mrb[0].mxu0
        %v5649 = vadd.f32 %v4284, %v5648
        %5650 = vmatprep.mubr.bf16.mxu0 %v2910
        %5651 = vmatmul.mubr.bf16.gmra.mrb[0].mxu0 %v2909
        %v5652 = vpop.f32.mrb[0].mxu0
        %v5653 = vadd.f32 %v4288, %v5652
        %v5654 = vpop.f32.mrb[0].mxu0
        %v5655 = vadd.f32 %v4290, %v5654
        %v5656 = vpop.f32.mrb[0].mxu0
        %v5657 = vadd.f32 %v4292, %v5656
        %v5658 = vpop.f32.mrb[0].mxu0
        %v5659 = vadd.f32 %v4294, %v5658
        %5660 = vmatprep.mubr.bf16.mxu0 %v2912
        %5661 = vmatmul.mubr.bf16.gmra.mrb[0].mxu0 %v2911
        %v5662 = vpop.f32.mrb[0].mxu0
        %v5663 = vadd.f32 %v4298, %v5662
        %v5664 = vpop.f32.mrb[0].mxu0
        %v5665 = vadd.f32 %v4300, %v5664
        %v5666 = vpop.f32.mrb[0].mxu0
        %v5667 = vadd.f32 %v4302, %v5666
        %v5668 = vpop.f32.mrb[0].mxu0
        %v5669 = vadd.f32 %v4304, %v5668
        %5670 = vmatprep.mubr.bf16.mxu0 %v2914
        %5671 = vmatmul.mubr.bf16.gmra.mrb[0].mxu0 %v2913
        %v5672 = vpop.f32.mrb[0].mxu0
        %v5673 = vadd.f32 %v4308, %v5672
        %v5674 = vpop.f32.mrb[0].mxu0
        %v5675 = vadd.f32 %v4310, %v5674
        %v5676 = vpop.f32.mrb[0].mxu0
        %v5677 = vadd.f32 %v4312, %v5676
        %v5678 = vpop.f32.mrb[0].mxu0
        %v5679 = vadd.f32 %v4314, %v5678
        %5680 = vmatprep.mubr.bf16.mxu0 %v2916
        %5681 = vmatmul.mubr.bf16.gmra.mrb[0].mxu0 %v2915
        %v5682 = vpop.f32.mrb[0].mxu0
        %v5683 = vadd.f32 %v4318, %v5682
        %v5684 = vpop.f32.mrb[0].mxu0
        %v5685 = vadd.f32 %v4320, %v5684
        %v5686 = vpop.f32.mrb[0].mxu0
        %v5687 = vadd.f32 %v4322, %v5686
        %v5688 = vpop.f32.mrb[0].mxu0
        %v5689 = vadd.f32 %v4324, %v5688
        %5690 = vmatprep.mubr.bf16.mxu0 %v2918
        %5691 = vmatmul.mubr.bf16.gmra.mrb[0].mxu0 %v2917
        %v5692 = vpop.f32.mrb[0].mxu0
        %v5693 = vadd.f32 %v4328, %v5692
        %v5694 = vpop.f32.mrb[0].mxu0
        %v5695 = vadd.f32 %v4330, %v5694
        %v5696 = vpop.f32.mrb[0].mxu0
        %v5697 = vadd.f32 %v4332, %v5696
        %v5698 = vpop.f32.mrb[0].mxu0
        %v5699 = vadd.f32 %v4334, %v5698
        %5700 = vmatprep.mubr.bf16.mxu0 %v2920
        %5701 = vmatmul.mubr.bf16.gmra.mrb[0].mxu0 %v2919
        %v5702 = vpop.f32.mrb[0].mxu0
        %v5703 = vadd.f32 %v4338, %v5702
        %v5704 = vpop.f32.mrb[0].mxu0
        %v5705 = vadd.f32 %v4340, %v5704
        %v5706 = vpop.f32.mrb[0].mxu0
        %v5707 = vadd.f32 %v4342, %v5706
        %v5708 = vpop.f32.mrb[0].mxu0
        %v5709 = vadd.f32 %v4344, %v5708
        %5710 = vmatprep.mubr.bf16.mxu0 %v2922
        %5711 = vmatmul.mubr.bf16.gmra.mrb[0].mxu0 %v2921
        %v5712 = vpop.f32.mrb[0].mxu0
        %v5713 = vadd.f32 %v4348, %v5712
        %v5714 = vpop.f32.mrb[0].mxu0
        %v5715 = vadd.f32 %v4350, %v5714
        %v5716 = vpop.f32.mrb[0].mxu0
        %v5717 = vadd.f32 %v4352, %v5716
        %v5718 = vpop.f32.mrb[0].mxu0
        %v5719 = vadd.f32 %v4354, %v5718
        %5720 = vmatprep.mubr.bf16.mxu0 %v2924
        %5721 = vmatmul.mubr.bf16.gmra.mrb[0].mxu0 %v2923
        %v5722 = vpop.f32.mrb[0].mxu0
        %v5723 = vadd.f32 %v4358, %v5722
        %v5724 = vpop.f32.mrb[0].mxu0
        %v5725 = vadd.f32 %v4360, %v5724
        %v5726 = vpop.f32.mrb[0].mxu0
        %v5727 = vadd.f32 %v4362, %v5726
        %v5728 = vpop.f32.mrb[0].mxu0
        %v5729 = vadd.f32 %v4364, %v5728
        %5730 = vmatprep.mubr.bf16.mxu0 %v2926
        %5731 = vmatmul.mubr.bf16.gmra.mrb[0].mxu0 %v2925
        %v5732 = vpop.f32.mrb[0].mxu0
        %v5733 = vadd.f32 %v4368, %v5732
        %v5734 = vpop.f32.mrb[0].mxu0
        %v5735 = vadd.f32 %v4370, %v5734
        %v5736 = vpop.f32.mrb[0].mxu0
        %v5737 = vadd.f32 %v4372, %v5736
        %v5738 = vpop.f32.mrb[0].mxu0
        %v5739 = vadd.f32 %v4374, %v5738
        %5740 = vmatprep.mubr.bf16.mxu0 %v2928
        %5741 = vmatmul.mubr.bf16.gmra.mrb[0].mxu0 %v2927
        %v5742 = vpop.f32.mrb[0].mxu0
        %v5743 = vadd.f32 %v4378, %v5742
        %v5744 = vpop.f32.mrb[0].mxu0
        %v5745 = vadd.f32 %v4380, %v5744
        %v5746 = vpop.f32.mrb[0].mxu0
        %v5747 = vadd.f32 %v4382, %v5746
        %v5748 = vpop.f32.mrb[0].mxu0
        %v5749 = vadd.f32 %v4384, %v5748
        %5750 = vmatprep.mubr.bf16.mxu0 %v2930
        %5751 = vmatmul.mubr.bf16.gmra.mrb[0].mxu0 %v2929
        %v5752 = vpop.f32.mrb[0].mxu0
        %v5753 = vadd.f32 %v4388, %v5752
        %v5754 = vpop.f32.mrb[0].mxu0
        %v5755 = vadd.f32 %v4390, %v5754
        %v5756 = vpop.f32.mrb[0].mxu0
        %v5757 = vadd.f32 %v4392, %v5756
        %v5758 = vpop.f32.mrb[0].mxu0
        %v5759 = vadd.f32 %v4394, %v5758
        %5760 = vmatprep.mubr.bf16.mxu0 %v2932
        %5761 = vmatmul.mubr.bf16.gmra.mrb[0].mxu0 %v2931
        %v5762 = vpop.f32.mrb[0].mxu0
        %v5763 = vadd.f32 %v4398, %v5762
        %v5764 = vpop.f32.mrb[0].mxu0
        %v5765 = vadd.f32 %v4400, %v5764
        %v5766 = vpop.f32.mrb[0].mxu0
        %v5767 = vadd.f32 %v4402, %v5766
        %v5768 = vpop.f32.mrb[0].mxu0
        %v5769 = vadd.f32 %v4404, %v5768
        %5770 = vdwg.mxu0
        %5771 = vmatprep.subr.bf16.mxu0 %v3816
        %5772 = vmatpush1.bf16.msra.mxu0 %v3815
        %5773 = vmatprep.subr.bf16.mxu0 %v3826
        %5774 = vmatpush1.bf16.msra.mxu0 %v3825
        %5775 = vmatprep.subr.bf16.mxu0 %v3836
        %5776 = vmatpush1.bf16.msra.mxu0 %v3835
        %5777 = vmatprep.subr.bf16.mxu0 %v3846
        %5778 = vmatpush1.bf16.msra.mxu0 %v3845
        %5779 = vmatprep.subr.bf16.mxu0 %v3856
        %5780 = vmatpush1.bf16.msra.mxu0 %v3855
        %5781 = vmatprep.subr.bf16.mxu0 %v3866
        %5782 = vmatpush1.bf16.msra.mxu0 %v3865
        %5783 = vmatprep.subr.bf16.mxu0 %v3876
        %5784 = vmatpush1.bf16.msra.mxu0 %v3875
        %5785 = vmatprep.subr.bf16.mxu0 %v3886
        %5786 = vmatpush1.bf16.msra.mxu0 %v3885
        %5787 = vmatprep.subr.bf16.mxu0 %v3896
        %5788 = vmatpush1.bf16.msra.mxu0 %v3895
        %5789 = vmatprep.subr.bf16.mxu0 %v3906
        %5790 = vmatpush1.bf16.msra.mxu0 %v3905
        %5791 = vmatprep.subr.bf16.mxu0 %v3916
        %5792 = vmatpush1.bf16.msra.mxu0 %v3915
        %5793 = vmatprep.subr.bf16.mxu0 %v3926
        %5794 = vmatpush1.bf16.msra.mxu0 %v3925
        %5795 = vmatprep.subr.bf16.mxu0 %v3936
        %5796 = vmatpush1.bf16.msra.mxu0 %v3935
        %5797 = vmatprep.subr.bf16.mxu0 %v3946
        %5798 = vmatpush1.bf16.msra.mxu0 %v3945
        %5799 = vmatprep.subr.bf16.mxu0 %v3956
        %5800 = vmatpush1.bf16.msra.mxu0 %v3955
        %5801 = vmatprep.subr.bf16.mxu0 %v3966
        %5802 = vmatpush1.bf16.msra.mxu0 %v3965
        %5803 = vmatprep.mubr.bf16.mxu0 %v2886
        %5804 = vmatmul.mubr.bf16.gmra.mrb[0].mxu0 %v2885
        %v5805 = vpop.f32.mrb[0].mxu0
        %v5806 = vadd.f32 %v4441, %v5805
        %v5807 = vpop.f32.mrb[0].mxu0
        %v5808 = vadd.f32 %v4443, %v5807
        %v5809 = vpop.f32.mrb[0].mxu0
        %v5810 = vadd.f32 %v4445, %v5809
        %v5811 = vpop.f32.mrb[0].mxu0
        %v5812 = vadd.f32 %v4447, %v5811
        %5813 = vmatprep.mubr.bf16.mxu0 %v2888
        %5814 = vmatmul.mubr.bf16.gmra.mrb[0].mxu0 %v2887
        %v5815 = vpop.f32.mrb[0].mxu0
        %v5816 = vadd.f32 %v4451, %v5815
        %v5817 = vpop.f32.mrb[0].mxu0
        %v5818 = vadd.f32 %v4453, %v5817
        %v5819 = vpop.f32.mrb[0].mxu0
        %v5820 = vadd.f32 %v4455, %v5819
        %v5821 = vpop.f32.mrb[0].mxu0
        %v5822 = vadd.f32 %v4457, %v5821
        %5823 = vmatprep.mubr.bf16.mxu0 %v2890
        %5824 = vmatmul.mubr.bf16.gmra.mrb[0].mxu0 %v2889
        %v5825 = vpop.f32.mrb[0].mxu0
        %v5826 = vadd.f32 %v4461, %v5825
        %v5827 = vpop.f32.mrb[0].mxu0
        %v5828 = vadd.f32 %v4463, %v5827
        %v5829 = vpop.f32.mrb[0].mxu0
        %v5830 = vadd.f32 %v4465, %v5829
        %v5831 = vpop.f32.mrb[0].mxu0
        %v5832 = vadd.f32 %v4467, %v5831
        %5833 = vmatprep.mubr.bf16.mxu0 %v2892
        %5834 = vmatmul.mubr.bf16.gmra.mrb[0].mxu0 %v2891
        %v5835 = vpop.f32.mrb[0].mxu0
        %v5836 = vadd.f32 %v4471, %v5835
        %v5837 = vpop.f32.mrb[0].mxu0
        %v5838 = vadd.f32 %v4473, %v5837
        %v5839 = vpop.f32.mrb[0].mxu0
        %v5840 = vadd.f32 %v4475, %v5839
        %v5841 = vpop.f32.mrb[0].mxu0
        %v5842 = vadd.f32 %v4477, %v5841
        %5843 = vmatprep.mubr.bf16.mxu0 %v2894
        %5844 = vmatmul.mubr.bf16.gmra.mrb[0].mxu0 %v2893
        %v5845 = vpop.f32.mrb[0].mxu0
        %v5846 = vadd.f32 %v4481, %v5845
        %v5847 = vpop.f32.mrb[0].mxu0
        %v5848 = vadd.f32 %v4483, %v5847
        %v5849 = vpop.f32.mrb[0].mxu0
        %v5850 = vadd.f32 %v4485, %v5849
        %v5851 = vpop.f32.mrb[0].mxu0
        %v5852 = vadd.f32 %v4487, %v5851
        %5853 = vmatprep.mubr.bf16.mxu0 %v2896
        %5854 = vmatmul.mubr.bf16.gmra.mrb[0].mxu0 %v2895
        %v5855 = vpop.f32.mrb[0].mxu0
        %v5856 = vadd.f32 %v4491, %v5855
        %v5857 = vpop.f32.mrb[0].mxu0
        %v5858 = vadd.f32 %v4493, %v5857
        %v5859 = vpop.f32.mrb[0].mxu0
        %v5860 = vadd.f32 %v4495, %v5859
        %v5861 = vpop.f32.mrb[0].mxu0
        %v5862 = vadd.f32 %v4497, %v5861
        %5863 = vmatprep.mubr.bf16.mxu0 %v2898
        %5864 = vmatmul.mubr.bf16.gmra.mrb[0].mxu0 %v2897
        %v5865 = vpop.f32.mrb[0].mxu0
        %v5866 = vadd.f32 %v4501, %v5865
        %v5867 = vpop.f32.mrb[0].mxu0
        %v5868 = vadd.f32 %v4503, %v5867
        %v5869 = vpop.f32.mrb[0].mxu0
        %v5870 = vadd.f32 %v4505, %v5869
        %v5871 = vpop.f32.mrb[0].mxu0
        %v5872 = vadd.f32 %v4507, %v5871
        %5873 = vmatprep.mubr.bf16.mxu0 %v2900
        %5874 = vmatmul.mubr.bf16.gmra.mrb[0].mxu0 %v2899
        %v5875 = vpop.f32.mrb[0].mxu0
        %v5876 = vadd.f32 %v4511, %v5875
        %v5877 = vpop.f32.mrb[0].mxu0
        %v5878 = vadd.f32 %v4513, %v5877
        %v5879 = vpop.f32.mrb[0].mxu0
        %v5880 = vadd.f32 %v4515, %v5879
        %v5881 = vpop.f32.mrb[0].mxu0
        %v5882 = vadd.f32 %v4517, %v5881
        %5883 = vmatprep.mubr.bf16.mxu0 %v2902
        %5884 = vmatmul.mubr.bf16.gmra.mrb[0].mxu0 %v2901
        %v5885 = vpop.f32.mrb[0].mxu0
        %v5886 = vadd.f32 %v4521, %v5885
        %v5887 = vpop.f32.mrb[0].mxu0
        %v5888 = vadd.f32 %v4523, %v5887
        %v5889 = vpop.f32.mrb[0].mxu0
        %v5890 = vadd.f32 %v4525, %v5889
        %v5891 = vpop.f32.mrb[0].mxu0
        %v5892 = vadd.f32 %v4527, %v5891
        %5893 = vmatprep.mubr.bf16.mxu0 %v2904
        %5894 = vmatmul.mubr.bf16.gmra.mrb[0].mxu0 %v2903
        %v5895 = vpop.f32.mrb[0].mxu0
        %v5896 = vadd.f32 %v4531, %v5895
        %v5897 = vpop.f32.mrb[0].mxu0
        %v5898 = vadd.f32 %v4533, %v5897
        %v5899 = vpop.f32.mrb[0].mxu0
        %v5900 = vadd.f32 %v4535, %v5899
        %v5901 = vpop.f32.mrb[0].mxu0
        %v5902 = vadd.f32 %v4537, %v5901
        %5903 = vmatprep.mubr.bf16.mxu0 %v2906
        %5904 = vmatmul.mubr.bf16.gmra.mrb[0].mxu0 %v2905
        %v5905 = vpop.f32.mrb[0].mxu0
        %v5906 = vadd.f32 %v4541, %v5905
        %v5907 = vpop.f32.mrb[0].mxu0
        %v5908 = vadd.f32 %v4543, %v5907
        %v5909 = vpop.f32.mrb[0].mxu0
        %v5910 = vadd.f32 %v4545, %v5909
        %v5911 = vpop.f32.mrb[0].mxu0
        %v5912 = vadd.f32 %v4547, %v5911
        %5913 = vmatprep.mubr.bf16.mxu0 %v2908
        %5914 = vmatmul.mubr.bf16.gmra.mrb[0].mxu0 %v2907
        %v5915 = vpop.f32.mrb[0].mxu0
        %v5916 = vadd.f32 %v4551, %v5915
        %v5917 = vpop.f32.mrb[0].mxu0
        %v5918 = vadd.f32 %v4553, %v5917
        %v5919 = vpop.f32.mrb[0].mxu0
        %v5920 = vadd.f32 %v4555, %v5919
        %v5921 = vpop.f32.mrb[0].mxu0
        %v5922 = vadd.f32 %v4557, %v5921
        %5923 = vmatprep.mubr.bf16.mxu0 %v2910
        %5924 = vmatmul.mubr.bf16.gmra.mrb[0].mxu0 %v2909
        %v5925 = vpop.f32.mrb[0].mxu0
        %v5926 = vadd.f32 %v4561, %v5925
        %v5927 = vpop.f32.mrb[0].mxu0
        %v5928 = vadd.f32 %v4563, %v5927
        %v5929 = vpop.f32.mrb[0].mxu0
        %v5930 = vadd.f32 %v4565, %v5929
        %v5931 = vpop.f32.mrb[0].mxu0
        %v5932 = vadd.f32 %v4567, %v5931
        %5933 = vmatprep.mubr.bf16.mxu0 %v2912
        %5934 = vmatmul.mubr.bf16.gmra.mrb[0].mxu0 %v2911
        %v5935 = vpop.f32.mrb[0].mxu0
        %v5936 = vadd.f32 %v4571, %v5935
        %v5937 = vpop.f32.mrb[0].mxu0
        %v5938 = vadd.f32 %v4573, %v5937
        %v5939 = vpop.f32.mrb[0].mxu0
        %v5940 = vadd.f32 %v4575, %v5939
        %v5941 = vpop.f32.mrb[0].mxu0
        %v5942 = vadd.f32 %v4577, %v5941
        %5943 = vmatprep.mubr.bf16.mxu0 %v2914
        %5944 = vmatmul.mubr.bf16.gmra.mrb[0].mxu0 %v2913
        %v5945 = vpop.f32.mrb[0].mxu0
        %v5946 = vadd.f32 %v4581, %v5945
        %v5947 = vpop.f32.mrb[0].mxu0
        %v5948 = vadd.f32 %v4583, %v5947
        %v5949 = vpop.f32.mrb[0].mxu0
        %v5950 = vadd.f32 %v4585, %v5949
        %v5951 = vpop.f32.mrb[0].mxu0
        %v5952 = vadd.f32 %v4587, %v5951
        %5953 = vmatprep.mubr.bf16.mxu0 %v2916
        %5954 = vmatmul.mubr.bf16.gmra.mrb[0].mxu0 %v2915
        %v5955 = vpop.f32.mrb[0].mxu0
        %v5956 = vadd.f32 %v4591, %v5955
        %v5957 = vpop.f32.mrb[0].mxu0
        %v5958 = vadd.f32 %v4593, %v5957
        %v5959 = vpop.f32.mrb[0].mxu0
        %v5960 = vadd.f32 %v4595, %v5959
        %v5961 = vpop.f32.mrb[0].mxu0
        %v5962 = vadd.f32 %v4597, %v5961
        %5963 = vmatprep.mubr.bf16.mxu0 %v2918
        %5964 = vmatmul.mubr.bf16.gmra.mrb[0].mxu0 %v2917
        %v5965 = vpop.f32.mrb[0].mxu0
        %v5966 = vadd.f32 %v4601, %v5965
        %v5967 = vpop.f32.mrb[0].mxu0
        %v5968 = vadd.f32 %v4603, %v5967
        %v5969 = vpop.f32.mrb[0].mxu0
        %v5970 = vadd.f32 %v4605, %v5969
        %v5971 = vpop.f32.mrb[0].mxu0
        %v5972 = vadd.f32 %v4607, %v5971
        %5973 = vmatprep.mubr.bf16.mxu0 %v2920
        %5974 = vmatmul.mubr.bf16.gmra.mrb[0].mxu0 %v2919
        %v5975 = vpop.f32.mrb[0].mxu0
        %v5976 = vadd.f32 %v4611, %v5975
        %v5977 = vpop.f32.mrb[0].mxu0
        %v5978 = vadd.f32 %v4613, %v5977
        %v5979 = vpop.f32.mrb[0].mxu0
        %v5980 = vadd.f32 %v4615, %v5979
        %v5981 = vpop.f32.mrb[0].mxu0
        %v5982 = vadd.f32 %v4617, %v5981
        %5983 = vmatprep.mubr.bf16.mxu0 %v2922
        %5984 = vmatmul.mubr.bf16.gmra.mrb[0].mxu0 %v2921
        %v5985 = vpop.f32.mrb[0].mxu0
        %v5986 = vadd.f32 %v4621, %v5985
        %v5987 = vpop.f32.mrb[0].mxu0
        %v5988 = vadd.f32 %v4623, %v5987
        %v5989 = vpop.f32.mrb[0].mxu0
        %v5990 = vadd.f32 %v4625, %v5989
        %v5991 = vpop.f32.mrb[0].mxu0
        %v5992 = vadd.f32 %v4627, %v5991
        %5993 = vmatprep.mubr.bf16.mxu0 %v2924
        %5994 = vmatmul.mubr.bf16.gmra.mrb[0].mxu0 %v2923
        %v5995 = vpop.f32.mrb[0].mxu0
        %v5996 = vadd.f32 %v4631, %v5995
        %v5997 = vpop.f32.mrb[0].mxu0
        %v5998 = vadd.f32 %v4633, %v5997
        %v5999 = vpop.f32.mrb[0].mxu0
        %v6000 = vadd.f32 %v4635, %v5999
        %v6001 = vpop.f32.mrb[0].mxu0
        %v6002 = vadd.f32 %v4637, %v6001
        %6003 = vmatprep.mubr.bf16.mxu0 %v2926
        %6004 = vmatmul.mubr.bf16.gmra.mrb[0].mxu0 %v2925
        %v6005 = vpop.f32.mrb[0].mxu0
        %v6006 = vadd.f32 %v4641, %v6005
        %v6007 = vpop.f32.mrb[0].mxu0
        %v6008 = vadd.f32 %v4643, %v6007
        %v6009 = vpop.f32.mrb[0].mxu0
        %v6010 = vadd.f32 %v4645, %v6009
        %v6011 = vpop.f32.mrb[0].mxu0
        %v6012 = vadd.f32 %v4647, %v6011
        %6013 = vmatprep.mubr.bf16.mxu0 %v2928
        %6014 = vmatmul.mubr.bf16.gmra.mrb[0].mxu0 %v2927
        %v6015 = vpop.f32.mrb[0].mxu0
        %v6016 = vadd.f32 %v4651, %v6015
        %v6017 = vpop.f32.mrb[0].mxu0
        %v6018 = vadd.f32 %v4653, %v6017
        %v6019 = vpop.f32.mrb[0].mxu0
        %v6020 = vadd.f32 %v4655, %v6019
        %v6021 = vpop.f32.mrb[0].mxu0
        %v6022 = vadd.f32 %v4657, %v6021
        %6023 = vmatprep.mubr.bf16.mxu0 %v2930
        %6024 = vmatmul.mubr.bf16.gmra.mrb[0].mxu0 %v2929
        %v6025 = vpop.f32.mrb[0].mxu0
        %v6026 = vadd.f32 %v4661, %v6025
        %v6027 = vpop.f32.mrb[0].mxu0
        %v6028 = vadd.f32 %v4663, %v6027
        %v6029 = vpop.f32.mrb[0].mxu0
        %v6030 = vadd.f32 %v4665, %v6029
        %v6031 = vpop.f32.mrb[0].mxu0
        %v6032 = vadd.f32 %v4667, %v6031
        %6033 = vmatprep.mubr.bf16.mxu0 %v2932
        %6034 = vmatmul.mubr.bf16.gmra.mrb[0].mxu0 %v2931
        %v6035 = vpop.f32.mrb[0].mxu0
        %v6036 = vadd.f32 %v4671, %v6035
        %v6037 = vpop.f32.mrb[0].mxu0
        %v6038 = vadd.f32 %v4673, %v6037
        %v6039 = vpop.f32.mrb[0].mxu0
        %v6040 = vadd.f32 %v4675, %v6039
        %v6041 = vpop.f32.mrb[0].mxu0
        %v6042 = vadd.f32 %v4677, %v6041
        %6043 = vdwg.mxu0
        %6044 = vmatprep.subr.bf16.mxu0 %v3818
        %6045 = vmatpush1.bf16.msra.mxu0 %v3817
        %6046 = vmatprep.subr.bf16.mxu0 %v3828
        %6047 = vmatpush1.bf16.msra.mxu0 %v3827
        %6048 = vmatprep.subr.bf16.mxu0 %v3838
        %6049 = vmatpush1.bf16.msra.mxu0 %v3837
        %6050 = vmatprep.subr.bf16.mxu0 %v3848
        %6051 = vmatpush1.bf16.msra.mxu0 %v3847
        %6052 = vmatprep.subr.bf16.mxu0 %v3858
        %6053 = vmatpush1.bf16.msra.mxu0 %v3857
        %6054 = vmatprep.subr.bf16.mxu0 %v3868
        %6055 = vmatpush1.bf16.msra.mxu0 %v3867
        %6056 = vmatprep.subr.bf16.mxu0 %v3878
        %6057 = vmatpush1.bf16.msra.mxu0 %v3877
        %6058 = vmatprep.subr.bf16.mxu0 %v3888
        %6059 = vmatpush1.bf16.msra.mxu0 %v3887
        %6060 = vmatprep.subr.bf16.mxu0 %v3898
        %6061 = vmatpush1.bf16.msra.mxu0 %v3897
        %6062 = vmatprep.subr.bf16.mxu0 %v3908
        %6063 = vmatpush1.bf16.msra.mxu0 %v3907
        %6064 = vmatprep.subr.bf16.mxu0 %v3918
        %6065 = vmatpush1.bf16.msra.mxu0 %v3917
        %6066 = vmatprep.subr.bf16.mxu0 %v3928
        %6067 = vmatpush1.bf16.msra.mxu0 %v3927
        %6068 = vmatprep.subr.bf16.mxu0 %v3938
        %6069 = vmatpush1.bf16.msra.mxu0 %v3937
        %6070 = vmatprep.subr.bf16.mxu0 %v3948
        %6071 = vmatpush1.bf16.msra.mxu0 %v3947
        %6072 = vmatprep.subr.bf16.mxu0 %v3958
        %6073 = vmatpush1.bf16.msra.mxu0 %v3957
        %6074 = vmatprep.subr.bf16.mxu0 %v3968
        %6075 = vmatpush1.bf16.msra.mxu0 %v3967
        %6076 = vmatprep.mubr.bf16.mxu0 %v2886
        %6077 = vmatmul.mubr.bf16.gmra.mrb[0].mxu0 %v2885
        %v6078 = vpop.f32.mrb[0].mxu0
        %v6079 = vadd.f32 %v4714, %v6078
        %v6080 = vpop.f32.mrb[0].mxu0
        %v6081 = vadd.f32 %v4716, %v6080
        %v6082 = vpop.f32.mrb[0].mxu0
        %v6083 = vadd.f32 %v4718, %v6082
        %v6084 = vpop.f32.mrb[0].mxu0
        %v6085 = vadd.f32 %v4720, %v6084
        %6086 = vmatprep.mubr.bf16.mxu0 %v2888
        %6087 = vmatmul.mubr.bf16.gmra.mrb[0].mxu0 %v2887
        %v6088 = vpop.f32.mrb[0].mxu0
        %v6089 = vadd.f32 %v4724, %v6088
        %v6090 = vpop.f32.mrb[0].mxu0
        %v6091 = vadd.f32 %v4726, %v6090
        %v6092 = vpop.f32.mrb[0].mxu0
        %v6093 = vadd.f32 %v4728, %v6092
        %v6094 = vpop.f32.mrb[0].mxu0
        %v6095 = vadd.f32 %v4730, %v6094
        %6096 = vmatprep.mubr.bf16.mxu0 %v2890
        %6097 = vmatmul.mubr.bf16.gmra.mrb[0].mxu0 %v2889
        %v6098 = vpop.f32.mrb[0].mxu0
        %v6099 = vadd.f32 %v4734, %v6098
        %v6100 = vpop.f32.mrb[0].mxu0
        %v6101 = vadd.f32 %v4736, %v6100
        %v6102 = vpop.f32.mrb[0].mxu0
        %v6103 = vadd.f32 %v4738, %v6102
        %v6104 = vpop.f32.mrb[0].mxu0
        %v6105 = vadd.f32 %v4740, %v6104
        %6106 = vmatprep.mubr.bf16.mxu0 %v2892
        %6107 = vmatmul.mubr.bf16.gmra.mrb[0].mxu0 %v2891
        %v6108 = vpop.f32.mrb[0].mxu0
        %v6109 = vadd.f32 %v4744, %v6108
        %v6110 = vpop.f32.mrb[0].mxu0
        %v6111 = vadd.f32 %v4746, %v6110
        %v6112 = vpop.f32.mrb[0].mxu0
        %v6113 = vadd.f32 %v4748, %v6112
        %v6114 = vpop.f32.mrb[0].mxu0
        %v6115 = vadd.f32 %v4750, %v6114
        %6116 = vmatprep.mubr.bf16.mxu0 %v2894
        %6117 = vmatmul.mubr.bf16.gmra.mrb[0].mxu0 %v2893
        %v6118 = vpop.f32.mrb[0].mxu0
        %v6119 = vadd.f32 %v4754, %v6118
        %v6120 = vpop.f32.mrb[0].mxu0
        %v6121 = vadd.f32 %v4756, %v6120
        %v6122 = vpop.f32.mrb[0].mxu0
        %v6123 = vadd.f32 %v4758, %v6122
        %v6124 = vpop.f32.mrb[0].mxu0
        %v6125 = vadd.f32 %v4760, %v6124
        %6126 = vmatprep.mubr.bf16.mxu0 %v2896
        %6127 = vmatmul.mubr.bf16.gmra.mrb[0].mxu0 %v2895
        %v6128 = vpop.f32.mrb[0].mxu0
        %v6129 = vadd.f32 %v4764, %v6128
        %v6130 = vpop.f32.mrb[0].mxu0
        %v6131 = vadd.f32 %v4766, %v6130
        %v6132 = vpop.f32.mrb[0].mxu0
        %v6133 = vadd.f32 %v4768, %v6132
        %v6134 = vpop.f32.mrb[0].mxu0
        %v6135 = vadd.f32 %v4770, %v6134
        %6136 = vmatprep.mubr.bf16.mxu0 %v2898
        %6137 = vmatmul.mubr.bf16.gmra.mrb[0].mxu0 %v2897
        %v6138 = vpop.f32.mrb[0].mxu0
        %v6139 = vadd.f32 %v4774, %v6138
        %v6140 = vpop.f32.mrb[0].mxu0
        %v6141 = vadd.f32 %v4776, %v6140
        %v6142 = vpop.f32.mrb[0].mxu0
        %v6143 = vadd.f32 %v4778, %v6142
        %v6144 = vpop.f32.mrb[0].mxu0
        %v6145 = vadd.f32 %v4780, %v6144
        %6146 = vmatprep.mubr.bf16.mxu0 %v2900
        %6147 = vmatmul.mubr.bf16.gmra.mrb[0].mxu0 %v2899
        %v6148 = vpop.f32.mrb[0].mxu0
        %v6149 = vadd.f32 %v4784, %v6148
        %v6150 = vpop.f32.mrb[0].mxu0
        %v6151 = vadd.f32 %v4786, %v6150
        %v6152 = vpop.f32.mrb[0].mxu0
        %v6153 = vadd.f32 %v4788, %v6152
        %v6154 = vpop.f32.mrb[0].mxu0
        %v6155 = vadd.f32 %v4790, %v6154
        %6156 = vmatprep.mubr.bf16.mxu0 %v2902
        %6157 = vmatmul.mubr.bf16.gmra.mrb[0].mxu0 %v2901
        %v6158 = vpop.f32.mrb[0].mxu0
        %v6159 = vadd.f32 %v4794, %v6158
        %v6160 = vpop.f32.mrb[0].mxu0
        %v6161 = vadd.f32 %v4796, %v6160
        %v6162 = vpop.f32.mrb[0].mxu0
        %v6163 = vadd.f32 %v4798, %v6162
        %v6164 = vpop.f32.mrb[0].mxu0
        %v6165 = vadd.f32 %v4800, %v6164
        %6166 = vmatprep.mubr.bf16.mxu0 %v2904
        %6167 = vmatmul.mubr.bf16.gmra.mrb[0].mxu0 %v2903
        %v6168 = vpop.f32.mrb[0].mxu0
        %v6169 = vadd.f32 %v4804, %v6168
        %v6170 = vpop.f32.mrb[0].mxu0
        %v6171 = vadd.f32 %v4806, %v6170
        %v6172 = vpop.f32.mrb[0].mxu0
        %v6173 = vadd.f32 %v4808, %v6172
        %v6174 = vpop.f32.mrb[0].mxu0
        %v6175 = vadd.f32 %v4810, %v6174
        %6176 = vmatprep.mubr.bf16.mxu0 %v2906
        %6177 = vmatmul.mubr.bf16.gmra.mrb[0].mxu0 %v2905
        %v6178 = vpop.f32.mrb[0].mxu0
        %v6179 = vadd.f32 %v4814, %v6178
        %v6180 = vpop.f32.mrb[0].mxu0
        %v6181 = vadd.f32 %v4816, %v6180
        %v6182 = vpop.f32.mrb[0].mxu0
        %v6183 = vadd.f32 %v4818, %v6182
        %v6184 = vpop.f32.mrb[0].mxu0
        %v6185 = vadd.f32 %v4820, %v6184
        %6186 = vmatprep.mubr.bf16.mxu0 %v2908
        %6187 = vmatmul.mubr.bf16.gmra.mrb[0].mxu0 %v2907
        %v6188 = vpop.f32.mrb[0].mxu0
        %v6189 = vadd.f32 %v4824, %v6188
        %v6190 = vpop.f32.mrb[0].mxu0
        %v6191 = vadd.f32 %v4826, %v6190
        %v6192 = vpop.f32.mrb[0].mxu0
        %v6193 = vadd.f32 %v4828, %v6192
        %v6194 = vpop.f32.mrb[0].mxu0
        %v6195 = vadd.f32 %v4830, %v6194
        %6196 = vmatprep.mubr.bf16.mxu0 %v2910
        %6197 = vmatmul.mubr.bf16.gmra.mrb[0].mxu0 %v2909
        %v6198 = vpop.f32.mrb[0].mxu0
        %v6199 = vadd.f32 %v4834, %v6198
        %v6200 = vpop.f32.mrb[0].mxu0
        %v6201 = vadd.f32 %v4836, %v6200
        %v6202 = vpop.f32.mrb[0].mxu0
        %v6203 = vadd.f32 %v4838, %v6202
        %v6204 = vpop.f32.mrb[0].mxu0
        %v6205 = vadd.f32 %v4840, %v6204
        %6206 = vmatprep.mubr.bf16.mxu0 %v2912
        %6207 = vmatmul.mubr.bf16.gmra.mrb[0].mxu0 %v2911
        %v6208 = vpop.f32.mrb[0].mxu0
        %v6209 = vadd.f32 %v4844, %v6208
        %v6210 = vpop.f32.mrb[0].mxu0
        %v6211 = vadd.f32 %v4846, %v6210
        %v6212 = vpop.f32.mrb[0].mxu0
        %v6213 = vadd.f32 %v4848, %v6212
        %v6214 = vpop.f32.mrb[0].mxu0
        %v6215 = vadd.f32 %v4850, %v6214
        %6216 = vmatprep.mubr.bf16.mxu0 %v2914
        %6217 = vmatmul.mubr.bf16.gmra.mrb[0].mxu0 %v2913
        %v6218 = vpop.f32.mrb[0].mxu0
        %v6219 = vadd.f32 %v4854, %v6218
        %v6220 = vpop.f32.mrb[0].mxu0
        %v6221 = vadd.f32 %v4856, %v6220
        %v6222 = vpop.f32.mrb[0].mxu0
        %v6223 = vadd.f32 %v4858, %v6222
        %v6224 = vpop.f32.mrb[0].mxu0
        %v6225 = vadd.f32 %v4860, %v6224
        %6226 = vmatprep.mubr.bf16.mxu0 %v2916
        %6227 = vmatmul.mubr.bf16.gmra.mrb[0].mxu0 %v2915
        %v6228 = vpop.f32.mrb[0].mxu0
        %v6229 = vadd.f32 %v4864, %v6228
        %v6230 = vpop.f32.mrb[0].mxu0
        %v6231 = vadd.f32 %v4866, %v6230
        %v6232 = vpop.f32.mrb[0].mxu0
        %v6233 = vadd.f32 %v4868, %v6232
        %v6234 = vpop.f32.mrb[0].mxu0
        %v6235 = vadd.f32 %v4870, %v6234
        %6236 = vmatprep.mubr.bf16.mxu0 %v2918
        %6237 = vmatmul.mubr.bf16.gmra.mrb[0].mxu0 %v2917
        %v6238 = vpop.f32.mrb[0].mxu0
        %v6239 = vadd.f32 %v4874, %v6238
        %v6240 = vpop.f32.mrb[0].mxu0
        %v6241 = vadd.f32 %v4876, %v6240
        %v6242 = vpop.f32.mrb[0].mxu0
        %v6243 = vadd.f32 %v4878, %v6242
        %v6244 = vpop.f32.mrb[0].mxu0
        %v6245 = vadd.f32 %v4880, %v6244
        %6246 = vmatprep.mubr.bf16.mxu0 %v2920
        %6247 = vmatmul.mubr.bf16.gmra.mrb[0].mxu0 %v2919
        %v6248 = vpop.f32.mrb[0].mxu0
        %v6249 = vadd.f32 %v4884, %v6248
        %v6250 = vpop.f32.mrb[0].mxu0
        %v6251 = vadd.f32 %v4886, %v6250
        %v6252 = vpop.f32.mrb[0].mxu0
        %v6253 = vadd.f32 %v4888, %v6252
        %v6254 = vpop.f32.mrb[0].mxu0
        %v6255 = vadd.f32 %v4890, %v6254
        %6256 = vmatprep.mubr.bf16.mxu0 %v2922
        %6257 = vmatmul.mubr.bf16.gmra.mrb[0].mxu0 %v2921
        %v6258 = vpop.f32.mrb[0].mxu0
        %v6259 = vadd.f32 %v4894, %v6258
        %v6260 = vpop.f32.mrb[0].mxu0
        %v6261 = vadd.f32 %v4896, %v6260
        %v6262 = vpop.f32.mrb[0].mxu0
        %v6263 = vadd.f32 %v4898, %v6262
        %v6264 = vpop.f32.mrb[0].mxu0
        %v6265 = vadd.f32 %v4900, %v6264
        %6266 = vmatprep.mubr.bf16.mxu0 %v2924
        %6267 = vmatmul.mubr.bf16.gmra.mrb[0].mxu0 %v2923
        %v6268 = vpop.f32.mrb[0].mxu0
        %v6269 = vadd.f32 %v4904, %v6268
        %v6270 = vpop.f32.mrb[0].mxu0
        %v6271 = vadd.f32 %v4906, %v6270
        %v6272 = vpop.f32.mrb[0].mxu0
        %v6273 = vadd.f32 %v4908, %v6272
        %v6274 = vpop.f32.mrb[0].mxu0
        %v6275 = vadd.f32 %v4910, %v6274
        %6276 = vmatprep.mubr.bf16.mxu0 %v2926
        %6277 = vmatmul.mubr.bf16.gmra.mrb[0].mxu0 %v2925
        %v6278 = vpop.f32.mrb[0].mxu0
        %v6279 = vadd.f32 %v4914, %v6278
        %v6280 = vpop.f32.mrb[0].mxu0
        %v6281 = vadd.f32 %v4916, %v6280
        %v6282 = vpop.f32.mrb[0].mxu0
        %v6283 = vadd.f32 %v4918, %v6282
        %v6284 = vpop.f32.mrb[0].mxu0
        %v6285 = vadd.f32 %v4920, %v6284
        %6286 = vmatprep.mubr.bf16.mxu0 %v2928
        %6287 = vmatmul.mubr.bf16.gmra.mrb[0].mxu0 %v2927
        %v6288 = vpop.f32.mrb[0].mxu0
        %v6289 = vadd.f32 %v4924, %v6288
        %v6290 = vpop.f32.mrb[0].mxu0
        %v6291 = vadd.f32 %v4926, %v6290
        %v6292 = vpop.f32.mrb[0].mxu0
        %v6293 = vadd.f32 %v4928, %v6292
        %v6294 = vpop.f32.mrb[0].mxu0
        %v6295 = vadd.f32 %v4930, %v6294
        %6296 = vmatprep.mubr.bf16.mxu0 %v2930
        %6297 = vmatmul.mubr.bf16.gmra.mrb[0].mxu0 %v2929
        %v6298 = vpop.f32.mrb[0].mxu0
        %v6299 = vadd.f32 %v4934, %v6298
        %v6300 = vpop.f32.mrb[0].mxu0
        %v6301 = vadd.f32 %v4936, %v6300
        %v6302 = vpop.f32.mrb[0].mxu0
        %v6303 = vadd.f32 %v4938, %v6302
        %v6304 = vpop.f32.mrb[0].mxu0
        %v6305 = vadd.f32 %v4940, %v6304
        %6306 = vmatprep.mubr.bf16.mxu0 %v2932
        %6307 = vmatmul.mubr.bf16.gmra.mrb[0].mxu0 %v2931
        %v6308 = vpop.f32.mrb[0].mxu0
        %v6309 = vadd.f32 %v4944, %v6308
        %v6310 = vpop.f32.mrb[0].mxu0
        %v6311 = vadd.f32 %v4946, %v6310
        %v6312 = vpop.f32.mrb[0].mxu0
        %v6313 = vadd.f32 %v4948, %v6312
        %v6314 = vpop.f32.mrb[0].mxu0
        %v6315 = vadd.f32 %v4950, %v6314
        %6316 = vdwg.mxu0
        %6317 = vmatprep.subr.bf16.mxu0 %v3820
        %6318 = vmatpush1.bf16.msra.mxu0 %v3819
        %6319 = vmatprep.subr.bf16.mxu0 %v3830
        %6320 = vmatpush1.bf16.msra.mxu0 %v3829
        %6321 = vmatprep.subr.bf16.mxu0 %v3840
        %6322 = vmatpush1.bf16.msra.mxu0 %v3839
        %6323 = vmatprep.subr.bf16.mxu0 %v3850
        %6324 = vmatpush1.bf16.msra.mxu0 %v3849
        %6325 = vmatprep.subr.bf16.mxu0 %v3860
        %6326 = vmatpush1.bf16.msra.mxu0 %v3859
        %6327 = vmatprep.subr.bf16.mxu0 %v3870
        %6328 = vmatpush1.bf16.msra.mxu0 %v3869
        %6329 = vmatprep.subr.bf16.mxu0 %v3880
        %6330 = vmatpush1.bf16.msra.mxu0 %v3879
        %6331 = vmatprep.subr.bf16.mxu0 %v3890
        %6332 = vmatpush1.bf16.msra.mxu0 %v3889
        %6333 = vmatprep.subr.bf16.mxu0 %v3900
        %6334 = vmatpush1.bf16.msra.mxu0 %v3899
        %6335 = vmatprep.subr.bf16.mxu0 %v3910
        %6336 = vmatpush1.bf16.msra.mxu0 %v3909
        %6337 = vmatprep.subr.bf16.mxu0 %v3920
        %6338 = vmatpush1.bf16.msra.mxu0 %v3919
        %6339 = vmatprep.subr.bf16.mxu0 %v3930
        %6340 = vmatpush1.bf16.msra.mxu0 %v3929
        %6341 = vmatprep.subr.bf16.mxu0 %v3940
        %6342 = vmatpush1.bf16.msra.mxu0 %v3939
        %6343 = vmatprep.subr.bf16.mxu0 %v3950
        %6344 = vmatpush1.bf16.msra.mxu0 %v3949
        %6345 = vmatprep.subr.bf16.mxu0 %v3960
        %6346 = vmatpush1.bf16.msra.mxu0 %v3959
        %6347 = vmatprep.subr.bf16.mxu0 %v3970
        %6348 = vmatpush1.bf16.msra.mxu0 %v3969
        %6349 = vmatprep.mubr.bf16.mxu0 %v2886
        %6350 = vmatmul.mubr.bf16.gmra.mrb[0].mxu0 %v2885
        %v6351 = vpop.f32.mrb[0].mxu0
        %v6352 = vadd.f32 %v4987, %v6351
        %v6353 = vpop.f32.mrb[0].mxu0
        %v6354 = vadd.f32 %v4989, %v6353
        %v6355 = vpop.f32.mrb[0].mxu0
        %v6356 = vadd.f32 %v4991, %v6355
        %v6357 = vpop.f32.mrb[0].mxu0
        %v6358 = vadd.f32 %v4993, %v6357
        %6359 = vmatprep.mubr.bf16.mxu0 %v2888
        %6360 = vmatmul.mubr.bf16.gmra.mrb[0].mxu0 %v2887
        %v6361 = vpop.f32.mrb[0].mxu0
        %v6362 = vadd.f32 %v4997, %v6361
        %v6363 = vpop.f32.mrb[0].mxu0
        %v6364 = vadd.f32 %v4999, %v6363
        %v6365 = vpop.f32.mrb[0].mxu0
        %v6366 = vadd.f32 %v5001, %v6365
        %v6367 = vpop.f32.mrb[0].mxu0
        %v6368 = vadd.f32 %v5003, %v6367
        %6369 = vmatprep.mubr.bf16.mxu0 %v2890
        %6370 = vmatmul.mubr.bf16.gmra.mrb[0].mxu0 %v2889
        %v6371 = vpop.f32.mrb[0].mxu0
        %v6372 = vadd.f32 %v5007, %v6371
        %v6373 = vpop.f32.mrb[0].mxu0
        %v6374 = vadd.f32 %v5009, %v6373
        %v6375 = vpop.f32.mrb[0].mxu0
        %v6376 = vadd.f32 %v5011, %v6375
        %v6377 = vpop.f32.mrb[0].mxu0
        %v6378 = vadd.f32 %v5013, %v6377
        %6379 = vmatprep.mubr.bf16.mxu0 %v2892
        %6380 = vmatmul.mubr.bf16.gmra.mrb[0].mxu0 %v2891
        %v6381 = vpop.f32.mrb[0].mxu0
        %v6382 = vadd.f32 %v5017, %v6381
        %v6383 = vpop.f32.mrb[0].mxu0
        %v6384 = vadd.f32 %v5019, %v6383
        %v6385 = vpop.f32.mrb[0].mxu0
        %v6386 = vadd.f32 %v5021, %v6385
        %v6387 = vpop.f32.mrb[0].mxu0
        %v6388 = vadd.f32 %v5023, %v6387
        %6389 = vmatprep.mubr.bf16.mxu0 %v2894
        %6390 = vmatmul.mubr.bf16.gmra.mrb[0].mxu0 %v2893
        %v6391 = vpop.f32.mrb[0].mxu0
        %v6392 = vadd.f32 %v5027, %v6391
        %v6393 = vpop.f32.mrb[0].mxu0
        %v6394 = vadd.f32 %v5029, %v6393
        %v6395 = vpop.f32.mrb[0].mxu0
        %v6396 = vadd.f32 %v5031, %v6395
        %v6397 = vpop.f32.mrb[0].mxu0
        %v6398 = vadd.f32 %v5033, %v6397
        %6399 = vmatprep.mubr.bf16.mxu0 %v2896
        %6400 = vmatmul.mubr.bf16.gmra.mrb[0].mxu0 %v2895
        %v6401 = vpop.f32.mrb[0].mxu0
        %v6402 = vadd.f32 %v5037, %v6401
        %v6403 = vpop.f32.mrb[0].mxu0
        %v6404 = vadd.f32 %v5039, %v6403
        %v6405 = vpop.f32.mrb[0].mxu0
        %v6406 = vadd.f32 %v5041, %v6405
        %v6407 = vpop.f32.mrb[0].mxu0
        %v6408 = vadd.f32 %v5043, %v6407
        %6409 = vmatprep.mubr.bf16.mxu0 %v2898
        %6410 = vmatmul.mubr.bf16.gmra.mrb[0].mxu0 %v2897
        %v6411 = vpop.f32.mrb[0].mxu0
        %v6412 = vadd.f32 %v5047, %v6411
        %v6413 = vpop.f32.mrb[0].mxu0
        %v6414 = vadd.f32 %v5049, %v6413
        %v6415 = vpop.f32.mrb[0].mxu0
        %v6416 = vadd.f32 %v5051, %v6415
        %v6417 = vpop.f32.mrb[0].mxu0
        %v6418 = vadd.f32 %v5053, %v6417
        %6419 = vmatprep.mubr.bf16.mxu0 %v2900
        %6420 = vmatmul.mubr.bf16.gmra.mrb[0].mxu0 %v2899
        %v6421 = vpop.f32.mrb[0].mxu0
        %v6422 = vadd.f32 %v5057, %v6421
        %v6423 = vpop.f32.mrb[0].mxu0
        %v6424 = vadd.f32 %v5059, %v6423
        %v6425 = vpop.f32.mrb[0].mxu0
        %v6426 = vadd.f32 %v5061, %v6425
        %v6427 = vpop.f32.mrb[0].mxu0
        %v6428 = vadd.f32 %v5063, %v6427
        %6429 = vmatprep.mubr.bf16.mxu0 %v2902
        %6430 = vmatmul.mubr.bf16.gmra.mrb[0].mxu0 %v2901
        %v6431 = vpop.f32.mrb[0].mxu0
        %v6432 = vadd.f32 %v5067, %v6431
        %v6433 = vpop.f32.mrb[0].mxu0
        %v6434 = vadd.f32 %v5069, %v6433
        %v6435 = vpop.f32.mrb[0].mxu0
        %v6436 = vadd.f32 %v5071, %v6435
        %v6437 = vpop.f32.mrb[0].mxu0
        %v6438 = vadd.f32 %v5073, %v6437
        %6439 = vmatprep.mubr.bf16.mxu0 %v2904
        %6440 = vmatmul.mubr.bf16.gmra.mrb[0].mxu0 %v2903
        %v6441 = vpop.f32.mrb[0].mxu0
        %v6442 = vadd.f32 %v5077, %v6441
        %v6443 = vpop.f32.mrb[0].mxu0
        %v6444 = vadd.f32 %v5079, %v6443
        %v6445 = vpop.f32.mrb[0].mxu0
        %v6446 = vadd.f32 %v5081, %v6445
        %v6447 = vpop.f32.mrb[0].mxu0
        %v6448 = vadd.f32 %v5083, %v6447
        %6449 = vmatprep.mubr.bf16.mxu0 %v2906
        %6450 = vmatmul.mubr.bf16.gmra.mrb[0].mxu0 %v2905
        %v6451 = vpop.f32.mrb[0].mxu0
        %v6452 = vadd.f32 %v5087, %v6451
        %v6453 = vpop.f32.mrb[0].mxu0
        %v6454 = vadd.f32 %v5089, %v6453
        %v6455 = vpop.f32.mrb[0].mxu0
        %v6456 = vadd.f32 %v5091, %v6455
        %v6457 = vpop.f32.mrb[0].mxu0
        %v6458 = vadd.f32 %v5093, %v6457
        %6459 = vmatprep.mubr.bf16.mxu0 %v2908
        %6460 = vmatmul.mubr.bf16.gmra.mrb[0].mxu0 %v2907
        %v6461 = vpop.f32.mrb[0].mxu0
        %v6462 = vadd.f32 %v5097, %v6461
        %v6463 = vpop.f32.mrb[0].mxu0
        %v6464 = vadd.f32 %v5099, %v6463
        %v6465 = vpop.f32.mrb[0].mxu0
        %v6466 = vadd.f32 %v5101, %v6465
        %v6467 = vpop.f32.mrb[0].mxu0
        %v6468 = vadd.f32 %v5103, %v6467
        %6469 = vmatprep.mubr.bf16.mxu0 %v2910
        %6470 = vmatmul.mubr.bf16.gmra.mrb[0].mxu0 %v2909
        %v6471 = vpop.f32.mrb[0].mxu0
        %v6472 = vadd.f32 %v5107, %v6471
        %v6473 = vpop.f32.mrb[0].mxu0
        %v6474 = vadd.f32 %v5109, %v6473
        %v6475 = vpop.f32.mrb[0].mxu0
        %v6476 = vadd.f32 %v5111, %v6475
        %v6477 = vpop.f32.mrb[0].mxu0
        %v6478 = vadd.f32 %v5113, %v6477
        %6479 = vmatprep.mubr.bf16.mxu0 %v2912
        %6480 = vmatmul.mubr.bf16.gmra.mrb[0].mxu0 %v2911
        %v6481 = vpop.f32.mrb[0].mxu0
        %v6482 = vadd.f32 %v5117, %v6481
        %v6483 = vpop.f32.mrb[0].mxu0
        %v6484 = vadd.f32 %v5119, %v6483
        %v6485 = vpop.f32.mrb[0].mxu0
        %v6486 = vadd.f32 %v5121, %v6485
        %v6487 = vpop.f32.mrb[0].mxu0
        %v6488 = vadd.f32 %v5123, %v6487
        %6489 = vmatprep.mubr.bf16.mxu0 %v2914
        %6490 = vmatmul.mubr.bf16.gmra.mrb[0].mxu0 %v2913
        %v6491 = vpop.f32.mrb[0].mxu0
        %v6492 = vadd.f32 %v5127, %v6491
        %v6493 = vpop.f32.mrb[0].mxu0
        %v6494 = vadd.f32 %v5129, %v6493
        %v6495 = vpop.f32.mrb[0].mxu0
        %v6496 = vadd.f32 %v5131, %v6495
        %v6497 = vpop.f32.mrb[0].mxu0
        %v6498 = vadd.f32 %v5133, %v6497
        %6499 = vmatprep.mubr.bf16.mxu0 %v2916
        %6500 = vmatmul.mubr.bf16.gmra.mrb[0].mxu0 %v2915
        %v6501 = vpop.f32.mrb[0].mxu0
        %v6502 = vadd.f32 %v5137, %v6501
        %v6503 = vpop.f32.mrb[0].mxu0
        %v6504 = vadd.f32 %v5139, %v6503
        %v6505 = vpop.f32.mrb[0].mxu0
        %v6506 = vadd.f32 %v5141, %v6505
        %v6507 = vpop.f32.mrb[0].mxu0
        %v6508 = vadd.f32 %v5143, %v6507
        %6509 = vmatprep.mubr.bf16.mxu0 %v2918
        %6510 = vmatmul.mubr.bf16.gmra.mrb[0].mxu0 %v2917
        %v6511 = vpop.f32.mrb[0].mxu0
        %v6512 = vadd.f32 %v5147, %v6511
        %v6513 = vpop.f32.mrb[0].mxu0
        %v6514 = vadd.f32 %v5149, %v6513
        %v6515 = vpop.f32.mrb[0].mxu0
        %v6516 = vadd.f32 %v5151, %v6515
        %v6517 = vpop.f32.mrb[0].mxu0
        %v6518 = vadd.f32 %v5153, %v6517
        %6519 = vmatprep.mubr.bf16.mxu0 %v2920
        %6520 = vmatmul.mubr.bf16.gmra.mrb[0].mxu0 %v2919
        %v6521 = vpop.f32.mrb[0].mxu0
        %v6522 = vadd.f32 %v5157, %v6521
        %v6523 = vpop.f32.mrb[0].mxu0
        %v6524 = vadd.f32 %v5159, %v6523
        %v6525 = vpop.f32.mrb[0].mxu0
        %v6526 = vadd.f32 %v5161, %v6525
        %v6527 = vpop.f32.mrb[0].mxu0
        %v6528 = vadd.f32 %v5163, %v6527
        %6529 = vmatprep.mubr.bf16.mxu0 %v2922
        %6530 = vmatmul.mubr.bf16.gmra.mrb[0].mxu0 %v2921
        %v6531 = vpop.f32.mrb[0].mxu0
        %v6532 = vadd.f32 %v5167, %v6531
        %v6533 = vpop.f32.mrb[0].mxu0
        %v6534 = vadd.f32 %v5169, %v6533
        %v6535 = vpop.f32.mrb[0].mxu0
        %v6536 = vadd.f32 %v5171, %v6535
        %v6537 = vpop.f32.mrb[0].mxu0
        %v6538 = vadd.f32 %v5173, %v6537
        %6539 = vmatprep.mubr.bf16.mxu0 %v2924
        %6540 = vmatmul.mubr.bf16.gmra.mrb[0].mxu0 %v2923
        %v6541 = vpop.f32.mrb[0].mxu0
        %v6542 = vadd.f32 %v5177, %v6541
        %v6543 = vpop.f32.mrb[0].mxu0
        %v6544 = vadd.f32 %v5179, %v6543
        %v6545 = vpop.f32.mrb[0].mxu0
        %v6546 = vadd.f32 %v5181, %v6545
        %v6547 = vpop.f32.mrb[0].mxu0
        %v6548 = vadd.f32 %v5183, %v6547
        %6549 = vmatprep.mubr.bf16.mxu0 %v2926
        %6550 = vmatmul.mubr.bf16.gmra.mrb[0].mxu0 %v2925
        %v6551 = vpop.f32.mrb[0].mxu0
        %v6552 = vadd.f32 %v5187, %v6551
        %v6553 = vpop.f32.mrb[0].mxu0
        %v6554 = vadd.f32 %v5189, %v6553
        %v6555 = vpop.f32.mrb[0].mxu0
        %v6556 = vadd.f32 %v5191, %v6555
        %v6557 = vpop.f32.mrb[0].mxu0
        %v6558 = vadd.f32 %v5193, %v6557
        %6559 = vmatprep.mubr.bf16.mxu0 %v2928
        %6560 = vmatmul.mubr.bf16.gmra.mrb[0].mxu0 %v2927
        %v6561 = vpop.f32.mrb[0].mxu0
        %v6562 = vadd.f32 %v5197, %v6561
        %v6563 = vpop.f32.mrb[0].mxu0
        %v6564 = vadd.f32 %v5199, %v6563
        %v6565 = vpop.f32.mrb[0].mxu0
        %v6566 = vadd.f32 %v5201, %v6565
        %v6567 = vpop.f32.mrb[0].mxu0
        %v6568 = vadd.f32 %v5203, %v6567
        %6569 = vmatprep.mubr.bf16.mxu0 %v2930
        %6570 = vmatmul.mubr.bf16.gmra.mrb[0].mxu0 %v2929
        %v6571 = vpop.f32.mrb[0].mxu0
        %v6572 = vadd.f32 %v5207, %v6571
        %v6573 = vpop.f32.mrb[0].mxu0
        %v6574 = vadd.f32 %v5209, %v6573
        %v6575 = vpop.f32.mrb[0].mxu0
        %v6576 = vadd.f32 %v5211, %v6575
        %v6577 = vpop.f32.mrb[0].mxu0
        %v6578 = vadd.f32 %v5213, %v6577
        %6579 = vmatprep.mubr.bf16.mxu0 %v2932
        %6580 = vmatmul.mubr.bf16.gmra.mrb[0].mxu0 %v2931
        %v6581 = vpop.f32.mrb[0].mxu0
        %v6582 = vadd.f32 %v5217, %v6581
        %v6583 = vpop.f32.mrb[0].mxu0
        %v6584 = vadd.f32 %v5219, %v6583
        %v6585 = vpop.f32.mrb[0].mxu0
        %v6586 = vadd.f32 %v5221, %v6585
        %v6587 = vpop.f32.mrb[0].mxu0
        %v6588 = vadd.f32 %v5223, %v6587
        %6589 = vdwg.mxu0
        %6590 = vmatprep.subr.bf16.mxu0 %v3822
        %6591 = vmatpush1.bf16.msra.mxu0 %v3821
        %6592 = vmatprep.subr.bf16.mxu0 %v3832
        %6593 = vmatpush1.bf16.msra.mxu0 %v3831
        %6594 = vmatprep.subr.bf16.mxu0 %v3842
        %6595 = vmatpush1.bf16.msra.mxu0 %v3841
        %6596 = vmatprep.subr.bf16.mxu0 %v3852
        %6597 = vmatpush1.bf16.msra.mxu0 %v3851
        %6598 = vmatprep.subr.bf16.mxu0 %v3862
        %6599 = vmatpush1.bf16.msra.mxu0 %v3861
        %6600 = vmatprep.subr.bf16.mxu0 %v3872
        %6601 = vmatpush1.bf16.msra.mxu0 %v3871
        %6602 = vmatprep.subr.bf16.mxu0 %v3882
        %6603 = vmatpush1.bf16.msra.mxu0 %v3881
        %6604 = vmatprep.subr.bf16.mxu0 %v3892
        %6605 = vmatpush1.bf16.msra.mxu0 %v3891
        %6606 = vmatprep.subr.bf16.mxu0 %v3902
        %6607 = vmatpush1.bf16.msra.mxu0 %v3901
        %6608 = vmatprep.subr.bf16.mxu0 %v3912
        %6609 = vmatpush1.bf16.msra.mxu0 %v3911
        %6610 = vmatprep.subr.bf16.mxu0 %v3922
        %6611 = vmatpush1.bf16.msra.mxu0 %v3921
        %6612 = vmatprep.subr.bf16.mxu0 %v3932
        %6613 = vmatpush1.bf16.msra.mxu0 %v3931
        %6614 = vmatprep.subr.bf16.mxu0 %v3942
        %6615 = vmatpush1.bf16.msra.mxu0 %v3941
        %6616 = vmatprep.subr.bf16.mxu0 %v3952
        %6617 = vmatpush1.bf16.msra.mxu0 %v3951
        %6618 = vmatprep.subr.bf16.mxu0 %v3962
        %6619 = vmatpush1.bf16.msra.mxu0 %v3961
        %6620 = vmatprep.subr.bf16.mxu0 %v3972
        %6621 = vmatpush1.bf16.msra.mxu0 %v3971
        %6622 = vmatprep.mubr.bf16.mxu0 %v2886
        %6623 = vmatmul.mubr.bf16.gmra.mrb[0].mxu0 %v2885
        %v6624 = vpop.f32.mrb[0].mxu0
        %v6625 = vadd.f32 %v5260, %v6624
        %v6626 = vpop.f32.mrb[0].mxu0
        %v6627 = vadd.f32 %v5262, %v6626
        %v6628 = vpop.f32.mrb[0].mxu0
        %v6629 = vadd.f32 %v5264, %v6628
        %v6630 = vpop.f32.mrb[0].mxu0
        %v6631 = vadd.f32 %v5266, %v6630
        %6632 = vmatprep.mubr.bf16.mxu0 %v2888
        %6633 = vmatmul.mubr.bf16.gmra.mrb[0].mxu0 %v2887
        %v6634 = vpop.f32.mrb[0].mxu0
        %v6635 = vadd.f32 %v5270, %v6634
        %v6636 = vpop.f32.mrb[0].mxu0
        %v6637 = vadd.f32 %v5272, %v6636
        %v6638 = vpop.f32.mrb[0].mxu0
        %v6639 = vadd.f32 %v5274, %v6638
        %v6640 = vpop.f32.mrb[0].mxu0
        %v6641 = vadd.f32 %v5276, %v6640
        %6642 = vmatprep.mubr.bf16.mxu0 %v2890
        %6643 = vmatmul.mubr.bf16.gmra.mrb[0].mxu0 %v2889
        %v6644 = vpop.f32.mrb[0].mxu0
        %v6645 = vadd.f32 %v5280, %v6644
        %v6646 = vpop.f32.mrb[0].mxu0
        %v6647 = vadd.f32 %v5282, %v6646
        %v6648 = vpop.f32.mrb[0].mxu0
        %v6649 = vadd.f32 %v5284, %v6648
        %v6650 = vpop.f32.mrb[0].mxu0
        %v6651 = vadd.f32 %v5286, %v6650
        %6652 = vmatprep.mubr.bf16.mxu0 %v2892
        %6653 = vmatmul.mubr.bf16.gmra.mrb[0].mxu0 %v2891
        %v6654 = vpop.f32.mrb[0].mxu0
        %v6655 = vadd.f32 %v5290, %v6654
        %v6656 = vpop.f32.mrb[0].mxu0
        %v6657 = vadd.f32 %v5292, %v6656
        %v6658 = vpop.f32.mrb[0].mxu0
        %v6659 = vadd.f32 %v5294, %v6658
        %v6660 = vpop.f32.mrb[0].mxu0
        %v6661 = vadd.f32 %v5296, %v6660
        %6662 = vmatprep.mubr.bf16.mxu0 %v2894
        %6663 = vmatmul.mubr.bf16.gmra.mrb[0].mxu0 %v2893
        %v6664 = vpop.f32.mrb[0].mxu0
        %v6665 = vadd.f32 %v5300, %v6664
        %v6666 = vpop.f32.mrb[0].mxu0
        %v6667 = vadd.f32 %v5302, %v6666
        %v6668 = vpop.f32.mrb[0].mxu0
        %v6669 = vadd.f32 %v5304, %v6668
        %v6670 = vpop.f32.mrb[0].mxu0
        %v6671 = vadd.f32 %v5306, %v6670
        %6672 = vmatprep.mubr.bf16.mxu0 %v2896
        %6673 = vmatmul.mubr.bf16.gmra.mrb[0].mxu0 %v2895
        %v6674 = vpop.f32.mrb[0].mxu0
        %v6675 = vadd.f32 %v5310, %v6674
        %v6676 = vpop.f32.mrb[0].mxu0
        %v6677 = vadd.f32 %v5312, %v6676
        %v6678 = vpop.f32.mrb[0].mxu0
        %v6679 = vadd.f32 %v5314, %v6678
        %v6680 = vpop.f32.mrb[0].mxu0
        %v6681 = vadd.f32 %v5316, %v6680
        %6682 = vmatprep.mubr.bf16.mxu0 %v2898
        %6683 = vmatmul.mubr.bf16.gmra.mrb[0].mxu0 %v2897
        %v6684 = vpop.f32.mrb[0].mxu0
        %v6685 = vadd.f32 %v5320, %v6684
        %v6686 = vpop.f32.mrb[0].mxu0
        %v6687 = vadd.f32 %v5322, %v6686
        %v6688 = vpop.f32.mrb[0].mxu0
        %v6689 = vadd.f32 %v5324, %v6688
        %v6690 = vpop.f32.mrb[0].mxu0
        %v6691 = vadd.f32 %v5326, %v6690
        %6692 = vmatprep.mubr.bf16.mxu0 %v2900
        %6693 = vmatmul.mubr.bf16.gmra.mrb[0].mxu0 %v2899
        %v6694 = vpop.f32.mrb[0].mxu0
        %v6695 = vadd.f32 %v5330, %v6694
        %v6696 = vpop.f32.mrb[0].mxu0
        %v6697 = vadd.f32 %v5332, %v6696
        %v6698 = vpop.f32.mrb[0].mxu0
        %v6699 = vadd.f32 %v5334, %v6698
        %v6700 = vpop.f32.mrb[0].mxu0
        %v6701 = vadd.f32 %v5336, %v6700
        %6702 = vmatprep.mubr.bf16.mxu0 %v2902
        %6703 = vmatmul.mubr.bf16.gmra.mrb[0].mxu0 %v2901
        %v6704 = vpop.f32.mrb[0].mxu0
        %v6705 = vadd.f32 %v5340, %v6704
        %v6706 = vpop.f32.mrb[0].mxu0
        %v6707 = vadd.f32 %v5342, %v6706
        %v6708 = vpop.f32.mrb[0].mxu0
        %v6709 = vadd.f32 %v5344, %v6708
        %v6710 = vpop.f32.mrb[0].mxu0
        %v6711 = vadd.f32 %v5346, %v6710
        %6712 = vmatprep.mubr.bf16.mxu0 %v2904
        %6713 = vmatmul.mubr.bf16.gmra.mrb[0].mxu0 %v2903
        %v6714 = vpop.f32.mrb[0].mxu0
        %v6715 = vadd.f32 %v5350, %v6714
        %v6716 = vpop.f32.mrb[0].mxu0
        %v6717 = vadd.f32 %v5352, %v6716
        %v6718 = vpop.f32.mrb[0].mxu0
        %v6719 = vadd.f32 %v5354, %v6718
        %v6720 = vpop.f32.mrb[0].mxu0
        %v6721 = vadd.f32 %v5356, %v6720
        %6722 = vmatprep.mubr.bf16.mxu0 %v2906
        %6723 = vmatmul.mubr.bf16.gmra.mrb[0].mxu0 %v2905
        %v6724 = vpop.f32.mrb[0].mxu0
        %v6725 = vadd.f32 %v5360, %v6724
        %v6726 = vpop.f32.mrb[0].mxu0
        %v6727 = vadd.f32 %v5362, %v6726
        %v6728 = vpop.f32.mrb[0].mxu0
        %v6729 = vadd.f32 %v5364, %v6728
        %v6730 = vpop.f32.mrb[0].mxu0
        %v6731 = vadd.f32 %v5366, %v6730
        %6732 = vmatprep.mubr.bf16.mxu0 %v2908
        %6733 = vmatmul.mubr.bf16.gmra.mrb[0].mxu0 %v2907
        %v6734 = vpop.f32.mrb[0].mxu0
        %v6735 = vadd.f32 %v5370, %v6734
        %v6736 = vpop.f32.mrb[0].mxu0
        %v6737 = vadd.f32 %v5372, %v6736
        %v6738 = vpop.f32.mrb[0].mxu0
        %v6739 = vadd.f32 %v5374, %v6738
        %v6740 = vpop.f32.mrb[0].mxu0
        %v6741 = vadd.f32 %v5376, %v6740
        %6742 = vmatprep.mubr.bf16.mxu0 %v2910
        %6743 = vmatmul.mubr.bf16.gmra.mrb[0].mxu0 %v2909
        %v6744 = vpop.f32.mrb[0].mxu0
        %v6745 = vadd.f32 %v5380, %v6744
        %v6746 = vpop.f32.mrb[0].mxu0
        %v6747 = vadd.f32 %v5382, %v6746
        %v6748 = vpop.f32.mrb[0].mxu0
        %v6749 = vadd.f32 %v5384, %v6748
        %v6750 = vpop.f32.mrb[0].mxu0
        %v6751 = vadd.f32 %v5386, %v6750
        %6752 = vmatprep.mubr.bf16.mxu0 %v2912
        %6753 = vmatmul.mubr.bf16.gmra.mrb[0].mxu0 %v2911
        %v6754 = vpop.f32.mrb[0].mxu0
        %v6755 = vadd.f32 %v5390, %v6754
        %v6756 = vpop.f32.mrb[0].mxu0
        %v6757 = vadd.f32 %v5392, %v6756
        %v6758 = vpop.f32.mrb[0].mxu0
        %v6759 = vadd.f32 %v5394, %v6758
        %v6760 = vpop.f32.mrb[0].mxu0
        %v6761 = vadd.f32 %v5396, %v6760
        %6762 = vmatprep.mubr.bf16.mxu0 %v2914
        %6763 = vmatmul.mubr.bf16.gmra.mrb[0].mxu0 %v2913
        %v6764 = vpop.f32.mrb[0].mxu0
        %v6765 = vadd.f32 %v5400, %v6764
        %v6766 = vpop.f32.mrb[0].mxu0
        %v6767 = vadd.f32 %v5402, %v6766
        %v6768 = vpop.f32.mrb[0].mxu0
        %v6769 = vadd.f32 %v5404, %v6768
        %v6770 = vpop.f32.mrb[0].mxu0
        %v6771 = vadd.f32 %v5406, %v6770
        %6772 = vmatprep.mubr.bf16.mxu0 %v2916
        %6773 = vmatmul.mubr.bf16.gmra.mrb[0].mxu0 %v2915
        %v6774 = vpop.f32.mrb[0].mxu0
        %v6775 = vadd.f32 %v5410, %v6774
        %v6776 = vpop.f32.mrb[0].mxu0
        %v6777 = vadd.f32 %v5412, %v6776
        %v6778 = vpop.f32.mrb[0].mxu0
        %v6779 = vadd.f32 %v5414, %v6778
        %v6780 = vpop.f32.mrb[0].mxu0
        %v6781 = vadd.f32 %v5416, %v6780
        %6782 = vmatprep.mubr.bf16.mxu0 %v2918
        %6783 = vmatmul.mubr.bf16.gmra.mrb[0].mxu0 %v2917
        %v6784 = vpop.f32.mrb[0].mxu0
        %v6785 = vadd.f32 %v5420, %v6784
        %v6786 = vpop.f32.mrb[0].mxu0
        %v6787 = vadd.f32 %v5422, %v6786
        %v6788 = vpop.f32.mrb[0].mxu0
        %v6789 = vadd.f32 %v5424, %v6788
        %v6790 = vpop.f32.mrb[0].mxu0
        %v6791 = vadd.f32 %v5426, %v6790
        %6792 = vmatprep.mubr.bf16.mxu0 %v2920
        %6793 = vmatmul.mubr.bf16.gmra.mrb[0].mxu0 %v2919
        %v6794 = vpop.f32.mrb[0].mxu0
        %v6795 = vadd.f32 %v5430, %v6794
        %v6796 = vpop.f32.mrb[0].mxu0
        %v6797 = vadd.f32 %v5432, %v6796
        %v6798 = vpop.f32.mrb[0].mxu0
        %v6799 = vadd.f32 %v5434, %v6798
        %v6800 = vpop.f32.mrb[0].mxu0
        %v6801 = vadd.f32 %v5436, %v6800
        %6802 = vmatprep.mubr.bf16.mxu0 %v2922
        %6803 = vmatmul.mubr.bf16.gmra.mrb[0].mxu0 %v2921
        %v6804 = vpop.f32.mrb[0].mxu0
        %v6805 = vadd.f32 %v5440, %v6804
        %v6806 = vpop.f32.mrb[0].mxu0
        %v6807 = vadd.f32 %v5442, %v6806
        %v6808 = vpop.f32.mrb[0].mxu0
        %v6809 = vadd.f32 %v5444, %v6808
        %v6810 = vpop.f32.mrb[0].mxu0
        %v6811 = vadd.f32 %v5446, %v6810
        %6812 = vmatprep.mubr.bf16.mxu0 %v2924
        %6813 = vmatmul.mubr.bf16.gmra.mrb[0].mxu0 %v2923
        %v6814 = vpop.f32.mrb[0].mxu0
        %v6815 = vadd.f32 %v5450, %v6814
        %v6816 = vpop.f32.mrb[0].mxu0
        %v6817 = vadd.f32 %v5452, %v6816
        %v6818 = vpop.f32.mrb[0].mxu0
        %v6819 = vadd.f32 %v5454, %v6818
        %v6820 = vpop.f32.mrb[0].mxu0
        %v6821 = vadd.f32 %v5456, %v6820
        %6822 = vmatprep.mubr.bf16.mxu0 %v2926
        %6823 = vmatmul.mubr.bf16.gmra.mrb[0].mxu0 %v2925
        %v6824 = vpop.f32.mrb[0].mxu0
        %v6825 = vadd.f32 %v5460, %v6824
        %v6826 = vpop.f32.mrb[0].mxu0
        %v6827 = vadd.f32 %v5462, %v6826
        %v6828 = vpop.f32.mrb[0].mxu0
        %v6829 = vadd.f32 %v5464, %v6828
        %v6830 = vpop.f32.mrb[0].mxu0
        %v6831 = vadd.f32 %v5466, %v6830
        %6832 = vmatprep.mubr.bf16.mxu0 %v2928
        %6833 = vmatmul.mubr.bf16.gmra.mrb[0].mxu0 %v2927
        %v6834 = vpop.f32.mrb[0].mxu0
        %v6835 = vadd.f32 %v5470, %v6834
        %v6836 = vpop.f32.mrb[0].mxu0
        %v6837 = vadd.f32 %v5472, %v6836
        %v6838 = vpop.f32.mrb[0].mxu0
        %v6839 = vadd.f32 %v5474, %v6838
        %v6840 = vpop.f32.mrb[0].mxu0
        %v6841 = vadd.f32 %v5476, %v6840
        %6842 = vmatprep.mubr.bf16.mxu0 %v2930
        %6843 = vmatmul.mubr.bf16.gmra.mrb[0].mxu0 %v2929
        %v6844 = vpop.f32.mrb[0].mxu0
        %v6845 = vadd.f32 %v5480, %v6844
        %v6846 = vpop.f32.mrb[0].mxu0
        %v6847 = vadd.f32 %v5482, %v6846
        %v6848 = vpop.f32.mrb[0].mxu0
        %v6849 = vadd.f32 %v5484, %v6848
        %v6850 = vpop.f32.mrb[0].mxu0
        %v6851 = vadd.f32 %v5486, %v6850
        %6852 = vmatprep.mubr.bf16.mxu0 %v2932
        %6853 = vmatmul.mubr.bf16.gmra.mrb[0].mxu0 %v2931
        %v6854 = vpop.f32.mrb[0].mxu0
        %v6855 = vadd.f32 %v5490, %v6854
        %v6856 = vpop.f32.mrb[0].mxu0
        %v6857 = vadd.f32 %v5492, %v6856
        %v6858 = vpop.f32.mrb[0].mxu0
        %v6859 = vadd.f32 %v5494, %v6858
        %v6860 = vpop.f32.mrb[0].mxu0
        %v6861 = vadd.f32 %v5496, %v6860
        %6862 = vdwg.mxu0
        %v6863 = vld [vmem:[#allocation7] sm:$0xff]
        %v6864 = vld [vmem:[#allocation7 + $0x8] sm:$0xff]
        %v6865 = vld [vmem:[#allocation7 + $0x10] sm:$0xff]
        %v6866 = vld [vmem:[#allocation7 + $0x18] sm:$0xff]
        %v6867 = vld [vmem:[#allocation7 + $0x20] sm:$0xff]
        %v6868 = vld [vmem:[#allocation7 + $0x28] sm:$0xff]
        %v6869 = vld [vmem:[#allocation7 + $0x30] sm:$0xff]
        %v6870 = vld [vmem:[#allocation7 + $0x38] sm:$0xff]
        %v6871 = vld [vmem:[#allocation7 + $0x40] sm:$0xff]
        %v6872 = vld [vmem:[#allocation7 + $0x48] sm:$0xff]
        %v6873 = vld [vmem:[#allocation7 + $0x50] sm:$0xff]
        %v6874 = vld [vmem:[#allocation7 + $0x58] sm:$0xff]
        %v6875 = vld [vmem:[#allocation7 + $0x60] sm:$0xff]
        %v6876 = vld [vmem:[#allocation7 + $0x68] sm:$0xff]
        %v6877 = vld [vmem:[#allocation7 + $0x70] sm:$0xff]
        %v6878 = vld [vmem:[#allocation7 + $0x78] sm:$0xff]
        %v6879 = vld [vmem:[#allocation7 + $0x80] sm:$0xff]
        %v6880 = vld [vmem:[#allocation7 + $0x88] sm:$0xff]
        %v6881 = vld [vmem:[#allocation7 + $0x90] sm:$0xff]
        %v6882 = vld [vmem:[#allocation7 + $0x98] sm:$0xff]
        %v6883 = vld [vmem:[#allocation7 + $0xa0] sm:$0xff]
        %v6884 = vld [vmem:[#allocation7 + $0xa8] sm:$0xff]
        %v6885 = vld [vmem:[#allocation7 + $0xb0] sm:$0xff]
        %v6886 = vld [vmem:[#allocation7 + $0xb8] sm:$0xff]
        %v6887 = vld [vmem:[#allocation7 + $0xc0] sm:$0xff]
        %v6888 = vld [vmem:[#allocation7 + $0xc8] sm:$0xff]
        %v6889 = vld [vmem:[#allocation7 + $0xd0] sm:$0xff]
        %v6890 = vld [vmem:[#allocation7 + $0xd8] sm:$0xff]
        %v6891 = vld [vmem:[#allocation7 + $0xe0] sm:$0xff]
        %v6892 = vld [vmem:[#allocation7 + $0xe8] sm:$0xff]
        %v6893 = vld [vmem:[#allocation7 + $0xf0] sm:$0xff]
        %v6894 = vld [vmem:[#allocation7 + $0xf8] sm:$0xff]
        %v6895 = vld [vmem:[#allocation7 + $0x100] sm:$0xff]
        %v6896 = vld [vmem:[#allocation7 + $0x108] sm:$0xff]
        %v6897 = vld [vmem:[#allocation7 + $0x110] sm:$0xff]
        %v6898 = vld [vmem:[#allocation7 + $0x118] sm:$0xff]
        %v6899 = vld [vmem:[#allocation7 + $0x120] sm:$0xff]
        %v6900 = vld [vmem:[#allocation7 + $0x128] sm:$0xff]
        %v6901 = vld [vmem:[#allocation7 + $0x130] sm:$0xff]
        %v6902 = vld [vmem:[#allocation7 + $0x138] sm:$0xff]
        %v6903 = vld [vmem:[#allocation7 + $0x140] sm:$0xff]
        %v6904 = vld [vmem:[#allocation7 + $0x148] sm:$0xff]
        %v6905 = vld [vmem:[#allocation7 + $0x150] sm:$0xff]
        %v6906 = vld [vmem:[#allocation7 + $0x158] sm:$0xff]
        %v6907 = vld [vmem:[#allocation7 + $0x160] sm:$0xff]
        %v6908 = vld [vmem:[#allocation7 + $0x168] sm:$0xff]
        %v6909 = vld [vmem:[#allocation7 + $0x170] sm:$0xff]
        %v6910 = vld [vmem:[#allocation7 + $0x178] sm:$0xff]
        %v6911 = vld [vmem:[#allocation7 + $0x180] sm:$0xff]
        %v6912 = vld [vmem:[#allocation7 + $0x188] sm:$0xff]
        %v6913 = vld [vmem:[#allocation7 + $0x190] sm:$0xff]
        %v6914 = vld [vmem:[#allocation7 + $0x198] sm:$0xff]
        %v6915 = vld [vmem:[#allocation7 + $0x1a0] sm:$0xff]
        %v6916 = vld [vmem:[#allocation7 + $0x1a8] sm:$0xff]
        %v6917 = vld [vmem:[#allocation7 + $0x1b0] sm:$0xff]
        %v6918 = vld [vmem:[#allocation7 + $0x1b8] sm:$0xff]
        %v6919 = vld [vmem:[#allocation7 + $0x1c0] sm:$0xff]
        %v6920 = vld [vmem:[#allocation7 + $0x1c8] sm:$0xff]
        %v6921 = vld [vmem:[#allocation7 + $0x1d0] sm:$0xff]
        %v6922 = vld [vmem:[#allocation7 + $0x1d8] sm:$0xff]
        %v6923 = vld [vmem:[#allocation7 + $0x1e0] sm:$0xff]
        %v6924 = vld [vmem:[#allocation7 + $0x1e8] sm:$0xff]
        %v6925 = vld [vmem:[#allocation7 + $0x1f0] sm:$0xff]
        %v6926 = vld [vmem:[#allocation7 + $0x1f8] sm:$0xff]
        %v6927 = vld [vmem:[#allocation7 + $0x200] sm:$0xff]
        %v6928 = vld [vmem:[#allocation7 + $0x208] sm:$0xff]
        %v6929 = vld [vmem:[#allocation7 + $0x210] sm:$0xff]
        %v6930 = vld [vmem:[#allocation7 + $0x218] sm:$0xff]
        %v6931 = vld [vmem:[#allocation7 + $0x220] sm:$0xff]
        %v6932 = vld [vmem:[#allocation7 + $0x228] sm:$0xff]
        %v6933 = vld [vmem:[#allocation7 + $0x230] sm:$0xff]
        %v6934 = vld [vmem:[#allocation7 + $0x238] sm:$0xff]
        %v6935 = vld [vmem:[#allocation7 + $0x240] sm:$0xff]
        %v6936 = vld [vmem:[#allocation7 + $0x248] sm:$0xff]
        %v6937 = vld [vmem:[#allocation7 + $0x250] sm:$0xff]
        %v6938 = vld [vmem:[#allocation7 + $0x258] sm:$0xff]
        %v6939 = vld [vmem:[#allocation7 + $0x260] sm:$0xff]
        %v6940 = vld [vmem:[#allocation7 + $0x268] sm:$0xff]
        %v6941 = vld [vmem:[#allocation7 + $0x270] sm:$0xff]
        %v6942 = vld [vmem:[#allocation7 + $0x278] sm:$0xff]
        %v6943 = vld [vmem:[#allocation7 + $0x280] sm:$0xff]
        %v6944 = vld [vmem:[#allocation7 + $0x288] sm:$0xff]
        %v6945 = vld [vmem:[#allocation7 + $0x290] sm:$0xff]
        %v6946 = vld [vmem:[#allocation7 + $0x298] sm:$0xff]
        %v6947 = vld [vmem:[#allocation7 + $0x2a0] sm:$0xff]
        %v6948 = vld [vmem:[#allocation7 + $0x2a8] sm:$0xff]
        %v6949 = vld [vmem:[#allocation7 + $0x2b0] sm:$0xff]
        %v6950 = vld [vmem:[#allocation7 + $0x2b8] sm:$0xff]
        %v6951 = vld [vmem:[#allocation7 + $0x2c0] sm:$0xff]
        %v6952 = vld [vmem:[#allocation7 + $0x2c8] sm:$0xff]
        %v6953 = vld [vmem:[#allocation7 + $0x2d0] sm:$0xff]
        %v6954 = vld [vmem:[#allocation7 + $0x2d8] sm:$0xff]
        %v6955 = vld [vmem:[#allocation7 + $0x2e0] sm:$0xff]
        %v6956 = vld [vmem:[#allocation7 + $0x2e8] sm:$0xff]
        %v6957 = vld [vmem:[#allocation7 + $0x2f0] sm:$0xff]
        %v6958 = vld [vmem:[#allocation7 + $0x2f8] sm:$0xff]
        %v6959 = vld [vmem:[#allocation7 + $0x300] sm:$0xff]
        %v6960 = vld [vmem:[#allocation7 + $0x308] sm:$0xff]
        %v6961 = vld [vmem:[#allocation7 + $0x310] sm:$0xff]
        %v6962 = vld [vmem:[#allocation7 + $0x318] sm:$0xff]
        %v6963 = vld [vmem:[#allocation7 + $0x320] sm:$0xff]
        %v6964 = vld [vmem:[#allocation7 + $0x328] sm:$0xff]
        %v6965 = vld [vmem:[#allocation7 + $0x330] sm:$0xff]
        %v6966 = vld [vmem:[#allocation7 + $0x338] sm:$0xff]
        %v6967 = vld [vmem:[#allocation7 + $0x340] sm:$0xff]
        %v6968 = vld [vmem:[#allocation7 + $0x348] sm:$0xff]
        %v6969 = vld [vmem:[#allocation7 + $0x350] sm:$0xff]
        %v6970 = vld [vmem:[#allocation7 + $0x358] sm:$0xff]
        %v6971 = vld [vmem:[#allocation7 + $0x360] sm:$0xff]
        %v6972 = vld [vmem:[#allocation7 + $0x368] sm:$0xff]
        %v6973 = vld [vmem:[#allocation7 + $0x370] sm:$0xff]
        %v6974 = vld [vmem:[#allocation7 + $0x378] sm:$0xff]
        %v6975 = vld [vmem:[#allocation7 + $0x380] sm:$0xff]
        %v6976 = vld [vmem:[#allocation7 + $0x388] sm:$0xff]
        %v6977 = vld [vmem:[#allocation7 + $0x390] sm:$0xff]
        %v6978 = vld [vmem:[#allocation7 + $0x398] sm:$0xff]
        %v6979 = vld [vmem:[#allocation7 + $0x3a0] sm:$0xff]
        %v6980 = vld [vmem:[#allocation7 + $0x3a8] sm:$0xff]
        %v6981 = vld [vmem:[#allocation7 + $0x3b0] sm:$0xff]
        %v6982 = vld [vmem:[#allocation7 + $0x3b8] sm:$0xff]
        %v6983 = vld [vmem:[#allocation7 + $0x3c0] sm:$0xff]
        %v6984 = vld [vmem:[#allocation7 + $0x3c8] sm:$0xff]
        %v6985 = vld [vmem:[#allocation7 + $0x3d0] sm:$0xff]
        %v6986 = vld [vmem:[#allocation7 + $0x3d8] sm:$0xff]
        %v6987 = vld [vmem:[#allocation7 + $0x3e0] sm:$0xff]
        %v6988 = vld [vmem:[#allocation7 + $0x3e8] sm:$0xff]
        %v6989 = vld [vmem:[#allocation7 + $0x3f0] sm:$0xff]
        %v6990 = vld [vmem:[#allocation7 + $0x3f8] sm:$0xff]
        %v6991 = vld [vmem:[#allocation7 + $0x400] sm:$0xff]
        %v6992 = vld [vmem:[#allocation7 + $0x408] sm:$0xff]
        %v6993 = vld [vmem:[#allocation7 + $0x410] sm:$0xff]
        %v6994 = vld [vmem:[#allocation7 + $0x418] sm:$0xff]
        %v6995 = vld [vmem:[#allocation7 + $0x420] sm:$0xff]
        %v6996 = vld [vmem:[#allocation7 + $0x428] sm:$0xff]
        %v6997 = vld [vmem:[#allocation7 + $0x430] sm:$0xff]
        %v6998 = vld [vmem:[#allocation7 + $0x438] sm:$0xff]
        %v6999 = vld [vmem:[#allocation7 + $0x440] sm:$0xff]
        %v7000 = vld [vmem:[#allocation7 + $0x448] sm:$0xff]
        %v7001 = vld [vmem:[#allocation7 + $0x450] sm:$0xff]
        %v7002 = vld [vmem:[#allocation7 + $0x458] sm:$0xff]
        %v7003 = vld [vmem:[#allocation7 + $0x460] sm:$0xff]
        %v7004 = vld [vmem:[#allocation7 + $0x468] sm:$0xff]
        %v7005 = vld [vmem:[#allocation7 + $0x470] sm:$0xff]
        %v7006 = vld [vmem:[#allocation7 + $0x478] sm:$0xff]
        %v7007 = vld [vmem:[#allocation7 + $0x480] sm:$0xff]
        %v7008 = vld [vmem:[#allocation7 + $0x488] sm:$0xff]
        %v7009 = vld [vmem:[#allocation7 + $0x490] sm:$0xff]
        %v7010 = vld [vmem:[#allocation7 + $0x498] sm:$0xff]
        %v7011 = vld [vmem:[#allocation7 + $0x4a0] sm:$0xff]
        %v7012 = vld [vmem:[#allocation7 + $0x4a8] sm:$0xff]
        %v7013 = vld [vmem:[#allocation7 + $0x4b0] sm:$0xff]
        %v7014 = vld [vmem:[#allocation7 + $0x4b8] sm:$0xff]
        %v7015 = vld [vmem:[#allocation7 + $0x4c0] sm:$0xff]
        %v7016 = vld [vmem:[#allocation7 + $0x4c8] sm:$0xff]
        %v7017 = vld [vmem:[#allocation7 + $0x4d0] sm:$0xff]
        %v7018 = vld [vmem:[#allocation7 + $0x4d8] sm:$0xff]
        %v7019 = vld [vmem:[#allocation7 + $0x4e0] sm:$0xff]
        %v7020 = vld [vmem:[#allocation7 + $0x4e8] sm:$0xff]
        %v7021 = vld [vmem:[#allocation7 + $0x4f0] sm:$0xff]
        %v7022 = vld [vmem:[#allocation7 + $0x4f8] sm:$0xff]
        %v7183 = vunpack.c.l.b16 %v6863
        %v7184 = vunpack.c.h.b16 %v6863
        %v7185 = vunpack.c.l.b16 %v6864
        %v7186 = vunpack.c.h.b16 %v6864
        %v7187 = vunpack.c.l.b16 %v6865
        %v7188 = vunpack.c.h.b16 %v6865
        %v7189 = vunpack.c.l.b16 %v6866
        %v7190 = vunpack.c.h.b16 %v6866
        %v7191 = vunpack.c.l.b16 %v6867
        %v7192 = vunpack.c.h.b16 %v6867
        %v7193 = vunpack.c.l.b16 %v6868
        %v7194 = vunpack.c.h.b16 %v6868
        %v7195 = vunpack.c.l.b16 %v6869
        %v7196 = vunpack.c.h.b16 %v6869
        %v7197 = vunpack.c.l.b16 %v6870
        %v7198 = vunpack.c.h.b16 %v6870
        %v7199 = vunpack.c.l.b16 %v6871
        %v7200 = vunpack.c.h.b16 %v6871
        %v7201 = vunpack.c.l.b16 %v6872
        %v7202 = vunpack.c.h.b16 %v6872
        %v7203 = vunpack.c.l.b16 %v6873
        %v7204 = vunpack.c.h.b16 %v6873
        %v7205 = vunpack.c.l.b16 %v6874
        %v7206 = vunpack.c.h.b16 %v6874
        %v7207 = vunpack.c.l.b16 %v6875
        %v7208 = vunpack.c.h.b16 %v6875
        %v7209 = vunpack.c.l.b16 %v6876
        %v7210 = vunpack.c.h.b16 %v6876
        %v7211 = vunpack.c.l.b16 %v6877
        %v7212 = vunpack.c.h.b16 %v6877
        %v7213 = vunpack.c.l.b16 %v6878
        %v7214 = vunpack.c.h.b16 %v6878
        %v7215 = vunpack.c.l.b16 %v6879
        %v7216 = vunpack.c.h.b16 %v6879
        %v7217 = vunpack.c.l.b16 %v6880
        %v7218 = vunpack.c.h.b16 %v6880
        %v7219 = vunpack.c.l.b16 %v6881
        %v7220 = vunpack.c.h.b16 %v6881
        %v7221 = vunpack.c.l.b16 %v6882
        %v7222 = vunpack.c.h.b16 %v6882
        %v7223 = vunpack.c.l.b16 %v6883
        %v7224 = vunpack.c.h.b16 %v6883
        %v7225 = vunpack.c.l.b16 %v6884
        %v7226 = vunpack.c.h.b16 %v6884
        %v7227 = vunpack.c.l.b16 %v6885
        %v7228 = vunpack.c.h.b16 %v6885
        %v7229 = vunpack.c.l.b16 %v6886
        %v7230 = vunpack.c.h.b16 %v6886
        %v7231 = vunpack.c.l.b16 %v6887
        %v7232 = vunpack.c.h.b16 %v6887
        %v7233 = vunpack.c.l.b16 %v6888
        %v7234 = vunpack.c.h.b16 %v6888
        %v7235 = vunpack.c.l.b16 %v6889
        %v7236 = vunpack.c.h.b16 %v6889
        %v7237 = vunpack.c.l.b16 %v6890
        %v7238 = vunpack.c.h.b16 %v6890
        %v7239 = vunpack.c.l.b16 %v6891
        %v7240 = vunpack.c.h.b16 %v6891
        %v7241 = vunpack.c.l.b16 %v6892
        %v7242 = vunpack.c.h.b16 %v6892
        %v7243 = vunpack.c.l.b16 %v6893
        %v7244 = vunpack.c.h.b16 %v6893
        %v7245 = vunpack.c.l.b16 %v6894
        %v7246 = vunpack.c.h.b16 %v6894
        %v7247 = vunpack.c.l.b16 %v6895
        %v7248 = vunpack.c.h.b16 %v6895
        %v7249 = vunpack.c.l.b16 %v6896
        %v7250 = vunpack.c.h.b16 %v6896
        %v7251 = vunpack.c.l.b16 %v6897
        %v7252 = vunpack.c.h.b16 %v6897
        %v7253 = vunpack.c.l.b16 %v6898
        %v7254 = vunpack.c.h.b16 %v6898
        %v7255 = vunpack.c.l.b16 %v6899
        %v7256 = vunpack.c.h.b16 %v6899
        %v7257 = vunpack.c.l.b16 %v6900
        %v7258 = vunpack.c.h.b16 %v6900
        %v7259 = vunpack.c.l.b16 %v6901
        %v7260 = vunpack.c.h.b16 %v6901
        %v7261 = vunpack.c.l.b16 %v6902
        %v7262 = vunpack.c.h.b16 %v6902
        %v7263 = vunpack.c.l.b16 %v6903
        %v7264 = vunpack.c.h.b16 %v6903
        %v7265 = vunpack.c.l.b16 %v6904
        %v7266 = vunpack.c.h.b16 %v6904
        %v7267 = vunpack.c.l.b16 %v6905
        %v7268 = vunpack.c.h.b16 %v6905
        %v7269 = vunpack.c.l.b16 %v6906
        %v7270 = vunpack.c.h.b16 %v6906
        %v7271 = vunpack.c.l.b16 %v6907
        %v7272 = vunpack.c.h.b16 %v6907
        %v7273 = vunpack.c.l.b16 %v6908
        %v7274 = vunpack.c.h.b16 %v6908
        %v7275 = vunpack.c.l.b16 %v6909
        %v7276 = vunpack.c.h.b16 %v6909
        %v7277 = vunpack.c.l.b16 %v6910
        %v7278 = vunpack.c.h.b16 %v6910
        %v7279 = vunpack.c.l.b16 %v6911
        %v7280 = vunpack.c.h.b16 %v6911
        %v7281 = vunpack.c.l.b16 %v6912
        %v7282 = vunpack.c.h.b16 %v6912
        %v7283 = vunpack.c.l.b16 %v6913
        %v7284 = vunpack.c.h.b16 %v6913
        %v7285 = vunpack.c.l.b16 %v6914
        %v7286 = vunpack.c.h.b16 %v6914
        %v7287 = vunpack.c.l.b16 %v6915
        %v7288 = vunpack.c.h.b16 %v6915
        %v7289 = vunpack.c.l.b16 %v6916
        %v7290 = vunpack.c.h.b16 %v6916
        %v7291 = vunpack.c.l.b16 %v6917
        %v7292 = vunpack.c.h.b16 %v6917
        %v7293 = vunpack.c.l.b16 %v6918
        %v7294 = vunpack.c.h.b16 %v6918
        %v7295 = vunpack.c.l.b16 %v6919
        %v7296 = vunpack.c.h.b16 %v6919
        %v7297 = vunpack.c.l.b16 %v6920
        %v7298 = vunpack.c.h.b16 %v6920
        %v7299 = vunpack.c.l.b16 %v6921
        %v7300 = vunpack.c.h.b16 %v6921
        %v7301 = vunpack.c.l.b16 %v6922
        %v7302 = vunpack.c.h.b16 %v6922
        %v7303 = vunpack.c.l.b16 %v6923
        %v7304 = vunpack.c.h.b16 %v6923
        %v7305 = vunpack.c.l.b16 %v6924
        %v7306 = vunpack.c.h.b16 %v6924
        %v7307 = vunpack.c.l.b16 %v6925
        %v7308 = vunpack.c.h.b16 %v6925
        %v7309 = vunpack.c.l.b16 %v6926
        %v7310 = vunpack.c.h.b16 %v6926
        %v7311 = vunpack.c.l.b16 %v6927
        %v7312 = vunpack.c.h.b16 %v6927
        %v7313 = vunpack.c.l.b16 %v6928
        %v7314 = vunpack.c.h.b16 %v6928
        %v7315 = vunpack.c.l.b16 %v6929
        %v7316 = vunpack.c.h.b16 %v6929
        %v7317 = vunpack.c.l.b16 %v6930
        %v7318 = vunpack.c.h.b16 %v6930
        %v7319 = vunpack.c.l.b16 %v6931
        %v7320 = vunpack.c.h.b16 %v6931
        %v7321 = vunpack.c.l.b16 %v6932
        %v7322 = vunpack.c.h.b16 %v6932
        %v7323 = vunpack.c.l.b16 %v6933
        %v7324 = vunpack.c.h.b16 %v6933
        %v7325 = vunpack.c.l.b16 %v6934
        %v7326 = vunpack.c.h.b16 %v6934
        %v7327 = vunpack.c.l.b16 %v6935
        %v7328 = vunpack.c.h.b16 %v6935
        %v7329 = vunpack.c.l.b16 %v6936
        %v7330 = vunpack.c.h.b16 %v6936
        %v7331 = vunpack.c.l.b16 %v6937
        %v7332 = vunpack.c.h.b16 %v6937
        %v7333 = vunpack.c.l.b16 %v6938
        %v7334 = vunpack.c.h.b16 %v6938
        %v7335 = vunpack.c.l.b16 %v6939
        %v7336 = vunpack.c.h.b16 %v6939
        %v7337 = vunpack.c.l.b16 %v6940
        %v7338 = vunpack.c.h.b16 %v6940
        %v7339 = vunpack.c.l.b16 %v6941
        %v7340 = vunpack.c.h.b16 %v6941
        %v7341 = vunpack.c.l.b16 %v6942
        %v7342 = vunpack.c.h.b16 %v6942
        %v7343 = vunpack.c.l.b16 %v6943
        %v7344 = vunpack.c.h.b16 %v6943
        %v7345 = vunpack.c.l.b16 %v6944
        %v7346 = vunpack.c.h.b16 %v6944
        %v7347 = vunpack.c.l.b16 %v6945
        %v7348 = vunpack.c.h.b16 %v6945
        %v7349 = vunpack.c.l.b16 %v6946
        %v7350 = vunpack.c.h.b16 %v6946
        %v7351 = vunpack.c.l.b16 %v6947
        %v7352 = vunpack.c.h.b16 %v6947
        %v7353 = vunpack.c.l.b16 %v6948
        %v7354 = vunpack.c.h.b16 %v6948
        %v7355 = vunpack.c.l.b16 %v6949
        %v7356 = vunpack.c.h.b16 %v6949
        %v7357 = vunpack.c.l.b16 %v6950
        %v7358 = vunpack.c.h.b16 %v6950
        %v7359 = vunpack.c.l.b16 %v6951
        %v7360 = vunpack.c.h.b16 %v6951
        %v7361 = vunpack.c.l.b16 %v6952
        %v7362 = vunpack.c.h.b16 %v6952
        %v7363 = vunpack.c.l.b16 %v6953
        %v7364 = vunpack.c.h.b16 %v6953
        %v7365 = vunpack.c.l.b16 %v6954
        %v7366 = vunpack.c.h.b16 %v6954
        %v7367 = vunpack.c.l.b16 %v6955
        %v7368 = vunpack.c.h.b16 %v6955
        %v7369 = vunpack.c.l.b16 %v6956
        %v7370 = vunpack.c.h.b16 %v6956
        %v7371 = vunpack.c.l.b16 %v6957
        %v7372 = vunpack.c.h.b16 %v6957
        %v7373 = vunpack.c.l.b16 %v6958
        %v7374 = vunpack.c.h.b16 %v6958
        %v7375 = vunpack.c.l.b16 %v6959
        %v7376 = vunpack.c.h.b16 %v6959
        %v7377 = vunpack.c.l.b16 %v6960
        %v7378 = vunpack.c.h.b16 %v6960
        %v7379 = vunpack.c.l.b16 %v6961
        %v7380 = vunpack.c.h.b16 %v6961
        %v7381 = vunpack.c.l.b16 %v6962
        %v7382 = vunpack.c.h.b16 %v6962
        %v7383 = vunpack.c.l.b16 %v6963
        %v7384 = vunpack.c.h.b16 %v6963
        %v7385 = vunpack.c.l.b16 %v6964
        %v7386 = vunpack.c.h.b16 %v6964
        %v7387 = vunpack.c.l.b16 %v6965
        %v7388 = vunpack.c.h.b16 %v6965
        %v7389 = vunpack.c.l.b16 %v6966
        %v7390 = vunpack.c.h.b16 %v6966
        %v7391 = vunpack.c.l.b16 %v6967
        %v7392 = vunpack.c.h.b16 %v6967
        %v7393 = vunpack.c.l.b16 %v6968
        %v7394 = vunpack.c.h.b16 %v6968
        %v7395 = vunpack.c.l.b16 %v6969
        %v7396 = vunpack.c.h.b16 %v6969
        %v7397 = vunpack.c.l.b16 %v6970
        %v7398 = vunpack.c.h.b16 %v6970
        %v7399 = vunpack.c.l.b16 %v6971
        %v7400 = vunpack.c.h.b16 %v6971
        %v7401 = vunpack.c.l.b16 %v6972
        %v7402 = vunpack.c.h.b16 %v6972
        %v7403 = vunpack.c.l.b16 %v6973
        %v7404 = vunpack.c.h.b16 %v6973
        %v7405 = vunpack.c.l.b16 %v6974
        %v7406 = vunpack.c.h.b16 %v6974
        %v7407 = vunpack.c.l.b16 %v6975
        %v7408 = vunpack.c.h.b16 %v6975
        %v7409 = vunpack.c.l.b16 %v6976
        %v7410 = vunpack.c.h.b16 %v6976
        %v7411 = vunpack.c.l.b16 %v6977
        %v7412 = vunpack.c.h.b16 %v6977
        %v7413 = vunpack.c.l.b16 %v6978
        %v7414 = vunpack.c.h.b16 %v6978
        %v7415 = vunpack.c.l.b16 %v6979
        %v7416 = vunpack.c.h.b16 %v6979
        %v7417 = vunpack.c.l.b16 %v6980
        %v7418 = vunpack.c.h.b16 %v6980
        %v7419 = vunpack.c.l.b16 %v6981
        %v7420 = vunpack.c.h.b16 %v6981
        %v7421 = vunpack.c.l.b16 %v6982
        %v7422 = vunpack.c.h.b16 %v6982
        %v7423 = vunpack.c.l.b16 %v6983
        %v7424 = vunpack.c.h.b16 %v6983
        %v7425 = vunpack.c.l.b16 %v6984
        %v7426 = vunpack.c.h.b16 %v6984
        %v7427 = vunpack.c.l.b16 %v6985
        %v7428 = vunpack.c.h.b16 %v6985
        %v7429 = vunpack.c.l.b16 %v6986
        %v7430 = vunpack.c.h.b16 %v6986
        %v7431 = vunpack.c.l.b16 %v6987
        %v7432 = vunpack.c.h.b16 %v6987
        %v7433 = vunpack.c.l.b16 %v6988
        %v7434 = vunpack.c.h.b16 %v6988
        %v7435 = vunpack.c.l.b16 %v6989
        %v7436 = vunpack.c.h.b16 %v6989
        %v7437 = vunpack.c.l.b16 %v6990
        %v7438 = vunpack.c.h.b16 %v6990
        %v7439 = vunpack.c.l.b16 %v6991
        %v7440 = vunpack.c.h.b16 %v6991
        %v7441 = vunpack.c.l.b16 %v6992
        %v7442 = vunpack.c.h.b16 %v6992
        %v7443 = vunpack.c.l.b16 %v6993
        %v7444 = vunpack.c.h.b16 %v6993
        %v7445 = vunpack.c.l.b16 %v6994
        %v7446 = vunpack.c.h.b16 %v6994
        %v7447 = vunpack.c.l.b16 %v6995
        %v7448 = vunpack.c.h.b16 %v6995
        %v7449 = vunpack.c.l.b16 %v6996
        %v7450 = vunpack.c.h.b16 %v6996
        %v7451 = vunpack.c.l.b16 %v6997
        %v7452 = vunpack.c.h.b16 %v6997
        %v7453 = vunpack.c.l.b16 %v6998
        %v7454 = vunpack.c.h.b16 %v6998
        %v7455 = vunpack.c.l.b16 %v6999
        %v7456 = vunpack.c.h.b16 %v6999
        %v7457 = vunpack.c.l.b16 %v7000
        %v7458 = vunpack.c.h.b16 %v7000
        %v7459 = vunpack.c.l.b16 %v7001
        %v7460 = vunpack.c.h.b16 %v7001
        %v7461 = vunpack.c.l.b16 %v7002
        %v7462 = vunpack.c.h.b16 %v7002
        %v7463 = vunpack.c.l.b16 %v7003
        %v7464 = vunpack.c.h.b16 %v7003
        %v7465 = vunpack.c.l.b16 %v7004
        %v7466 = vunpack.c.h.b16 %v7004
        %v7467 = vunpack.c.l.b16 %v7005
        %v7468 = vunpack.c.h.b16 %v7005
        %v7469 = vunpack.c.l.b16 %v7006
        %v7470 = vunpack.c.h.b16 %v7006
        %v7471 = vunpack.c.l.b16 %v7007
        %v7472 = vunpack.c.h.b16 %v7007
        %v7473 = vunpack.c.l.b16 %v7008
        %v7474 = vunpack.c.h.b16 %v7008
        %v7475 = vunpack.c.l.b16 %v7009
        %v7476 = vunpack.c.h.b16 %v7009
        %v7477 = vunpack.c.l.b16 %v7010
        %v7478 = vunpack.c.h.b16 %v7010
        %v7479 = vunpack.c.l.b16 %v7011
        %v7480 = vunpack.c.h.b16 %v7011
        %v7481 = vunpack.c.l.b16 %v7012
        %v7482 = vunpack.c.h.b16 %v7012
        %v7483 = vunpack.c.l.b16 %v7013
        %v7484 = vunpack.c.h.b16 %v7013
        %v7485 = vunpack.c.l.b16 %v7014
        %v7486 = vunpack.c.h.b16 %v7014
        %v7487 = vunpack.c.l.b16 %v7015
        %v7488 = vunpack.c.h.b16 %v7015
        %v7489 = vunpack.c.l.b16 %v7016
        %v7490 = vunpack.c.h.b16 %v7016
        %v7491 = vunpack.c.l.b16 %v7017
        %v7492 = vunpack.c.h.b16 %v7017
        %v7493 = vunpack.c.l.b16 %v7018
        %v7494 = vunpack.c.h.b16 %v7018
        %v7495 = vunpack.c.l.b16 %v7019
        %v7496 = vunpack.c.h.b16 %v7019
        %v7497 = vunpack.c.l.b16 %v7020
        %v7498 = vunpack.c.h.b16 %v7020
        %v7499 = vunpack.c.l.b16 %v7021
        %v7500 = vunpack.c.h.b16 %v7021
        %v7501 = vunpack.c.l.b16 %v7022
        %v7502 = vunpack.c.h.b16 %v7022
        %v7503 = vpack.c.b16 %v7193, %v7183
        %v7504 = vpack.c.b16 %v7194, %v7184
        %v7505 = vpack.c.b16 %v7195, %v7185
        %v7506 = vpack.c.b16 %v7196, %v7186
        %v7507 = vpack.c.b16 %v7197, %v7187
        %v7508 = vpack.c.b16 %v7198, %v7188
        %v7509 = vpack.c.b16 %v7199, %v7189
        %v7510 = vpack.c.b16 %v7200, %v7190
        %v7511 = vpack.c.b16 %v7201, %v7191
        %v7512 = vpack.c.b16 %v7202, %v7192
        %v7513 = vpack.c.b16 %v7213, %v7203
        %v7514 = vpack.c.b16 %v7214, %v7204
        %v7515 = vpack.c.b16 %v7215, %v7205
        %v7516 = vpack.c.b16 %v7216, %v7206
        %v7517 = vpack.c.b16 %v7217, %v7207
        %v7518 = vpack.c.b16 %v7218, %v7208
        %v7519 = vpack.c.b16 %v7219, %v7209
        %v7520 = vpack.c.b16 %v7220, %v7210
        %v7521 = vpack.c.b16 %v7221, %v7211
        %v7522 = vpack.c.b16 %v7222, %v7212
        %v7523 = vpack.c.b16 %v7233, %v7223
        %v7524 = vpack.c.b16 %v7234, %v7224
        %v7525 = vpack.c.b16 %v7235, %v7225
        %v7526 = vpack.c.b16 %v7236, %v7226
        %v7527 = vpack.c.b16 %v7237, %v7227
        %v7528 = vpack.c.b16 %v7238, %v7228
        %v7529 = vpack.c.b16 %v7239, %v7229
        %v7530 = vpack.c.b16 %v7240, %v7230
        %v7531 = vpack.c.b16 %v7241, %v7231
        %v7532 = vpack.c.b16 %v7242, %v7232
        %v7533 = vpack.c.b16 %v7253, %v7243
        %v7534 = vpack.c.b16 %v7254, %v7244
        %v7535 = vpack.c.b16 %v7255, %v7245
        %v7536 = vpack.c.b16 %v7256, %v7246
        %v7537 = vpack.c.b16 %v7257, %v7247
        %v7538 = vpack.c.b16 %v7258, %v7248
        %v7539 = vpack.c.b16 %v7259, %v7249
        %v7540 = vpack.c.b16 %v7260, %v7250
        %v7541 = vpack.c.b16 %v7261, %v7251
        %v7542 = vpack.c.b16 %v7262, %v7252
        %v7543 = vpack.c.b16 %v7273, %v7263
        %v7544 = vpack.c.b16 %v7274, %v7264
        %v7545 = vpack.c.b16 %v7275, %v7265
        %v7546 = vpack.c.b16 %v7276, %v7266
        %v7547 = vpack.c.b16 %v7277, %v7267
        %v7548 = vpack.c.b16 %v7278, %v7268
        %v7549 = vpack.c.b16 %v7279, %v7269
        %v7550 = vpack.c.b16 %v7280, %v7270
        %v7551 = vpack.c.b16 %v7281, %v7271
        %v7552 = vpack.c.b16 %v7282, %v7272
        %v7553 = vpack.c.b16 %v7293, %v7283
        %v7554 = vpack.c.b16 %v7294, %v7284
        %v7555 = vpack.c.b16 %v7295, %v7285
        %v7556 = vpack.c.b16 %v7296, %v7286
        %v7557 = vpack.c.b16 %v7297, %v7287
        %v7558 = vpack.c.b16 %v7298, %v7288
        %v7559 = vpack.c.b16 %v7299, %v7289
        %v7560 = vpack.c.b16 %v7300, %v7290
        %v7561 = vpack.c.b16 %v7301, %v7291
        %v7562 = vpack.c.b16 %v7302, %v7292
        %v7563 = vpack.c.b16 %v7313, %v7303
        %v7564 = vpack.c.b16 %v7314, %v7304
        %v7565 = vpack.c.b16 %v7315, %v7305
        %v7566 = vpack.c.b16 %v7316, %v7306
        %v7567 = vpack.c.b16 %v7317, %v7307
        %v7568 = vpack.c.b16 %v7318, %v7308
        %v7569 = vpack.c.b16 %v7319, %v7309
        %v7570 = vpack.c.b16 %v7320, %v7310
        %v7571 = vpack.c.b16 %v7321, %v7311
        %v7572 = vpack.c.b16 %v7322, %v7312
        %v7573 = vpack.c.b16 %v7333, %v7323
        %v7574 = vpack.c.b16 %v7334, %v7324
        %v7575 = vpack.c.b16 %v7335, %v7325
        %v7576 = vpack.c.b16 %v7336, %v7326
        %v7577 = vpack.c.b16 %v7337, %v7327
        %v7578 = vpack.c.b16 %v7338, %v7328
        %v7579 = vpack.c.b16 %v7339, %v7329
        %v7580 = vpack.c.b16 %v7340, %v7330
        %v7581 = vpack.c.b16 %v7341, %v7331
        %v7582 = vpack.c.b16 %v7342, %v7332
        %v7583 = vpack.c.b16 %v7353, %v7343
        %v7584 = vpack.c.b16 %v7354, %v7344
        %v7585 = vpack.c.b16 %v7355, %v7345
        %v7586 = vpack.c.b16 %v7356, %v7346
        %v7587 = vpack.c.b16 %v7357, %v7347
        %v7588 = vpack.c.b16 %v7358, %v7348
        %v7589 = vpack.c.b16 %v7359, %v7349
        %v7590 = vpack.c.b16 %v7360, %v7350
        %v7591 = vpack.c.b16 %v7361, %v7351
        %v7592 = vpack.c.b16 %v7362, %v7352
        %v7593 = vpack.c.b16 %v7373, %v7363
        %v7594 = vpack.c.b16 %v7374, %v7364
        %v7595 = vpack.c.b16 %v7375, %v7365
        %v7596 = vpack.c.b16 %v7376, %v7366
        %v7597 = vpack.c.b16 %v7377, %v7367
        %v7598 = vpack.c.b16 %v7378, %v7368
        %v7599 = vpack.c.b16 %v7379, %v7369
        %v7600 = vpack.c.b16 %v7380, %v7370
        %v7601 = vpack.c.b16 %v7381, %v7371
        %v7602 = vpack.c.b16 %v7382, %v7372
        %v7603 = vpack.c.b16 %v7393, %v7383
        %v7604 = vpack.c.b16 %v7394, %v7384
        %v7605 = vpack.c.b16 %v7395, %v7385
        %v7606 = vpack.c.b16 %v7396, %v7386
        %v7607 = vpack.c.b16 %v7397, %v7387
        %v7608 = vpack.c.b16 %v7398, %v7388
        %v7609 = vpack.c.b16 %v7399, %v7389
        %v7610 = vpack.c.b16 %v7400, %v7390
        %v7611 = vpack.c.b16 %v7401, %v7391
        %v7612 = vpack.c.b16 %v7402, %v7392
        %v7613 = vpack.c.b16 %v7413, %v7403
        %v7614 = vpack.c.b16 %v7414, %v7404
        %v7615 = vpack.c.b16 %v7415, %v7405
        %v7616 = vpack.c.b16 %v7416, %v7406
        %v7617 = vpack.c.b16 %v7417, %v7407
        %v7618 = vpack.c.b16 %v7418, %v7408
        %v7619 = vpack.c.b16 %v7419, %v7409
        %v7620 = vpack.c.b16 %v7420, %v7410
        %v7621 = vpack.c.b16 %v7421, %v7411
        %v7622 = vpack.c.b16 %v7422, %v7412
        %v7623 = vpack.c.b16 %v7433, %v7423
        %v7624 = vpack.c.b16 %v7434, %v7424
        %v7625 = vpack.c.b16 %v7435, %v7425
        %v7626 = vpack.c.b16 %v7436, %v7426
        %v7627 = vpack.c.b16 %v7437, %v7427
        %v7628 = vpack.c.b16 %v7438, %v7428
        %v7629 = vpack.c.b16 %v7439, %v7429
        %v7630 = vpack.c.b16 %v7440, %v7430
        %v7631 = vpack.c.b16 %v7441, %v7431
        %v7632 = vpack.c.b16 %v7442, %v7432
        %v7633 = vpack.c.b16 %v7453, %v7443
        %v7634 = vpack.c.b16 %v7454, %v7444
        %v7635 = vpack.c.b16 %v7455, %v7445
        %v7636 = vpack.c.b16 %v7456, %v7446
        %v7637 = vpack.c.b16 %v7457, %v7447
        %v7638 = vpack.c.b16 %v7458, %v7448
        %v7639 = vpack.c.b16 %v7459, %v7449
        %v7640 = vpack.c.b16 %v7460, %v7450
        %v7641 = vpack.c.b16 %v7461, %v7451
        %v7642 = vpack.c.b16 %v7462, %v7452
        %v7643 = vpack.c.b16 %v7473, %v7463
        %v7644 = vpack.c.b16 %v7474, %v7464
        %v7645 = vpack.c.b16 %v7475, %v7465
        %v7646 = vpack.c.b16 %v7476, %v7466
        %v7647 = vpack.c.b16 %v7477, %v7467
        %v7648 = vpack.c.b16 %v7478, %v7468
        %v7649 = vpack.c.b16 %v7479, %v7469
        %v7650 = vpack.c.b16 %v7480, %v7470
        %v7651 = vpack.c.b16 %v7481, %v7471
        %v7652 = vpack.c.b16 %v7482, %v7472
        %v7653 = vpack.c.b16 %v7493, %v7483
        %v7654 = vpack.c.b16 %v7494, %v7484
        %v7655 = vpack.c.b16 %v7495, %v7485
        %v7656 = vpack.c.b16 %v7496, %v7486
        %v7657 = vpack.c.b16 %v7497, %v7487
        %v7658 = vpack.c.b16 %v7498, %v7488
        %v7659 = vpack.c.b16 %v7499, %v7489
        %v7660 = vpack.c.b16 %v7500, %v7490
        %v7661 = vpack.c.b16 %v7501, %v7491
        %v7662 = vpack.c.b16 %v7502, %v7492
        %7823 = vmatprep.subr.bf16.mxu0 %v7504
        %7824 = vmatpush1.bf16.msra.mxu0 %v7503
        %7825 = vmatprep.subr.bf16.mxu0 %v7514
        %7826 = vmatpush1.bf16.msra.mxu0 %v7513
        %7827 = vmatprep.subr.bf16.mxu0 %v7524
        %7828 = vmatpush1.bf16.msra.mxu0 %v7523
        %7829 = vmatprep.subr.bf16.mxu0 %v7534
        %7830 = vmatpush1.bf16.msra.mxu0 %v7533
        %7831 = vmatprep.subr.bf16.mxu0 %v7544
        %7832 = vmatpush1.bf16.msra.mxu0 %v7543
        %7833 = vmatprep.subr.bf16.mxu0 %v7554
        %7834 = vmatpush1.bf16.msra.mxu0 %v7553
        %7835 = vmatprep.subr.bf16.mxu0 %v7564
        %7836 = vmatpush1.bf16.msra.mxu0 %v7563
        %7837 = vmatprep.subr.bf16.mxu0 %v7574
        %7838 = vmatpush1.bf16.msra.mxu0 %v7573
        %7839 = vmatprep.subr.bf16.mxu0 %v7584
        %7840 = vmatpush1.bf16.msra.mxu0 %v7583
        %7841 = vmatprep.subr.bf16.mxu0 %v7594
        %7842 = vmatpush1.bf16.msra.mxu0 %v7593
        %7843 = vmatprep.subr.bf16.mxu0 %v7604
        %7844 = vmatpush1.bf16.msra.mxu0 %v7603
        %7845 = vmatprep.subr.bf16.mxu0 %v7614
        %7846 = vmatpush1.bf16.msra.mxu0 %v7613
        %7847 = vmatprep.subr.bf16.mxu0 %v7624
        %7848 = vmatpush1.bf16.msra.mxu0 %v7623
        %7849 = vmatprep.subr.bf16.mxu0 %v7634
        %7850 = vmatpush1.bf16.msra.mxu0 %v7633
        %7851 = vmatprep.subr.bf16.mxu0 %v7644
        %7852 = vmatpush1.bf16.msra.mxu0 %v7643
        %7853 = vmatprep.subr.bf16.mxu0 %v7654
        %7854 = vmatpush1.bf16.msra.mxu0 %v7653
        %7855 = vmatprep.mubr.bf16.mxu0 %v2886
        %7856 = vmatmul.mubr.bf16.gmra.mrb[0].mxu0 %v2885
        %v7857 = vpop.f32.mrb[0].mxu0
        %v7858 = vadd.f32 0.0, %v7857
        %v7859 = vpop.f32.mrb[0].mxu0
        %v7860 = vadd.f32 0.0, %v7859
        %v7861 = vpop.f32.mrb[0].mxu0
        %v7862 = vadd.f32 0.0, %v7861
        %v7863 = vpop.f32.mrb[0].mxu0
        %v7864 = vadd.f32 0.0, %v7863
        %7865 = vmatprep.mubr.bf16.mxu0 %v2888
        %7866 = vmatmul.mubr.bf16.gmra.mrb[0].mxu0 %v2887
        %v7867 = vpop.f32.mrb[0].mxu0
        %v7868 = vadd.f32 0.0, %v7867
        %v7869 = vpop.f32.mrb[0].mxu0
        %v7870 = vadd.f32 0.0, %v7869
        %v7871 = vpop.f32.mrb[0].mxu0
        %v7872 = vadd.f32 0.0, %v7871
        %v7873 = vpop.f32.mrb[0].mxu0
        %v7874 = vadd.f32 0.0, %v7873
        %7875 = vmatprep.mubr.bf16.mxu0 %v2890
        %7876 = vmatmul.mubr.bf16.gmra.mrb[0].mxu0 %v2889
        %v7877 = vpop.f32.mrb[0].mxu0
        %v7878 = vadd.f32 0.0, %v7877
        %v7879 = vpop.f32.mrb[0].mxu0
        %v7880 = vadd.f32 0.0, %v7879
        %v7881 = vpop.f32.mrb[0].mxu0
        %v7882 = vadd.f32 0.0, %v7881
        %v7883 = vpop.f32.mrb[0].mxu0
        %v7884 = vadd.f32 0.0, %v7883
        %7885 = vmatprep.mubr.bf16.mxu0 %v2892
        %7886 = vmatmul.mubr.bf16.gmra.mrb[0].mxu0 %v2891
        %v7887 = vpop.f32.mrb[0].mxu0
        %v7888 = vadd.f32 0.0, %v7887
        %v7889 = vpop.f32.mrb[0].mxu0
        %v7890 = vadd.f32 0.0, %v7889
        %v7891 = vpop.f32.mrb[0].mxu0
        %v7892 = vadd.f32 0.0, %v7891
        %v7893 = vpop.f32.mrb[0].mxu0
        %v7894 = vadd.f32 0.0, %v7893
        %7895 = vmatprep.mubr.bf16.mxu0 %v2894
        %7896 = vmatmul.mubr.bf16.gmra.mrb[0].mxu0 %v2893
        %v7897 = vpop.f32.mrb[0].mxu0
        %v7898 = vadd.f32 0.0, %v7897
        %v7899 = vpop.f32.mrb[0].mxu0
        %v7900 = vadd.f32 0.0, %v7899
        %v7901 = vpop.f32.mrb[0].mxu0
        %v7902 = vadd.f32 0.0, %v7901
        %v7903 = vpop.f32.mrb[0].mxu0
        %v7904 = vadd.f32 0.0, %v7903
        %7905 = vmatprep.mubr.bf16.mxu0 %v2896
        %7906 = vmatmul.mubr.bf16.gmra.mrb[0].mxu0 %v2895
        %v7907 = vpop.f32.mrb[0].mxu0
        %v7908 = vadd.f32 0.0, %v7907
        %v7909 = vpop.f32.mrb[0].mxu0
        %v7910 = vadd.f32 0.0, %v7909
        %v7911 = vpop.f32.mrb[0].mxu0
        %v7912 = vadd.f32 0.0, %v7911
        %v7913 = vpop.f32.mrb[0].mxu0
        %v7914 = vadd.f32 0.0, %v7913
        %7915 = vmatprep.mubr.bf16.mxu0 %v2898
        %7916 = vmatmul.mubr.bf16.gmra.mrb[0].mxu0 %v2897
        %v7917 = vpop.f32.mrb[0].mxu0
        %v7918 = vadd.f32 0.0, %v7917
        %v7919 = vpop.f32.mrb[0].mxu0
        %v7920 = vadd.f32 0.0, %v7919
        %v7921 = vpop.f32.mrb[0].mxu0
        %v7922 = vadd.f32 0.0, %v7921
        %v7923 = vpop.f32.mrb[0].mxu0
        %v7924 = vadd.f32 0.0, %v7923
        %7925 = vmatprep.mubr.bf16.mxu0 %v2900
        %7926 = vmatmul.mubr.bf16.gmra.mrb[0].mxu0 %v2899
        %v7927 = vpop.f32.mrb[0].mxu0
        %v7928 = vadd.f32 0.0, %v7927
        %v7929 = vpop.f32.mrb[0].mxu0
        %v7930 = vadd.f32 0.0, %v7929
        %v7931 = vpop.f32.mrb[0].mxu0
        %v7932 = vadd.f32 0.0, %v7931
        %v7933 = vpop.f32.mrb[0].mxu0
        %v7934 = vadd.f32 0.0, %v7933
        %7935 = vmatprep.mubr.bf16.mxu0 %v2902
        %7936 = vmatmul.mubr.bf16.gmra.mrb[0].mxu0 %v2901
        %v7937 = vpop.f32.mrb[0].mxu0
        %v7938 = vadd.f32 0.0, %v7937
        %v7939 = vpop.f32.mrb[0].mxu0
        %v7940 = vadd.f32 0.0, %v7939
        %v7941 = vpop.f32.mrb[0].mxu0
        %v7942 = vadd.f32 0.0, %v7941
        %v7943 = vpop.f32.mrb[0].mxu0
        %v7944 = vadd.f32 0.0, %v7943
        %7945 = vmatprep.mubr.bf16.mxu0 %v2904
        %7946 = vmatmul.mubr.bf16.gmra.mrb[0].mxu0 %v2903
        %v7947 = vpop.f32.mrb[0].mxu0
        %v7948 = vadd.f32 0.0, %v7947
        %v7949 = vpop.f32.mrb[0].mxu0
        %v7950 = vadd.f32 0.0, %v7949
        %v7951 = vpop.f32.mrb[0].mxu0
        %v7952 = vadd.f32 0.0, %v7951
        %v7953 = vpop.f32.mrb[0].mxu0
        %v7954 = vadd.f32 0.0, %v7953
        %7955 = vmatprep.mubr.bf16.mxu0 %v2906
        %7956 = vmatmul.mubr.bf16.gmra.mrb[0].mxu0 %v2905
        %v7957 = vpop.f32.mrb[0].mxu0
        %v7958 = vadd.f32 0.0, %v7957
        %v7959 = vpop.f32.mrb[0].mxu0
        %v7960 = vadd.f32 0.0, %v7959
        %v7961 = vpop.f32.mrb[0].mxu0
        %v7962 = vadd.f32 0.0, %v7961
        %v7963 = vpop.f32.mrb[0].mxu0
        %v7964 = vadd.f32 0.0, %v7963
        %7965 = vmatprep.mubr.bf16.mxu0 %v2908
        %7966 = vmatmul.mubr.bf16.gmra.mrb[0].mxu0 %v2907
        %v7967 = vpop.f32.mrb[0].mxu0
        %v7968 = vadd.f32 0.0, %v7967
        %v7969 = vpop.f32.mrb[0].mxu0
        %v7970 = vadd.f32 0.0, %v7969
        %v7971 = vpop.f32.mrb[0].mxu0
        %v7972 = vadd.f32 0.0, %v7971
        %v7973 = vpop.f32.mrb[0].mxu0
        %v7974 = vadd.f32 0.0, %v7973
        %7975 = vmatprep.mubr.bf16.mxu0 %v2910
        %7976 = vmatmul.mubr.bf16.gmra.mrb[0].mxu0 %v2909
        %v7977 = vpop.f32.mrb[0].mxu0
        %v7978 = vadd.f32 0.0, %v7977
        %v7979 = vpop.f32.mrb[0].mxu0
        %v7980 = vadd.f32 0.0, %v7979
        %v7981 = vpop.f32.mrb[0].mxu0
        %v7982 = vadd.f32 0.0, %v7981
        %v7983 = vpop.f32.mrb[0].mxu0
        %v7984 = vadd.f32 0.0, %v7983
        %7985 = vmatprep.mubr.bf16.mxu0 %v2912
        %7986 = vmatmul.mubr.bf16.gmra.mrb[0].mxu0 %v2911
        %v7987 = vpop.f32.mrb[0].mxu0
        %v7988 = vadd.f32 0.0, %v7987
        %v7989 = vpop.f32.mrb[0].mxu0
        %v7990 = vadd.f32 0.0, %v7989
        %v7991 = vpop.f32.mrb[0].mxu0
        %v7992 = vadd.f32 0.0, %v7991
        %v7993 = vpop.f32.mrb[0].mxu0
        %v7994 = vadd.f32 0.0, %v7993
        %7995 = vmatprep.mubr.bf16.mxu0 %v2914
        %7996 = vmatmul.mubr.bf16.gmra.mrb[0].mxu0 %v2913
        %v7997 = vpop.f32.mrb[0].mxu0
        %v7998 = vadd.f32 0.0, %v7997
        %v7999 = vpop.f32.mrb[0].mxu0
        %v8000 = vadd.f32 0.0, %v7999
        %v8001 = vpop.f32.mrb[0].mxu0
        %v8002 = vadd.f32 0.0, %v8001
        %v8003 = vpop.f32.mrb[0].mxu0
        %v8004 = vadd.f32 0.0, %v8003
        %8005 = vmatprep.mubr.bf16.mxu0 %v2916
        %8006 = vmatmul.mubr.bf16.gmra.mrb[0].mxu0 %v2915
        %v8007 = vpop.f32.mrb[0].mxu0
        %v8008 = vadd.f32 0.0, %v8007
        %v8009 = vpop.f32.mrb[0].mxu0
        %v8010 = vadd.f32 0.0, %v8009
        %v8011 = vpop.f32.mrb[0].mxu0
        %v8012 = vadd.f32 0.0, %v8011
        %v8013 = vpop.f32.mrb[0].mxu0
        %v8014 = vadd.f32 0.0, %v8013
        %8015 = vmatprep.mubr.bf16.mxu0 %v2918
        %8016 = vmatmul.mubr.bf16.gmra.mrb[0].mxu0 %v2917
        %v8017 = vpop.f32.mrb[0].mxu0
        %v8018 = vadd.f32 0.0, %v8017
        %v8019 = vpop.f32.mrb[0].mxu0
        %v8020 = vadd.f32 0.0, %v8019
        %v8021 = vpop.f32.mrb[0].mxu0
        %v8022 = vadd.f32 0.0, %v8021
        %v8023 = vpop.f32.mrb[0].mxu0
        %v8024 = vadd.f32 0.0, %v8023
        %8025 = vmatprep.mubr.bf16.mxu0 %v2920
        %8026 = vmatmul.mubr.bf16.gmra.mrb[0].mxu0 %v2919
        %v8027 = vpop.f32.mrb[0].mxu0
        %v8028 = vadd.f32 0.0, %v8027
        %v8029 = vpop.f32.mrb[0].mxu0
        %v8030 = vadd.f32 0.0, %v8029
        %v8031 = vpop.f32.mrb[0].mxu0
        %v8032 = vadd.f32 0.0, %v8031
        %v8033 = vpop.f32.mrb[0].mxu0
        %v8034 = vadd.f32 0.0, %v8033
        %8035 = vmatprep.mubr.bf16.mxu0 %v2922
        %8036 = vmatmul.mubr.bf16.gmra.mrb[0].mxu0 %v2921
        %v8037 = vpop.f32.mrb[0].mxu0
        %v8038 = vadd.f32 0.0, %v8037
        %v8039 = vpop.f32.mrb[0].mxu0
        %v8040 = vadd.f32 0.0, %v8039
        %v8041 = vpop.f32.mrb[0].mxu0
        %v8042 = vadd.f32 0.0, %v8041
        %v8043 = vpop.f32.mrb[0].mxu0
        %v8044 = vadd.f32 0.0, %v8043
        %8045 = vmatprep.mubr.bf16.mxu0 %v2924
        %8046 = vmatmul.mubr.bf16.gmra.mrb[0].mxu0 %v2923
        %v8047 = vpop.f32.mrb[0].mxu0
        %v8048 = vadd.f32 0.0, %v8047
        %v8049 = vpop.f32.mrb[0].mxu0
        %v8050 = vadd.f32 0.0, %v8049
        %v8051 = vpop.f32.mrb[0].mxu0
        %v8052 = vadd.f32 0.0, %v8051
        %v8053 = vpop.f32.mrb[0].mxu0
        %v8054 = vadd.f32 0.0, %v8053
        %8055 = vmatprep.mubr.bf16.mxu0 %v2926
        %8056 = vmatmul.mubr.bf16.gmra.mrb[0].mxu0 %v2925
        %v8057 = vpop.f32.mrb[0].mxu0
        %v8058 = vadd.f32 0.0, %v8057
        %v8059 = vpop.f32.mrb[0].mxu0
        %v8060 = vadd.f32 0.0, %v8059
        %v8061 = vpop.f32.mrb[0].mxu0
        %v8062 = vadd.f32 0.0, %v8061
        %v8063 = vpop.f32.mrb[0].mxu0
        %v8064 = vadd.f32 0.0, %v8063
        %8065 = vmatprep.mubr.bf16.mxu0 %v2928
        %8066 = vmatmul.mubr.bf16.gmra.mrb[0].mxu0 %v2927
        %v8067 = vpop.f32.mrb[0].mxu0
        %v8068 = vadd.f32 0.0, %v8067
        %v8069 = vpop.f32.mrb[0].mxu0
        %v8070 = vadd.f32 0.0, %v8069
        %v8071 = vpop.f32.mrb[0].mxu0
        %v8072 = vadd.f32 0.0, %v8071
        %v8073 = vpop.f32.mrb[0].mxu0
        %v8074 = vadd.f32 0.0, %v8073
        %8075 = vmatprep.mubr.bf16.mxu0 %v2930
        %8076 = vmatmul.mubr.bf16.gmra.mrb[0].mxu0 %v2929
        %v8077 = vpop.f32.mrb[0].mxu0
        %v8078 = vadd.f32 0.0, %v8077
        %v8079 = vpop.f32.mrb[0].mxu0
        %v8080 = vadd.f32 0.0, %v8079
        %v8081 = vpop.f32.mrb[0].mxu0
        %v8082 = vadd.f32 0.0, %v8081
        %v8083 = vpop.f32.mrb[0].mxu0
        %v8084 = vadd.f32 0.0, %v8083
        %8085 = vmatprep.mubr.bf16.mxu0 %v2932
        %8086 = vmatmul.mubr.bf16.gmra.mrb[0].mxu0 %v2931
        %v8087 = vpop.f32.mrb[0].mxu0
        %v8088 = vadd.f32 0.0, %v8087
        %v8089 = vpop.f32.mrb[0].mxu0
        %v8090 = vadd.f32 0.0, %v8089
        %v8091 = vpop.f32.mrb[0].mxu0
        %v8092 = vadd.f32 0.0, %v8091
        %v8093 = vpop.f32.mrb[0].mxu0
        %v8094 = vadd.f32 0.0, %v8093
        %8095 = vdwg.mxu0
        %8096 = vmatprep.subr.bf16.mxu0 %v7506
        %8097 = vmatpush1.bf16.msra.mxu0 %v7505
        %8098 = vmatprep.subr.bf16.mxu0 %v7516
        %8099 = vmatpush1.bf16.msra.mxu0 %v7515
        %8100 = vmatprep.subr.bf16.mxu0 %v7526
        %8101 = vmatpush1.bf16.msra.mxu0 %v7525
        %8102 = vmatprep.subr.bf16.mxu0 %v7536
        %8103 = vmatpush1.bf16.msra.mxu0 %v7535
        %8104 = vmatprep.subr.bf16.mxu0 %v7546
        %8105 = vmatpush1.bf16.msra.mxu0 %v7545
        %8106 = vmatprep.subr.bf16.mxu0 %v7556
        %8107 = vmatpush1.bf16.msra.mxu0 %v7555
        %8108 = vmatprep.subr.bf16.mxu0 %v7566
        %8109 = vmatpush1.bf16.msra.mxu0 %v7565
        %8110 = vmatprep.subr.bf16.mxu0 %v7576
        %8111 = vmatpush1.bf16.msra.mxu0 %v7575
        %8112 = vmatprep.subr.bf16.mxu0 %v7586
        %8113 = vmatpush1.bf16.msra.mxu0 %v7585
        %8114 = vmatprep.subr.bf16.mxu0 %v7596
        %8115 = vmatpush1.bf16.msra.mxu0 %v7595
        %8116 = vmatprep.subr.bf16.mxu0 %v7606
        %8117 = vmatpush1.bf16.msra.mxu0 %v7605
        %8118 = vmatprep.subr.bf16.mxu0 %v7616
        %8119 = vmatpush1.bf16.msra.mxu0 %v7615
        %8120 = vmatprep.subr.bf16.mxu0 %v7626
        %8121 = vmatpush1.bf16.msra.mxu0 %v7625
        %8122 = vmatprep.subr.bf16.mxu0 %v7636
        %8123 = vmatpush1.bf16.msra.mxu0 %v7635
        %8124 = vmatprep.subr.bf16.mxu0 %v7646
        %8125 = vmatpush1.bf16.msra.mxu0 %v7645
        %8126 = vmatprep.subr.bf16.mxu0 %v7656
        %8127 = vmatpush1.bf16.msra.mxu0 %v7655
        %8128 = vmatprep.mubr.bf16.mxu0 %v2886
        %8129 = vmatmul.mubr.bf16.gmra.mrb[0].mxu0 %v2885
        %v8130 = vpop.f32.mrb[0].mxu0
        %v8131 = vadd.f32 0.0, %v8130
        %v8132 = vpop.f32.mrb[0].mxu0
        %v8133 = vadd.f32 0.0, %v8132
        %v8134 = vpop.f32.mrb[0].mxu0
        %v8135 = vadd.f32 0.0, %v8134
        %v8136 = vpop.f32.mrb[0].mxu0
        %v8137 = vadd.f32 0.0, %v8136
        %8138 = vmatprep.mubr.bf16.mxu0 %v2888
        %8139 = vmatmul.mubr.bf16.gmra.mrb[0].mxu0 %v2887
        %v8140 = vpop.f32.mrb[0].mxu0
        %v8141 = vadd.f32 0.0, %v8140
        %v8142 = vpop.f32.mrb[0].mxu0
        %v8143 = vadd.f32 0.0, %v8142
        %v8144 = vpop.f32.mrb[0].mxu0
        %v8145 = vadd.f32 0.0, %v8144
        %v8146 = vpop.f32.mrb[0].mxu0
        %v8147 = vadd.f32 0.0, %v8146
        %8148 = vmatprep.mubr.bf16.mxu0 %v2890
        %8149 = vmatmul.mubr.bf16.gmra.mrb[0].mxu0 %v2889
        %v8150 = vpop.f32.mrb[0].mxu0
        %v8151 = vadd.f32 0.0, %v8150
        %v8152 = vpop.f32.mrb[0].mxu0
        %v8153 = vadd.f32 0.0, %v8152
        %v8154 = vpop.f32.mrb[0].mxu0
        %v8155 = vadd.f32 0.0, %v8154
        %v8156 = vpop.f32.mrb[0].mxu0
        %v8157 = vadd.f32 0.0, %v8156
        %8158 = vmatprep.mubr.bf16.mxu0 %v2892
        %8159 = vmatmul.mubr.bf16.gmra.mrb[0].mxu0 %v2891
        %v8160 = vpop.f32.mrb[0].mxu0
        %v8161 = vadd.f32 0.0, %v8160
        %v8162 = vpop.f32.mrb[0].mxu0
        %v8163 = vadd.f32 0.0, %v8162
        %v8164 = vpop.f32.mrb[0].mxu0
        %v8165 = vadd.f32 0.0, %v8164
        %v8166 = vpop.f32.mrb[0].mxu0
        %v8167 = vadd.f32 0.0, %v8166
        %8168 = vmatprep.mubr.bf16.mxu0 %v2894
        %8169 = vmatmul.mubr.bf16.gmra.mrb[0].mxu0 %v2893
        %v8170 = vpop.f32.mrb[0].mxu0
        %v8171 = vadd.f32 0.0, %v8170
        %v8172 = vpop.f32.mrb[0].mxu0
        %v8173 = vadd.f32 0.0, %v8172
        %v8174 = vpop.f32.mrb[0].mxu0
        %v8175 = vadd.f32 0.0, %v8174
        %v8176 = vpop.f32.mrb[0].mxu0
        %v8177 = vadd.f32 0.0, %v8176
        %8178 = vmatprep.mubr.bf16.mxu0 %v2896
        %8179 = vmatmul.mubr.bf16.gmra.mrb[0].mxu0 %v2895
        %v8180 = vpop.f32.mrb[0].mxu0
        %v8181 = vadd.f32 0.0, %v8180
        %v8182 = vpop.f32.mrb[0].mxu0
        %v8183 = vadd.f32 0.0, %v8182
        %v8184 = vpop.f32.mrb[0].mxu0
        %v8185 = vadd.f32 0.0, %v8184
        %v8186 = vpop.f32.mrb[0].mxu0
        %v8187 = vadd.f32 0.0, %v8186
        %8188 = vmatprep.mubr.bf16.mxu0 %v2898
        %8189 = vmatmul.mubr.bf16.gmra.mrb[0].mxu0 %v2897
        %v8190 = vpop.f32.mrb[0].mxu0
        %v8191 = vadd.f32 0.0, %v8190
        %v8192 = vpop.f32.mrb[0].mxu0
        %v8193 = vadd.f32 0.0, %v8192
        %v8194 = vpop.f32.mrb[0].mxu0
        %v8195 = vadd.f32 0.0, %v8194
        %v8196 = vpop.f32.mrb[0].mxu0
        %v8197 = vadd.f32 0.0, %v8196
        %8198 = vmatprep.mubr.bf16.mxu0 %v2900
        %8199 = vmatmul.mubr.bf16.gmra.mrb[0].mxu0 %v2899
        %v8200 = vpop.f32.mrb[0].mxu0
        %v8201 = vadd.f32 0.0, %v8200
        %v8202 = vpop.f32.mrb[0].mxu0
        %v8203 = vadd.f32 0.0, %v8202
        %v8204 = vpop.f32.mrb[0].mxu0
        %v8205 = vadd.f32 0.0, %v8204
        %v8206 = vpop.f32.mrb[0].mxu0
        %v8207 = vadd.f32 0.0, %v8206
        %8208 = vmatprep.mubr.bf16.mxu0 %v2902
        %8209 = vmatmul.mubr.bf16.gmra.mrb[0].mxu0 %v2901
        %v8210 = vpop.f32.mrb[0].mxu0
        %v8211 = vadd.f32 0.0, %v8210
        %v8212 = vpop.f32.mrb[0].mxu0
        %v8213 = vadd.f32 0.0, %v8212
        %v8214 = vpop.f32.mrb[0].mxu0
        %v8215 = vadd.f32 0.0, %v8214
        %v8216 = vpop.f32.mrb[0].mxu0
        %v8217 = vadd.f32 0.0, %v8216
        %8218 = vmatprep.mubr.bf16.mxu0 %v2904
        %8219 = vmatmul.mubr.bf16.gmra.mrb[0].mxu0 %v2903
        %v8220 = vpop.f32.mrb[0].mxu0
        %v8221 = vadd.f32 0.0, %v8220
        %v8222 = vpop.f32.mrb[0].mxu0
        %v8223 = vadd.f32 0.0, %v8222
        %v8224 = vpop.f32.mrb[0].mxu0
        %v8225 = vadd.f32 0.0, %v8224
        %v8226 = vpop.f32.mrb[0].mxu0
        %v8227 = vadd.f32 0.0, %v8226
        %8228 = vmatprep.mubr.bf16.mxu0 %v2906
        %8229 = vmatmul.mubr.bf16.gmra.mrb[0].mxu0 %v2905
        %v8230 = vpop.f32.mrb[0].mxu0
        %v8231 = vadd.f32 0.0, %v8230
        %v8232 = vpop.f32.mrb[0].mxu0
        %v8233 = vadd.f32 0.0, %v8232
        %v8234 = vpop.f32.mrb[0].mxu0
        %v8235 = vadd.f32 0.0, %v8234
        %v8236 = vpop.f32.mrb[0].mxu0
        %v8237 = vadd.f32 0.0, %v8236
        %8238 = vmatprep.mubr.bf16.mxu0 %v2908
        %8239 = vmatmul.mubr.bf16.gmra.mrb[0].mxu0 %v2907
        %v8240 = vpop.f32.mrb[0].mxu0
        %v8241 = vadd.f32 0.0, %v8240
        %v8242 = vpop.f32.mrb[0].mxu0
        %v8243 = vadd.f32 0.0, %v8242
        %v8244 = vpop.f32.mrb[0].mxu0
        %v8245 = vadd.f32 0.0, %v8244
        %v8246 = vpop.f32.mrb[0].mxu0
        %v8247 = vadd.f32 0.0, %v8246
        %8248 = vmatprep.mubr.bf16.mxu0 %v2910
        %8249 = vmatmul.mubr.bf16.gmra.mrb[0].mxu0 %v2909
        %v8250 = vpop.f32.mrb[0].mxu0
        %v8251 = vadd.f32 0.0, %v8250
        %v8252 = vpop.f32.mrb[0].mxu0
        %v8253 = vadd.f32 0.0, %v8252
        %v8254 = vpop.f32.mrb[0].mxu0
        %v8255 = vadd.f32 0.0, %v8254
        %v8256 = vpop.f32.mrb[0].mxu0
        %v8257 = vadd.f32 0.0, %v8256
        %8258 = vmatprep.mubr.bf16.mxu0 %v2912
        %8259 = vmatmul.mubr.bf16.gmra.mrb[0].mxu0 %v2911
        %v8260 = vpop.f32.mrb[0].mxu0
        %v8261 = vadd.f32 0.0, %v8260
        %v8262 = vpop.f32.mrb[0].mxu0
        %v8263 = vadd.f32 0.0, %v8262
        %v8264 = vpop.f32.mrb[0].mxu0
        %v8265 = vadd.f32 0.0, %v8264
        %v8266 = vpop.f32.mrb[0].mxu0
        %v8267 = vadd.f32 0.0, %v8266
        %8268 = vmatprep.mubr.bf16.mxu0 %v2914
        %8269 = vmatmul.mubr.bf16.gmra.mrb[0].mxu0 %v2913
        %v8270 = vpop.f32.mrb[0].mxu0
        %v8271 = vadd.f32 0.0, %v8270
        %v8272 = vpop.f32.mrb[0].mxu0
        %v8273 = vadd.f32 0.0, %v8272
        %v8274 = vpop.f32.mrb[0].mxu0
        %v8275 = vadd.f32 0.0, %v8274
        %v8276 = vpop.f32.mrb[0].mxu0
        %v8277 = vadd.f32 0.0, %v8276
        %8278 = vmatprep.mubr.bf16.mxu0 %v2916
        %8279 = vmatmul.mubr.bf16.gmra.mrb[0].mxu0 %v2915
        %v8280 = vpop.f32.mrb[0].mxu0
        %v8281 = vadd.f32 0.0, %v8280
        %v8282 = vpop.f32.mrb[0].mxu0
        %v8283 = vadd.f32 0.0, %v8282
        %v8284 = vpop.f32.mrb[0].mxu0
        %v8285 = vadd.f32 0.0, %v8284
        %v8286 = vpop.f32.mrb[0].mxu0
        %v8287 = vadd.f32 0.0, %v8286
        %8288 = vmatprep.mubr.bf16.mxu0 %v2918
        %8289 = vmatmul.mubr.bf16.gmra.mrb[0].mxu0 %v2917
        %v8290 = vpop.f32.mrb[0].mxu0
        %v8291 = vadd.f32 0.0, %v8290
        %v8292 = vpop.f32.mrb[0].mxu0
        %v8293 = vadd.f32 0.0, %v8292
        %v8294 = vpop.f32.mrb[0].mxu0
        %v8295 = vadd.f32 0.0, %v8294
        %v8296 = vpop.f32.mrb[0].mxu0
        %v8297 = vadd.f32 0.0, %v8296
        %8298 = vmatprep.mubr.bf16.mxu0 %v2920
        %8299 = vmatmul.mubr.bf16.gmra.mrb[0].mxu0 %v2919
        %v8300 = vpop.f32.mrb[0].mxu0
        %v8301 = vadd.f32 0.0, %v8300
        %v8302 = vpop.f32.mrb[0].mxu0
        %v8303 = vadd.f32 0.0, %v8302
        %v8304 = vpop.f32.mrb[0].mxu0
        %v8305 = vadd.f32 0.0, %v8304
        %v8306 = vpop.f32.mrb[0].mxu0
        %v8307 = vadd.f32 0.0, %v8306
        %8308 = vmatprep.mubr.bf16.mxu0 %v2922
        %8309 = vmatmul.mubr.bf16.gmra.mrb[0].mxu0 %v2921
        %v8310 = vpop.f32.mrb[0].mxu0
        %v8311 = vadd.f32 0.0, %v8310
        %v8312 = vpop.f32.mrb[0].mxu0
        %v8313 = vadd.f32 0.0, %v8312
        %v8314 = vpop.f32.mrb[0].mxu0
        %v8315 = vadd.f32 0.0, %v8314
        %v8316 = vpop.f32.mrb[0].mxu0
        %v8317 = vadd.f32 0.0, %v8316
        %8318 = vmatprep.mubr.bf16.mxu0 %v2924
        %8319 = vmatmul.mubr.bf16.gmra.mrb[0].mxu0 %v2923
        %v8320 = vpop.f32.mrb[0].mxu0
        %v8321 = vadd.f32 0.0, %v8320
        %v8322 = vpop.f32.mrb[0].mxu0
        %v8323 = vadd.f32 0.0, %v8322
        %v8324 = vpop.f32.mrb[0].mxu0
        %v8325 = vadd.f32 0.0, %v8324
        %v8326 = vpop.f32.mrb[0].mxu0
        %v8327 = vadd.f32 0.0, %v8326
        %8328 = vmatprep.mubr.bf16.mxu0 %v2926
        %8329 = vmatmul.mubr.bf16.gmra.mrb[0].mxu0 %v2925
        %v8330 = vpop.f32.mrb[0].mxu0
        %v8331 = vadd.f32 0.0, %v8330
        %v8332 = vpop.f32.mrb[0].mxu0
        %v8333 = vadd.f32 0.0, %v8332
        %v8334 = vpop.f32.mrb[0].mxu0
        %v8335 = vadd.f32 0.0, %v8334
        %v8336 = vpop.f32.mrb[0].mxu0
        %v8337 = vadd.f32 0.0, %v8336
        %8338 = vmatprep.mubr.bf16.mxu0 %v2928
        %8339 = vmatmul.mubr.bf16.gmra.mrb[0].mxu0 %v2927
        %v8340 = vpop.f32.mrb[0].mxu0
        %v8341 = vadd.f32 0.0, %v8340
        %v8342 = vpop.f32.mrb[0].mxu0
        %v8343 = vadd.f32 0.0, %v8342
        %v8344 = vpop.f32.mrb[0].mxu0
        %v8345 = vadd.f32 0.0, %v8344
        %v8346 = vpop.f32.mrb[0].mxu0
        %v8347 = vadd.f32 0.0, %v8346
        %8348 = vmatprep.mubr.bf16.mxu0 %v2930
        %8349 = vmatmul.mubr.bf16.gmra.mrb[0].mxu0 %v2929
        %v8350 = vpop.f32.mrb[0].mxu0
        %v8351 = vadd.f32 0.0, %v8350
        %v8352 = vpop.f32.mrb[0].mxu0
        %v8353 = vadd.f32 0.0, %v8352
        %v8354 = vpop.f32.mrb[0].mxu0
        %v8355 = vadd.f32 0.0, %v8354
        %v8356 = vpop.f32.mrb[0].mxu0
        %v8357 = vadd.f32 0.0, %v8356
        %8358 = vmatprep.mubr.bf16.mxu0 %v2932
        %8359 = vmatmul.mubr.bf16.gmra.mrb[0].mxu0 %v2931
        %v8360 = vpop.f32.mrb[0].mxu0
        %v8361 = vadd.f32 0.0, %v8360
        %v8362 = vpop.f32.mrb[0].mxu0
        %v8363 = vadd.f32 0.0, %v8362
        %v8364 = vpop.f32.mrb[0].mxu0
        %v8365 = vadd.f32 0.0, %v8364
        %v8366 = vpop.f32.mrb[0].mxu0
        %v8367 = vadd.f32 0.0, %v8366
        %8368 = vdwg.mxu0
        %8369 = vmatprep.subr.bf16.mxu0 %v7508
        %8370 = vmatpush1.bf16.msra.mxu0 %v7507
        %8371 = vmatprep.subr.bf16.mxu0 %v7518
        %8372 = vmatpush1.bf16.msra.mxu0 %v7517
        %8373 = vmatprep.subr.bf16.mxu0 %v7528
        %8374 = vmatpush1.bf16.msra.mxu0 %v7527
        %8375 = vmatprep.subr.bf16.mxu0 %v7538
        %8376 = vmatpush1.bf16.msra.mxu0 %v7537
        %8377 = vmatprep.subr.bf16.mxu0 %v7548
        %8378 = vmatpush1.bf16.msra.mxu0 %v7547
        %8379 = vmatprep.subr.bf16.mxu0 %v7558
        %8380 = vmatpush1.bf16.msra.mxu0 %v7557
        %8381 = vmatprep.subr.bf16.mxu0 %v7568
        %8382 = vmatpush1.bf16.msra.mxu0 %v7567
        %8383 = vmatprep.subr.bf16.mxu0 %v7578
        %8384 = vmatpush1.bf16.msra.mxu0 %v7577
        %8385 = vmatprep.subr.bf16.mxu0 %v7588
        %8386 = vmatpush1.bf16.msra.mxu0 %v7587
        %8387 = vmatprep.subr.bf16.mxu0 %v7598
        %8388 = vmatpush1.bf16.msra.mxu0 %v7597
        %8389 = vmatprep.subr.bf16.mxu0 %v7608
        %8390 = vmatpush1.bf16.msra.mxu0 %v7607
        %8391 = vmatprep.subr.bf16.mxu0 %v7618
        %8392 = vmatpush1.bf16.msra.mxu0 %v7617
        %8393 = vmatprep.subr.bf16.mxu0 %v7628
        %8394 = vmatpush1.bf16.msra.mxu0 %v7627
        %8395 = vmatprep.subr.bf16.mxu0 %v7638
        %8396 = vmatpush1.bf16.msra.mxu0 %v7637
        %8397 = vmatprep.subr.bf16.mxu0 %v7648
        %8398 = vmatpush1.bf16.msra.mxu0 %v7647
        %8399 = vmatprep.subr.bf16.mxu0 %v7658
        %8400 = vmatpush1.bf16.msra.mxu0 %v7657
        %8401 = vmatprep.mubr.bf16.mxu0 %v2886
        %8402 = vmatmul.mubr.bf16.gmra.mrb[0].mxu0 %v2885
        %v8403 = vpop.f32.mrb[0].mxu0
        %v8404 = vadd.f32 0.0, %v8403
        %v8405 = vpop.f32.mrb[0].mxu0
        %v8406 = vadd.f32 0.0, %v8405
        %v8407 = vpop.f32.mrb[0].mxu0
        %v8408 = vadd.f32 0.0, %v8407
        %v8409 = vpop.f32.mrb[0].mxu0
        %v8410 = vadd.f32 0.0, %v8409
        %8411 = vmatprep.mubr.bf16.mxu0 %v2888
        %8412 = vmatmul.mubr.bf16.gmra.mrb[0].mxu0 %v2887
        %v8413 = vpop.f32.mrb[0].mxu0
        %v8414 = vadd.f32 0.0, %v8413
        %v8415 = vpop.f32.mrb[0].mxu0
        %v8416 = vadd.f32 0.0, %v8415
        %v8417 = vpop.f32.mrb[0].mxu0
        %v8418 = vadd.f32 0.0, %v8417
        %v8419 = vpop.f32.mrb[0].mxu0
        %v8420 = vadd.f32 0.0, %v8419
        %8421 = vmatprep.mubr.bf16.mxu0 %v2890
        %8422 = vmatmul.mubr.bf16.gmra.mrb[0].mxu0 %v2889
        %v8423 = vpop.f32.mrb[0].mxu0
        %v8424 = vadd.f32 0.0, %v8423
        %v8425 = vpop.f32.mrb[0].mxu0
        %v8426 = vadd.f32 0.0, %v8425
        %v8427 = vpop.f32.mrb[0].mxu0
        %v8428 = vadd.f32 0.0, %v8427
        %v8429 = vpop.f32.mrb[0].mxu0
        %v8430 = vadd.f32 0.0, %v8429
        %8431 = vmatprep.mubr.bf16.mxu0 %v2892
        %8432 = vmatmul.mubr.bf16.gmra.mrb[0].mxu0 %v2891
        %v8433 = vpop.f32.mrb[0].mxu0
        %v8434 = vadd.f32 0.0, %v8433
        %v8435 = vpop.f32.mrb[0].mxu0
        %v8436 = vadd.f32 0.0, %v8435
        %v8437 = vpop.f32.mrb[0].mxu0
        %v8438 = vadd.f32 0.0, %v8437
        %v8439 = vpop.f32.mrb[0].mxu0
        %v8440 = vadd.f32 0.0, %v8439
        %8441 = vmatprep.mubr.bf16.mxu0 %v2894
        %8442 = vmatmul.mubr.bf16.gmra.mrb[0].mxu0 %v2893
        %v8443 = vpop.f32.mrb[0].mxu0
        %v8444 = vadd.f32 0.0, %v8443
        %v8445 = vpop.f32.mrb[0].mxu0
        %v8446 = vadd.f32 0.0, %v8445
        %v8447 = vpop.f32.mrb[0].mxu0
        %v8448 = vadd.f32 0.0, %v8447
        %v8449 = vpop.f32.mrb[0].mxu0
        %v8450 = vadd.f32 0.0, %v8449
        %8451 = vmatprep.mubr.bf16.mxu0 %v2896
        %8452 = vmatmul.mubr.bf16.gmra.mrb[0].mxu0 %v2895
        %v8453 = vpop.f32.mrb[0].mxu0
        %v8454 = vadd.f32 0.0, %v8453
        %v8455 = vpop.f32.mrb[0].mxu0
        %v8456 = vadd.f32 0.0, %v8455
        %v8457 = vpop.f32.mrb[0].mxu0
        %v8458 = vadd.f32 0.0, %v8457
        %v8459 = vpop.f32.mrb[0].mxu0
        %v8460 = vadd.f32 0.0, %v8459
        %8461 = vmatprep.mubr.bf16.mxu0 %v2898
        %8462 = vmatmul.mubr.bf16.gmra.mrb[0].mxu0 %v2897
        %v8463 = vpop.f32.mrb[0].mxu0
        %v8464 = vadd.f32 0.0, %v8463
        %v8465 = vpop.f32.mrb[0].mxu0
        %v8466 = vadd.f32 0.0, %v8465
        %v8467 = vpop.f32.mrb[0].mxu0
        %v8468 = vadd.f32 0.0, %v8467
        %v8469 = vpop.f32.mrb[0].mxu0
        %v8470 = vadd.f32 0.0, %v8469
        %8471 = vmatprep.mubr.bf16.mxu0 %v2900
        %8472 = vmatmul.mubr.bf16.gmra.mrb[0].mxu0 %v2899
        %v8473 = vpop.f32.mrb[0].mxu0
        %v8474 = vadd.f32 0.0, %v8473
        %v8475 = vpop.f32.mrb[0].mxu0
        %v8476 = vadd.f32 0.0, %v8475
        %v8477 = vpop.f32.mrb[0].mxu0
        %v8478 = vadd.f32 0.0, %v8477
        %v8479 = vpop.f32.mrb[0].mxu0
        %v8480 = vadd.f32 0.0, %v8479
        %8481 = vmatprep.mubr.bf16.mxu0 %v2902
        %8482 = vmatmul.mubr.bf16.gmra.mrb[0].mxu0 %v2901
        %v8483 = vpop.f32.mrb[0].mxu0
        %v8484 = vadd.f32 0.0, %v8483
        %v8485 = vpop.f32.mrb[0].mxu0
        %v8486 = vadd.f32 0.0, %v8485
        %v8487 = vpop.f32.mrb[0].mxu0
        %v8488 = vadd.f32 0.0, %v8487
        %v8489 = vpop.f32.mrb[0].mxu0
        %v8490 = vadd.f32 0.0, %v8489
        %8491 = vmatprep.mubr.bf16.mxu0 %v2904
        %8492 = vmatmul.mubr.bf16.gmra.mrb[0].mxu0 %v2903
        %v8493 = vpop.f32.mrb[0].mxu0
        %v8494 = vadd.f32 0.0, %v8493
        %v8495 = vpop.f32.mrb[0].mxu0
        %v8496 = vadd.f32 0.0, %v8495
        %v8497 = vpop.f32.mrb[0].mxu0
        %v8498 = vadd.f32 0.0, %v8497
        %v8499 = vpop.f32.mrb[0].mxu0
        %v8500 = vadd.f32 0.0, %v8499
        %8501 = vmatprep.mubr.bf16.mxu0 %v2906
        %8502 = vmatmul.mubr.bf16.gmra.mrb[0].mxu0 %v2905
        %v8503 = vpop.f32.mrb[0].mxu0
        %v8504 = vadd.f32 0.0, %v8503
        %v8505 = vpop.f32.mrb[0].mxu0
        %v8506 = vadd.f32 0.0, %v8505
        %v8507 = vpop.f32.mrb[0].mxu0
        %v8508 = vadd.f32 0.0, %v8507
        %v8509 = vpop.f32.mrb[0].mxu0
        %v8510 = vadd.f32 0.0, %v8509
        %8511 = vmatprep.mubr.bf16.mxu0 %v2908
        %8512 = vmatmul.mubr.bf16.gmra.mrb[0].mxu0 %v2907
        %v8513 = vpop.f32.mrb[0].mxu0
        %v8514 = vadd.f32 0.0, %v8513
        %v8515 = vpop.f32.mrb[0].mxu0
        %v8516 = vadd.f32 0.0, %v8515
        %v8517 = vpop.f32.mrb[0].mxu0
        %v8518 = vadd.f32 0.0, %v8517
        %v8519 = vpop.f32.mrb[0].mxu0
        %v8520 = vadd.f32 0.0, %v8519
        %8521 = vmatprep.mubr.bf16.mxu0 %v2910
        %8522 = vmatmul.mubr.bf16.gmra.mrb[0].mxu0 %v2909
        %v8523 = vpop.f32.mrb[0].mxu0
        %v8524 = vadd.f32 0.0, %v8523
        %v8525 = vpop.f32.mrb[0].mxu0
        %v8526 = vadd.f32 0.0, %v8525
        %v8527 = vpop.f32.mrb[0].mxu0
        %v8528 = vadd.f32 0.0, %v8527
        %v8529 = vpop.f32.mrb[0].mxu0
        %v8530 = vadd.f32 0.0, %v8529
        %8531 = vmatprep.mubr.bf16.mxu0 %v2912
        %8532 = vmatmul.mubr.bf16.gmra.mrb[0].mxu0 %v2911
        %v8533 = vpop.f32.mrb[0].mxu0
        %v8534 = vadd.f32 0.0, %v8533
        %v8535 = vpop.f32.mrb[0].mxu0
        %v8536 = vadd.f32 0.0, %v8535
        %v8537 = vpop.f32.mrb[0].mxu0
        %v8538 = vadd.f32 0.0, %v8537
        %v8539 = vpop.f32.mrb[0].mxu0
        %v8540 = vadd.f32 0.0, %v8539
        %8541 = vmatprep.mubr.bf16.mxu0 %v2914
        %8542 = vmatmul.mubr.bf16.gmra.mrb[0].mxu0 %v2913
        %v8543 = vpop.f32.mrb[0].mxu0
        %v8544 = vadd.f32 0.0, %v8543
        %v8545 = vpop.f32.mrb[0].mxu0
        %v8546 = vadd.f32 0.0, %v8545
        %v8547 = vpop.f32.mrb[0].mxu0
        %v8548 = vadd.f32 0.0, %v8547
        %v8549 = vpop.f32.mrb[0].mxu0
        %v8550 = vadd.f32 0.0, %v8549
        %8551 = vmatprep.mubr.bf16.mxu0 %v2916
        %8552 = vmatmul.mubr.bf16.gmra.mrb[0].mxu0 %v2915
        %v8553 = vpop.f32.mrb[0].mxu0
        %v8554 = vadd.f32 0.0, %v8553
        %v8555 = vpop.f32.mrb[0].mxu0
        %v8556 = vadd.f32 0.0, %v8555
        %v8557 = vpop.f32.mrb[0].mxu0
        %v8558 = vadd.f32 0.0, %v8557
        %v8559 = vpop.f32.mrb[0].mxu0
        %v8560 = vadd.f32 0.0, %v8559
        %8561 = vmatprep.mubr.bf16.mxu0 %v2918
        %8562 = vmatmul.mubr.bf16.gmra.mrb[0].mxu0 %v2917
        %v8563 = vpop.f32.mrb[0].mxu0
        %v8564 = vadd.f32 0.0, %v8563
        %v8565 = vpop.f32.mrb[0].mxu0
        %v8566 = vadd.f32 0.0, %v8565
        %v8567 = vpop.f32.mrb[0].mxu0
        %v8568 = vadd.f32 0.0, %v8567
        %v8569 = vpop.f32.mrb[0].mxu0
        %v8570 = vadd.f32 0.0, %v8569
        %8571 = vmatprep.mubr.bf16.mxu0 %v2920
        %8572 = vmatmul.mubr.bf16.gmra.mrb[0].mxu0 %v2919
        %v8573 = vpop.f32.mrb[0].mxu0
        %v8574 = vadd.f32 0.0, %v8573
        %v8575 = vpop.f32.mrb[0].mxu0
        %v8576 = vadd.f32 0.0, %v8575
        %v8577 = vpop.f32.mrb[0].mxu0
        %v8578 = vadd.f32 0.0, %v8577
        %v8579 = vpop.f32.mrb[0].mxu0
        %v8580 = vadd.f32 0.0, %v8579
        %8581 = vmatprep.mubr.bf16.mxu0 %v2922
        %8582 = vmatmul.mubr.bf16.gmra.mrb[0].mxu0 %v2921
        %v8583 = vpop.f32.mrb[0].mxu0
        %v8584 = vadd.f32 0.0, %v8583
        %v8585 = vpop.f32.mrb[0].mxu0
        %v8586 = vadd.f32 0.0, %v8585
        %v8587 = vpop.f32.mrb[0].mxu0
        %v8588 = vadd.f32 0.0, %v8587
        %v8589 = vpop.f32.mrb[0].mxu0
        %v8590 = vadd.f32 0.0, %v8589
        %8591 = vmatprep.mubr.bf16.mxu0 %v2924
        %8592 = vmatmul.mubr.bf16.gmra.mrb[0].mxu0 %v2923
        %v8593 = vpop.f32.mrb[0].mxu0
        %v8594 = vadd.f32 0.0, %v8593
        %v8595 = vpop.f32.mrb[0].mxu0
        %v8596 = vadd.f32 0.0, %v8595
        %v8597 = vpop.f32.mrb[0].mxu0
        %v8598 = vadd.f32 0.0, %v8597
        %v8599 = vpop.f32.mrb[0].mxu0
        %v8600 = vadd.f32 0.0, %v8599
        %8601 = vmatprep.mubr.bf16.mxu0 %v2926
        %8602 = vmatmul.mubr.bf16.gmra.mrb[0].mxu0 %v2925
        %v8603 = vpop.f32.mrb[0].mxu0
        %v8604 = vadd.f32 0.0, %v8603
        %v8605 = vpop.f32.mrb[0].mxu0
        %v8606 = vadd.f32 0.0, %v8605
        %v8607 = vpop.f32.mrb[0].mxu0
        %v8608 = vadd.f32 0.0, %v8607
        %v8609 = vpop.f32.mrb[0].mxu0
        %v8610 = vadd.f32 0.0, %v8609
        %8611 = vmatprep.mubr.bf16.mxu0 %v2928
        %8612 = vmatmul.mubr.bf16.gmra.mrb[0].mxu0 %v2927
        %v8613 = vpop.f32.mrb[0].mxu0
        %v8614 = vadd.f32 0.0, %v8613
        %v8615 = vpop.f32.mrb[0].mxu0
        %v8616 = vadd.f32 0.0, %v8615
        %v8617 = vpop.f32.mrb[0].mxu0
        %v8618 = vadd.f32 0.0, %v8617
        %v8619 = vpop.f32.mrb[0].mxu0
        %v8620 = vadd.f32 0.0, %v8619
        %8621 = vmatprep.mubr.bf16.mxu0 %v2930
        %8622 = vmatmul.mubr.bf16.gmra.mrb[0].mxu0 %v2929
        %v8623 = vpop.f32.mrb[0].mxu0
        %v8624 = vadd.f32 0.0, %v8623
        %v8625 = vpop.f32.mrb[0].mxu0
        %v8626 = vadd.f32 0.0, %v8625
        %v8627 = vpop.f32.mrb[0].mxu0
        %v8628 = vadd.f32 0.0, %v8627
        %v8629 = vpop.f32.mrb[0].mxu0
        %v8630 = vadd.f32 0.0, %v8629
        %8631 = vmatprep.mubr.bf16.mxu0 %v2932
        %8632 = vmatmul.mubr.bf16.gmra.mrb[0].mxu0 %v2931
        %v8633 = vpop.f32.mrb[0].mxu0
        %v8634 = vadd.f32 0.0, %v8633
        %v8635 = vpop.f32.mrb[0].mxu0
        %v8636 = vadd.f32 0.0, %v8635
        %v8637 = vpop.f32.mrb[0].mxu0
        %v8638 = vadd.f32 0.0, %v8637
        %v8639 = vpop.f32.mrb[0].mxu0
        %v8640 = vadd.f32 0.0, %v8639
        %8641 = vdwg.mxu0
        %8642 = vmatprep.subr.bf16.mxu0 %v7510
        %8643 = vmatpush1.bf16.msra.mxu0 %v7509
        %8644 = vmatprep.subr.bf16.mxu0 %v7520
        %8645 = vmatpush1.bf16.msra.mxu0 %v7519
        %8646 = vmatprep.subr.bf16.mxu0 %v7530
        %8647 = vmatpush1.bf16.msra.mxu0 %v7529
        %8648 = vmatprep.subr.bf16.mxu0 %v7540
        %8649 = vmatpush1.bf16.msra.mxu0 %v7539
        %8650 = vmatprep.subr.bf16.mxu0 %v7550
        %8651 = vmatpush1.bf16.msra.mxu0 %v7549
        %8652 = vmatprep.subr.bf16.mxu0 %v7560
        %8653 = vmatpush1.bf16.msra.mxu0 %v7559
        %8654 = vmatprep.subr.bf16.mxu0 %v7570
        %8655 = vmatpush1.bf16.msra.mxu0 %v7569
        %8656 = vmatprep.subr.bf16.mxu0 %v7580
        %8657 = vmatpush1.bf16.msra.mxu0 %v7579
        %8658 = vmatprep.subr.bf16.mxu0 %v7590
        %8659 = vmatpush1.bf16.msra.mxu0 %v7589
        %8660 = vmatprep.subr.bf16.mxu0 %v7600
        %8661 = vmatpush1.bf16.msra.mxu0 %v7599
        %8662 = vmatprep.subr.bf16.mxu0 %v7610
        %8663 = vmatpush1.bf16.msra.mxu0 %v7609
        %8664 = vmatprep.subr.bf16.mxu0 %v7620
        %8665 = vmatpush1.bf16.msra.mxu0 %v7619
        %8666 = vmatprep.subr.bf16.mxu0 %v7630
        %8667 = vmatpush1.bf16.msra.mxu0 %v7629
        %8668 = vmatprep.subr.bf16.mxu0 %v7640
        %8669 = vmatpush1.bf16.msra.mxu0 %v7639
        %8670 = vmatprep.subr.bf16.mxu0 %v7650
        %8671 = vmatpush1.bf16.msra.mxu0 %v7649
        %8672 = vmatprep.subr.bf16.mxu0 %v7660
        %8673 = vmatpush1.bf16.msra.mxu0 %v7659
        %8674 = vmatprep.mubr.bf16.mxu0 %v2886
        %8675 = vmatmul.mubr.bf16.gmra.mrb[0].mxu0 %v2885
        %v8676 = vpop.f32.mrb[0].mxu0
        %v8677 = vadd.f32 0.0, %v8676
        %v8678 = vpop.f32.mrb[0].mxu0
        %v8679 = vadd.f32 0.0, %v8678
        %v8680 = vpop.f32.mrb[0].mxu0
        %v8681 = vadd.f32 0.0, %v8680
        %v8682 = vpop.f32.mrb[0].mxu0
        %v8683 = vadd.f32 0.0, %v8682
        %8684 = vmatprep.mubr.bf16.mxu0 %v2888
        %8685 = vmatmul.mubr.bf16.gmra.mrb[0].mxu0 %v2887
        %v8686 = vpop.f32.mrb[0].mxu0
        %v8687 = vadd.f32 0.0, %v8686
        %v8688 = vpop.f32.mrb[0].mxu0
        %v8689 = vadd.f32 0.0, %v8688
        %v8690 = vpop.f32.mrb[0].mxu0
        %v8691 = vadd.f32 0.0, %v8690
        %v8692 = vpop.f32.mrb[0].mxu0
        %v8693 = vadd.f32 0.0, %v8692
        %8694 = vmatprep.mubr.bf16.mxu0 %v2890
        %8695 = vmatmul.mubr.bf16.gmra.mrb[0].mxu0 %v2889
        %v8696 = vpop.f32.mrb[0].mxu0
        %v8697 = vadd.f32 0.0, %v8696
        %v8698 = vpop.f32.mrb[0].mxu0
        %v8699 = vadd.f32 0.0, %v8698
        %v8700 = vpop.f32.mrb[0].mxu0
        %v8701 = vadd.f32 0.0, %v8700
        %v8702 = vpop.f32.mrb[0].mxu0
        %v8703 = vadd.f32 0.0, %v8702
        %8704 = vmatprep.mubr.bf16.mxu0 %v2892
        %8705 = vmatmul.mubr.bf16.gmra.mrb[0].mxu0 %v2891
        %v8706 = vpop.f32.mrb[0].mxu0
        %v8707 = vadd.f32 0.0, %v8706
        %v8708 = vpop.f32.mrb[0].mxu0
        %v8709 = vadd.f32 0.0, %v8708
        %v8710 = vpop.f32.mrb[0].mxu0
        %v8711 = vadd.f32 0.0, %v8710
        %v8712 = vpop.f32.mrb[0].mxu0
        %v8713 = vadd.f32 0.0, %v8712
        %8714 = vmatprep.mubr.bf16.mxu0 %v2894
        %8715 = vmatmul.mubr.bf16.gmra.mrb[0].mxu0 %v2893
        %v8716 = vpop.f32.mrb[0].mxu0
        %v8717 = vadd.f32 0.0, %v8716
        %v8718 = vpop.f32.mrb[0].mxu0
        %v8719 = vadd.f32 0.0, %v8718
        %v8720 = vpop.f32.mrb[0].mxu0
        %v8721 = vadd.f32 0.0, %v8720
        %v8722 = vpop.f32.mrb[0].mxu0
        %v8723 = vadd.f32 0.0, %v8722
        %8724 = vmatprep.mubr.bf16.mxu0 %v2896
        %8725 = vmatmul.mubr.bf16.gmra.mrb[0].mxu0 %v2895
        %v8726 = vpop.f32.mrb[0].mxu0
        %v8727 = vadd.f32 0.0, %v8726
        %v8728 = vpop.f32.mrb[0].mxu0
        %v8729 = vadd.f32 0.0, %v8728
        %v8730 = vpop.f32.mrb[0].mxu0
        %v8731 = vadd.f32 0.0, %v8730
        %v8732 = vpop.f32.mrb[0].mxu0
        %v8733 = vadd.f32 0.0, %v8732
        %8734 = vmatprep.mubr.bf16.mxu0 %v2898
        %8735 = vmatmul.mubr.bf16.gmra.mrb[0].mxu0 %v2897
        %v8736 = vpop.f32.mrb[0].mxu0
        %v8737 = vadd.f32 0.0, %v8736
        %v8738 = vpop.f32.mrb[0].mxu0
        %v8739 = vadd.f32 0.0, %v8738
        %v8740 = vpop.f32.mrb[0].mxu0
        %v8741 = vadd.f32 0.0, %v8740
        %v8742 = vpop.f32.mrb[0].mxu0
        %v8743 = vadd.f32 0.0, %v8742
        %8744 = vmatprep.mubr.bf16.mxu0 %v2900
        %8745 = vmatmul.mubr.bf16.gmra.mrb[0].mxu0 %v2899
        %v8746 = vpop.f32.mrb[0].mxu0
        %v8747 = vadd.f32 0.0, %v8746
        %v8748 = vpop.f32.mrb[0].mxu0
        %v8749 = vadd.f32 0.0, %v8748
        %v8750 = vpop.f32.mrb[0].mxu0
        %v8751 = vadd.f32 0.0, %v8750
        %v8752 = vpop.f32.mrb[0].mxu0
        %v8753 = vadd.f32 0.0, %v8752
        %8754 = vmatprep.mubr.bf16.mxu0 %v2902
        %8755 = vmatmul.mubr.bf16.gmra.mrb[0].mxu0 %v2901
        %v8756 = vpop.f32.mrb[0].mxu0
        %v8757 = vadd.f32 0.0, %v8756
        %v8758 = vpop.f32.mrb[0].mxu0
        %v8759 = vadd.f32 0.0, %v8758
        %v8760 = vpop.f32.mrb[0].mxu0
        %v8761 = vadd.f32 0.0, %v8760
        %v8762 = vpop.f32.mrb[0].mxu0
        %v8763 = vadd.f32 0.0, %v8762
        %8764 = vmatprep.mubr.bf16.mxu0 %v2904
        %8765 = vmatmul.mubr.bf16.gmra.mrb[0].mxu0 %v2903
        %v8766 = vpop.f32.mrb[0].mxu0
        %v8767 = vadd.f32 0.0, %v8766
        %v8768 = vpop.f32.mrb[0].mxu0
        %v8769 = vadd.f32 0.0, %v8768
        %v8770 = vpop.f32.mrb[0].mxu0
        %v8771 = vadd.f32 0.0, %v8770
        %v8772 = vpop.f32.mrb[0].mxu0
        %v8773 = vadd.f32 0.0, %v8772
        %8774 = vmatprep.mubr.bf16.mxu0 %v2906
        %8775 = vmatmul.mubr.bf16.gmra.mrb[0].mxu0 %v2905
        %v8776 = vpop.f32.mrb[0].mxu0
        %v8777 = vadd.f32 0.0, %v8776
        %v8778 = vpop.f32.mrb[0].mxu0
        %v8779 = vadd.f32 0.0, %v8778
        %v8780 = vpop.f32.mrb[0].mxu0
        %v8781 = vadd.f32 0.0, %v8780
        %v8782 = vpop.f32.mrb[0].mxu0
        %v8783 = vadd.f32 0.0, %v8782
        %8784 = vmatprep.mubr.bf16.mxu0 %v2908
        %8785 = vmatmul.mubr.bf16.gmra.mrb[0].mxu0 %v2907
        %v8786 = vpop.f32.mrb[0].mxu0
        %v8787 = vadd.f32 0.0, %v8786
        %v8788 = vpop.f32.mrb[0].mxu0
        %v8789 = vadd.f32 0.0, %v8788
        %v8790 = vpop.f32.mrb[0].mxu0
        %v8791 = vadd.f32 0.0, %v8790
        %v8792 = vpop.f32.mrb[0].mxu0
        %v8793 = vadd.f32 0.0, %v8792
        %8794 = vmatprep.mubr.bf16.mxu0 %v2910
        %8795 = vmatmul.mubr.bf16.gmra.mrb[0].mxu0 %v2909
        %v8796 = vpop.f32.mrb[0].mxu0
        %v8797 = vadd.f32 0.0, %v8796
        %v8798 = vpop.f32.mrb[0].mxu0
        %v8799 = vadd.f32 0.0, %v8798
        %v8800 = vpop.f32.mrb[0].mxu0
        %v8801 = vadd.f32 0.0, %v8800
        %v8802 = vpop.f32.mrb[0].mxu0
        %v8803 = vadd.f32 0.0, %v8802
        %8804 = vmatprep.mubr.bf16.mxu0 %v2912
        %8805 = vmatmul.mubr.bf16.gmra.mrb[0].mxu0 %v2911
        %v8806 = vpop.f32.mrb[0].mxu0
        %v8807 = vadd.f32 0.0, %v8806
        %v8808 = vpop.f32.mrb[0].mxu0
        %v8809 = vadd.f32 0.0, %v8808
        %v8810 = vpop.f32.mrb[0].mxu0
        %v8811 = vadd.f32 0.0, %v8810
        %v8812 = vpop.f32.mrb[0].mxu0
        %v8813 = vadd.f32 0.0, %v8812
        %8814 = vmatprep.mubr.bf16.mxu0 %v2914
        %8815 = vmatmul.mubr.bf16.gmra.mrb[0].mxu0 %v2913
        %v8816 = vpop.f32.mrb[0].mxu0
        %v8817 = vadd.f32 0.0, %v8816
        %v8818 = vpop.f32.mrb[0].mxu0
        %v8819 = vadd.f32 0.0, %v8818
        %v8820 = vpop.f32.mrb[0].mxu0
        %v8821 = vadd.f32 0.0, %v8820
        %v8822 = vpop.f32.mrb[0].mxu0
        %v8823 = vadd.f32 0.0, %v8822
        %8824 = vmatprep.mubr.bf16.mxu0 %v2916
        %8825 = vmatmul.mubr.bf16.gmra.mrb[0].mxu0 %v2915
        %v8826 = vpop.f32.mrb[0].mxu0
        %v8827 = vadd.f32 0.0, %v8826
        %v8828 = vpop.f32.mrb[0].mxu0
        %v8829 = vadd.f32 0.0, %v8828
        %v8830 = vpop.f32.mrb[0].mxu0
        %v8831 = vadd.f32 0.0, %v8830
        %v8832 = vpop.f32.mrb[0].mxu0
        %v8833 = vadd.f32 0.0, %v8832
        %8834 = vmatprep.mubr.bf16.mxu0 %v2918
        %8835 = vmatmul.mubr.bf16.gmra.mrb[0].mxu0 %v2917
        %v8836 = vpop.f32.mrb[0].mxu0
        %v8837 = vadd.f32 0.0, %v8836
        %v8838 = vpop.f32.mrb[0].mxu0
        %v8839 = vadd.f32 0.0, %v8838
        %v8840 = vpop.f32.mrb[0].mxu0
        %v8841 = vadd.f32 0.0, %v8840
        %v8842 = vpop.f32.mrb[0].mxu0
        %v8843 = vadd.f32 0.0, %v8842
        %8844 = vmatprep.mubr.bf16.mxu0 %v2920
        %8845 = vmatmul.mubr.bf16.gmra.mrb[0].mxu0 %v2919
        %v8846 = vpop.f32.mrb[0].mxu0
        %v8847 = vadd.f32 0.0, %v8846
        %v8848 = vpop.f32.mrb[0].mxu0
        %v8849 = vadd.f32 0.0, %v8848
        %v8850 = vpop.f32.mrb[0].mxu0
        %v8851 = vadd.f32 0.0, %v8850
        %v8852 = vpop.f32.mrb[0].mxu0
        %v8853 = vadd.f32 0.0, %v8852
        %8854 = vmatprep.mubr.bf16.mxu0 %v2922
        %8855 = vmatmul.mubr.bf16.gmra.mrb[0].mxu0 %v2921
        %v8856 = vpop.f32.mrb[0].mxu0
        %v8857 = vadd.f32 0.0, %v8856
        %v8858 = vpop.f32.mrb[0].mxu0
        %v8859 = vadd.f32 0.0, %v8858
        %v8860 = vpop.f32.mrb[0].mxu0
        %v8861 = vadd.f32 0.0, %v8860
        %v8862 = vpop.f32.mrb[0].mxu0
        %v8863 = vadd.f32 0.0, %v8862
        %8864 = vmatprep.mubr.bf16.mxu0 %v2924
        %8865 = vmatmul.mubr.bf16.gmra.mrb[0].mxu0 %v2923
        %v8866 = vpop.f32.mrb[0].mxu0
        %v8867 = vadd.f32 0.0, %v8866
        %v8868 = vpop.f32.mrb[0].mxu0
        %v8869 = vadd.f32 0.0, %v8868
        %v8870 = vpop.f32.mrb[0].mxu0
        %v8871 = vadd.f32 0.0, %v8870
        %v8872 = vpop.f32.mrb[0].mxu0
        %v8873 = vadd.f32 0.0, %v8872
        %8874 = vmatprep.mubr.bf16.mxu0 %v2926
        %8875 = vmatmul.mubr.bf16.gmra.mrb[0].mxu0 %v2925
        %v8876 = vpop.f32.mrb[0].mxu0
        %v8877 = vadd.f32 0.0, %v8876
        %v8878 = vpop.f32.mrb[0].mxu0
        %v8879 = vadd.f32 0.0, %v8878
        %v8880 = vpop.f32.mrb[0].mxu0
        %v8881 = vadd.f32 0.0, %v8880
        %v8882 = vpop.f32.mrb[0].mxu0
        %v8883 = vadd.f32 0.0, %v8882
        %8884 = vmatprep.mubr.bf16.mxu0 %v2928
        %8885 = vmatmul.mubr.bf16.gmra.mrb[0].mxu0 %v2927
        %v8886 = vpop.f32.mrb[0].mxu0
        %v8887 = vadd.f32 0.0, %v8886
        %v8888 = vpop.f32.mrb[0].mxu0
        %v8889 = vadd.f32 0.0, %v8888
        %v8890 = vpop.f32.mrb[0].mxu0
        %v8891 = vadd.f32 0.0, %v8890
        %v8892 = vpop.f32.mrb[0].mxu0
        %v8893 = vadd.f32 0.0, %v8892
        %8894 = vmatprep.mubr.bf16.mxu0 %v2930
        %8895 = vmatmul.mubr.bf16.gmra.mrb[0].mxu0 %v2929
        %v8896 = vpop.f32.mrb[0].mxu0
        %v8897 = vadd.f32 0.0, %v8896
        %v8898 = vpop.f32.mrb[0].mxu0
        %v8899 = vadd.f32 0.0, %v8898
        %v8900 = vpop.f32.mrb[0].mxu0
        %v8901 = vadd.f32 0.0, %v8900
        %v8902 = vpop.f32.mrb[0].mxu0
        %v8903 = vadd.f32 0.0, %v8902
        %8904 = vmatprep.mubr.bf16.mxu0 %v2932
        %8905 = vmatmul.mubr.bf16.gmra.mrb[0].mxu0 %v2931
        %v8906 = vpop.f32.mrb[0].mxu0
        %v8907 = vadd.f32 0.0, %v8906
        %v8908 = vpop.f32.mrb[0].mxu0
        %v8909 = vadd.f32 0.0, %v8908
        %v8910 = vpop.f32.mrb[0].mxu0
        %v8911 = vadd.f32 0.0, %v8910
        %v8912 = vpop.f32.mrb[0].mxu0
        %v8913 = vadd.f32 0.0, %v8912
        %8914 = vdwg.mxu0
        %8915 = vmatprep.subr.bf16.mxu0 %v7512
        %8916 = vmatpush1.bf16.msra.mxu0 %v7511
        %8917 = vmatprep.subr.bf16.mxu0 %v7522
        %8918 = vmatpush1.bf16.msra.mxu0 %v7521
        %8919 = vmatprep.subr.bf16.mxu0 %v7532
        %8920 = vmatpush1.bf16.msra.mxu0 %v7531
        %8921 = vmatprep.subr.bf16.mxu0 %v7542
        %8922 = vmatpush1.bf16.msra.mxu0 %v7541
        %8923 = vmatprep.subr.bf16.mxu0 %v7552
        %8924 = vmatpush1.bf16.msra.mxu0 %v7551
        %8925 = vmatprep.subr.bf16.mxu0 %v7562
        %8926 = vmatpush1.bf16.msra.mxu0 %v7561
        %8927 = vmatprep.subr.bf16.mxu0 %v7572
        %8928 = vmatpush1.bf16.msra.mxu0 %v7571
        %8929 = vmatprep.subr.bf16.mxu0 %v7582
        %8930 = vmatpush1.bf16.msra.mxu0 %v7581
        %8931 = vmatprep.subr.bf16.mxu0 %v7592
        %8932 = vmatpush1.bf16.msra.mxu0 %v7591
        %8933 = vmatprep.subr.bf16.mxu0 %v7602
        %8934 = vmatpush1.bf16.msra.mxu0 %v7601
        %8935 = vmatprep.subr.bf16.mxu0 %v7612
        %8936 = vmatpush1.bf16.msra.mxu0 %v7611
        %8937 = vmatprep.subr.bf16.mxu0 %v7622
        %8938 = vmatpush1.bf16.msra.mxu0 %v7621
        %8939 = vmatprep.subr.bf16.mxu0 %v7632
        %8940 = vmatpush1.bf16.msra.mxu0 %v7631
        %8941 = vmatprep.subr.bf16.mxu0 %v7642
        %8942 = vmatpush1.bf16.msra.mxu0 %v7641
        %8943 = vmatprep.subr.bf16.mxu0 %v7652
        %8944 = vmatpush1.bf16.msra.mxu0 %v7651
        %8945 = vmatprep.subr.bf16.mxu0 %v7662
        %8946 = vmatpush1.bf16.msra.mxu0 %v7661
        %8947 = vmatprep.mubr.bf16.mxu0 %v2886
        %8948 = vmatmul.mubr.bf16.gmra.mrb[0].mxu0 %v2885
        %v8949 = vpop.f32.mrb[0].mxu0
        %v8950 = vadd.f32 0.0, %v8949
        %v8951 = vpop.f32.mrb[0].mxu0
        %v8952 = vadd.f32 0.0, %v8951
        %v8953 = vpop.f32.mrb[0].mxu0
        %v8954 = vadd.f32 0.0, %v8953
        %v8955 = vpop.f32.mrb[0].mxu0
        %v8956 = vadd.f32 0.0, %v8955
        %8957 = vmatprep.mubr.bf16.mxu0 %v2888
        %8958 = vmatmul.mubr.bf16.gmra.mrb[0].mxu0 %v2887
        %v8959 = vpop.f32.mrb[0].mxu0
        %v8960 = vadd.f32 0.0, %v8959
        %v8961 = vpop.f32.mrb[0].mxu0
        %v8962 = vadd.f32 0.0, %v8961
        %v8963 = vpop.f32.mrb[0].mxu0
        %v8964 = vadd.f32 0.0, %v8963
        %v8965 = vpop.f32.mrb[0].mxu0
        %v8966 = vadd.f32 0.0, %v8965
        %8967 = vmatprep.mubr.bf16.mxu0 %v2890
        %8968 = vmatmul.mubr.bf16.gmra.mrb[0].mxu0 %v2889
        %v8969 = vpop.f32.mrb[0].mxu0
        %v8970 = vadd.f32 0.0, %v8969
        %v8971 = vpop.f32.mrb[0].mxu0
        %v8972 = vadd.f32 0.0, %v8971
        %v8973 = vpop.f32.mrb[0].mxu0
        %v8974 = vadd.f32 0.0, %v8973
        %v8975 = vpop.f32.mrb[0].mxu0
        %v8976 = vadd.f32 0.0, %v8975
        %8977 = vmatprep.mubr.bf16.mxu0 %v2892
        %8978 = vmatmul.mubr.bf16.gmra.mrb[0].mxu0 %v2891
        %v8979 = vpop.f32.mrb[0].mxu0
        %v8980 = vadd.f32 0.0, %v8979
        %v8981 = vpop.f32.mrb[0].mxu0
        %v8982 = vadd.f32 0.0, %v8981
        %v8983 = vpop.f32.mrb[0].mxu0
        %v8984 = vadd.f32 0.0, %v8983
        %v8985 = vpop.f32.mrb[0].mxu0
        %v8986 = vadd.f32 0.0, %v8985
        %8987 = vmatprep.mubr.bf16.mxu0 %v2894
        %8988 = vmatmul.mubr.bf16.gmra.mrb[0].mxu0 %v2893
        %v8989 = vpop.f32.mrb[0].mxu0
        %v8990 = vadd.f32 0.0, %v8989
        %v8991 = vpop.f32.mrb[0].mxu0
        %v8992 = vadd.f32 0.0, %v8991
        %v8993 = vpop.f32.mrb[0].mxu0
        %v8994 = vadd.f32 0.0, %v8993
        %v8995 = vpop.f32.mrb[0].mxu0
        %v8996 = vadd.f32 0.0, %v8995
        %8997 = vmatprep.mubr.bf16.mxu0 %v2896
        %8998 = vmatmul.mubr.bf16.gmra.mrb[0].mxu0 %v2895
        %v8999 = vpop.f32.mrb[0].mxu0
        %v9000 = vadd.f32 0.0, %v8999
        %v9001 = vpop.f32.mrb[0].mxu0
        %v9002 = vadd.f32 0.0, %v9001
        %v9003 = vpop.f32.mrb[0].mxu0
        %v9004 = vadd.f32 0.0, %v9003
        %v9005 = vpop.f32.mrb[0].mxu0
        %v9006 = vadd.f32 0.0, %v9005
        %9007 = vmatprep.mubr.bf16.mxu0 %v2898
        %9008 = vmatmul.mubr.bf16.gmra.mrb[0].mxu0 %v2897
        %v9009 = vpop.f32.mrb[0].mxu0
        %v9010 = vadd.f32 0.0, %v9009
        %v9011 = vpop.f32.mrb[0].mxu0
        %v9012 = vadd.f32 0.0, %v9011
        %v9013 = vpop.f32.mrb[0].mxu0
        %v9014 = vadd.f32 0.0, %v9013
        %v9015 = vpop.f32.mrb[0].mxu0
        %v9016 = vadd.f32 0.0, %v9015
        %9017 = vmatprep.mubr.bf16.mxu0 %v2900
        %9018 = vmatmul.mubr.bf16.gmra.mrb[0].mxu0 %v2899
        %v9019 = vpop.f32.mrb[0].mxu0
        %v9020 = vadd.f32 0.0, %v9019
        %v9021 = vpop.f32.mrb[0].mxu0
        %v9022 = vadd.f32 0.0, %v9021
        %v9023 = vpop.f32.mrb[0].mxu0
        %v9024 = vadd.f32 0.0, %v9023
        %v9025 = vpop.f32.mrb[0].mxu0
        %v9026 = vadd.f32 0.0, %v9025
        %9027 = vmatprep.mubr.bf16.mxu0 %v2902
        %9028 = vmatmul.mubr.bf16.gmra.mrb[0].mxu0 %v2901
        %v9029 = vpop.f32.mrb[0].mxu0
        %v9030 = vadd.f32 0.0, %v9029
        %v9031 = vpop.f32.mrb[0].mxu0
        %v9032 = vadd.f32 0.0, %v9031
        %v9033 = vpop.f32.mrb[0].mxu0
        %v9034 = vadd.f32 0.0, %v9033
        %v9035 = vpop.f32.mrb[0].mxu0
        %v9036 = vadd.f32 0.0, %v9035
        %9037 = vmatprep.mubr.bf16.mxu0 %v2904
        %9038 = vmatmul.mubr.bf16.gmra.mrb[0].mxu0 %v2903
        %v9039 = vpop.f32.mrb[0].mxu0
        %v9040 = vadd.f32 0.0, %v9039
        %v9041 = vpop.f32.mrb[0].mxu0
        %v9042 = vadd.f32 0.0, %v9041
        %v9043 = vpop.f32.mrb[0].mxu0
        %v9044 = vadd.f32 0.0, %v9043
        %v9045 = vpop.f32.mrb[0].mxu0
        %v9046 = vadd.f32 0.0, %v9045
        %9047 = vmatprep.mubr.bf16.mxu0 %v2906
        %9048 = vmatmul.mubr.bf16.gmra.mrb[0].mxu0 %v2905
        %v9049 = vpop.f32.mrb[0].mxu0
        %v9050 = vadd.f32 0.0, %v9049
        %v9051 = vpop.f32.mrb[0].mxu0
        %v9052 = vadd.f32 0.0, %v9051
        %v9053 = vpop.f32.mrb[0].mxu0
        %v9054 = vadd.f32 0.0, %v9053
        %v9055 = vpop.f32.mrb[0].mxu0
        %v9056 = vadd.f32 0.0, %v9055
        %9057 = vmatprep.mubr.bf16.mxu0 %v2908
        %9058 = vmatmul.mubr.bf16.gmra.mrb[0].mxu0 %v2907
        %v9059 = vpop.f32.mrb[0].mxu0
        %v9060 = vadd.f32 0.0, %v9059
        %v9061 = vpop.f32.mrb[0].mxu0
        %v9062 = vadd.f32 0.0, %v9061
        %v9063 = vpop.f32.mrb[0].mxu0
        %v9064 = vadd.f32 0.0, %v9063
        %v9065 = vpop.f32.mrb[0].mxu0
        %v9066 = vadd.f32 0.0, %v9065
        %9067 = vmatprep.mubr.bf16.mxu0 %v2910
        %9068 = vmatmul.mubr.bf16.gmra.mrb[0].mxu0 %v2909
        %v9069 = vpop.f32.mrb[0].mxu0
        %v9070 = vadd.f32 0.0, %v9069
        %v9071 = vpop.f32.mrb[0].mxu0
        %v9072 = vadd.f32 0.0, %v9071
        %v9073 = vpop.f32.mrb[0].mxu0
        %v9074 = vadd.f32 0.0, %v9073
        %v9075 = vpop.f32.mrb[0].mxu0
        %v9076 = vadd.f32 0.0, %v9075
        %9077 = vmatprep.mubr.bf16.mxu0 %v2912
        %9078 = vmatmul.mubr.bf16.gmra.mrb[0].mxu0 %v2911
        %v9079 = vpop.f32.mrb[0].mxu0
        %v9080 = vadd.f32 0.0, %v9079
        %v9081 = vpop.f32.mrb[0].mxu0
        %v9082 = vadd.f32 0.0, %v9081
        %v9083 = vpop.f32.mrb[0].mxu0
        %v9084 = vadd.f32 0.0, %v9083
        %v9085 = vpop.f32.mrb[0].mxu0
        %v9086 = vadd.f32 0.0, %v9085
        %9087 = vmatprep.mubr.bf16.mxu0 %v2914
        %9088 = vmatmul.mubr.bf16.gmra.mrb[0].mxu0 %v2913
        %v9089 = vpop.f32.mrb[0].mxu0
        %v9090 = vadd.f32 0.0, %v9089
        %v9091 = vpop.f32.mrb[0].mxu0
        %v9092 = vadd.f32 0.0, %v9091
        %v9093 = vpop.f32.mrb[0].mxu0
        %v9094 = vadd.f32 0.0, %v9093
        %v9095 = vpop.f32.mrb[0].mxu0
        %v9096 = vadd.f32 0.0, %v9095
        %9097 = vmatprep.mubr.bf16.mxu0 %v2916
        %9098 = vmatmul.mubr.bf16.gmra.mrb[0].mxu0 %v2915
        %v9099 = vpop.f32.mrb[0].mxu0
        %v9100 = vadd.f32 0.0, %v9099
        %v9101 = vpop.f32.mrb[0].mxu0
        %v9102 = vadd.f32 0.0, %v9101
        %v9103 = vpop.f32.mrb[0].mxu0
        %v9104 = vadd.f32 0.0, %v9103
        %v9105 = vpop.f32.mrb[0].mxu0
        %v9106 = vadd.f32 0.0, %v9105
        %9107 = vmatprep.mubr.bf16.mxu0 %v2918
        %9108 = vmatmul.mubr.bf16.gmra.mrb[0].mxu0 %v2917
        %v9109 = vpop.f32.mrb[0].mxu0
        %v9110 = vadd.f32 0.0, %v9109
        %v9111 = vpop.f32.mrb[0].mxu0
        %v9112 = vadd.f32 0.0, %v9111
        %v9113 = vpop.f32.mrb[0].mxu0
        %v9114 = vadd.f32 0.0, %v9113
        %v9115 = vpop.f32.mrb[0].mxu0
        %v9116 = vadd.f32 0.0, %v9115
        %9117 = vmatprep.mubr.bf16.mxu0 %v2920
        %9118 = vmatmul.mubr.bf16.gmra.mrb[0].mxu0 %v2919
        %v9119 = vpop.f32.mrb[0].mxu0
        %v9120 = vadd.f32 0.0, %v9119
        %v9121 = vpop.f32.mrb[0].mxu0
        %v9122 = vadd.f32 0.0, %v9121
        %v9123 = vpop.f32.mrb[0].mxu0
        %v9124 = vadd.f32 0.0, %v9123
        %v9125 = vpop.f32.mrb[0].mxu0
        %v9126 = vadd.f32 0.0, %v9125
        %9127 = vmatprep.mubr.bf16.mxu0 %v2922
        %9128 = vmatmul.mubr.bf16.gmra.mrb[0].mxu0 %v2921
        %v9129 = vpop.f32.mrb[0].mxu0
        %v9130 = vadd.f32 0.0, %v9129
        %v9131 = vpop.f32.mrb[0].mxu0
        %v9132 = vadd.f32 0.0, %v9131
        %v9133 = vpop.f32.mrb[0].mxu0
        %v9134 = vadd.f32 0.0, %v9133
        %v9135 = vpop.f32.mrb[0].mxu0
        %v9136 = vadd.f32 0.0, %v9135
        %9137 = vmatprep.mubr.bf16.mxu0 %v2924
        %9138 = vmatmul.mubr.bf16.gmra.mrb[0].mxu0 %v2923
        %v9139 = vpop.f32.mrb[0].mxu0
        %v9140 = vadd.f32 0.0, %v9139
        %v9141 = vpop.f32.mrb[0].mxu0
        %v9142 = vadd.f32 0.0, %v9141
        %v9143 = vpop.f32.mrb[0].mxu0
        %v9144 = vadd.f32 0.0, %v9143
        %v9145 = vpop.f32.mrb[0].mxu0
        %v9146 = vadd.f32 0.0, %v9145
        %9147 = vmatprep.mubr.bf16.mxu0 %v2926
        %9148 = vmatmul.mubr.bf16.gmra.mrb[0].mxu0 %v2925
        %v9149 = vpop.f32.mrb[0].mxu0
        %v9150 = vadd.f32 0.0, %v9149
        %v9151 = vpop.f32.mrb[0].mxu0
        %v9152 = vadd.f32 0.0, %v9151
        %v9153 = vpop.f32.mrb[0].mxu0
        %v9154 = vadd.f32 0.0, %v9153
        %v9155 = vpop.f32.mrb[0].mxu0
        %v9156 = vadd.f32 0.0, %v9155
        %9157 = vmatprep.mubr.bf16.mxu0 %v2928
        %9158 = vmatmul.mubr.bf16.gmra.mrb[0].mxu0 %v2927
        %v9159 = vpop.f32.mrb[0].mxu0
        %v9160 = vadd.f32 0.0, %v9159
        %v9161 = vpop.f32.mrb[0].mxu0
        %v9162 = vadd.f32 0.0, %v9161
        %v9163 = vpop.f32.mrb[0].mxu0
        %v9164 = vadd.f32 0.0, %v9163
        %v9165 = vpop.f32.mrb[0].mxu0
        %v9166 = vadd.f32 0.0, %v9165
        %9167 = vmatprep.mubr.bf16.mxu0 %v2930
        %9168 = vmatmul.mubr.bf16.gmra.mrb[0].mxu0 %v2929
        %v9169 = vpop.f32.mrb[0].mxu0
        %v9170 = vadd.f32 0.0, %v9169
        %v9171 = vpop.f32.mrb[0].mxu0
        %v9172 = vadd.f32 0.0, %v9171
        %v9173 = vpop.f32.mrb[0].mxu0
        %v9174 = vadd.f32 0.0, %v9173
        %v9175 = vpop.f32.mrb[0].mxu0
        %v9176 = vadd.f32 0.0, %v9175
        %9177 = vmatprep.mubr.bf16.mxu0 %v2932
        %9178 = vmatmul.mubr.bf16.gmra.mrb[0].mxu0 %v2931
        %v9179 = vpop.f32.mrb[0].mxu0
        %v9180 = vadd.f32 0.0, %v9179
        %v9181 = vpop.f32.mrb[0].mxu0
        %v9182 = vadd.f32 0.0, %v9181
        %v9183 = vpop.f32.mrb[0].mxu0
        %v9184 = vadd.f32 0.0, %v9183
        %v9185 = vpop.f32.mrb[0].mxu0
        %v9186 = vadd.f32 0.0, %v9185
        %9187 = vdwg.mxu0
        %v9188 = vadd.f32 %v5533, %v7858
        %v9189 = vadd.f32 %v5535, %v7860
        %v9190 = vadd.f32 %v5806, %v8131
        %v9191 = vadd.f32 %v5808, %v8133
        %v9192 = vadd.f32 %v6079, %v8404
        %v9193 = vadd.f32 %v6081, %v8406
        %v9194 = vadd.f32 %v6352, %v8677
        %v9195 = vadd.f32 %v6354, %v8679
        %v9196 = vadd.f32 %v6625, %v8950
        %v9197 = vadd.f32 %v6627, %v8952
        %v9198 = vadd.f32 %v5537, %v7862
        %v9199 = vadd.f32 %v5539, %v7864
        %v9200 = vadd.f32 %v5810, %v8135
        %v9201 = vadd.f32 %v5812, %v8137
        %v9202 = vadd.f32 %v6083, %v8408
        %v9203 = vadd.f32 %v6085, %v8410
        %v9204 = vadd.f32 %v6356, %v8681
        %v9205 = vadd.f32 %v6358, %v8683
        %v9206 = vadd.f32 %v6629, %v8954
        %v9207 = vadd.f32 %v6631, %v8956
        %v9208 = vadd.f32 %v5543, %v7868
        %v9209 = vadd.f32 %v5545, %v7870
        %v9210 = vadd.f32 %v5816, %v8141
        %v9211 = vadd.f32 %v5818, %v8143
        %v9212 = vadd.f32 %v6089, %v8414
        %v9213 = vadd.f32 %v6091, %v8416
        %v9214 = vadd.f32 %v6362, %v8687
        %v9215 = vadd.f32 %v6364, %v8689
        %v9216 = vadd.f32 %v6635, %v8960
        %v9217 = vadd.f32 %v6637, %v8962
        %v9218 = vadd.f32 %v5547, %v7872
        %v9219 = vadd.f32 %v5549, %v7874
        %v9220 = vadd.f32 %v5820, %v8145
        %v9221 = vadd.f32 %v5822, %v8147
        %v9222 = vadd.f32 %v6093, %v8418
        %v9223 = vadd.f32 %v6095, %v8420
        %v9224 = vadd.f32 %v6366, %v8691
        %v9225 = vadd.f32 %v6368, %v8693
        %v9226 = vadd.f32 %v6639, %v8964
        %v9227 = vadd.f32 %v6641, %v8966
        %v9228 = vadd.f32 %v5553, %v7878
        %v9229 = vadd.f32 %v5555, %v7880
        %v9230 = vadd.f32 %v5826, %v8151
        %v9231 = vadd.f32 %v5828, %v8153
        %v9232 = vadd.f32 %v6099, %v8424
        %v9233 = vadd.f32 %v6101, %v8426
        %v9234 = vadd.f32 %v6372, %v8697
        %v9235 = vadd.f32 %v6374, %v8699
        %v9236 = vadd.f32 %v6645, %v8970
        %v9237 = vadd.f32 %v6647, %v8972
        %v9238 = vadd.f32 %v5557, %v7882
        %v9239 = vadd.f32 %v5559, %v7884
        %v9240 = vadd.f32 %v5830, %v8155
        %v9241 = vadd.f32 %v5832, %v8157
        %v9242 = vadd.f32 %v6103, %v8428
        %v9243 = vadd.f32 %v6105, %v8430
        %v9244 = vadd.f32 %v6376, %v8701
        %v9245 = vadd.f32 %v6378, %v8703
        %v9246 = vadd.f32 %v6649, %v8974
        %v9247 = vadd.f32 %v6651, %v8976
        %v9248 = vadd.f32 %v5563, %v7888
        %v9249 = vadd.f32 %v5565, %v7890
        %v9250 = vadd.f32 %v5836, %v8161
        %v9251 = vadd.f32 %v5838, %v8163
        %v9252 = vadd.f32 %v6109, %v8434
        %v9253 = vadd.f32 %v6111, %v8436
        %v9254 = vadd.f32 %v6382, %v8707
        %v9255 = vadd.f32 %v6384, %v8709
        %v9256 = vadd.f32 %v6655, %v8980
        %v9257 = vadd.f32 %v6657, %v8982
        %v9258 = vadd.f32 %v5567, %v7892
        %v9259 = vadd.f32 %v5569, %v7894
        %v9260 = vadd.f32 %v5840, %v8165
        %v9261 = vadd.f32 %v5842, %v8167
        %v9262 = vadd.f32 %v6113, %v8438
        %v9263 = vadd.f32 %v6115, %v8440
        %v9264 = vadd.f32 %v6386, %v8711
        %v9265 = vadd.f32 %v6388, %v8713
        %v9266 = vadd.f32 %v6659, %v8984
        %v9267 = vadd.f32 %v6661, %v8986
        %v9268 = vadd.f32 %v5573, %v7898
        %v9269 = vadd.f32 %v5575, %v7900
        %v9270 = vadd.f32 %v5846, %v8171
        %v9271 = vadd.f32 %v5848, %v8173
        %v9272 = vadd.f32 %v6119, %v8444
        %v9273 = vadd.f32 %v6121, %v8446
        %v9274 = vadd.f32 %v6392, %v8717
        %v9275 = vadd.f32 %v6394, %v8719
        %v9276 = vadd.f32 %v6665, %v8990
        %v9277 = vadd.f32 %v6667, %v8992
        %v9278 = vadd.f32 %v5577, %v7902
        %v9279 = vadd.f32 %v5579, %v7904
        %v9280 = vadd.f32 %v5850, %v8175
        %v9281 = vadd.f32 %v5852, %v8177
        %v9282 = vadd.f32 %v6123, %v8448
        %v9283 = vadd.f32 %v6125, %v8450
        %v9284 = vadd.f32 %v6396, %v8721
        %v9285 = vadd.f32 %v6398, %v8723
        %v9286 = vadd.f32 %v6669, %v8994
        %v9287 = vadd.f32 %v6671, %v8996
        %v9288 = vadd.f32 %v5583, %v7908
        %v9289 = vadd.f32 %v5585, %v7910
        %v9290 = vadd.f32 %v5856, %v8181
        %v9291 = vadd.f32 %v5858, %v8183
        %v9292 = vadd.f32 %v6129, %v8454
        %v9293 = vadd.f32 %v6131, %v8456
        %v9294 = vadd.f32 %v6402, %v8727
        %v9295 = vadd.f32 %v6404, %v8729
        %v9296 = vadd.f32 %v6675, %v9000
        %v9297 = vadd.f32 %v6677, %v9002
        %v9298 = vadd.f32 %v5587, %v7912
        %v9299 = vadd.f32 %v5589, %v7914
        %v9300 = vadd.f32 %v5860, %v8185
        %v9301 = vadd.f32 %v5862, %v8187
        %v9302 = vadd.f32 %v6133, %v8458
        %v9303 = vadd.f32 %v6135, %v8460
        %v9304 = vadd.f32 %v6406, %v8731
        %v9305 = vadd.f32 %v6408, %v8733
        %v9306 = vadd.f32 %v6679, %v9004
        %v9307 = vadd.f32 %v6681, %v9006
        %v9308 = vadd.f32 %v5593, %v7918
        %v9309 = vadd.f32 %v5595, %v7920
        %v9310 = vadd.f32 %v5866, %v8191
        %v9311 = vadd.f32 %v5868, %v8193
        %v9312 = vadd.f32 %v6139, %v8464
        %v9313 = vadd.f32 %v6141, %v8466
        %v9314 = vadd.f32 %v6412, %v8737
        %v9315 = vadd.f32 %v6414, %v8739
        %v9316 = vadd.f32 %v6685, %v9010
        %v9317 = vadd.f32 %v6687, %v9012
        %v9318 = vadd.f32 %v5597, %v7922
        %v9319 = vadd.f32 %v5599, %v7924
        %v9320 = vadd.f32 %v5870, %v8195
        %v9321 = vadd.f32 %v5872, %v8197
        %v9322 = vadd.f32 %v6143, %v8468
        %v9323 = vadd.f32 %v6145, %v8470
        %v9324 = vadd.f32 %v6416, %v8741
        %v9325 = vadd.f32 %v6418, %v8743
        %v9326 = vadd.f32 %v6689, %v9014
        %v9327 = vadd.f32 %v6691, %v9016
        %v9328 = vadd.f32 %v5603, %v7928
        %v9329 = vadd.f32 %v5605, %v7930
        %v9330 = vadd.f32 %v5876, %v8201
        %v9331 = vadd.f32 %v5878, %v8203
        %v9332 = vadd.f32 %v6149, %v8474
        %v9333 = vadd.f32 %v6151, %v8476
        %v9334 = vadd.f32 %v6422, %v8747
        %v9335 = vadd.f32 %v6424, %v8749
        %v9336 = vadd.f32 %v6695, %v9020
        %v9337 = vadd.f32 %v6697, %v9022
        %v9338 = vadd.f32 %v5607, %v7932
        %v9339 = vadd.f32 %v5609, %v7934
        %v9340 = vadd.f32 %v5880, %v8205
        %v9341 = vadd.f32 %v5882, %v8207
        %v9342 = vadd.f32 %v6153, %v8478
        %v9343 = vadd.f32 %v6155, %v8480
        %v9344 = vadd.f32 %v6426, %v8751
        %v9345 = vadd.f32 %v6428, %v8753
        %v9346 = vadd.f32 %v6699, %v9024
        %v9347 = vadd.f32 %v6701, %v9026
        %v9348 = vadd.f32 %v5613, %v7938
        %v9349 = vadd.f32 %v5615, %v7940
        %v9350 = vadd.f32 %v5886, %v8211
        %v9351 = vadd.f32 %v5888, %v8213
        %v9352 = vadd.f32 %v6159, %v8484
        %v9353 = vadd.f32 %v6161, %v8486
        %v9354 = vadd.f32 %v6432, %v8757
        %v9355 = vadd.f32 %v6434, %v8759
        %v9356 = vadd.f32 %v6705, %v9030
        %v9357 = vadd.f32 %v6707, %v9032
        %v9358 = vadd.f32 %v5617, %v7942
        %v9359 = vadd.f32 %v5619, %v7944
        %v9360 = vadd.f32 %v5890, %v8215
        %v9361 = vadd.f32 %v5892, %v8217
        %v9362 = vadd.f32 %v6163, %v8488
        %v9363 = vadd.f32 %v6165, %v8490
        %v9364 = vadd.f32 %v6436, %v8761
        %v9365 = vadd.f32 %v6438, %v8763
        %v9366 = vadd.f32 %v6709, %v9034
        %v9367 = vadd.f32 %v6711, %v9036
        %v9368 = vadd.f32 %v5623, %v7948
        %v9369 = vadd.f32 %v5625, %v7950
        %v9370 = vadd.f32 %v5896, %v8221
        %v9371 = vadd.f32 %v5898, %v8223
        %v9372 = vadd.f32 %v6169, %v8494
        %v9373 = vadd.f32 %v6171, %v8496
        %v9374 = vadd.f32 %v6442, %v8767
        %v9375 = vadd.f32 %v6444, %v8769
        %v9376 = vadd.f32 %v6715, %v9040
        %v9377 = vadd.f32 %v6717, %v9042
        %v9378 = vadd.f32 %v5627, %v7952
        %v9379 = vadd.f32 %v5629, %v7954
        %v9380 = vadd.f32 %v5900, %v8225
        %v9381 = vadd.f32 %v5902, %v8227
        %v9382 = vadd.f32 %v6173, %v8498
        %v9383 = vadd.f32 %v6175, %v8500
        %v9384 = vadd.f32 %v6446, %v8771
        %v9385 = vadd.f32 %v6448, %v8773
        %v9386 = vadd.f32 %v6719, %v9044
        %v9387 = vadd.f32 %v6721, %v9046
        %v9388 = vadd.f32 %v5633, %v7958
        %v9389 = vadd.f32 %v5635, %v7960
        %v9390 = vadd.f32 %v5906, %v8231
        %v9391 = vadd.f32 %v5908, %v8233
        %v9392 = vadd.f32 %v6179, %v8504
        %v9393 = vadd.f32 %v6181, %v8506
        %v9394 = vadd.f32 %v6452, %v8777
        %v9395 = vadd.f32 %v6454, %v8779
        %v9396 = vadd.f32 %v6725, %v9050
        %v9397 = vadd.f32 %v6727, %v9052
        %v9398 = vadd.f32 %v5637, %v7962
        %v9399 = vadd.f32 %v5639, %v7964
        %v9400 = vadd.f32 %v5910, %v8235
        %v9401 = vadd.f32 %v5912, %v8237
        %v9402 = vadd.f32 %v6183, %v8508
        %v9403 = vadd.f32 %v6185, %v8510
        %v9404 = vadd.f32 %v6456, %v8781
        %v9405 = vadd.f32 %v6458, %v8783
        %v9406 = vadd.f32 %v6729, %v9054
        %v9407 = vadd.f32 %v6731, %v9056
        %v9408 = vadd.f32 %v5643, %v7968
        %v9409 = vadd.f32 %v5645, %v7970
        %v9410 = vadd.f32 %v5916, %v8241
        %v9411 = vadd.f32 %v5918, %v8243
        %v9412 = vadd.f32 %v6189, %v8514
        %v9413 = vadd.f32 %v6191, %v8516
        %v9414 = vadd.f32 %v6462, %v8787
        %v9415 = vadd.f32 %v6464, %v8789
        %v9416 = vadd.f32 %v6735, %v9060
        %v9417 = vadd.f32 %v6737, %v9062
        %v9418 = vadd.f32 %v5647, %v7972
        %v9419 = vadd.f32 %v5649, %v7974
        %v9420 = vadd.f32 %v5920, %v8245
        %v9421 = vadd.f32 %v5922, %v8247
        %v9422 = vadd.f32 %v6193, %v8518
        %v9423 = vadd.f32 %v6195, %v8520
        %v9424 = vadd.f32 %v6466, %v8791
        %v9425 = vadd.f32 %v6468, %v8793
        %v9426 = vadd.f32 %v6739, %v9064
        %v9427 = vadd.f32 %v6741, %v9066
        %v9428 = vadd.f32 %v5653, %v7978
        %v9429 = vadd.f32 %v5655, %v7980
        %v9430 = vadd.f32 %v5926, %v8251
        %v9431 = vadd.f32 %v5928, %v8253
        %v9432 = vadd.f32 %v6199, %v8524
        %v9433 = vadd.f32 %v6201, %v8526
        %v9434 = vadd.f32 %v6472, %v8797
        %v9435 = vadd.f32 %v6474, %v8799
        %v9436 = vadd.f32 %v6745, %v9070
        %v9437 = vadd.f32 %v6747, %v9072
        %v9438 = vadd.f32 %v5657, %v7982
        %v9439 = vadd.f32 %v5659, %v7984
        %v9440 = vadd.f32 %v5930, %v8255
        %v9441 = vadd.f32 %v5932, %v8257
        %v9442 = vadd.f32 %v6203, %v8528
        %v9443 = vadd.f32 %v6205, %v8530
        %v9444 = vadd.f32 %v6476, %v8801
        %v9445 = vadd.f32 %v6478, %v8803
        %v9446 = vadd.f32 %v6749, %v9074
        %v9447 = vadd.f32 %v6751, %v9076
        %v9448 = vadd.f32 %v5663, %v7988
        %v9449 = vadd.f32 %v5665, %v7990
        %v9450 = vadd.f32 %v5936, %v8261
        %v9451 = vadd.f32 %v5938, %v8263
        %v9452 = vadd.f32 %v6209, %v8534
        %v9453 = vadd.f32 %v6211, %v8536
        %v9454 = vadd.f32 %v6482, %v8807
        %v9455 = vadd.f32 %v6484, %v8809
        %v9456 = vadd.f32 %v6755, %v9080
        %v9457 = vadd.f32 %v6757, %v9082
        %v9458 = vadd.f32 %v5667, %v7992
        %v9459 = vadd.f32 %v5669, %v7994
        %v9460 = vadd.f32 %v5940, %v8265
        %v9461 = vadd.f32 %v5942, %v8267
        %v9462 = vadd.f32 %v6213, %v8538
        %v9463 = vadd.f32 %v6215, %v8540
        %v9464 = vadd.f32 %v6486, %v8811
        %v9465 = vadd.f32 %v6488, %v8813
        %v9466 = vadd.f32 %v6759, %v9084
        %v9467 = vadd.f32 %v6761, %v9086
        %v9468 = vadd.f32 %v5673, %v7998
        %v9469 = vadd.f32 %v5675, %v8000
        %v9470 = vadd.f32 %v5946, %v8271
        %v9471 = vadd.f32 %v5948, %v8273
        %v9472 = vadd.f32 %v6219, %v8544
        %v9473 = vadd.f32 %v6221, %v8546
        %v9474 = vadd.f32 %v6492, %v8817
        %v9475 = vadd.f32 %v6494, %v8819
        %v9476 = vadd.f32 %v6765, %v9090
        %v9477 = vadd.f32 %v6767, %v9092
        %v9478 = vadd.f32 %v5677, %v8002
        %v9479 = vadd.f32 %v5679, %v8004
        %v9480 = vadd.f32 %v5950, %v8275
        %v9481 = vadd.f32 %v5952, %v8277
        %v9482 = vadd.f32 %v6223, %v8548
        %v9483 = vadd.f32 %v6225, %v8550
        %v9484 = vadd.f32 %v6496, %v8821
        %v9485 = vadd.f32 %v6498, %v8823
        %v9486 = vadd.f32 %v6769, %v9094
        %v9487 = vadd.f32 %v6771, %v9096
        %v9488 = vadd.f32 %v5683, %v8008
        %v9489 = vadd.f32 %v5685, %v8010
        %v9490 = vadd.f32 %v5956, %v8281
        %v9491 = vadd.f32 %v5958, %v8283
        %v9492 = vadd.f32 %v6229, %v8554
        %v9493 = vadd.f32 %v6231, %v8556
        %v9494 = vadd.f32 %v6502, %v8827
        %v9495 = vadd.f32 %v6504, %v8829
        %v9496 = vadd.f32 %v6775, %v9100
        %v9497 = vadd.f32 %v6777, %v9102
        %v9498 = vadd.f32 %v5687, %v8012
        %v9499 = vadd.f32 %v5689, %v8014
        %v9500 = vadd.f32 %v5960, %v8285
        %v9501 = vadd.f32 %v5962, %v8287
        %v9502 = vadd.f32 %v6233, %v8558
        %v9503 = vadd.f32 %v6235, %v8560
        %v9504 = vadd.f32 %v6506, %v8831
        %v9505 = vadd.f32 %v6508, %v8833
        %v9506 = vadd.f32 %v6779, %v9104
        %v9507 = vadd.f32 %v6781, %v9106
        %v9508 = vadd.f32 %v5693, %v8018
        %v9509 = vadd.f32 %v5695, %v8020
        %v9510 = vadd.f32 %v5966, %v8291
        %v9511 = vadd.f32 %v5968, %v8293
        %v9512 = vadd.f32 %v6239, %v8564
        %v9513 = vadd.f32 %v6241, %v8566
        %v9514 = vadd.f32 %v6512, %v8837
        %v9515 = vadd.f32 %v6514, %v8839
        %v9516 = vadd.f32 %v6785, %v9110
        %v9517 = vadd.f32 %v6787, %v9112
        %v9518 = vadd.f32 %v5697, %v8022
        %v9519 = vadd.f32 %v5699, %v8024
        %v9520 = vadd.f32 %v5970, %v8295
        %v9521 = vadd.f32 %v5972, %v8297
        %v9522 = vadd.f32 %v6243, %v8568
        %v9523 = vadd.f32 %v6245, %v8570
        %v9524 = vadd.f32 %v6516, %v8841
        %v9525 = vadd.f32 %v6518, %v8843
        %v9526 = vadd.f32 %v6789, %v9114
        %v9527 = vadd.f32 %v6791, %v9116
        %v9528 = vadd.f32 %v5703, %v8028
        %v9529 = vadd.f32 %v5705, %v8030
        %v9530 = vadd.f32 %v5976, %v8301
        %v9531 = vadd.f32 %v5978, %v8303
        %v9532 = vadd.f32 %v6249, %v8574
        %v9533 = vadd.f32 %v6251, %v8576
        %v9534 = vadd.f32 %v6522, %v8847
        %v9535 = vadd.f32 %v6524, %v8849
        %v9536 = vadd.f32 %v6795, %v9120
        %v9537 = vadd.f32 %v6797, %v9122
        %v9538 = vadd.f32 %v5707, %v8032
        %v9539 = vadd.f32 %v5709, %v8034
        %v9540 = vadd.f32 %v5980, %v8305
        %v9541 = vadd.f32 %v5982, %v8307
        %v9542 = vadd.f32 %v6253, %v8578
        %v9543 = vadd.f32 %v6255, %v8580
        %v9544 = vadd.f32 %v6526, %v8851
        %v9545 = vadd.f32 %v6528, %v8853
        %v9546 = vadd.f32 %v6799, %v9124
        %v9547 = vadd.f32 %v6801, %v9126
        %v9548 = vadd.f32 %v5713, %v8038
        %v9549 = vadd.f32 %v5715, %v8040
        %v9550 = vadd.f32 %v5986, %v8311
        %v9551 = vadd.f32 %v5988, %v8313
        %v9552 = vadd.f32 %v6259, %v8584
        %v9553 = vadd.f32 %v6261, %v8586
        %v9554 = vadd.f32 %v6532, %v8857
        %v9555 = vadd.f32 %v6534, %v8859
        %v9556 = vadd.f32 %v6805, %v9130
        %v9557 = vadd.f32 %v6807, %v9132
        %v9558 = vadd.f32 %v5717, %v8042
        %v9559 = vadd.f32 %v5719, %v8044
        %v9560 = vadd.f32 %v5990, %v8315
        %v9561 = vadd.f32 %v5992, %v8317
        %v9562 = vadd.f32 %v6263, %v8588
        %v9563 = vadd.f32 %v6265, %v8590
        %v9564 = vadd.f32 %v6536, %v8861
        %v9565 = vadd.f32 %v6538, %v8863
        %v9566 = vadd.f32 %v6809, %v9134
        %v9567 = vadd.f32 %v6811, %v9136
        %v9568 = vadd.f32 %v5723, %v8048
        %v9569 = vadd.f32 %v5725, %v8050
        %v9570 = vadd.f32 %v5996, %v8321
        %v9571 = vadd.f32 %v5998, %v8323
        %v9572 = vadd.f32 %v6269, %v8594
        %v9573 = vadd.f32 %v6271, %v8596
        %v9574 = vadd.f32 %v6542, %v8867
        %v9575 = vadd.f32 %v6544, %v8869
        %v9576 = vadd.f32 %v6815, %v9140
        %v9577 = vadd.f32 %v6817, %v9142
        %v9578 = vadd.f32 %v5727, %v8052
        %v9579 = vadd.f32 %v5729, %v8054
        %v9580 = vadd.f32 %v6000, %v8325
        %v9581 = vadd.f32 %v6002, %v8327
        %v9582 = vadd.f32 %v6273, %v8598
        %v9583 = vadd.f32 %v6275, %v8600
        %v9584 = vadd.f32 %v6546, %v8871
        %v9585 = vadd.f32 %v6548, %v8873
        %v9586 = vadd.f32 %v6819, %v9144
        %v9587 = vadd.f32 %v6821, %v9146
        %v9588 = vadd.f32 %v5733, %v8058
        %v9589 = vadd.f32 %v5735, %v8060
        %v9590 = vadd.f32 %v6006, %v8331
        %v9591 = vadd.f32 %v6008, %v8333
        %v9592 = vadd.f32 %v6279, %v8604
        %v9593 = vadd.f32 %v6281, %v8606
        %v9594 = vadd.f32 %v6552, %v8877
        %v9595 = vadd.f32 %v6554, %v8879
        %v9596 = vadd.f32 %v6825, %v9150
        %v9597 = vadd.f32 %v6827, %v9152
        %v9598 = vadd.f32 %v5737, %v8062
        %v9599 = vadd.f32 %v5739, %v8064
        %v9600 = vadd.f32 %v6010, %v8335
        %v9601 = vadd.f32 %v6012, %v8337
        %v9602 = vadd.f32 %v6283, %v8608
        %v9603 = vadd.f32 %v6285, %v8610
        %v9604 = vadd.f32 %v6556, %v8881
        %v9605 = vadd.f32 %v6558, %v8883
        %v9606 = vadd.f32 %v6829, %v9154
        %v9607 = vadd.f32 %v6831, %v9156
        %v9608 = vadd.f32 %v5743, %v8068
        %v9609 = vadd.f32 %v5745, %v8070
        %v9610 = vadd.f32 %v6016, %v8341
        %v9611 = vadd.f32 %v6018, %v8343
        %v9612 = vadd.f32 %v6289, %v8614
        %v9613 = vadd.f32 %v6291, %v8616
        %v9614 = vadd.f32 %v6562, %v8887
        %v9615 = vadd.f32 %v6564, %v8889
        %v9616 = vadd.f32 %v6835, %v9160
        %v9617 = vadd.f32 %v6837, %v9162
        %v9618 = vadd.f32 %v5747, %v8072
        %v9619 = vadd.f32 %v5749, %v8074
        %v9620 = vadd.f32 %v6020, %v8345
        %v9621 = vadd.f32 %v6022, %v8347
        %v9622 = vadd.f32 %v6293, %v8618
        %v9623 = vadd.f32 %v6295, %v8620
        %v9624 = vadd.f32 %v6566, %v8891
        %v9625 = vadd.f32 %v6568, %v8893
        %v9626 = vadd.f32 %v6839, %v9164
        %v9627 = vadd.f32 %v6841, %v9166
        %v9628 = vadd.f32 %v5753, %v8078
        %v9629 = vadd.f32 %v5755, %v8080
        %v9630 = vadd.f32 %v6026, %v8351
        %v9631 = vadd.f32 %v6028, %v8353
        %v9632 = vadd.f32 %v6299, %v8624
        %v9633 = vadd.f32 %v6301, %v8626
        %v9634 = vadd.f32 %v6572, %v8897
        %v9635 = vadd.f32 %v6574, %v8899
        %v9636 = vadd.f32 %v6845, %v9170
        %v9637 = vadd.f32 %v6847, %v9172
        %v9638 = vadd.f32 %v5757, %v8082
        %v9639 = vadd.f32 %v5759, %v8084
        %v9640 = vadd.f32 %v6030, %v8355
        %v9641 = vadd.f32 %v6032, %v8357
        %v9642 = vadd.f32 %v6303, %v8628
        %v9643 = vadd.f32 %v6305, %v8630
        %v9644 = vadd.f32 %v6576, %v8901
        %v9645 = vadd.f32 %v6578, %v8903
        %v9646 = vadd.f32 %v6849, %v9174
        %v9647 = vadd.f32 %v6851, %v9176
        %v9648 = vadd.f32 %v5763, %v8088
        %v9649 = vadd.f32 %v5765, %v8090
        %v9650 = vadd.f32 %v6036, %v8361
        %v9651 = vadd.f32 %v6038, %v8363
        %v9652 = vadd.f32 %v6309, %v8634
        %v9653 = vadd.f32 %v6311, %v8636
        %v9654 = vadd.f32 %v6582, %v8907
        %v9655 = vadd.f32 %v6584, %v8909
        %v9656 = vadd.f32 %v6855, %v9180
        %v9657 = vadd.f32 %v6857, %v9182
        %v9658 = vadd.f32 %v5767, %v8092
        %v9659 = vadd.f32 %v5769, %v8094
        %v9660 = vadd.f32 %v6040, %v8365
        %v9661 = vadd.f32 %v6042, %v8367
        %v9662 = vadd.f32 %v6313, %v8638
        %v9663 = vadd.f32 %v6315, %v8640
        %v9664 = vadd.f32 %v6586, %v8911
        %v9665 = vadd.f32 %v6588, %v8913
        %v9666 = vadd.f32 %v6859, %v9184
        %v9667 = vadd.f32 %v6861, %v9186
        %v9668 = vsub.f32 %v9188, %v9433
        %v9669 = vsub.f32 %v9189, %v9434
        %v9670 = vsub.f32 %v9190, %v9435
        %v9671 = vsub.f32 %v9191, %v9436
        %v9672 = vsub.f32 %v9192, %v9437
        %v9673 = vsub.f32 %v9198, %v9443
        %v9674 = vsub.f32 %v9199, %v9444
        %v9675 = vsub.f32 %v9200, %v9445
        %v9676 = vsub.f32 %v9201, %v9446
        %v9677 = vsub.f32 %v9202, %v9447
        %v9678 = vsub.f32 %v9208, %v9453
        %v9679 = vsub.f32 %v9209, %v9454
        %v9680 = vsub.f32 %v9210, %v9455
        %v9681 = vsub.f32 %v9211, %v9456
        %v9682 = vsub.f32 %v9212, %v9457
        %v9683 = vsub.f32 %v9218, %v9463
        %v9684 = vsub.f32 %v9219, %v9464
        %v9685 = vsub.f32 %v9220, %v9465
        %v9686 = vsub.f32 %v9221, %v9466
        %v9687 = vsub.f32 %v9222, %v9467
        %v9688 = vadd.f32 %v9193, %v9428
        %v9689 = vadd.f32 %v9194, %v9429
        %v9690 = vadd.f32 %v9195, %v9430
        %v9691 = vadd.f32 %v9196, %v9431
        %v9692 = vadd.f32 %v9197, %v9432
        %v9693 = vadd.f32 %v9203, %v9438
        %v9694 = vadd.f32 %v9204, %v9439
        %v9695 = vadd.f32 %v9205, %v9440
        %v9696 = vadd.f32 %v9206, %v9441
        %v9697 = vadd.f32 %v9207, %v9442
        %v9698 = vadd.f32 %v9213, %v9448
        %v9699 = vadd.f32 %v9214, %v9449
        %v9700 = vadd.f32 %v9215, %v9450
        %v9701 = vadd.f32 %v9216, %v9451
        %v9702 = vadd.f32 %v9217, %v9452
        %v9703 = vadd.f32 %v9223, %v9458
        %v9704 = vadd.f32 %v9224, %v9459
        %v9705 = vadd.f32 %v9225, %v9460
        %v9706 = vadd.f32 %v9226, %v9461
        %v9707 = vadd.f32 %v9227, %v9462
        %v9708 = vmul.f32 %v9668, %v9668
        %v9709 = vmul.f32 %v9669, %v9669
        %v9710 = vmul.f32 %v9670, %v9670
        %v9711 = vmul.f32 %v9671, %v9671
        %v9712 = vmul.f32 %v9672, %v9672
        %v9713 = vmul.f32 %v9673, %v9673
        %v9714 = vmul.f32 %v9674, %v9674
        %v9715 = vmul.f32 %v9675, %v9675
        %v9716 = vmul.f32 %v9676, %v9676
        %v9717 = vmul.f32 %v9677, %v9677
        %v9718 = vmul.f32 %v9678, %v9678
        %v9719 = vmul.f32 %v9679, %v9679
        %v9720 = vmul.f32 %v9680, %v9680
        %v9721 = vmul.f32 %v9681, %v9681
        %v9722 = vmul.f32 %v9682, %v9682
        %v9723 = vmul.f32 %v9683, %v9683
        %v9724 = vmul.f32 %v9684, %v9684
        %v9725 = vmul.f32 %v9685, %v9685
        %v9726 = vmul.f32 %v9686, %v9686
        %v9727 = vmul.f32 %v9687, %v9687
        %v9728 = vmul.f32 %v9688, %v9688
        %v9729 = vmul.f32 %v9689, %v9689
        %v9730 = vmul.f32 %v9690, %v9690
        %v9731 = vmul.f32 %v9691, %v9691
        %v9732 = vmul.f32 %v9692, %v9692
        %v9733 = vmul.f32 %v9693, %v9693
        %v9734 = vmul.f32 %v9694, %v9694
        %v9735 = vmul.f32 %v9695, %v9695
        %v9736 = vmul.f32 %v9696, %v9696
        %v9737 = vmul.f32 %v9697, %v9697
        %v9738 = vmul.f32 %v9698, %v9698
        %v9739 = vmul.f32 %v9699, %v9699
        %v9740 = vmul.f32 %v9700, %v9700
        %v9741 = vmul.f32 %v9701, %v9701
        %v9742 = vmul.f32 %v9702, %v9702
        %v9743 = vmul.f32 %v9703, %v9703
        %v9744 = vmul.f32 %v9704, %v9704
        %v9745 = vmul.f32 %v9705, %v9705
        %v9746 = vmul.f32 %v9706, %v9706
        %v9747 = vmul.f32 %v9707, %v9707
        %v9748 = vadd.f32 %v9708, %v9728
        %v9749 = vadd.f32 %v9709, %v9729
        %v9750 = vadd.f32 %v9710, %v9730
        %v9751 = vadd.f32 %v9711, %v9731
        %v9752 = vadd.f32 %v9712, %v9732
        %v9753 = vadd.f32 %v9713, %v9733
        %v9754 = vadd.f32 %v9714, %v9734
        %v9755 = vadd.f32 %v9715, %v9735
        %v9756 = vadd.f32 %v9716, %v9736
        %v9757 = vadd.f32 %v9717, %v9737
        %v9758 = vadd.f32 %v9718, %v9738
        %v9759 = vadd.f32 %v9719, %v9739
        %v9760 = vadd.f32 %v9720, %v9740
        %v9761 = vadd.f32 %v9721, %v9741
        %v9762 = vadd.f32 %v9722, %v9742
        %v9763 = vadd.f32 %v9723, %v9743
        %v9764 = vadd.f32 %v9724, %v9744
        %v9765 = vadd.f32 %v9725, %v9745
        %v9766 = vadd.f32 %v9726, %v9746
        %v9767 = vadd.f32 %v9727, %v9747
        %v9768 = vsub.f32 %v9228, %v9473
        %v9769 = vsub.f32 %v9229, %v9474
        %v9770 = vsub.f32 %v9230, %v9475
        %v9771 = vsub.f32 %v9231, %v9476
        %v9772 = vsub.f32 %v9232, %v9477
        %v9773 = vsub.f32 %v9238, %v9483
        %v9774 = vsub.f32 %v9239, %v9484
        %v9775 = vsub.f32 %v9240, %v9485
        %v9776 = vsub.f32 %v9241, %v9486
        %v9777 = vsub.f32 %v9242, %v9487
        %v9778 = vsub.f32 %v9248, %v9493
        %v9779 = vsub.f32 %v9249, %v9494
        %v9780 = vsub.f32 %v9250, %v9495
        %v9781 = vsub.f32 %v9251, %v9496
        %v9782 = vsub.f32 %v9252, %v9497
        %v9783 = vsub.f32 %v9258, %v9503
        %v9784 = vsub.f32 %v9259, %v9504
        %v9785 = vsub.f32 %v9260, %v9505
        %v9786 = vsub.f32 %v9261, %v9506
        %v9787 = vsub.f32 %v9262, %v9507
        %v9788 = vadd.f32 %v9233, %v9468
        %v9789 = vadd.f32 %v9234, %v9469
        %v9790 = vadd.f32 %v9235, %v9470
        %v9791 = vadd.f32 %v9236, %v9471
        %v9792 = vadd.f32 %v9237, %v9472
        %v9793 = vadd.f32 %v9243, %v9478
        %v9794 = vadd.f32 %v9244, %v9479
        %v9795 = vadd.f32 %v9245, %v9480
        %v9796 = vadd.f32 %v9246, %v9481
        %v9797 = vadd.f32 %v9247, %v9482
        %v9798 = vadd.f32 %v9253, %v9488
        %v9799 = vadd.f32 %v9254, %v9489
        %v9800 = vadd.f32 %v9255, %v9490
        %v9801 = vadd.f32 %v9256, %v9491
        %v9802 = vadd.f32 %v9257, %v9492
        %v9803 = vadd.f32 %v9263, %v9498
        %v9804 = vadd.f32 %v9264, %v9499
        %v9805 = vadd.f32 %v9265, %v9500
        %v9806 = vadd.f32 %v9266, %v9501
        %v9807 = vadd.f32 %v9267, %v9502
        %v9808 = vmul.f32 %v9768, %v9768
        %v9809 = vmul.f32 %v9769, %v9769
        %v9810 = vmul.f32 %v9770, %v9770
        %v9811 = vmul.f32 %v9771, %v9771
        %v9812 = vmul.f32 %v9772, %v9772
        %v9813 = vmul.f32 %v9773, %v9773
        %v9814 = vmul.f32 %v9774, %v9774
        %v9815 = vmul.f32 %v9775, %v9775
        %v9816 = vmul.f32 %v9776, %v9776
        %v9817 = vmul.f32 %v9777, %v9777
        %v9818 = vmul.f32 %v9778, %v9778
        %v9819 = vmul.f32 %v9779, %v9779
        %v9820 = vmul.f32 %v9780, %v9780
        %v9821 = vmul.f32 %v9781, %v9781
        %v9822 = vmul.f32 %v9782, %v9782
        %v9823 = vmul.f32 %v9783, %v9783
        %v9824 = vmul.f32 %v9784, %v9784
        %v9825 = vmul.f32 %v9785, %v9785
        %v9826 = vmul.f32 %v9786, %v9786
        %v9827 = vmul.f32 %v9787, %v9787
        %v9828 = vmul.f32 %v9788, %v9788
        %v9829 = vmul.f32 %v9789, %v9789
        %v9830 = vmul.f32 %v9790, %v9790
        %v9831 = vmul.f32 %v9791, %v9791
        %v9832 = vmul.f32 %v9792, %v9792
        %v9833 = vmul.f32 %v9793, %v9793
        %v9834 = vmul.f32 %v9794, %v9794
        %v9835 = vmul.f32 %v9795, %v9795
        %v9836 = vmul.f32 %v9796, %v9796
        %v9837 = vmul.f32 %v9797, %v9797
        %v9838 = vmul.f32 %v9798, %v9798
        %v9839 = vmul.f32 %v9799, %v9799
        %v9840 = vmul.f32 %v9800, %v9800
        %v9841 = vmul.f32 %v9801, %v9801
        %v9842 = vmul.f32 %v9802, %v9802
        %v9843 = vmul.f32 %v9803, %v9803
        %v9844 = vmul.f32 %v9804, %v9804
        %v9845 = vmul.f32 %v9805, %v9805
        %v9846 = vmul.f32 %v9806, %v9806
        %v9847 = vmul.f32 %v9807, %v9807
        %v9848 = vadd.f32 %v9808, %v9828
        %v9849 = vadd.f32 %v9809, %v9829
        %v9850 = vadd.f32 %v9810, %v9830
        %v9851 = vadd.f32 %v9811, %v9831
        %v9852 = vadd.f32 %v9812, %v9832
        %v9853 = vadd.f32 %v9813, %v9833
        %v9854 = vadd.f32 %v9814, %v9834
        %v9855 = vadd.f32 %v9815, %v9835
        %v9856 = vadd.f32 %v9816, %v9836
        %v9857 = vadd.f32 %v9817, %v9837
        %v9858 = vadd.f32 %v9818, %v9838
        %v9859 = vadd.f32 %v9819, %v9839
        %v9860 = vadd.f32 %v9820, %v9840
        %v9861 = vadd.f32 %v9821, %v9841
        %v9862 = vadd.f32 %v9822, %v9842
        %v9863 = vadd.f32 %v9823, %v9843
        %v9864 = vadd.f32 %v9824, %v9844
        %v9865 = vadd.f32 %v9825, %v9845
        %v9866 = vadd.f32 %v9826, %v9846
        %v9867 = vadd.f32 %v9827, %v9847
        %v9868 = vadd.f32 %v9748, %v9848
        %v9869 = vadd.f32 %v9749, %v9849
        %v9870 = vadd.f32 %v9750, %v9850
        %v9871 = vadd.f32 %v9751, %v9851
        %v9872 = vadd.f32 %v9752, %v9852
        %v9873 = vadd.f32 %v9753, %v9853
        %v9874 = vadd.f32 %v9754, %v9854
        %v9875 = vadd.f32 %v9755, %v9855
        %v9876 = vadd.f32 %v9756, %v9856
        %v9877 = vadd.f32 %v9757, %v9857
        %v9878 = vadd.f32 %v9758, %v9858
        %v9879 = vadd.f32 %v9759, %v9859
        %v9880 = vadd.f32 %v9760, %v9860
        %v9881 = vadd.f32 %v9761, %v9861
        %v9882 = vadd.f32 %v9762, %v9862
        %v9883 = vadd.f32 %v9763, %v9863
        %v9884 = vadd.f32 %v9764, %v9864
        %v9885 = vadd.f32 %v9765, %v9865
        %v9886 = vadd.f32 %v9766, %v9866
        %v9887 = vadd.f32 %v9767, %v9867
        %v9888 = vsub.f32 %v9268, %v9513
        %v9889 = vsub.f32 %v9269, %v9514
        %v9890 = vsub.f32 %v9270, %v9515
        %v9891 = vsub.f32 %v9271, %v9516
        %v9892 = vsub.f32 %v9272, %v9517
        %v9893 = vsub.f32 %v9278, %v9523
        %v9894 = vsub.f32 %v9279, %v9524
        %v9895 = vsub.f32 %v9280, %v9525
        %v9896 = vsub.f32 %v9281, %v9526
        %v9897 = vsub.f32 %v9282, %v9527
        %v9898 = vsub.f32 %v9288, %v9533
        %v9899 = vsub.f32 %v9289, %v9534
        %v9900 = vsub.f32 %v9290, %v9535
        %v9901 = vsub.f32 %v9291, %v9536
        %v9902 = vsub.f32 %v9292, %v9537
        %v9903 = vsub.f32 %v9298, %v9543
        %v9904 = vsub.f32 %v9299, %v9544
        %v9905 = vsub.f32 %v9300, %v9545
        %v9906 = vsub.f32 %v9301, %v9546
        %v9907 = vsub.f32 %v9302, %v9547
        %v9908 = vadd.f32 %v9273, %v9508
        %v9909 = vadd.f32 %v9274, %v9509
        %v9910 = vadd.f32 %v9275, %v9510
        %v9911 = vadd.f32 %v9276, %v9511
        %v9912 = vadd.f32 %v9277, %v9512
        %v9913 = vadd.f32 %v9283, %v9518
        %v9914 = vadd.f32 %v9284, %v9519
        %v9915 = vadd.f32 %v9285, %v9520
        %v9916 = vadd.f32 %v9286, %v9521
        %v9917 = vadd.f32 %v9287, %v9522
        %v9918 = vadd.f32 %v9293, %v9528
        %v9919 = vadd.f32 %v9294, %v9529
        %v9920 = vadd.f32 %v9295, %v9530
        %v9921 = vadd.f32 %v9296, %v9531
        %v9922 = vadd.f32 %v9297, %v9532
        %v9923 = vadd.f32 %v9303, %v9538
        %v9924 = vadd.f32 %v9304, %v9539
        %v9925 = vadd.f32 %v9305, %v9540
        %v9926 = vadd.f32 %v9306, %v9541
        %v9927 = vadd.f32 %v9307, %v9542
        %v9928 = vmul.f32 %v9888, %v9888
        %v9929 = vmul.f32 %v9889, %v9889
        %v9930 = vmul.f32 %v9890, %v9890
        %v9931 = vmul.f32 %v9891, %v9891
        %v9932 = vmul.f32 %v9892, %v9892
        %v9933 = vmul.f32 %v9893, %v9893
        %v9934 = vmul.f32 %v9894, %v9894
        %v9935 = vmul.f32 %v9895, %v9895
        %v9936 = vmul.f32 %v9896, %v9896
        %v9937 = vmul.f32 %v9897, %v9897
        %v9938 = vmul.f32 %v9898, %v9898
        %v9939 = vmul.f32 %v9899, %v9899
        %v9940 = vmul.f32 %v9900, %v9900
        %v9941 = vmul.f32 %v9901, %v9901
        %v9942 = vmul.f32 %v9902, %v9902
        %v9943 = vmul.f32 %v9903, %v9903
        %v9944 = vmul.f32 %v9904, %v9904
        %v9945 = vmul.f32 %v9905, %v9905
        %v9946 = vmul.f32 %v9906, %v9906
        %v9947 = vmul.f32 %v9907, %v9907
        %v9948 = vmul.f32 %v9908, %v9908
        %v9949 = vmul.f32 %v9909, %v9909
        %v9950 = vmul.f32 %v9910, %v9910
        %v9951 = vmul.f32 %v9911, %v9911
        %v9952 = vmul.f32 %v9912, %v9912
        %v9953 = vmul.f32 %v9913, %v9913
        %v9954 = vmul.f32 %v9914, %v9914
        %v9955 = vmul.f32 %v9915, %v9915
        %v9956 = vmul.f32 %v9916, %v9916
        %v9957 = vmul.f32 %v9917, %v9917
        %v9958 = vmul.f32 %v9918, %v9918
        %v9959 = vmul.f32 %v9919, %v9919
        %v9960 = vmul.f32 %v9920, %v9920
        %v9961 = vmul.f32 %v9921, %v9921
        %v9962 = vmul.f32 %v9922, %v9922
        %v9963 = vmul.f32 %v9923, %v9923
        %v9964 = vmul.f32 %v9924, %v9924
        %v9965 = vmul.f32 %v9925, %v9925
        %v9966 = vmul.f32 %v9926, %v9926
        %v9967 = vmul.f32 %v9927, %v9927
        %v9968 = vadd.f32 %v9928, %v9948
        %v9969 = vadd.f32 %v9929, %v9949
        %v9970 = vadd.f32 %v9930, %v9950
        %v9971 = vadd.f32 %v9931, %v9951
        %v9972 = vadd.f32 %v9932, %v9952
        %v9973 = vadd.f32 %v9933, %v9953
        %v9974 = vadd.f32 %v9934, %v9954
        %v9975 = vadd.f32 %v9935, %v9955
        %v9976 = vadd.f32 %v9936, %v9956
        %v9977 = vadd.f32 %v9937, %v9957
        %v9978 = vadd.f32 %v9938, %v9958
        %v9979 = vadd.f32 %v9939, %v9959
        %v9980 = vadd.f32 %v9940, %v9960
        %v9981 = vadd.f32 %v9941, %v9961
        %v9982 = vadd.f32 %v9942, %v9962
        %v9983 = vadd.f32 %v9943, %v9963
        %v9984 = vadd.f32 %v9944, %v9964
        %v9985 = vadd.f32 %v9945, %v9965
        %v9986 = vadd.f32 %v9946, %v9966
        %v9987 = vadd.f32 %v9947, %v9967
        %v9988 = vadd.f32 %v9868, %v9968
        %v9989 = vadd.f32 %v9869, %v9969
        %v9990 = vadd.f32 %v9870, %v9970
        %v9991 = vadd.f32 %v9871, %v9971
        %v9992 = vadd.f32 %v9872, %v9972
        %v9993 = vadd.f32 %v9873, %v9973
        %v9994 = vadd.f32 %v9874, %v9974
        %v9995 = vadd.f32 %v9875, %v9975
        %v9996 = vadd.f32 %v9876, %v9976
        %v9997 = vadd.f32 %v9877, %v9977
        %v9998 = vadd.f32 %v9878, %v9978
        %v9999 = vadd.f32 %v9879, %v9979
        %v10000 = vadd.f32 %v9880, %v9980
        %v10001 = vadd.f32 %v9881, %v9981
        %v10002 = vadd.f32 %v9882, %v9982
        %v10003 = vadd.f32 %v9883, %v9983
        %v10004 = vadd.f32 %v9884, %v9984
        %v10005 = vadd.f32 %v9885, %v9985
        %v10006 = vadd.f32 %v9886, %v9986
        %v10007 = vadd.f32 %v9887, %v9987
        %v10008 = vsub.f32 %v9308, %v9553
        %v10009 = vsub.f32 %v9309, %v9554
        %v10010 = vsub.f32 %v9310, %v9555
        %v10011 = vsub.f32 %v9311, %v9556
        %v10012 = vsub.f32 %v9312, %v9557
        %v10013 = vsub.f32 %v9318, %v9563
        %v10014 = vsub.f32 %v9319, %v9564
        %v10015 = vsub.f32 %v9320, %v9565
        %v10016 = vsub.f32 %v9321, %v9566
        %v10017 = vsub.f32 %v9322, %v9567
        %v10018 = vsub.f32 %v9328, %v9573
        %v10019 = vsub.f32 %v9329, %v9574
        %v10020 = vsub.f32 %v9330, %v9575
        %v10021 = vsub.f32 %v9331, %v9576
        %v10022 = vsub.f32 %v9332, %v9577
        %v10023 = vsub.f32 %v9338, %v9583
        %v10024 = vsub.f32 %v9339, %v9584
        %v10025 = vsub.f32 %v9340, %v9585
        %v10026 = vsub.f32 %v9341, %v9586
        %v10027 = vsub.f32 %v9342, %v9587
        %v10028 = vadd.f32 %v9313, %v9548
        %v10029 = vadd.f32 %v9314, %v9549
        %v10030 = vadd.f32 %v9315, %v9550
        %v10031 = vadd.f32 %v9316, %v9551
        %v10032 = vadd.f32 %v9317, %v9552
        %v10033 = vadd.f32 %v9323, %v9558
        %v10034 = vadd.f32 %v9324, %v9559
        %v10035 = vadd.f32 %v9325, %v9560
        %v10036 = vadd.f32 %v9326, %v9561
        %v10037 = vadd.f32 %v9327, %v9562
        %v10038 = vadd.f32 %v9333, %v9568
        %v10039 = vadd.f32 %v9334, %v9569
        %v10040 = vadd.f32 %v9335, %v9570
        %v10041 = vadd.f32 %v9336, %v9571
        %v10042 = vadd.f32 %v9337, %v9572
        %v10043 = vadd.f32 %v9343, %v9578
        %v10044 = vadd.f32 %v9344, %v9579
        %v10045 = vadd.f32 %v9345, %v9580
        %v10046 = vadd.f32 %v9346, %v9581
        %v10047 = vadd.f32 %v9347, %v9582
        %v10048 = vmul.f32 %v10008, %v10008
        %v10049 = vmul.f32 %v10009, %v10009
        %v10050 = vmul.f32 %v10010, %v10010
        %v10051 = vmul.f32 %v10011, %v10011
        %v10052 = vmul.f32 %v10012, %v10012
        %v10053 = vmul.f32 %v10013, %v10013
        %v10054 = vmul.f32 %v10014, %v10014
        %v10055 = vmul.f32 %v10015, %v10015
        %v10056 = vmul.f32 %v10016, %v10016
        %v10057 = vmul.f32 %v10017, %v10017
        %v10058 = vmul.f32 %v10018, %v10018
        %v10059 = vmul.f32 %v10019, %v10019
        %v10060 = vmul.f32 %v10020, %v10020
        %v10061 = vmul.f32 %v10021, %v10021
        %v10062 = vmul.f32 %v10022, %v10022
        %v10063 = vmul.f32 %v10023, %v10023
        %v10064 = vmul.f32 %v10024, %v10024
        %v10065 = vmul.f32 %v10025, %v10025
        %v10066 = vmul.f32 %v10026, %v10026
        %v10067 = vmul.f32 %v10027, %v10027
        %v10068 = vmul.f32 %v10028, %v10028
        %v10069 = vmul.f32 %v10029, %v10029
        %v10070 = vmul.f32 %v10030, %v10030
        %v10071 = vmul.f32 %v10031, %v10031
        %v10072 = vmul.f32 %v10032, %v10032
        %v10073 = vmul.f32 %v10033, %v10033
        %v10074 = vmul.f32 %v10034, %v10034
        %v10075 = vmul.f32 %v10035, %v10035
        %v10076 = vmul.f32 %v10036, %v10036
        %v10077 = vmul.f32 %v10037, %v10037
        %v10078 = vmul.f32 %v10038, %v10038
        %v10079 = vmul.f32 %v10039, %v10039
        %v10080 = vmul.f32 %v10040, %v10040
        %v10081 = vmul.f32 %v10041, %v10041
        %v10082 = vmul.f32 %v10042, %v10042
        %v10083 = vmul.f32 %v10043, %v10043
        %v10084 = vmul.f32 %v10044, %v10044
        %v10085 = vmul.f32 %v10045, %v10045
        %v10086 = vmul.f32 %v10046, %v10046
        %v10087 = vmul.f32 %v10047, %v10047
        %v10088 = vadd.f32 %v10048, %v10068
        %v10089 = vadd.f32 %v10049, %v10069
        %v10090 = vadd.f32 %v10050, %v10070
        %v10091 = vadd.f32 %v10051, %v10071
        %v10092 = vadd.f32 %v10052, %v10072
        %v10093 = vadd.f32 %v10053, %v10073
        %v10094 = vadd.f32 %v10054, %v10074
        %v10095 = vadd.f32 %v10055, %v10075
        %v10096 = vadd.f32 %v10056, %v10076
        %v10097 = vadd.f32 %v10057, %v10077
        %v10098 = vadd.f32 %v10058, %v10078
        %v10099 = vadd.f32 %v10059, %v10079
        %v10100 = vadd.f32 %v10060, %v10080
        %v10101 = vadd.f32 %v10061, %v10081
        %v10102 = vadd.f32 %v10062, %v10082
        %v10103 = vadd.f32 %v10063, %v10083
        %v10104 = vadd.f32 %v10064, %v10084
        %v10105 = vadd.f32 %v10065, %v10085
        %v10106 = vadd.f32 %v10066, %v10086
        %v10107 = vadd.f32 %v10067, %v10087
        %v10108 = vadd.f32 %v9988, %v10088
        %v10109 = vadd.f32 %v9989, %v10089
        %v10110 = vadd.f32 %v9990, %v10090
        %v10111 = vadd.f32 %v9991, %v10091
        %v10112 = vadd.f32 %v9992, %v10092
        %v10113 = vadd.f32 %v9993, %v10093
        %v10114 = vadd.f32 %v9994, %v10094
        %v10115 = vadd.f32 %v9995, %v10095
        %v10116 = vadd.f32 %v9996, %v10096
        %v10117 = vadd.f32 %v9997, %v10097
        %v10118 = vadd.f32 %v9998, %v10098
        %v10119 = vadd.f32 %v9999, %v10099
        %v10120 = vadd.f32 %v10000, %v10100
        %v10121 = vadd.f32 %v10001, %v10101
        %v10122 = vadd.f32 %v10002, %v10102
        %v10123 = vadd.f32 %v10003, %v10103
        %v10124 = vadd.f32 %v10004, %v10104
        %v10125 = vadd.f32 %v10005, %v10105
        %v10126 = vadd.f32 %v10006, %v10106
        %v10127 = vadd.f32 %v10007, %v10107
        %v10128 = vsub.f32 %v9348, %v9593
        %v10129 = vsub.f32 %v9349, %v9594
        %v10130 = vsub.f32 %v9350, %v9595
        %v10131 = vsub.f32 %v9351, %v9596
        %v10132 = vsub.f32 %v9352, %v9597
        %v10133 = vsub.f32 %v9358, %v9603
        %v10134 = vsub.f32 %v9359, %v9604
        %v10135 = vsub.f32 %v9360, %v9605
        %v10136 = vsub.f32 %v9361, %v9606
        %v10137 = vsub.f32 %v9362, %v9607
        %v10138 = vsub.f32 %v9368, %v9613
        %v10139 = vsub.f32 %v9369, %v9614
        %v10140 = vsub.f32 %v9370, %v9615
        %v10141 = vsub.f32 %v9371, %v9616
        %v10142 = vsub.f32 %v9372, %v9617
        %v10143 = vsub.f32 %v9378, %v9623
        %v10144 = vsub.f32 %v9379, %v9624
        %v10145 = vsub.f32 %v9380, %v9625
        %v10146 = vsub.f32 %v9381, %v9626
        %v10147 = vsub.f32 %v9382, %v9627
        %v10148 = vadd.f32 %v9353, %v9588
        %v10149 = vadd.f32 %v9354, %v9589
        %v10150 = vadd.f32 %v9355, %v9590
        %v10151 = vadd.f32 %v9356, %v9591
        %v10152 = vadd.f32 %v9357, %v9592
        %v10153 = vadd.f32 %v9363, %v9598
        %v10154 = vadd.f32 %v9364, %v9599
        %v10155 = vadd.f32 %v9365, %v9600
        %v10156 = vadd.f32 %v9366, %v9601
        %v10157 = vadd.f32 %v9367, %v9602
        %v10158 = vadd.f32 %v9373, %v9608
        %v10159 = vadd.f32 %v9374, %v9609
        %v10160 = vadd.f32 %v9375, %v9610
        %v10161 = vadd.f32 %v9376, %v9611
        %v10162 = vadd.f32 %v9377, %v9612
        %v10163 = vadd.f32 %v9383, %v9618
        %v10164 = vadd.f32 %v9384, %v9619
        %v10165 = vadd.f32 %v9385, %v9620
        %v10166 = vadd.f32 %v9386, %v9621
        %v10167 = vadd.f32 %v9387, %v9622
        %v10168 = vmul.f32 %v10128, %v10128
        %v10169 = vmul.f32 %v10129, %v10129
        %v10170 = vmul.f32 %v10130, %v10130
        %v10171 = vmul.f32 %v10131, %v10131
        %v10172 = vmul.f32 %v10132, %v10132
        %v10173 = vmul.f32 %v10133, %v10133
        %v10174 = vmul.f32 %v10134, %v10134
        %v10175 = vmul.f32 %v10135, %v10135
        %v10176 = vmul.f32 %v10136, %v10136
        %v10177 = vmul.f32 %v10137, %v10137
        %v10178 = vmul.f32 %v10138, %v10138
        %v10179 = vmul.f32 %v10139, %v10139
        %v10180 = vmul.f32 %v10140, %v10140
        %v10181 = vmul.f32 %v10141, %v10141
        %v10182 = vmul.f32 %v10142, %v10142
        %v10183 = vmul.f32 %v10143, %v10143
        %v10184 = vmul.f32 %v10144, %v10144
        %v10185 = vmul.f32 %v10145, %v10145
        %v10186 = vmul.f32 %v10146, %v10146
        %v10187 = vmul.f32 %v10147, %v10147
        %v10188 = vmul.f32 %v10148, %v10148
        %v10189 = vmul.f32 %v10149, %v10149
        %v10190 = vmul.f32 %v10150, %v10150
        %v10191 = vmul.f32 %v10151, %v10151
        %v10192 = vmul.f32 %v10152, %v10152
        %v10193 = vmul.f32 %v10153, %v10153
        %v10194 = vmul.f32 %v10154, %v10154
        %v10195 = vmul.f32 %v10155, %v10155
        %v10196 = vmul.f32 %v10156, %v10156
        %v10197 = vmul.f32 %v10157, %v10157
        %v10198 = vmul.f32 %v10158, %v10158
        %v10199 = vmul.f32 %v10159, %v10159
        %v10200 = vmul.f32 %v10160, %v10160
        %v10201 = vmul.f32 %v10161, %v10161
        %v10202 = vmul.f32 %v10162, %v10162
        %v10203 = vmul.f32 %v10163, %v10163
        %v10204 = vmul.f32 %v10164, %v10164
        %v10205 = vmul.f32 %v10165, %v10165
        %v10206 = vmul.f32 %v10166, %v10166
        %v10207 = vmul.f32 %v10167, %v10167
        %v10208 = vadd.f32 %v10168, %v10188
        %v10209 = vadd.f32 %v10169, %v10189
        %v10210 = vadd.f32 %v10170, %v10190
        %v10211 = vadd.f32 %v10171, %v10191
        %v10212 = vadd.f32 %v10172, %v10192
        %v10213 = vadd.f32 %v10173, %v10193
        %v10214 = vadd.f32 %v10174, %v10194
        %v10215 = vadd.f32 %v10175, %v10195
        %v10216 = vadd.f32 %v10176, %v10196
        %v10217 = vadd.f32 %v10177, %v10197
        %v10218 = vadd.f32 %v10178, %v10198
        %v10219 = vadd.f32 %v10179, %v10199
        %v10220 = vadd.f32 %v10180, %v10200
        %v10221 = vadd.f32 %v10181, %v10201
        %v10222 = vadd.f32 %v10182, %v10202
        %v10223 = vadd.f32 %v10183, %v10203
        %v10224 = vadd.f32 %v10184, %v10204
        %v10225 = vadd.f32 %v10185, %v10205
        %v10226 = vadd.f32 %v10186, %v10206
        %v10227 = vadd.f32 %v10187, %v10207
        %v10228 = vadd.f32 %v10108, %v10208
        %v10229 = vadd.f32 %v10109, %v10209
        %v10230 = vadd.f32 %v10110, %v10210
        %v10231 = vadd.f32 %v10111, %v10211
        %v10232 = vadd.f32 %v10112, %v10212
        %v10233 = vadd.f32 %v10113, %v10213
        %v10234 = vadd.f32 %v10114, %v10214
        %v10235 = vadd.f32 %v10115, %v10215
        %v10236 = vadd.f32 %v10116, %v10216
        %v10237 = vadd.f32 %v10117, %v10217
        %v10238 = vadd.f32 %v10118, %v10218
        %v10239 = vadd.f32 %v10119, %v10219
        %v10240 = vadd.f32 %v10120, %v10220
        %v10241 = vadd.f32 %v10121, %v10221
        %v10242 = vadd.f32 %v10122, %v10222
        %v10243 = vadd.f32 %v10123, %v10223
        %v10244 = vadd.f32 %v10124, %v10224
        %v10245 = vadd.f32 %v10125, %v10225
        %v10246 = vadd.f32 %v10126, %v10226
        %v10247 = vadd.f32 %v10127, %v10227
        %v10248 = vsub.f32 %v9388, %v9633
        %v10249 = vsub.f32 %v9389, %v9634
        %v10250 = vsub.f32 %v9390, %v9635
        %v10251 = vsub.f32 %v9391, %v9636
        %v10252 = vsub.f32 %v9392, %v9637
        %v10253 = vsub.f32 %v9398, %v9643
        %v10254 = vsub.f32 %v9399, %v9644
        %v10255 = vsub.f32 %v9400, %v9645
        %v10256 = vsub.f32 %v9401, %v9646
        %v10257 = vsub.f32 %v9402, %v9647
        %v10258 = vsub.f32 %v9408, %v9653
        %v10259 = vsub.f32 %v9409, %v9654
        %v10260 = vsub.f32 %v9410, %v9655
        %v10261 = vsub.f32 %v9411, %v9656
        %v10262 = vsub.f32 %v9412, %v9657
        %v10263 = vsub.f32 %v9418, %v9663
        %v10264 = vsub.f32 %v9419, %v9664
        %v10265 = vsub.f32 %v9420, %v9665
        %v10266 = vsub.f32 %v9421, %v9666
        %v10267 = vsub.f32 %v9422, %v9667
        %v10268 = vadd.f32 %v9393, %v9628
        %v10269 = vadd.f32 %v9394, %v9629
        %v10270 = vadd.f32 %v9395, %v9630
        %v10271 = vadd.f32 %v9396, %v9631
        %v10272 = vadd.f32 %v9397, %v9632
        %v10273 = vadd.f32 %v9403, %v9638
        %v10274 = vadd.f32 %v9404, %v9639
        %v10275 = vadd.f32 %v9405, %v9640
        %v10276 = vadd.f32 %v9406, %v9641
        %v10277 = vadd.f32 %v9407, %v9642
        %v10278 = vadd.f32 %v9413, %v9648
        %v10279 = vadd.f32 %v9414, %v9649
        %v10280 = vadd.f32 %v9415, %v9650
        %v10281 = vadd.f32 %v9416, %v9651
        %v10282 = vadd.f32 %v9417, %v9652
        %v10283 = vadd.f32 %v9423, %v9658
        %v10284 = vadd.f32 %v9424, %v9659
        %v10285 = vadd.f32 %v9425, %v9660
        %v10286 = vadd.f32 %v9426, %v9661
        %v10287 = vadd.f32 %v9427, %v9662
        %v10288 = vmul.f32 %v10248, %v10248
        %v10289 = vmul.f32 %v10249, %v10249
        %v10290 = vmul.f32 %v10250, %v10250
        %v10291 = vmul.f32 %v10251, %v10251
        %v10292 = vmul.f32 %v10252, %v10252
        %v10293 = vmul.f32 %v10253, %v10253
        %v10294 = vmul.f32 %v10254, %v10254
        %v10295 = vmul.f32 %v10255, %v10255
        %v10296 = vmul.f32 %v10256, %v10256
        %v10297 = vmul.f32 %v10257, %v10257
        %v10298 = vmul.f32 %v10258, %v10258
        %v10299 = vmul.f32 %v10259, %v10259
        %v10300 = vmul.f32 %v10260, %v10260
        %v10301 = vmul.f32 %v10261, %v10261
        %v10302 = vmul.f32 %v10262, %v10262
        %v10303 = vmul.f32 %v10263, %v10263
        %v10304 = vmul.f32 %v10264, %v10264
        %v10305 = vmul.f32 %v10265, %v10265
        %v10306 = vmul.f32 %v10266, %v10266
        %v10307 = vmul.f32 %v10267, %v10267
        %v10308 = vmul.f32 %v10268, %v10268
        %v10309 = vmul.f32 %v10269, %v10269
        %v10310 = vmul.f32 %v10270, %v10270
        %v10311 = vmul.f32 %v10271, %v10271
        %v10312 = vmul.f32 %v10272, %v10272
        %v10313 = vmul.f32 %v10273, %v10273
        %v10314 = vmul.f32 %v10274, %v10274
        %v10315 = vmul.f32 %v10275, %v10275
        %v10316 = vmul.f32 %v10276, %v10276
        %v10317 = vmul.f32 %v10277, %v10277
        %v10318 = vmul.f32 %v10278, %v10278
        %v10319 = vmul.f32 %v10279, %v10279
        %v10320 = vmul.f32 %v10280, %v10280
        %v10321 = vmul.f32 %v10281, %v10281
        %v10322 = vmul.f32 %v10282, %v10282
        %v10323 = vmul.f32 %v10283, %v10283
        %v10324 = vmul.f32 %v10284, %v10284
        %v10325 = vmul.f32 %v10285, %v10285
        %v10326 = vmul.f32 %v10286, %v10286
        %v10327 = vmul.f32 %v10287, %v10287
        %v10328 = vadd.f32 %v10288, %v10308
        %v10329 = vadd.f32 %v10289, %v10309
        %v10330 = vadd.f32 %v10290, %v10310
        %v10331 = vadd.f32 %v10291, %v10311
        %v10332 = vadd.f32 %v10292, %v10312
        %v10333 = vadd.f32 %v10293, %v10313
        %v10334 = vadd.f32 %v10294, %v10314
        %v10335 = vadd.f32 %v10295, %v10315
        %v10336 = vadd.f32 %v10296, %v10316
        %v10337 = vadd.f32 %v10297, %v10317
        %v10338 = vadd.f32 %v10298, %v10318
        %v10339 = vadd.f32 %v10299, %v10319
        %v10340 = vadd.f32 %v10300, %v10320
        %v10341 = vadd.f32 %v10301, %v10321
        %v10342 = vadd.f32 %v10302, %v10322
        %v10343 = vadd.f32 %v10303, %v10323
        %v10344 = vadd.f32 %v10304, %v10324
        %v10345 = vadd.f32 %v10305, %v10325
        %v10346 = vadd.f32 %v10306, %v10326
        %v10347 = vadd.f32 %v10307, %v10327
        %v10348 = vadd.f32 %v10228, %v10328
        %v10349 = vadd.f32 %v10229, %v10329
        %v10350 = vadd.f32 %v10230, %v10330
        %v10351 = vadd.f32 %v10231, %v10331
        %v10352 = vadd.f32 %v10232, %v10332
        %v10353 = vadd.f32 %v10233, %v10333
        %v10354 = vadd.f32 %v10234, %v10334
        %v10355 = vadd.f32 %v10235, %v10335
        %v10356 = vadd.f32 %v10236, %v10336
        %v10357 = vadd.f32 %v10237, %v10337
        %v10358 = vadd.f32 %v10238, %v10338
        %v10359 = vadd.f32 %v10239, %v10339
        %v10360 = vadd.f32 %v10240, %v10340
        %v10361 = vadd.f32 %v10241, %v10341
        %v10362 = vadd.f32 %v10242, %v10342
        %v10363 = vadd.f32 %v10243, %v10343
        %v10364 = vadd.f32 %v10244, %v10344
        %v10365 = vadd.f32 %v10245, %v10345
        %v10366 = vadd.f32 %v10246, %v10346
        %v10367 = vadd.f32 %v10247, %v10347
        %10368 = vst [vmem:[%s291] sm:$0xff] %v10348
        %10369 = vst [vmem:[%s291 + $0x8] sm:$0xff] %v10349
        %10370 = vst [vmem:[%s291 + $0x10] sm:$0xff] %v10350
        %10371 = vst [vmem:[%s291 + $0x18] sm:$0xff] %v10351
        %10372 = vst [vmem:[%s291 + $0x20] sm:$0xff] %v10352
        %10373 = vst [vmem:[%s291 + $0x28] sm:$0xff] %v10353
        %10374 = vst [vmem:[%s291 + $0x30] sm:$0xff] %v10354
        %10375 = vst [vmem:[%s291 + $0x38] sm:$0xff] %v10355
        %10376 = vst [vmem:[%s291 + $0x40] sm:$0xff] %v10356
        %10377 = vst [vmem:[%s291 + $0x48] sm:$0xff] %v10357
        %10378 = vst [vmem:[%s291 + $0x50] sm:$0xff] %v10358
        %10379 = vst [vmem:[%s291 + $0x58] sm:$0xff] %v10359
        %10380 = vst [vmem:[%s291 + $0x60] sm:$0xff] %v10360
        %10381 = vst [vmem:[%s291 + $0x68] sm:$0xff] %v10361
        %10382 = vst [vmem:[%s291 + $0x70] sm:$0xff] %v10362
        %10383 = vst [vmem:[%s291 + $0x78] sm:$0xff] %v10363
        %10384 = vst [vmem:[%s291 + $0x80] sm:$0xff] %v10364
        %10385 = vst [vmem:[%s291 + $0x88] sm:$0xff] %v10365
        %10386 = vst [vmem:[%s291 + $0x90] sm:$0xff] %v10366
        %10387 = vst [vmem:[%s291 + $0x98] sm:$0xff] %v10367
        %v10388 = vld [vmem:[%s303] sm:$0xff]
        %v10389 = vld [vmem:[%s303 + $0x8] sm:$0xff]
        %v10390 = vld [vmem:[%s303 + $0x10] sm:$0xff]
        %v10391 = vld [vmem:[%s303 + $0x18] sm:$0xff]
        %10393 = vset.pattern.permute.xlu0 3
        %10394 = vperm.xlu0 %10393, %v10388
        %v10395 = vpop.permute.xlu0 %10394
        %10398 = vset.pattern.permute.xlu0 3
        %10399 = vperm.xlu0 %10398, %v10389
        %v10400 = vpop.permute.xlu0 %10399
        %10403 = vset.pattern.permute.xlu0 3
        %10404 = vperm.xlu0 %10403, %v10390
        %v10405 = vpop.permute.xlu0 %10404
        %10408 = vset.pattern.permute.xlu0 3
        %10409 = vperm.xlu0 %10408, %v10391
        %v10410 = vpop.permute.xlu0 %10409
        %v10412 = vmul.f32 %v10395, %v10348
        %v10413 = vmul.f32 %v10395, %v10349
        %v10414 = vmul.f32 %v10395, %v10350
        %v10415 = vmul.f32 %v10395, %v10351
        %v10416 = vmul.f32 %v10395, %v10352
        %v10417 = vmul.f32 %v10400, %v10353
        %v10418 = vmul.f32 %v10400, %v10354
        %v10419 = vmul.f32 %v10400, %v10355
        %v10420 = vmul.f32 %v10400, %v10356
        %v10421 = vmul.f32 %v10400, %v10357
        %v10422 = vmul.f32 %v10405, %v10358
        %v10423 = vmul.f32 %v10405, %v10359
        %v10424 = vmul.f32 %v10405, %v10360
        %v10425 = vmul.f32 %v10405, %v10361
        %v10426 = vmul.f32 %v10405, %v10362
        %v10427 = vmul.f32 %v10410, %v10363
        %v10428 = vmul.f32 %v10410, %v10364
        %v10429 = vmul.f32 %v10410, %v10365
        %v10430 = vmul.f32 %v10410, %v10366
        %v10431 = vmul.f32 %v10410, %v10367
        %10432 = vset.pattern.permute.xlu0 4
        %10433 = vperm.xlu0 %10432, %v10388
        %v10434 = vpop.permute.xlu0 %10433
        %10436 = vset.pattern.permute.xlu0 4
        %10437 = vperm.xlu0 %10436, %v10389
        %v10438 = vpop.permute.xlu0 %10437
        %10440 = vset.pattern.permute.xlu0 4
        %10441 = vperm.xlu0 %10440, %v10390
        %v10442 = vpop.permute.xlu0 %10441
        %10444 = vset.pattern.permute.xlu0 4
        %10445 = vperm.xlu0 %10444, %v10391
        %v10446 = vpop.permute.xlu0 %10445
        %v10448 = vadd.f32 %v10412, %v10434
        %v10449 = vadd.f32 %v10413, %v10434
        %v10450 = vadd.f32 %v10414, %v10434
        %v10451 = vadd.f32 %v10415, %v10434
        %v10452 = vadd.f32 %v10416, %v10434
        %v10453 = vadd.f32 %v10417, %v10438
        %v10454 = vadd.f32 %v10418, %v10438
        %v10455 = vadd.f32 %v10419, %v10438
        %v10456 = vadd.f32 %v10420, %v10438
        %v10457 = vadd.f32 %v10421, %v10438
        %v10458 = vadd.f32 %v10422, %v10442
        %v10459 = vadd.f32 %v10423, %v10442
        %v10460 = vadd.f32 %v10424, %v10442
        %v10461 = vadd.f32 %v10425, %v10442
        %v10462 = vadd.f32 %v10426, %v10442
        %v10463 = vadd.f32 %v10427, %v10446
        %v10464 = vadd.f32 %v10428, %v10446
        %v10465 = vadd.f32 %v10429, %v10446
        %v10466 = vadd.f32 %v10430, %v10446
        %v10467 = vadd.f32 %v10431, %v10446
        %10468 = vst [vmem:[%s298] sm:$0xff] %v10448
        %10469 = vst [vmem:[%s298 + $0x8] sm:$0xff] %v10449
        %10470 = vst [vmem:[%s298 + $0x10] sm:$0xff] %v10450
        %10471 = vst [vmem:[%s298 + $0x18] sm:$0xff] %v10451
        %10472 = vst [vmem:[%s298 + $0x20] sm:$0xff] %v10452
        %10473 = vst [vmem:[%s298 + $0x28] sm:$0xff] %v10453
        %10474 = vst [vmem:[%s298 + $0x30] sm:$0xff] %v10454
        %10475 = vst [vmem:[%s298 + $0x38] sm:$0xff] %v10455
        %10476 = vst [vmem:[%s298 + $0x40] sm:$0xff] %v10456
        %10477 = vst [vmem:[%s298 + $0x48] sm:$0xff] %v10457
        %10478 = vst [vmem:[%s298 + $0x50] sm:$0xff] %v10458
        %10479 = vst [vmem:[%s298 + $0x58] sm:$0xff] %v10459
        %10480 = vst [vmem:[%s298 + $0x60] sm:$0xff] %v10460
        %10481 = vst [vmem:[%s298 + $0x68] sm:$0xff] %v10461
        %10482 = vst [vmem:[%s298 + $0x70] sm:$0xff] %v10462
        %10483 = vst [vmem:[%s298 + $0x78] sm:$0xff] %v10463
        %10484 = vst [vmem:[%s298 + $0x80] sm:$0xff] %v10464
        %10485 = vst [vmem:[%s298 + $0x88] sm:$0xff] %v10465
        %10486 = vst [vmem:[%s298 + $0x90] sm:$0xff] %v10466
        %10487 = vst [vmem:[%s298 + $0x98] sm:$0xff] %v10467
        %s10488 = sand.u32 %s144, 1
        %s10489 = scalar_lea.sflag [#allocation4], %s10488
        %s10490 = sand.u32 %s144, 1
        %s10491 = smul.addr %s10490, 160
        %s10492 = scalar_lea.vmem [#allocation8], %s10491
        %s10493 = sand.u32 %s170, 1
        %s10494 = scalar_lea.sflag [#allocation10], %s10493
        %s10495 = sand.u32 %s170, 1
        %s10496 = smul.addr %s10495, 160
        %s10497 = scalar_lea.vmem [#allocation9], %s10496
        // Predicated region
        $region53: #{tpu_custom_call.1} parent=39 // pred_check
          %p10498 = pneg %p154
        $region54: #{tpu_custom_call.1} parent=39 // pred_check_branch
          %10500 = sbr.rel (%p10498) target = $region56
        $region55: #{tpu_custom_call.1} parent=39 // pred_region
          %s10501 = smul.u32 4, %s26
          %s10503 = ssub.s32 2560, 2560
          %10504 = vsyncadd %s10489, %s10503
          %s10505 = smul.addr %s10501, 5
          %s10506 = smul.addr %s10505, 128
          %s10507 = scalar_lea.hbm %s5, %s10506
          %s10508 = sshll.u32 %s10492, 4
          %s10509 = int_to_ptr.vmem [resolvable:$true] %s10508
          %10514 = dma.vmem_to_hbm [thread:$0]  %s10509, 2560, %s10507, %s10489, 640, 640, 40
        $region56: #{tpu_custom_call.1} parent=39 // pred_fallthru
          _
        // Predicated region
        $region57: #{tpu_custom_call.1} parent=39 // pred_check
          %p10515 = pneg %p180
        $region58: #{tpu_custom_call.1} parent=39 // pred_check_branch
          %10517 = sbr.rel (%p10515) target = $region60
        $region59: #{tpu_custom_call.1} parent=39 // pred_region
          %s10518 = smul.u32 4, %s26
          %s10520 = ssub.s32 2560, 2560
          %10521 = vsyncadd %s10494, %s10520
          %s10522 = smul.addr %s10518, 5
          %s10523 = smul.addr %s10522, 128
          %s10524 = scalar_lea.hbm %s6, %s10523
          %s10525 = sshll.u32 %s10497, 4
          %s10526 = int_to_ptr.vmem [resolvable:$true] %s10525
          %10531 = dma.vmem_to_hbm [thread:$0]  %s10526, 2560, %s10524, %s10494, 640, 640, 40
        $region60: #{tpu_custom_call.1} parent=39 // pred_fallthru
          _
      $region40: #{tpu_custom_call.1} parent=5 // pred_fallthru
        _
      %p10532 = scmp.le.s32.totalorder 2, %s21
      // Predicated region
      $region61: #{tpu_custom_call.1} parent=5 // pred_check
        %p10533 = pneg %p10532
      $region62: #{tpu_custom_call.1} parent=5 // pred_check_branch
        %10535 = sbr.rel (%p10533) target = $region64
      $region63: #{tpu_custom_call.1} parent=5 // pred_region
        %s10536 = ssub.s32 %s21, 2
        // Predicated region
        $region65: #{tpu_custom_call.1} parent=63 // pred_check
          %p10537 = pneg %p160
        $region66: #{tpu_custom_call.1} parent=63 // pred_check_branch
          %10539 = sbr.rel (%p10537) target = $region68
        $region67: #{tpu_custom_call.1} parent=63 // pred_region
          %s10540 = sand.u32 %s145, 1
          %s10541 = scalar_lea.sflag [#allocation4], %s10540
          %s10542 = sand.u32 %s145, 1
          %s10543 = smul.addr %s10542, 160
          %s10544 = scalar_lea.vmem [#allocation8], %s10543
          %10545 = dma.done %s10541, 2560
        $region68: #{tpu_custom_call.1} parent=63 // pred_fallthru
          _
        // Predicated region
        $region69: #{tpu_custom_call.1} parent=63 // pred_check
          %p10546 = pneg %p186
        $region70: #{tpu_custom_call.1} parent=63 // pred_check_branch
          %10548 = sbr.rel (%p10546) target = $region72
        $region71: #{tpu_custom_call.1} parent=63 // pred_region
          %s10549 = sand.u32 %s171, 1
          %s10550 = scalar_lea.sflag [#allocation10], %s10549
          %s10551 = sand.u32 %s171, 1
          %s10552 = smul.addr %s10551, 160
          %s10553 = scalar_lea.vmem [#allocation9], %s10552
          %10554 = dma.done %s10550, 2560
        $region72: #{tpu_custom_call.1} parent=63 // pred_fallthru
          _
      $region64: #{tpu_custom_call.1} parent=5 // pred_fallthru
        _
    $region6: #{tpu_custom_call.1} parent=1 // loop_footer
      %s25 = sadd.s32 1, %s21
    $region7: #{tpu_custom_call.1} parent=1 // loop_footer_branch
      %20 = sbr.rel target = $region3
    $region8: #{tpu_custom_call.1} parent=1 // loop_exit
      _
    %10555 = vsyncpa [#allocation3], 1
    %s10556 = scalar_lea.sflag [#allocation3], 1
    %10557 = vsyncpa %s10556, 1
    %10558 = vsyncpa [#allocation6], 1
    %10559 = vsyncpa [#allocation4], 1
    %s10560 = scalar_lea.sflag [#allocation4], 1
    %10561 = vsyncpa %s10560, 1
    %10562 = vsyncpa [#allocation10], 1
    %s10563 = scalar_lea.sflag [#allocation10], 1
    %10564 = vsyncpa %s10563, 1

</llo_original>
